<compile_context>
chip_gen: v7x
topology: tpu7x:2x2x1
jax: 0.10.0
libtpu: 0.0.40
codegen_flags: <defaults>
</compile_context>

<pallas_src>
import functools

import jax
import jax.numpy as jnp
from jax.experimental import pallas as pl
from jax.experimental.pallas import tpu as pltpu

LN_EPS = 1e-5  # PyTorch nn.LayerNorm default


# --------------------------------------------------------------------------- #
# Kernel
# --------------------------------------------------------------------------- #
def _ctb_kernel(a_ref, s_ref,
                gamma_s_ref, b_gate_ref, b_s_ref,
                w_adaln_ref, w_a12_ref, w_b_ref, w_s_ref,
                out_ref, *, c_a, c_hidden):
    a = a_ref[...].astype(jnp.float32)      # [tm, c_a]
    s = s_ref[...].astype(jnp.float32)      # [tm, c_s]

    # ---- AdaptiveLayerNorm (f32 elementwise) ----
    mu_a = jnp.mean(a, axis=-1, keepdims=True)
    var_a = jnp.mean(jnp.square(a - mu_a), axis=-1, keepdims=True)
    a_ln = (a - mu_a) * jax.lax.rsqrt(var_a + LN_EPS)

    mu_s = jnp.mean(s, axis=-1, keepdims=True)
    var_s = jnp.mean(jnp.square(s - mu_s), axis=-1, keepdims=True)
    s_ln = (s - mu_s) * jax.lax.rsqrt(var_s + LN_EPS) * gamma_s_ref[...]

    # Fused gate|skip matmul: one bf16 MXU pass with a 2*c_a-wide output.
    gs = jnp.dot(s_ln.astype(jnp.bfloat16), w_adaln_ref[...],
                 preferred_element_type=jnp.float32)          # [tm, 2*c_a]
    gate = jax.nn.sigmoid(gs[:, :c_a] + b_gate_ref[...])
    a_mod = gate * a_ln + gs[:, c_a:]

    # ---- transition (SwiGLU-style), fused a1|a2 matmul ----
    h = jnp.dot(a_mod.astype(jnp.bfloat16), w_a12_ref[...],
                preferred_element_type=jnp.float32)           # [tm, 2*c_hidden]
    b = jax.nn.silu(h[:, :c_hidden]) * h[:, c_hidden:]

    # ---- output gate from the ORIGINAL s ----
    s_gate = jax.nn.sigmoid(
        jnp.dot(s.astype(jnp.bfloat16), w_s_ref[...],
                preferred_element_type=jnp.float32) + b_s_ref[...])
    out = s_gate * jnp.dot(b.astype(jnp.bfloat16), w_b_ref[...],
                           preferred_element_type=jnp.float32)

    out_ref[...] = out.astype(out_ref.dtype)


# --------------------------------------------------------------------------- #
# Wrapper
# --------------------------------------------------------------------------- #
@functools.partial(jax.jit, static_argnames=("tm", "single_buffer_weights"))
def _ctb_call(a, s, gamma_s, b_gate, b_s, w_adaln, w_a12, w_b, w_s,
              *, tm, single_buffer_weights):
    R, c_a = a.shape
    _, c_s = s.shape
    c_hidden = w_a12.shape[1] // 2
    out_dtype = a.dtype

    # Pad rows to a multiple of the row tile (pad rows produce garbage that is sliced off).
    n_tiles = pl.cdiv(R, tm)
    R_pad = n_tiles * tm
    if R_pad != R:
        a = jnp.pad(a, ((0, R_pad - R), (0, 0)))
        s = jnp.pad(s, ((0, R_pad - R), (0, 0)))

    row_spec = lambda d: pl.BlockSpec((tm, d), lambda i: (i, 0))

    def const_spec(r, c):
        # Weights / biases never change across the grid; request a single buffer
        # to halve their resident VMEM footprint when supported.
        if single_buffer_weights:
            return pl.BlockSpec((r, c), lambda i: (0, 0),
                                pipeline_mode=pl.Buffered(1))
        return pl.BlockSpec((r, c), lambda i: (0, 0))

    flops = 2 * R_pad * (c_s * 2 * c_a          # fused gate|skip
                         + c_a * 2 * c_hidden   # fused a1|a2
                         + c_hidden * c_a       # w_b
                         + c_s * c_a)           # w_s
    transcendentals = R_pad * (2 * c_a + c_hidden + 2)
    bytes_accessed = (
        (2 * R_pad * c_a + R_pad * c_s) * a.dtype.itemsize      # a, out, s
        + (w_adaln.size + w_a12.size + w_b.size + w_s.size) * w_adaln.dtype.itemsize
        + (gamma_s.size + b_gate.size + b_s.size) * 4)

    kernel = functools.partial(_ctb_kernel, c_a=c_a, c_hidden=c_hidden)

    out = pl.pallas_call(
        kernel,
        out_shape=jax.ShapeDtypeStruct((R_pad, c_a), out_dtype),
        grid_spec=pltpu.PrefetchScalarGridSpec(
            num_scalar_prefetch=0,
            grid=(n_tiles,),
            in_specs=[
                row_spec(c_a),                  # a
                row_spec(c_s),                  # s
                const_spec(1, c_s),             # gamma_s  (LN weight for s)
                const_spec(1, c_a),             # b_gate   (AdaLN sigmoid-gate bias)
                const_spec(1, c_a),             # b_s      (BiasInitLinear bias)
                const_spec(c_s, 2 * c_a),       # w_adaln  = [w_gate | w_skip]   (bf16)
                const_spec(c_a, 2 * c_hidden),  # w_a12    = [w_a1  | w_a2]      (bf16)
                const_spec(c_hidden, c_a),      # w_b                             (bf16)
                const_spec(c_s, c_a),           # w_s                             (bf16)
            ],
            out_specs=row_spec(c_a),
        ),
        compiler_params=pltpu.CompilerParams(
            dimension_semantics=("parallel",),
            vmem_limit_bytes=48 * 1024 * 1024),
        cost_estimate=pl.CostEstimate(
            flops=flops,
            transcendentals=transcendentals,
            bytes_accessed=bytes_accessed),
    )(a, s, gamma_s, b_gate, b_s, w_adaln, w_a12, w_b, w_s)

    return out[:R] if R_pad != R else out


def conditioned_transition_block(a, s, prepared, *, tm=256):
    """a: [R, c_a], s: [R, c_s], prepared = prepare_params(params)  ->  [R, c_a]."""
    args = (a, s,
            prepared["gamma_s"], prepared["b_gate"], prepared["b_s"],
            prepared["w_adaln"], prepared["w_a12"],
            prepared["w_b"], prepared["w_s"])
    try:
        return _ctb_call(*args, tm=tm, single_buffer_weights=True)
    except Exception:
        # pl.Buffered(1) (single-buffered resident weights) is a newer Pallas
        # feature; fall back to default double-buffered weights so the kernel
        # always runs.
        return _ctb_call(*args, tm=tm, single_buffer_weights=False)


# --------------------------------------------------------------------------- #
# Parameters
# --------------------------------------------------------------------------- #
def init_params(key, c_a, c_s, n=2, biasinit=-2.0, dtype=jnp.float32):
    """Deterministic synthetic parameters (shapes follow the module __init__)."""
    ks = jax.random.split(key, 6)

    def lin(k, fan_in, fan_out):
        return (jax.random.normal(k, (fan_in, fan_out)) / jnp.sqrt(fan_in)).astype(dtype)

    return {
        # AdaptiveLayerNorm
        "gamma_s": jnp.ones((1, c_s), dtype),
        "w_gate":  lin(ks[0], c_s, c_a),
        "b_gate":  jnp.zeros((1, c_a), dtype),
        "w_skip":  lin(ks[1], c_s, c_a),
        # transition linears
        "w_a1":    lin(ks[2], c_a, n * c_a),
        "w_a2":    lin(ks[3], c_a, n * c_a),
        "w_b":     lin(ks[4], n * c_a, c_a),
        # BiasInitLinear(c_s -> c_a, bias init = biasinit)
        "w_s":     lin(ks[5], c_s, c_a),
        "b_s":     jnp.full((1, c_a), biasinit, dtype),
    }


def prepare_params(params, matmul_dtype=jnp.bfloat16):
    """Fuse paired weights and cast MXU weights to bf16 once, outside pallas_call."""
    return {
        "gamma_s": params["gamma_s"].astype(jnp.float32),
        "b_gate":  params["b_gate"].astype(jnp.float32),
        "b_s":     params["b_s"].astype(jnp.float32),
        "w_adaln": jnp.concatenate([params["w_gate"], params["w_skip"]],
                                   axis=1).astype(matmul_dtype),
        "w_a12":   jnp.concatenate([params["w_a1"], params["w_a2"]],
                                   axis=1).astype(matmul_dtype),
        "w_b":     params["w_b"].astype(matmul_dtype),
        "w_s":     params["w_s"].astype(matmul_dtype),
    }


# --------------------------------------------------------------------------- #
# Pure-JAX reference (f32, unfused) for correctness checking
# --------------------------------------------------------------------------- #
def reference(a, s, p):
    a32, s32 = a.astype(jnp.float32), s.astype(jnp.float32)
    mu = a32.mean(-1, keepdims=True)
    a_ln = (a32 - mu) * jax.lax.rsqrt(((a32 - mu) ** 2).mean(-1, keepdims=True) + LN_EPS)
    mus = s32.mean(-1, keepdims=True)
    s_ln = (s32 - mus) * jax.lax.rsqrt(((s32 - mus) ** 2).mean(-1, keepdims=True) + LN_EPS)
    s_ln = s_ln * p["gamma_s"]
    a_mod = jax.nn.sigmoid(s_ln @ p["w_gate"] + p["b_gate"]) * a_ln + s_ln @ p["w_skip"]
    b = jax.nn.silu(a_mod @ p["w_a1"]) * (a_mod @ p["w_a2"])
    return (jax.nn.sigmoid(s32 @ p["w_s"] + p["b_s"]) * (b @ p["w_b"])).astype(a.dtype)


if __name__ == "__main__":
    # Shapes implied by the forward: a: [B, N, c_a], s: [B, N, c_s]
    B, N, c_a, c_s, n = 2, 512, 128, 128, 2   # R = 1024 rows -> 4 grid steps at tm=256

    key = jax.random.PRNGKey(0)
    k_a, k_s, k_p = jax.random.split(key, 3)
    a = jax.random.normal(k_a, (B, N, c_a), jnp.float32)
    s = jax.random.normal(k_s, (B, N, c_s), jnp.float32)
    params = init_params(k_p, c_a, c_s, n=n, biasinit=-2.0)
    prepared = prepare_params(params)

    # Flatten leading dims into the row axis for the kernel.
    a2 = a.reshape(-1, c_a)
    s2 = s.reshape(-1, c_s)

    out = conditioned_transition_block(a2, s2, prepared, tm=256)
    out = jax.block_until_ready(out).reshape(B, N, c_a)

    ref = reference(a2, s2, params).reshape(B, N, c_a)
    assert out.shape == (B, N, c_a)
    # bf16 MXU operands vs. a pure-f32 reference -> loosened tolerance.
    max_err = float(jnp.max(jnp.abs(out.astype(jnp.float32) - ref.astype(jnp.float32))))
    assert jnp.allclose(out, ref, atol=5e-2, rtol=5e-2), (
        f"mismatch vs. JAX reference (max abs err {max_err:.3e})")

    print("KERNEL_OK")
</pallas_src>

<mosaic_0001>
module attributes {stable_mosaic.version = 11 : i64} {
  func.func @_ctb_kernel(%arg0: i32, %arg1: memref<256x128xf32, #tpu.memory_space<vmem>>, %arg2: memref<256x128xf32, #tpu.memory_space<vmem>>, %arg3: memref<1x128xf32, #tpu.memory_space<vmem>>, %arg4: memref<1x128xf32, #tpu.memory_space<vmem>>, %arg5: memref<1x128xf32, #tpu.memory_space<vmem>>, %arg6: memref<128x256xbf16, #tpu.memory_space<vmem>>, %arg7: memref<128x512xbf16, #tpu.memory_space<vmem>>, %arg8: memref<256x128xbf16, #tpu.memory_space<vmem>>, %arg9: memref<128x128xbf16, #tpu.memory_space<vmem>>, %arg10: memref<256x128xf32, #tpu.memory_space<vmem>>) attributes {dimension_semantics = [#tpu.dimension_semantics<parallel>], iteration_bounds = array<i64: 4>, scalar_prefetch = 0 : i64, scratch_operands = 0 : i64, tpu.core_type = #tpu.core_type<tc>, window_params = [{transform_indices = @transform_0, window_bounds = array<i64: 256, 128>}, {transform_indices = @transform_1, window_bounds = array<i64: 256, 128>}, {pipeline_mode = #tpu.pipeline_mode<synchronous>, transform_indices = @transform_2, window_bounds = array<i64: 1, 128>}, {pipeline_mode = #tpu.pipeline_mode<synchronous>, transform_indices = @transform_3, window_bounds = array<i64: 1, 128>}, {pipeline_mode = #tpu.pipeline_mode<synchronous>, transform_indices = @transform_4, window_bounds = array<i64: 1, 128>}, {pipeline_mode = #tpu.pipeline_mode<synchronous>, transform_indices = @transform_5, window_bounds = array<i64: 128, 256>}, {pipeline_mode = #tpu.pipeline_mode<synchronous>, transform_indices = @transform_6, window_bounds = array<i64: 128, 512>}, {pipeline_mode = #tpu.pipeline_mode<synchronous>, transform_indices = @transform_7, window_bounds = array<i64: 256, 128>}, {pipeline_mode = #tpu.pipeline_mode<synchronous>, transform_indices = @transform_8, window_bounds = array<i64: 128, 128>}, {transform_indices = @transform_9, window_bounds = array<i64: 256, 128>}]} {
    %c0 = arith.constant 0 : index
    %c0_0 = arith.constant 0 : index
    %0 = vector.load %arg1[%c0, %c0_0] : memref<256x128xf32, #tpu.memory_space<vmem>>, vector<256x128xf32>
    %c0_1 = arith.constant 0 : index
    %c0_2 = arith.constant 0 : index
    %1 = vector.load %arg2[%c0_1, %c0_2] : memref<256x128xf32, #tpu.memory_space<vmem>>, vector<256x128xf32>
    %cst = arith.constant dense<0.000000e+00> : vector<256xf32>
    %2 = vector.multi_reduction <add>, %0, %cst [1] : vector<256x128xf32> to vector<256xf32>
    %3 = vector.shape_cast %2 : vector<256xf32> to vector<256x1xf32>
    %cst_3 = arith.constant 1.280000e+02 : f32
    %4 = vector.broadcast %cst_3 : f32 to vector<256x1xf32>
    %5 = arith.divf %3, %4 : vector<256x1xf32>
    %6 = vector.broadcast %5 : vector<256x1xf32> to vector<256x128xf32>
    %7 = arith.subf %0, %6 : vector<256x128xf32>
    %8 = arith.mulf %7, %7 : vector<256x128xf32>
    %cst_4 = arith.constant dense<0.000000e+00> : vector<256xf32>
    %9 = vector.multi_reduction <add>, %8, %cst_4 [1] : vector<256x128xf32> to vector<256xf32>
    %10 = vector.shape_cast %9 : vector<256xf32> to vector<256x1xf32>
    %cst_5 = arith.constant 1.280000e+02 : f32
    %11 = vector.broadcast %cst_5 : f32 to vector<256x1xf32>
    %12 = arith.divf %10, %11 : vector<256x1xf32>
    %13 = vector.broadcast %5 : vector<256x1xf32> to vector<256x128xf32>
    %14 = arith.subf %0, %13 : vector<256x128xf32>
    %cst_6 = arith.constant 9.99999974E-6 : f32
    %15 = vector.broadcast %cst_6 : f32 to vector<256x1xf32>
    %16 = arith.addf %12, %15 : vector<256x1xf32>
    %17 = math.rsqrt %16 : vector<256x1xf32>
    %18 = vector.broadcast %17 : vector<256x1xf32> to vector<256x128xf32>
    %19 = arith.mulf %14, %18 : vector<256x128xf32>
    %cst_7 = arith.constant dense<0.000000e+00> : vector<256xf32>
    %20 = vector.multi_reduction <add>, %1, %cst_7 [1] : vector<256x128xf32> to vector<256xf32>
    %21 = vector.shape_cast %20 : vector<256xf32> to vector<256x1xf32>
    %cst_8 = arith.constant 1.280000e+02 : f32
    %22 = vector.broadcast %cst_8 : f32 to vector<256x1xf32>
    %23 = arith.divf %21, %22 : vector<256x1xf32>
    %24 = vector.broadcast %23 : vector<256x1xf32> to vector<256x128xf32>
    %25 = arith.subf %1, %24 : vector<256x128xf32>
    %26 = arith.mulf %25, %25 : vector<256x128xf32>
    %cst_9 = arith.constant dense<0.000000e+00> : vector<256xf32>
    %27 = vector.multi_reduction <add>, %26, %cst_9 [1] : vector<256x128xf32> to vector<256xf32>
    %28 = vector.shape_cast %27 : vector<256xf32> to vector<256x1xf32>
    %cst_10 = arith.constant 1.280000e+02 : f32
    %29 = vector.broadcast %cst_10 : f32 to vector<256x1xf32>
    %30 = arith.divf %28, %29 : vector<256x1xf32>
    %31 = vector.broadcast %23 : vector<256x1xf32> to vector<256x128xf32>
    %32 = arith.subf %1, %31 : vector<256x128xf32>
    %cst_11 = arith.constant 9.99999974E-6 : f32
    %33 = vector.broadcast %cst_11 : f32 to vector<256x1xf32>
    %34 = arith.addf %30, %33 : vector<256x1xf32>
    %35 = math.rsqrt %34 : vector<256x1xf32>
    %36 = vector.broadcast %35 : vector<256x1xf32> to vector<256x128xf32>
    %37 = arith.mulf %32, %36 : vector<256x128xf32>
    %c0_12 = arith.constant 0 : index
    %c0_13 = arith.constant 0 : index
    %38 = vector.load %arg3[%c0_12, %c0_13] : memref<1x128xf32, #tpu.memory_space<vmem>>, vector<1x128xf32>
    %39 = vector.broadcast %38 : vector<1x128xf32> to vector<256x128xf32>
    %40 = arith.mulf %37, %39 : vector<256x128xf32>
    %41 = arith.truncf %40 : vector<256x128xf32> to vector<256x128xbf16>
    %c0_14 = arith.constant 0 : index
    %c0_15 = arith.constant 0 : index
    %42 = vector.load %arg6[%c0_14, %c0_15] : memref<128x256xbf16, #tpu.memory_space<vmem>>, vector<128x256xbf16>
    %cst_16 = arith.constant dense<0.000000e+00> : vector<256x256xf32>
    %43 = tpu.matmul %41, %42, %cst_16 {dimension_numbers = #tpu.dot_dimension_numbers<[1], [0], [0], [1], [0, 0, 1, 1], [], []>} : vector<256x128xbf16>, vector<128x256xbf16>, vector<256x256xf32> -> vector<256x256xf32>
    %44 = vector.extract_strided_slice %43 {offsets = [0, 0], sizes = [256, 128], strides = [1, 1]} : vector<256x256xf32> to vector<256x128xf32>
    %c0_17 = arith.constant 0 : index
    %c0_18 = arith.constant 0 : index
    %45 = vector.load %arg4[%c0_17, %c0_18] : memref<1x128xf32, #tpu.memory_space<vmem>>, vector<1x128xf32>
    %46 = vector.broadcast %45 : vector<1x128xf32> to vector<256x128xf32>
    %47 = arith.addf %44, %46 : vector<256x128xf32>
    %48 = arith.negf %47 : vector<256x128xf32>
    %49 = math.exp %48 : vector<256x128xf32>
    %cst_19 = arith.constant 1.000000e+00 : f32
    %50 = vector.broadcast %cst_19 : f32 to vector<256x128xf32>
    %51 = arith.addf %50, %49 : vector<256x128xf32>
    %52 = arith.divf %50, %51 : vector<256x128xf32>
    %53 = arith.mulf %52, %19 : vector<256x128xf32>
    %54 = vector.extract_strided_slice %43 {offsets = [0, 128], sizes = [256, 128], strides = [1, 1]} : vector<256x256xf32> to vector<256x128xf32>
    %55 = arith.addf %53, %54 : vector<256x128xf32>
    %56 = arith.truncf %55 : vector<256x128xf32> to vector<256x128xbf16>
    %c0_20 = arith.constant 0 : index
    %c0_21 = arith.constant 0 : index
    %57 = vector.load %arg7[%c0_20, %c0_21] : memref<128x512xbf16, #tpu.memory_space<vmem>>, vector<128x512xbf16>
    %cst_22 = arith.constant dense<0.000000e+00> : vector<256x512xf32>
    %58 = tpu.matmul %56, %57, %cst_22 {dimension_numbers = #tpu.dot_dimension_numbers<[1], [0], [0], [1], [0, 0, 1, 1], [], []>} : vector<256x128xbf16>, vector<128x512xbf16>, vector<256x512xf32> -> vector<256x512xf32>
    %59 = vector.extract_strided_slice %58 {offsets = [0, 0], sizes = [256, 256], strides = [1, 1]} : vector<256x512xf32> to vector<256x256xf32>
    %60 = arith.negf %59 : vector<256x256xf32>
    %61 = math.exp %60 : vector<256x256xf32>
    %cst_23 = arith.constant 1.000000e+00 : f32
    %62 = vector.broadcast %cst_23 : f32 to vector<256x256xf32>
    %63 = arith.addf %62, %61 : vector<256x256xf32>
    %64 = arith.divf %62, %63 : vector<256x256xf32>
    %65 = arith.mulf %59, %64 : vector<256x256xf32>
    %66 = vector.extract_strided_slice %58 {offsets = [0, 256], sizes = [256, 256], strides = [1, 1]} : vector<256x512xf32> to vector<256x256xf32>
    %67 = arith.mulf %65, %66 : vector<256x256xf32>
    %68 = arith.truncf %1 : vector<256x128xf32> to vector<256x128xbf16>
    %c0_24 = arith.constant 0 : index
    %c0_25 = arith.constant 0 : index
    %69 = vector.load %arg9[%c0_24, %c0_25] : memref<128x128xbf16, #tpu.memory_space<vmem>>, vector<128x128xbf16>
    %cst_26 = arith.constant dense<0.000000e+00> : vector<256x128xf32>
    %70 = tpu.matmul %68, %69, %cst_26 {dimension_numbers = #tpu.dot_dimension_numbers<[1], [0], [0], [1], [0, 0, 1, 1], [], []>} : vector<256x128xbf16>, vector<128x128xbf16>, vector<256x128xf32> -> vector<256x128xf32>
    %c0_27 = arith.constant 0 : index
    %c0_28 = arith.constant 0 : index
    %71 = vector.load %arg5[%c0_27, %c0_28] : memref<1x128xf32, #tpu.memory_space<vmem>>, vector<1x128xf32>
    %72 = vector.broadcast %71 : vector<1x128xf32> to vector<256x128xf32>
    %73 = arith.addf %70, %72 : vector<256x128xf32>
    %74 = arith.negf %73 : vector<256x128xf32>
    %75 = math.exp %74 : vector<256x128xf32>
    %cst_29 = arith.constant 1.000000e+00 : f32
    %76 = vector.broadcast %cst_29 : f32 to vector<256x128xf32>
    %77 = arith.addf %76, %75 : vector<256x128xf32>
    %78 = arith.divf %76, %77 : vector<256x128xf32>
    %79 = arith.truncf %67 : vector<256x256xf32> to vector<256x256xbf16>
    %c0_30 = arith.constant 0 : index
    %c0_31 = arith.constant 0 : index
    %80 = vector.load %arg8[%c0_30, %c0_31] : memref<256x128xbf16, #tpu.memory_space<vmem>>, vector<256x128xbf16>
    %cst_32 = arith.constant dense<0.000000e+00> : vector<256x128xf32>
    %81 = tpu.matmul %79, %80, %cst_32 {dimension_numbers = #tpu.dot_dimension_numbers<[1], [0], [0], [1], [0, 0, 1, 1], [], []>} : vector<256x256xbf16>, vector<256x128xbf16>, vector<256x128xf32> -> vector<256x128xf32>
    %82 = arith.mulf %78, %81 : vector<256x128xf32>
    %c0_33 = arith.constant 0 : index
    %c0_34 = arith.constant 0 : index
    %83 = vector.load %arg10[%c0_33, %c0_34] : memref<256x128xf32, #tpu.memory_space<vmem>>, vector<256x128xf32>
    tpu.vector_store %arg10[%c0_33, %c0_34], %82 {strides = array<i32>} : memref<256x128xf32, #tpu.memory_space<vmem>>, vector<256x128xf32>,
    return
  }
  func.func @transform_0(%arg0: i32) -> (i32, i32) {
    %c0_i32 = arith.constant 0 : i32
    %c0_i32_0 = arith.constant 0 : i32
    return %arg0, %c0_i32 : i32, i32
  }
  func.func @transform_1(%arg0: i32) -> (i32, i32) {
    %c0_i32 = arith.constant 0 : i32
    %c0_i32_0 = arith.constant 0 : i32
    return %arg0, %c0_i32 : i32, i32
  }
  func.func @transform_2(%arg0: i32) -> (i32, i32) {
    %c0_i32 = arith.constant 0 : i32
    %c0_i32_0 = arith.constant 0 : i32
    %c0_i32_1 = arith.constant 0 : i32
    return %c0_i32, %c0_i32_0 : i32, i32
  }
  func.func @transform_3(%arg0: i32) -> (i32, i32) {
    %c0_i32 = arith.constant 0 : i32
    %c0_i32_0 = arith.constant 0 : i32
    %c0_i32_1 = arith.constant 0 : i32
    return %c0_i32, %c0_i32_0 : i32, i32
  }
  func.func @transform_4(%arg0: i32) -> (i32, i32) {
    %c0_i32 = arith.constant 0 : i32
    %c0_i32_0 = arith.constant 0 : i32
    %c0_i32_1 = arith.constant 0 : i32
    return %c0_i32, %c0_i32_0 : i32, i32
  }
  func.func @transform_5(%arg0: i32) -> (i32, i32) {
    %c0_i32 = arith.constant 0 : i32
    %c0_i32_0 = arith.constant 0 : i32
    %c0_i32_1 = arith.constant 0 : i32
    return %c0_i32, %c0_i32_0 : i32, i32
  }
  func.func @transform_6(%arg0: i32) -> (i32, i32) {
    %c0_i32 = arith.constant 0 : i32
    %c0_i32_0 = arith.constant 0 : i32
    %c0_i32_1 = arith.constant 0 : i32
    return %c0_i32, %c0_i32_0 : i32, i32
  }
  func.func @transform_7(%arg0: i32) -> (i32, i32) {
    %c0_i32 = arith.constant 0 : i32
    %c0_i32_0 = arith.constant 0 : i32
    %c0_i32_1 = arith.constant 0 : i32
    return %c0_i32, %c0_i32_0 : i32, i32
  }
  func.func @transform_8(%arg0: i32) -> (i32, i32) {
    %c0_i32 = arith.constant 0 : i32
    %c0_i32_0 = arith.constant 0 : i32
    %c0_i32_1 = arith.constant 0 : i32
    return %c0_i32, %c0_i32_0 : i32, i32
  }
  func.func @transform_9(%arg0: i32) -> (i32, i32) {
    %c0_i32 = arith.constant 0 : i32
    %c0_i32_0 = arith.constant 0 : i32
    return %arg0, %c0_i32 : i32, i32
  }
}

module attributes {stable_mosaic.version = 11 : i64} {
  func.func @_ctb_kernel(%arg0: i32, %arg1: memref<256x128xf32, #tpu.memory_space<vmem>>, %arg2: memref<256x128xf32, #tpu.memory_space<vmem>>, %arg3: memref<1x128xf32, #tpu.memory_space<vmem>>, %arg4: memref<1x128xf32, #tpu.memory_space<vmem>>, %arg5: memref<1x128xf32, #tpu.memory_space<vmem>>, %arg6: memref<128x256xbf16, #tpu.memory_space<vmem>>, %arg7: memref<128x512xbf16, #tpu.memory_space<vmem>>, %arg8: memref<256x128xbf16, #tpu.memory_space<vmem>>, %arg9: memref<128x128xbf16, #tpu.memory_space<vmem>>, %arg10: memref<256x128xf32, #tpu.memory_space<vmem>>) attributes {dimension_semantics = [#tpu.dimension_semantics<parallel>], iteration_bounds = array<i64: 4>, scalar_prefetch = 0 : i64, scratch_operands = 0 : i64, tpu.core_type = #tpu.core_type<tc>, window_params = [{transform_indices = @transform_0, window_bounds = array<i64: 256, 128>}, {transform_indices = @transform_1, window_bounds = array<i64: 256, 128>}, {pipeline_mode = #tpu.pipeline_mode<synchronous>, transform_indices = @transform_2, window_bounds = array<i64: 1, 128>}, {pipeline_mode = #tpu.pipeline_mode<synchronous>, transform_indices = @transform_3, window_bounds = array<i64: 1, 128>}, {pipeline_mode = #tpu.pipeline_mode<synchronous>, transform_indices = @transform_4, window_bounds = array<i64: 1, 128>}, {pipeline_mode = #tpu.pipeline_mode<synchronous>, transform_indices = @transform_5, window_bounds = array<i64: 128, 256>}, {pipeline_mode = #tpu.pipeline_mode<synchronous>, transform_indices = @transform_6, window_bounds = array<i64: 128, 512>}, {pipeline_mode = #tpu.pipeline_mode<synchronous>, transform_indices = @transform_7, window_bounds = array<i64: 256, 128>}, {pipeline_mode = #tpu.pipeline_mode<synchronous>, transform_indices = @transform_8, window_bounds = array<i64: 128, 128>}, {transform_indices = @transform_9, window_bounds = array<i64: 256, 128>}]} {
    %c0 = arith.constant 0 : index
    %c0_0 = arith.constant 0 : index
    %0 = vector.load %arg1[%c0, %c0_0] : memref<256x128xf32, #tpu.memory_space<vmem>>, vector<256x128xf32>
    %c0_1 = arith.constant 0 : index
    %c0_2 = arith.constant 0 : index
    %1 = vector.load %arg2[%c0_1, %c0_2] : memref<256x128xf32, #tpu.memory_space<vmem>>, vector<256x128xf32>
    %cst = arith.constant dense<0.000000e+00> : vector<256xf32>
    %2 = vector.multi_reduction <add>, %0, %cst [1] : vector<256x128xf32> to vector<256xf32>
    %3 = vector.shape_cast %2 : vector<256xf32> to vector<256x1xf32>
    %cst_3 = arith.constant 1.280000e+02 : f32
    %4 = vector.broadcast %cst_3 : f32 to vector<256x1xf32>
    %5 = arith.divf %3, %4 : vector<256x1xf32>
    %6 = vector.broadcast %5 : vector<256x1xf32> to vector<256x128xf32>
    %7 = arith.subf %0, %6 : vector<256x128xf32>
    %8 = arith.mulf %7, %7 : vector<256x128xf32>
    %cst_4 = arith.constant dense<0.000000e+00> : vector<256xf32>
    %9 = vector.multi_reduction <add>, %8, %cst_4 [1] : vector<256x128xf32> to vector<256xf32>
    %10 = vector.shape_cast %9 : vector<256xf32> to vector<256x1xf32>
    %cst_5 = arith.constant 1.280000e+02 : f32
    %11 = vector.broadcast %cst_5 : f32 to vector<256x1xf32>
    %12 = arith.divf %10, %11 : vector<256x1xf32>
    %13 = vector.broadcast %5 : vector<256x1xf32> to vector<256x128xf32>
    %14 = arith.subf %0, %13 : vector<256x128xf32>
    %cst_6 = arith.constant 9.99999974E-6 : f32
    %15 = vector.broadcast %cst_6 : f32 to vector<256x1xf32>
    %16 = arith.addf %12, %15 : vector<256x1xf32>
    %17 = math.rsqrt %16 : vector<256x1xf32>
    %18 = vector.broadcast %17 : vector<256x1xf32> to vector<256x128xf32>
    %19 = arith.mulf %14, %18 : vector<256x128xf32>
    %cst_7 = arith.constant dense<0.000000e+00> : vector<256xf32>
    %20 = vector.multi_reduction <add>, %1, %cst_7 [1] : vector<256x128xf32> to vector<256xf32>
    %21 = vector.shape_cast %20 : vector<256xf32> to vector<256x1xf32>
    %cst_8 = arith.constant 1.280000e+02 : f32
    %22 = vector.broadcast %cst_8 : f32 to vector<256x1xf32>
    %23 = arith.divf %21, %22 : vector<256x1xf32>
    %24 = vector.broadcast %23 : vector<256x1xf32> to vector<256x128xf32>
    %25 = arith.subf %1, %24 : vector<256x128xf32>
    %26 = arith.mulf %25, %25 : vector<256x128xf32>
    %cst_9 = arith.constant dense<0.000000e+00> : vector<256xf32>
    %27 = vector.multi_reduction <add>, %26, %cst_9 [1] : vector<256x128xf32> to vector<256xf32>
    %28 = vector.shape_cast %27 : vector<256xf32> to vector<256x1xf32>
    %cst_10 = arith.constant 1.280000e+02 : f32
    %29 = vector.broadcast %cst_10 : f32 to vector<256x1xf32>
    %30 = arith.divf %28, %29 : vector<256x1xf32>
    %31 = vector.broadcast %23 : vector<256x1xf32> to vector<256x128xf32>
    %32 = arith.subf %1, %31 : vector<256x128xf32>
    %cst_11 = arith.constant 9.99999974E-6 : f32
    %33 = vector.broadcast %cst_11 : f32 to vector<256x1xf32>
    %34 = arith.addf %30, %33 : vector<256x1xf32>
    %35 = math.rsqrt %34 : vector<256x1xf32>
    %36 = vector.broadcast %35 : vector<256x1xf32> to vector<256x128xf32>
    %37 = arith.mulf %32, %36 : vector<256x128xf32>
    %c0_12 = arith.constant 0 : index
    %c0_13 = arith.constant 0 : index
    %38 = vector.load %arg3[%c0_12, %c0_13] : memref<1x128xf32, #tpu.memory_space<vmem>>, vector<1x128xf32>
    %39 = vector.broadcast %38 : vector<1x128xf32> to vector<256x128xf32>
    %40 = arith.mulf %37, %39 : vector<256x128xf32>
    %41 = arith.truncf %40 : vector<256x128xf32> to vector<256x128xbf16>
    %c0_14 = arith.constant 0 : index
    %c0_15 = arith.constant 0 : index
    %42 = vector.load %arg6[%c0_14, %c0_15] : memref<128x256xbf16, #tpu.memory_space<vmem>>, vector<128x256xbf16>
    %cst_16 = arith.constant dense<0.000000e+00> : vector<256x256xf32>
    %43 = tpu.matmul %41, %42, %cst_16 {dimension_numbers = #tpu.dot_dimension_numbers<[1], [0], [0], [1], [0, 0, 1, 1], [], []>} : vector<256x128xbf16>, vector<128x256xbf16>, vector<256x256xf32> -> vector<256x256xf32>
    %44 = vector.extract_strided_slice %43 {offsets = [0, 0], sizes = [256, 128], strides = [1, 1]} : vector<256x256xf32> to vector<256x128xf32>
    %c0_17 = arith.constant 0 : index
    %c0_18 = arith.constant 0 : index
    %45 = vector.load %arg4[%c0_17, %c0_18] : memref<1x128xf32, #tpu.memory_space<vmem>>, vector<1x128xf32>
    %46 = vector.broadcast %45 : vector<1x128xf32> to vector<256x128xf32>
    %47 = arith.addf %44, %46 : vector<256x128xf32>
    %48 = arith.negf %47 : vector<256x128xf32>
    %49 = math.exp %48 : vector<256x128xf32>
    %cst_19 = arith.constant 1.000000e+00 : f32
    %50 = vector.broadcast %cst_19 : f32 to vector<256x128xf32>
    %51 = arith.addf %50, %49 : vector<256x128xf32>
    %52 = arith.divf %50, %51 : vector<256x128xf32>
    %53 = arith.mulf %52, %19 : vector<256x128xf32>
    %54 = vector.extract_strided_slice %43 {offsets = [0, 128], sizes = [256, 128], strides = [1, 1]} : vector<256x256xf32> to vector<256x128xf32>
    %55 = arith.addf %53, %54 : vector<256x128xf32>
    %56 = arith.truncf %55 : vector<256x128xf32> to vector<256x128xbf16>
    %c0_20 = arith.constant 0 : index
    %c0_21 = arith.constant 0 : index
    %57 = vector.load %arg7[%c0_20, %c0_21] : memref<128x512xbf16, #tpu.memory_space<vmem>>, vector<128x512xbf16>
    %cst_22 = arith.constant dense<0.000000e+00> : vector<256x512xf32>
    %58 = tpu.matmul %56, %57, %cst_22 {dimension_numbers = #tpu.dot_dimension_numbers<[1], [0], [0], [1], [0, 0, 1, 1], [], []>} : vector<256x128xbf16>, vector<128x512xbf16>, vector<256x512xf32> -> vector<256x512xf32>
    %59 = vector.extract_strided_slice %58 {offsets = [0, 0], sizes = [256, 256], strides = [1, 1]} : vector<256x512xf32> to vector<256x256xf32>
    %60 = arith.negf %59 : vector<256x256xf32>
    %61 = math.exp %60 : vector<256x256xf32>
    %cst_23 = arith.constant 1.000000e+00 : f32
    %62 = vector.broadcast %cst_23 : f32 to vector<256x256xf32>
    %63 = arith.addf %62, %61 : vector<256x256xf32>
    %64 = arith.divf %62, %63 : vector<256x256xf32>
    %65 = arith.mulf %59, %64 : vector<256x256xf32>
    %66 = vector.extract_strided_slice %58 {offsets = [0, 256], sizes = [256, 256], strides = [1, 1]} : vector<256x512xf32> to vector<256x256xf32>
    %67 = arith.mulf %65, %66 : vector<256x256xf32>
    %68 = arith.truncf %1 : vector<256x128xf32> to vector<256x128xbf16>
    %c0_24 = arith.constant 0 : index
    %c0_25 = arith.constant 0 : index
    %69 = vector.load %arg9[%c0_24, %c0_25] : memref<128x128xbf16, #tpu.memory_space<vmem>>, vector<128x128xbf16>
    %cst_26 = arith.constant dense<0.000000e+00> : vector<256x128xf32>
    %70 = tpu.matmul %68, %69, %cst_26 {dimension_numbers = #tpu.dot_dimension_numbers<[1], [0], [0], [1], [0, 0, 1, 1], [], []>} : vector<256x128xbf16>, vector<128x128xbf16>, vector<256x128xf32> -> vector<256x128xf32>
    %c0_27 = arith.constant 0 : index
    %c0_28 = arith.constant 0 : index
    %71 = vector.load %arg5[%c0_27, %c0_28] : memref<1x128xf32, #tpu.memory_space<vmem>>, vector<1x128xf32>
    %72 = vector.broadcast %71 : vector<1x128xf32> to vector<256x128xf32>
    %73 = arith.addf %70, %72 : vector<256x128xf32>
    %74 = arith.negf %73 : vector<256x128xf32>
    %75 = math.exp %74 : vector<256x128xf32>
    %cst_29 = arith.constant 1.000000e+00 : f32
    %76 = vector.broadcast %cst_29 : f32 to vector<256x128xf32>
    %77 = arith.addf %76, %75 : vector<256x128xf32>
    %78 = arith.divf %76, %77 : vector<256x128xf32>
    %79 = arith.truncf %67 : vector<256x256xf32> to vector<256x256xbf16>
    %c0_30 = arith.constant 0 : index
    %c0_31 = arith.constant 0 : index
    %80 = vector.load %arg8[%c0_30, %c0_31] : memref<256x128xbf16, #tpu.memory_space<vmem>>, vector<256x128xbf16>
    %cst_32 = arith.constant dense<0.000000e+00> : vector<256x128xf32>
    %81 = tpu.matmul %79, %80, %cst_32 {dimension_numbers = #tpu.dot_dimension_numbers<[1], [0], [0], [1], [0, 0, 1, 1], [], []>} : vector<256x256xbf16>, vector<256x128xbf16>, vector<256x128xf32> -> vector<256x128xf32>
    %82 = arith.mulf %78, %81 : vector<256x128xf32>
    %c0_33 = arith.constant 0 : index
    %c0_34 = arith.constant 0 : index
    %83 = vector.load %arg10[%c0_33, %c0_34] : memref<256x128xf32, #tpu.memory_space<vmem>>, vector<256x128xf32>
    tpu.vector_store %arg10[%c0_33, %c0_34], %82 {strides = array<i32>} : memref<256x128xf32, #tpu.memory_space<vmem>>, vector<256x128xf32>,
    return
  }
  func.func @transform_0(%arg0: i32) -> (i32, i32) {
    %c0_i32 = arith.constant 0 : i32
    %c0_i32_0 = arith.constant 0 : i32
    return %arg0, %c0_i32 : i32, i32
  }
  func.func @transform_1(%arg0: i32) -> (i32, i32) {
    %c0_i32 = arith.constant 0 : i32
    %c0_i32_0 = arith.constant 0 : i32
    return %arg0, %c0_i32 : i32, i32
  }
  func.func @transform_2(%arg0: i32) -> (i32, i32) {
    %c0_i32 = arith.constant 0 : i32
    %c0_i32_0 = arith.constant 0 : i32
    %c0_i32_1 = arith.constant 0 : i32
    return %c0_i32, %c0_i32_0 : i32, i32
  }
  func.func @transform_3(%arg0: i32) -> (i32, i32) {
    %c0_i32 = arith.constant 0 : i32
    %c0_i32_0 = arith.constant 0 : i32
    %c0_i32_1 = arith.constant 0 : i32
    return %c0_i32, %c0_i32_0 : i32, i32
  }
  func.func @transform_4(%arg0: i32) -> (i32, i32) {
    %c0_i32 = arith.constant 0 : i32
    %c0_i32_0 = arith.constant 0 : i32
    %c0_i32_1 = arith.constant 0 : i32
    return %c0_i32, %c0_i32_0 : i32, i32
  }
  func.func @transform_5(%arg0: i32) -> (i32, i32) {
    %c0_i32 = arith.constant 0 : i32
    %c0_i32_0 = arith.constant 0 : i32
    %c0_i32_1 = arith.constant 0 : i32
    return %c0_i32, %c0_i32_0 : i32, i32
  }
  func.func @transform_6(%arg0: i32) -> (i32, i32) {
    %c0_i32 = arith.constant 0 : i32
    %c0_i32_0 = arith.constant 0 : i32
    %c0_i32_1 = arith.constant 0 : i32
    return %c0_i32, %c0_i32_0 : i32, i32
  }
  func.func @transform_7(%arg0: i32) -> (i32, i32) {
    %c0_i32 = arith.constant 0 : i32
    %c0_i32_0 = arith.constant 0 : i32
    %c0_i32_1 = arith.constant 0 : i32
    return %c0_i32, %c0_i32_0 : i32, i32
  }
  func.func @transform_8(%arg0: i32) -> (i32, i32) {
    %c0_i32 = arith.constant 0 : i32
    %c0_i32_0 = arith.constant 0 : i32
    %c0_i32_1 = arith.constant 0 : i32
    return %c0_i32, %c0_i32_0 : i32, i32
  }
  func.func @transform_9(%arg0: i32) -> (i32, i32) {
    %c0_i32 = arith.constant 0 : i32
    %c0_i32_0 = arith.constant 0 : i32
    return %arg0, %c0_i32 : i32, i32
  }
}

</mosaic_0001>

<llo_original>
// kernel: _ctb_call.1
$region0: #{_ctb_call.1}
  #allocation0 [shape = 'u32[]', space=smem, size = 0x4, offset = 0x4, fixed_abs, tag = 'smem constant byte address 0x4 - core index']
  #allocation1 [shape = 'u32[144,128]{1,0:T(1,128)}', space=vmem, size = 0x12000, scoped, tag = 'internal scratch']
  %s0 = inlined_call_operand.hbm [shape: f32[1024,128], index: 0, kind: input, shape index: {}]
  %s1 = inlined_call_operand.hbm [shape: f32[1024,128], index: 1, kind: input, shape index: {}]
  %s2 = inlined_call_operand.vmem [shape: f32[1,128], index: 2, kind: input, shape index: {}]
  %s3 = inlined_call_operand.vmem [shape: f32[1,128], index: 3, kind: input, shape index: {}]
  %s4 = inlined_call_operand.vmem [shape: f32[1,128], index: 4, kind: input, shape index: {}]
  %s5 = inlined_call_operand.hbm [shape: bf16[128,256], index: 5, kind: input, shape index: {}]
  %s6 = inlined_call_operand.hbm [shape: bf16[128,512], index: 6, kind: input, shape index: {}]
  %s7 = inlined_call_operand.hbm [shape: bf16[256,128], index: 7, kind: input, shape index: {}]
  %s8 = inlined_call_operand.hbm [shape: bf16[128,128], index: 8, kind: input, shape index: {}]
  %s9 = inlined_call_operand.hbm [shape: f32[1024,128], index: 9, kind: output, shape index: {}]
  %s10 = sld [smem:[#allocation0]]
  $region93: #{_ctb_call.1} parent=0
    _
  %s12 = ssub.s32 1, %s10
  %s13 = scalar_select 0, %s12, %s10
  $region1: #{_ctb_call.1} parent=0
    #allocation2 [shape = 'u8[262144]{0}', space=vmem, size = 0x40000, scoped, tag = 'input window, operand 0']
    #allocation3 [shape = 's32[2]{0}', space=sflag, size = 0x8, scoped, tag = 'scoped memory for _ctb_call.1']
    #allocation4 [shape = 's32[2]{0}', space=sflag, size = 0x8, scoped, tag = 'scoped memory for _ctb_call.1']
    #allocation5 [shape = 'u8[262144]{0}', space=vmem, size = 0x40000, scoped, tag = 'input window, operand 1']
    #allocation6 [shape = 's32[2]{0}', space=sflag, size = 0x8, scoped, tag = 'scoped memory for _ctb_call.1']
    #allocation7 [shape = 'u8[65536]{0}', space=vmem, size = 0x10000, scoped, tag = 'input window, operand 5, single buffered']
    #allocation8 [shape = 'u8[131072]{0}', space=vmem, size = 0x20000, scoped, tag = 'input window, operand 6, single buffered']
    #allocation9 [shape = 's32[1]{0}', space=sflag, size = 0x4, scoped, tag = 'scoped memory for _ctb_call.1']
    #allocation10 [shape = 'u8[65536]{0}', space=vmem, size = 0x10000, scoped, tag = 'input window, operand 7, single buffered']
    #allocation11 [shape = 'u8[32768]{0}', space=vmem, size = 0x8000, scoped, tag = 'input window, operand 8, single buffered']
    #allocation12 [shape = 's32[1]{0}', space=sflag, size = 0x4, scoped, tag = 'scoped memory for _ctb_call.1']
    #allocation13 [shape = 'u8[262144]{0}', space=vmem, size = 0x40000, scoped, tag = 'output window, operand 0']
    %14 = vsyncpa [#allocation3], 0
    %s15 = scalar_lea.sflag [#allocation3], 1
    %16 = vsyncpa %s15, 0
    %17 = vsyncpa [#allocation6], 0
    %s18 = scalar_lea.sflag [#allocation6], 1
    %19 = vsyncpa %s18, 0
    %20 = vsyncpa [#allocation9], 0
    %21 = vsyncpa [#allocation12], 0
    %22 = vsyncpa [#allocation4], 0
    %s23 = scalar_lea.sflag [#allocation4], 1
    %24 = vsyncpa %s23, 0
    loop: start=0, step=1, limit=6
    $region2: #{_ctb_call.1} parent=1 // loop_pre_header
      _
    $region3: #{_ctb_call.1} parent=1 // loop_header
      %s26 = sphi 0, %s30
      %p27 = scmp.ge.s32.totalorder %s26, 6
      %s36 = sphi 0, %s38
      %s39 = sphi 0, %s36
      %s40 = sphi 0, %s39
      %s56 = sphi 0, %s40
      %s62 = sphi 0, %s64
      %s65 = sphi 0, %s62
      %s66 = sphi 0, %s65
      %s82 = sphi 0, %s66
      %s86 = sphi 0, %s86
      %s88 = sphi 0, %s86
      %s89 = sphi 0, %s88
      %s103 = sphi 0, %s89
      %s107 = sphi 0, %s107
      %s109 = sphi 0, %s107
      %s110 = sphi 0, %s109
      %s124 = sphi 0, %s110
      %s128 = sphi 0, %s128
      %s130 = sphi 0, %s128
      %s131 = sphi 0, %s130
      %s145 = sphi 0, %s131
      %s149 = sphi 0, %s149
      %s151 = sphi 0, %s149
      %s152 = sphi 0, %s151
      %s166 = sphi 0, %s152
      %s170 = sphi 0, %s170
      %s172 = sphi 0, %s170
      %s173 = sphi 0, %s172
      %s187 = sphi 0, %s173
      %s191 = sphi 0, %s191
      %s193 = sphi 0, %s191
      %s194 = sphi 0, %s193
      %s208 = sphi 0, %s194
      %s212 = sphi 0, %s212
      %s214 = sphi 0, %s212
      %s215 = sphi 0, %s214
      %s229 = sphi 0, %s215
      %s235 = sphi 0, %s237
      %s238 = sphi 0, %s235
      %s239 = sphi 0, %s238
      %s255 = sphi 0, %s239
    $region4: #{_ctb_call.1} parent=1 // loop_header_branch
      %29 = sbr.rel (%p27) target = $region8
    $region5: #{_ctb_call.1} parent=1 // loop_body
      %s31 = ssub.s32 %s26, 1
      %s32 = ssub.s32 %s26, 2
      %s33 = sadd.s32 %s26, 1
      %s34 = ssub.s32 %s26, %s33
      %p35 = scmp.eq.s32.totalorder %s34, 0
      %s37 = sadd.s32 %s36, 1
      %s38 = scalar_select %p35, %s36, %s37
      %p41 = pneg %p35
      %p42 = scmp.eq.s32.totalorder %s26, 3
      %p43 = por %p41, %p42
      %p44 = scmp.ne.s32.totalorder %s36, %s39
      %p45 = scmp.eq.s32.totalorder %s26, 0
      %p46 = por %p44, %p45
      %p47 = scmp.ne.s32.totalorder %s36, %s39
      %p48 = scmp.eq.s32.totalorder %s31, 3
      %p49 = por %p47, %p48
      %p50 = scmp.ne.s32.totalorder %s39, %s40
      %p51 = scmp.eq.s32.totalorder %s31, 0
      %p52 = por %p50, %p51
      %p53 = scmp.ne.s32.totalorder %s39, %s40
      %p54 = scmp.eq.s32.totalorder %s32, 3
      %p55 = por %p53, %p54
      %p57 = scmp.ne.s32.totalorder %s40, %s56
      %p58 = scmp.eq.s32.totalorder %s32, 0
      %p59 = por %p57, %p58
      %s60 = ssub.s32 %s26, %s33
      %p61 = scmp.eq.s32.totalorder %s60, 0
      %s63 = sadd.s32 %s62, 1
      %s64 = scalar_select %p61, %s62, %s63
      %p67 = pneg %p61
      %p68 = scmp.eq.s32.totalorder %s26, 3
      %p69 = por %p67, %p68
      %p70 = scmp.ne.s32.totalorder %s62, %s65
      %p71 = scmp.eq.s32.totalorder %s26, 0
      %p72 = por %p70, %p71
      %p73 = scmp.ne.s32.totalorder %s62, %s65
      %p74 = scmp.eq.s32.totalorder %s31, 3
      %p75 = por %p73, %p74
      %p76 = scmp.ne.s32.totalorder %s65, %s66
      %p77 = scmp.eq.s32.totalorder %s31, 0
      %p78 = por %p76, %p77
      %p79 = scmp.ne.s32.totalorder %s65, %s66
      %p80 = scmp.eq.s32.totalorder %s32, 3
      %p81 = por %p79, %p80
      %p83 = scmp.ne.s32.totalorder %s66, %s82
      %p84 = scmp.eq.s32.totalorder %s32, 0
      %p85 = por %p83, %p84
      %s87 = sadd.s32 %s86, 1
      %p90 = scmp.eq.s32.totalorder %s26, 3
      %p91 = scmp.ne.s32.totalorder %s86, %s88
      %p92 = scmp.eq.s32.totalorder %s26, 0
      %p93 = por %p91, %p92
      %p94 = scmp.ne.s32.totalorder %s86, %s88
      %p95 = scmp.eq.s32.totalorder %s31, 3
      %p96 = por %p94, %p95
      %p97 = scmp.ne.s32.totalorder %s88, %s89
      %p98 = scmp.eq.s32.totalorder %s31, 0
      %p99 = por %p97, %p98
      %p100 = scmp.ne.s32.totalorder %s88, %s89
      %p101 = scmp.eq.s32.totalorder %s32, 3
      %p102 = por %p100, %p101
      %p104 = scmp.ne.s32.totalorder %s89, %s103
      %p105 = scmp.eq.s32.totalorder %s32, 0
      %p106 = por %p104, %p105
      %s108 = sadd.s32 %s107, 1
      %p111 = scmp.eq.s32.totalorder %s26, 3
      %p112 = scmp.ne.s32.totalorder %s107, %s109
      %p113 = scmp.eq.s32.totalorder %s26, 0
      %p114 = por %p112, %p113
      %p115 = scmp.ne.s32.totalorder %s107, %s109
      %p116 = scmp.eq.s32.totalorder %s31, 3
      %p117 = por %p115, %p116
      %p118 = scmp.ne.s32.totalorder %s109, %s110
      %p119 = scmp.eq.s32.totalorder %s31, 0
      %p120 = por %p118, %p119
      %p121 = scmp.ne.s32.totalorder %s109, %s110
      %p122 = scmp.eq.s32.totalorder %s32, 3
      %p123 = por %p121, %p122
      %p125 = scmp.ne.s32.totalorder %s110, %s124
      %p126 = scmp.eq.s32.totalorder %s32, 0
      %p127 = por %p125, %p126
      %s129 = sadd.s32 %s128, 1
      %p132 = scmp.eq.s32.totalorder %s26, 3
      %p133 = scmp.ne.s32.totalorder %s128, %s130
      %p134 = scmp.eq.s32.totalorder %s26, 0
      %p135 = por %p133, %p134
      %p136 = scmp.ne.s32.totalorder %s128, %s130
      %p137 = scmp.eq.s32.totalorder %s31, 3
      %p138 = por %p136, %p137
      %p139 = scmp.ne.s32.totalorder %s130, %s131
      %p140 = scmp.eq.s32.totalorder %s31, 0
      %p141 = por %p139, %p140
      %p142 = scmp.ne.s32.totalorder %s130, %s131
      %p143 = scmp.eq.s32.totalorder %s32, 3
      %p144 = por %p142, %p143
      %p146 = scmp.ne.s32.totalorder %s131, %s145
      %p147 = scmp.eq.s32.totalorder %s32, 0
      %p148 = por %p146, %p147
      %s150 = sadd.s32 %s149, 1
      %p153 = scmp.eq.s32.totalorder %s26, 3
      %p154 = scmp.ne.s32.totalorder %s149, %s151
      %p155 = scmp.eq.s32.totalorder %s26, 0
      %p156 = por %p154, %p155
      %p157 = scmp.ne.s32.totalorder %s149, %s151
      %p158 = scmp.eq.s32.totalorder %s31, 3
      %p159 = por %p157, %p158
      %p160 = scmp.ne.s32.totalorder %s151, %s152
      %p161 = scmp.eq.s32.totalorder %s31, 0
      %p162 = por %p160, %p161
      %p163 = scmp.ne.s32.totalorder %s151, %s152
      %p164 = scmp.eq.s32.totalorder %s32, 3
      %p165 = por %p163, %p164
      %p167 = scmp.ne.s32.totalorder %s152, %s166
      %p168 = scmp.eq.s32.totalorder %s32, 0
      %p169 = por %p167, %p168
      %s171 = sadd.s32 %s170, 1
      %p174 = scmp.eq.s32.totalorder %s26, 3
      %p175 = scmp.ne.s32.totalorder %s170, %s172
      %p176 = scmp.eq.s32.totalorder %s26, 0
      %p177 = por %p175, %p176
      %p178 = scmp.ne.s32.totalorder %s170, %s172
      %p179 = scmp.eq.s32.totalorder %s31, 3
      %p180 = por %p178, %p179
      %p181 = scmp.ne.s32.totalorder %s172, %s173
      %p182 = scmp.eq.s32.totalorder %s31, 0
      %p183 = por %p181, %p182
      %p184 = scmp.ne.s32.totalorder %s172, %s173
      %p185 = scmp.eq.s32.totalorder %s32, 3
      %p186 = por %p184, %p185
      %p188 = scmp.ne.s32.totalorder %s173, %s187
      %p189 = scmp.eq.s32.totalorder %s32, 0
      %p190 = por %p188, %p189
      %s192 = sadd.s32 %s191, 1
      %p195 = scmp.eq.s32.totalorder %s26, 3
      %p196 = scmp.ne.s32.totalorder %s191, %s193
      %p197 = scmp.eq.s32.totalorder %s26, 0
      %p198 = por %p196, %p197
      %p199 = scmp.ne.s32.totalorder %s191, %s193
      %p200 = scmp.eq.s32.totalorder %s31, 3
      %p201 = por %p199, %p200
      %p202 = scmp.ne.s32.totalorder %s193, %s194
      %p203 = scmp.eq.s32.totalorder %s31, 0
      %p204 = por %p202, %p203
      %p205 = scmp.ne.s32.totalorder %s193, %s194
      %p206 = scmp.eq.s32.totalorder %s32, 3
      %p207 = por %p205, %p206
      %p209 = scmp.ne.s32.totalorder %s194, %s208
      %p210 = scmp.eq.s32.totalorder %s32, 0
      %p211 = por %p209, %p210
      %s213 = sadd.s32 %s212, 1
      %p216 = scmp.eq.s32.totalorder %s26, 3
      %p217 = scmp.ne.s32.totalorder %s212, %s214
      %p218 = scmp.eq.s32.totalorder %s26, 0
      %p219 = por %p217, %p218
      %p220 = scmp.ne.s32.totalorder %s212, %s214
      %p221 = scmp.eq.s32.totalorder %s31, 3
      %p222 = por %p220, %p221
      %p223 = scmp.ne.s32.totalorder %s214, %s215
      %p224 = scmp.eq.s32.totalorder %s31, 0
      %p225 = por %p223, %p224
      %p226 = scmp.ne.s32.totalorder %s214, %s215
      %p227 = scmp.eq.s32.totalorder %s32, 3
      %p228 = por %p226, %p227
      %p230 = scmp.ne.s32.totalorder %s215, %s229
      %p231 = scmp.eq.s32.totalorder %s32, 0
      %p232 = por %p230, %p231
      %s233 = ssub.s32 %s26, %s33
      %p234 = scmp.eq.s32.totalorder %s233, 0
      %s236 = sadd.s32 %s235, 1
      %s237 = scalar_select %p234, %s235, %s236
      %p240 = pneg %p234
      %p241 = scmp.eq.s32.totalorder %s26, 3
      %p242 = por %p240, %p241
      %p243 = scmp.ne.s32.totalorder %s235, %s238
      %p244 = scmp.eq.s32.totalorder %s26, 0
      %p245 = por %p243, %p244
      %p246 = scmp.ne.s32.totalorder %s235, %s238
      %p247 = scmp.eq.s32.totalorder %s31, 3
      %p248 = por %p246, %p247
      %p249 = scmp.ne.s32.totalorder %s238, %s239
      %p250 = scmp.eq.s32.totalorder %s31, 0
      %p251 = por %p249, %p250
      %p252 = scmp.ne.s32.totalorder %s238, %s239
      %p253 = scmp.eq.s32.totalorder %s32, 3
      %p254 = por %p252, %p253
      %p256 = scmp.ne.s32.totalorder %s239, %s255
      %p257 = scmp.eq.s32.totalorder %s32, 0
      %p258 = por %p256, %p257
      %p259 = scmp.le.s32.totalorder 1, %s26
      %p260 = scmp.lt.s32.totalorder %s26, 5
      %p261 = pnand %p259, %p260
      %p262 = pneg %p261
      // Predicated region
      $region9: #{_ctb_call.1} parent=5 // pred_check
        _
      $region10: #{_ctb_call.1} parent=5 // pred_check_branch
        %264 = sbr.rel (%p261) target = $region12
      $region11: #{_ctb_call.1} parent=5 // pred_region
        %s265 = ssub.s32 %s26, 1
        // Predicated region
        $region13: #{_ctb_call.1} parent=11 // pred_check
          %p266 = pneg %p99
        $region14: #{_ctb_call.1} parent=11 // pred_check_branch
          %268 = sbr.rel (%p266) target = $region16
        $region15: #{_ctb_call.1} parent=11 // pred_region
          _
        $region16: #{_ctb_call.1} parent=11 // pred_fallthru
          _
        // Predicated region
        $region17: #{_ctb_call.1} parent=11 // pred_check
          %p269 = pneg %p120
        $region18: #{_ctb_call.1} parent=11 // pred_check_branch
          %271 = sbr.rel (%p269) target = $region20
        $region19: #{_ctb_call.1} parent=11 // pred_region
          _
        $region20: #{_ctb_call.1} parent=11 // pred_fallthru
          _
        // Predicated region
        $region21: #{_ctb_call.1} parent=11 // pred_check
          %p272 = pneg %p141
        $region22: #{_ctb_call.1} parent=11 // pred_check_branch
          %274 = sbr.rel (%p272) target = $region24
        $region23: #{_ctb_call.1} parent=11 // pred_region
          _
        $region24: #{_ctb_call.1} parent=11 // pred_fallthru
          _
        // Predicated region
        $region25: #{_ctb_call.1} parent=11 // pred_check
          %p275 = pneg %p162
        $region26: #{_ctb_call.1} parent=11 // pred_check_branch
          %277 = sbr.rel (%p275) target = $region28
        $region27: #{_ctb_call.1} parent=11 // pred_region
          %s279 = ssub.s32 2048, 2048
          %280 = vsyncadd [#allocation6], %s279
          %s281 = sshll.u32 [#allocation7], 4
          %s282 = int_to_ptr.vmem [resolvable:$true] %s281
          %287 = dma.hbm_to_vmem [thread:$0]  %s5, 2048, %s282, [#allocation6], 128, 128, 8
        $region28: #{_ctb_call.1} parent=11 // pred_fallthru
          _
        // Predicated region
        $region29: #{_ctb_call.1} parent=11 // pred_check
          %p288 = pneg %p183
        $region30: #{_ctb_call.1} parent=11 // pred_check_branch
          %290 = sbr.rel (%p288) target = $region32
        $region31: #{_ctb_call.1} parent=11 // pred_region
          %s292 = ssub.s32 4096, 4096
          %293 = vsyncadd [#allocation9], %s292
          %s294 = sshll.u32 [#allocation8], 4
          %s295 = int_to_ptr.vmem [resolvable:$true] %s294
          %300 = dma.hbm_to_vmem [thread:$0]  %s6, 4096, %s295, [#allocation9], 256, 256, 16
        $region32: #{_ctb_call.1} parent=11 // pred_fallthru
          _
        // Predicated region
        $region33: #{_ctb_call.1} parent=11 // pred_check
          %p301 = pneg %p204
        $region34: #{_ctb_call.1} parent=11 // pred_check_branch
          %303 = sbr.rel (%p301) target = $region36
        $region35: #{_ctb_call.1} parent=11 // pred_region
          %s305 = ssub.s32 2048, 2048
          %306 = vsyncadd [#allocation9], %s305
          %s307 = sshll.u32 [#allocation10], 4
          %s308 = int_to_ptr.vmem [resolvable:$true] %s307
          %313 = dma.hbm_to_vmem [thread:$0]  %s7, 2048, %s308, [#allocation9], 64, 64, 4
        $region36: #{_ctb_call.1} parent=11 // pred_fallthru
          _
        // Predicated region
        $region37: #{_ctb_call.1} parent=11 // pred_check
          %p314 = pneg %p225
        $region38: #{_ctb_call.1} parent=11 // pred_check_branch
          %316 = sbr.rel (%p314) target = $region40
        $region39: #{_ctb_call.1} parent=11 // pred_region
          %s318 = ssub.s32 1024, 1024
          %319 = vsyncadd [#allocation12], %s318
          %s320 = sshll.u32 [#allocation11], 4
          %s321 = int_to_ptr.vmem [resolvable:$true] %s320
          %326 = dma.hbm_to_vmem [thread:$0]  %s8, 1024, %s321, [#allocation12], 64, 64, 4
        $region40: #{_ctb_call.1} parent=11 // pred_fallthru
          _
      $region12: #{_ctb_call.1} parent=5 // pred_fallthru
        _
      %p327 = scmp.lt.s32.totalorder %s26, 4
      // Predicated region
      $region41: #{_ctb_call.1} parent=5 // pred_check
        %p328 = pneg %p327
      $region42: #{_ctb_call.1} parent=5 // pred_check_branch
        %330 = sbr.rel (%p328) target = $region44
      $region43: #{_ctb_call.1} parent=5 // pred_region
        // Predicated region
        $region45: #{_ctb_call.1} parent=43 // pred_check
          %p331 = pneg %p46
        $region46: #{_ctb_call.1} parent=43 // pred_check_branch
          %333 = sbr.rel (%p331) target = $region48
        $region47: #{_ctb_call.1} parent=43 // pred_region
          %s334 = sand.u32 %s36, 1
          %s335 = scalar_lea.sflag [#allocation3], %s334
          %s336 = sand.u32 %s36, 1
          %s337 = smul.addr %s336, 256
          %s338 = scalar_lea.vmem [#allocation2], %s337
          %s339 = smul.u32 32, %s26
          %s341 = ssub.s32 4096, 4096
          %342 = vsyncadd %s335, %s341
          %s343 = smul.addr %s339, 128
          %s344 = scalar_lea.hbm %s0, %s343
          %s345 = sshll.u32 %s338, 4
          %s346 = int_to_ptr.vmem [resolvable:$true] %s345
          %351 = dma.hbm_to_vmem [thread:$0]  %s344, 4096, %s346, %s335, 128, 128, 8
        $region48: #{_ctb_call.1} parent=43 // pred_fallthru
          _
        // Predicated region
        $region49: #{_ctb_call.1} parent=43 // pred_check
          %p352 = pneg %p72
        $region50: #{_ctb_call.1} parent=43 // pred_check_branch
          %354 = sbr.rel (%p352) target = $region52
        $region51: #{_ctb_call.1} parent=43 // pred_region
          %s355 = sand.u32 %s26, 1
          %s356 = scalar_lea.sflag [#allocation6], %s355
          %s357 = sand.u32 %s62, 1
          %s358 = smul.addr %s357, 256
          %s359 = scalar_lea.vmem [#allocation5], %s358
          %s360 = smul.u32 32, %s26
          %s362 = ssub.s32 4096, 4096
          %363 = vsyncadd %s356, %s362
          %s364 = smul.addr %s360, 128
          %s365 = scalar_lea.hbm %s1, %s364
          %s366 = sshll.u32 %s359, 4
          %s367 = int_to_ptr.vmem [resolvable:$true] %s366
          %372 = dma.hbm_to_vmem [thread:$0]  %s365, 4096, %s367, %s356, 128, 128, 8
        $region52: #{_ctb_call.1} parent=43 // pred_fallthru
          _
      $region44: #{_ctb_call.1} parent=5 // pred_fallthru
        _
      %p373 = scmp.le.s32.totalorder 1, %s26
      %p374 = scmp.lt.s32.totalorder %s26, 5
      %p375 = pnand %p373, %p374
      %p376 = pneg %p375
      // Predicated region
      $region53: #{_ctb_call.1} parent=5 // pred_check
        _
      $region54: #{_ctb_call.1} parent=5 // pred_check_branch
        %378 = sbr.rel (%p375) target = $region56
      $region55: #{_ctb_call.1} parent=5 // pred_region
        %s379 = ssub.s32 %s26, 1
        %s380 = sand.u32 %s39, 1
        %s381 = scalar_lea.sflag [#allocation3], %s380
        %s382 = sand.u32 %s39, 1
        %s383 = smul.addr %s382, 256
        %s384 = scalar_lea.vmem [#allocation2], %s383
        // Predicated region
        $region57: #{_ctb_call.1} parent=55 // pred_check
          %p385 = pneg %p52
        $region58: #{_ctb_call.1} parent=55 // pred_check_branch
          %387 = sbr.rel (%p385) target = $region60
        $region59: #{_ctb_call.1} parent=55 // pred_region
          %388 = dma.done %s381, 4096
        $region60: #{_ctb_call.1} parent=55 // pred_fallthru
          _
        %s389 = sand.u32 %s31, 1
        %s390 = scalar_lea.sflag [#allocation6], %s389
        %s391 = sand.u32 %s65, 1
        %s392 = smul.addr %s391, 256
        %s393 = scalar_lea.vmem [#allocation5], %s392
        // Predicated region
        $region61: #{_ctb_call.1} parent=55 // pred_check
          %p394 = pneg %p78
        $region62: #{_ctb_call.1} parent=55 // pred_check_branch
          %396 = sbr.rel (%p394) target = $region64
        $region63: #{_ctb_call.1} parent=55 // pred_region
          %397 = dma.done %s390, 4096
        $region64: #{_ctb_call.1} parent=55 // pred_fallthru
          _
        // Predicated region
        $region65: #{_ctb_call.1} parent=55 // pred_check
          %p398 = pneg %p162
        $region66: #{_ctb_call.1} parent=55 // pred_check_branch
          %400 = sbr.rel (%p398) target = $region68
        $region67: #{_ctb_call.1} parent=55 // pred_region
          %401 = dma.done [#allocation6], 2048
        $region68: #{_ctb_call.1} parent=55 // pred_fallthru
          _
        // Predicated region
        $region69: #{_ctb_call.1} parent=55 // pred_check
          %p402 = pneg %p183
        $region70: #{_ctb_call.1} parent=55 // pred_check_branch
          %404 = sbr.rel (%p402) target = $region72
        $region71: #{_ctb_call.1} parent=55 // pred_region
          %405 = dma.done [#allocation9], 4096
        $region72: #{_ctb_call.1} parent=55 // pred_fallthru
          _
        // Predicated region
        $region73: #{_ctb_call.1} parent=55 // pred_check
          %p406 = pneg %p204
        $region74: #{_ctb_call.1} parent=55 // pred_check_branch
          %408 = sbr.rel (%p406) target = $region76
        $region75: #{_ctb_call.1} parent=55 // pred_region
          %409 = dma.done [#allocation9], 2048
        $region76: #{_ctb_call.1} parent=55 // pred_fallthru
          _
        // Predicated region
        $region77: #{_ctb_call.1} parent=55 // pred_check
          %p410 = pneg %p225
        $region78: #{_ctb_call.1} parent=55 // pred_check_branch
          %412 = sbr.rel (%p410) target = $region80
        $region79: #{_ctb_call.1} parent=55 // pred_region
          %413 = dma.done [#allocation12], 1024
        $region80: #{_ctb_call.1} parent=55 // pred_fallthru
          _
        %s414 = sand.u32 %s39, 1
        %s415 = scalar_lea.sflag [#allocation3], %s414
        %s416 = sand.u32 %s39, 1
        %s417 = smul.addr %s416, 256
        %s418 = scalar_lea.vmem [#allocation2], %s417
        %p419 = pneg %p52
        %p420 = pneg %p49
        %s421 = sand.u32 %s31, 1
        %s422 = scalar_lea.sflag [#allocation6], %s421
        %s423 = sand.u32 %s65, 1
        %s424 = smul.addr %s423, 256
        %s425 = scalar_lea.vmem [#allocation5], %s424
        %p426 = pneg %p78
        %p427 = pneg %p75
        %p428 = pneg %p99
        %p429 = pneg %p96
        %p430 = pneg %p120
        %p431 = pneg %p117
        %p432 = pneg %p141
        %p433 = pneg %p138
        %p434 = pneg %p162
        %p435 = pneg %p159
        %p436 = pneg %p183
        %p437 = pneg %p180
        %p438 = pneg %p204
        %p439 = pneg %p201
        %p440 = pneg %p225
        %p441 = pneg %p222
        %p442 = pneg %p251
        %p443 = pneg %p248
        %s444 = sand.u32 %s238, 1
        %s445 = scalar_lea.sflag [#allocation4], %s444
        %s446 = sand.u32 %s238, 1
        %s447 = smul.addr %s446, 256
        %s448 = scalar_lea.vmem [#allocation13], %s447
        %s449 = smul.u32 32, %s31
        %s450 = smul.u32 32, %s31
        %s451 = smul.u32 32, %s31
        %v453 = vld [vmem:[%s384] sm:$0xff]
        %v454 = vld [vmem:[%s384 + $0x8] sm:$0xff]
        %v455 = vld [vmem:[%s384 + $0x10] sm:$0xff]
        %v456 = vld [vmem:[%s384 + $0x18] sm:$0xff]
        %v457 = vld [vmem:[%s384 + $0x20] sm:$0xff]
        %v458 = vld [vmem:[%s384 + $0x28] sm:$0xff]
        %v459 = vld [vmem:[%s384 + $0x30] sm:$0xff]
        %v460 = vld [vmem:[%s384 + $0x38] sm:$0xff]
        %v461 = vld [vmem:[%s384 + $0x40] sm:$0xff]
        %v462 = vld [vmem:[%s384 + $0x48] sm:$0xff]
        %v463 = vld [vmem:[%s384 + $0x50] sm:$0xff]
        %v464 = vld [vmem:[%s384 + $0x58] sm:$0xff]
        %v465 = vld [vmem:[%s384 + $0x60] sm:$0xff]
        %v466 = vld [vmem:[%s384 + $0x68] sm:$0xff]
        %v467 = vld [vmem:[%s384 + $0x70] sm:$0xff]
        %v468 = vld [vmem:[%s384 + $0x78] sm:$0xff]
        %v469 = vld [vmem:[%s384 + $0x80] sm:$0xff]
        %v470 = vld [vmem:[%s384 + $0x88] sm:$0xff]
        %v471 = vld [vmem:[%s384 + $0x90] sm:$0xff]
        %v472 = vld [vmem:[%s384 + $0x98] sm:$0xff]
        %v473 = vld [vmem:[%s384 + $0xa0] sm:$0xff]
        %v474 = vld [vmem:[%s384 + $0xa8] sm:$0xff]
        %v475 = vld [vmem:[%s384 + $0xb0] sm:$0xff]
        %v476 = vld [vmem:[%s384 + $0xb8] sm:$0xff]
        %v477 = vld [vmem:[%s384 + $0xc0] sm:$0xff]
        %v478 = vld [vmem:[%s384 + $0xc8] sm:$0xff]
        %v479 = vld [vmem:[%s384 + $0xd0] sm:$0xff]
        %v480 = vld [vmem:[%s384 + $0xd8] sm:$0xff]
        %v481 = vld [vmem:[%s384 + $0xe0] sm:$0xff]
        %v482 = vld [vmem:[%s384 + $0xe8] sm:$0xff]
        %v483 = vld [vmem:[%s384 + $0xf0] sm:$0xff]
        %v484 = vld [vmem:[%s384 + $0xf8] sm:$0xff]
        %v485 = vld [vmem:[%s393] sm:$0xff]
        %v486 = vld [vmem:[%s393 + $0x8] sm:$0xff]
        %v487 = vld [vmem:[%s393 + $0x10] sm:$0xff]
        %v488 = vld [vmem:[%s393 + $0x18] sm:$0xff]
        %v489 = vld [vmem:[%s393 + $0x20] sm:$0xff]
        %v490 = vld [vmem:[%s393 + $0x28] sm:$0xff]
        %v491 = vld [vmem:[%s393 + $0x30] sm:$0xff]
        %v492 = vld [vmem:[%s393 + $0x38] sm:$0xff]
        %v493 = vld [vmem:[%s393 + $0x40] sm:$0xff]
        %v494 = vld [vmem:[%s393 + $0x48] sm:$0xff]
        %v495 = vld [vmem:[%s393 + $0x50] sm:$0xff]
        %v496 = vld [vmem:[%s393 + $0x58] sm:$0xff]
        %v497 = vld [vmem:[%s393 + $0x60] sm:$0xff]
        %v498 = vld [vmem:[%s393 + $0x68] sm:$0xff]
        %v499 = vld [vmem:[%s393 + $0x70] sm:$0xff]
        %v500 = vld [vmem:[%s393 + $0x78] sm:$0xff]
        %v501 = vld [vmem:[%s393 + $0x80] sm:$0xff]
        %v502 = vld [vmem:[%s393 + $0x88] sm:$0xff]
        %v503 = vld [vmem:[%s393 + $0x90] sm:$0xff]
        %v504 = vld [vmem:[%s393 + $0x98] sm:$0xff]
        %v505 = vld [vmem:[%s393 + $0xa0] sm:$0xff]
        %v506 = vld [vmem:[%s393 + $0xa8] sm:$0xff]
        %v507 = vld [vmem:[%s393 + $0xb0] sm:$0xff]
        %v508 = vld [vmem:[%s393 + $0xb8] sm:$0xff]
        %v509 = vld [vmem:[%s393 + $0xc0] sm:$0xff]
        %v510 = vld [vmem:[%s393 + $0xc8] sm:$0xff]
        %v511 = vld [vmem:[%s393 + $0xd0] sm:$0xff]
        %v512 = vld [vmem:[%s393 + $0xd8] sm:$0xff]
        %v513 = vld [vmem:[%s393 + $0xe0] sm:$0xff]
        %v514 = vld [vmem:[%s393 + $0xe8] sm:$0xff]
        %v515 = vld [vmem:[%s393 + $0xf0] sm:$0xff]
        %v516 = vld [vmem:[%s393 + $0xf8] sm:$0xff]
        %517 = vadd.xlane.f32.xlu0 %v453
        %v518 = vpop.xlane.xlu0 %517
        %519 = vadd.xlane.f32.xlu0 %v454
        %v520 = vpop.xlane.xlu0 %519
        %521 = vadd.xlane.f32.xlu0 %v455
        %v522 = vpop.xlane.xlu0 %521
        %523 = vadd.xlane.f32.xlu0 %v456
        %v524 = vpop.xlane.xlu0 %523
        %525 = vadd.xlane.f32.xlu0 %v457
        %v526 = vpop.xlane.xlu0 %525
        %527 = vadd.xlane.f32.xlu0 %v458
        %v528 = vpop.xlane.xlu0 %527
        %529 = vadd.xlane.f32.xlu0 %v459
        %v530 = vpop.xlane.xlu0 %529
        %531 = vadd.xlane.f32.xlu0 %v460
        %v532 = vpop.xlane.xlu0 %531
        %533 = vadd.xlane.f32.xlu0 %v461
        %v534 = vpop.xlane.xlu0 %533
        %535 = vadd.xlane.f32.xlu0 %v462
        %v536 = vpop.xlane.xlu0 %535
        %537 = vadd.xlane.f32.xlu0 %v463
        %v538 = vpop.xlane.xlu0 %537
        %539 = vadd.xlane.f32.xlu0 %v464
        %v540 = vpop.xlane.xlu0 %539
        %541 = vadd.xlane.f32.xlu0 %v465
        %v542 = vpop.xlane.xlu0 %541
        %543 = vadd.xlane.f32.xlu0 %v466
        %v544 = vpop.xlane.xlu0 %543
        %545 = vadd.xlane.f32.xlu0 %v467
        %v546 = vpop.xlane.xlu0 %545
        %547 = vadd.xlane.f32.xlu0 %v468
        %v548 = vpop.xlane.xlu0 %547
        %549 = vadd.xlane.f32.xlu0 %v469
        %v550 = vpop.xlane.xlu0 %549
        %551 = vadd.xlane.f32.xlu0 %v470
        %v552 = vpop.xlane.xlu0 %551
        %553 = vadd.xlane.f32.xlu0 %v471
        %v554 = vpop.xlane.xlu0 %553
        %555 = vadd.xlane.f32.xlu0 %v472
        %v556 = vpop.xlane.xlu0 %555
        %557 = vadd.xlane.f32.xlu0 %v473
        %v558 = vpop.xlane.xlu0 %557
        %559 = vadd.xlane.f32.xlu0 %v474
        %v560 = vpop.xlane.xlu0 %559
        %561 = vadd.xlane.f32.xlu0 %v475
        %v562 = vpop.xlane.xlu0 %561
        %563 = vadd.xlane.f32.xlu0 %v476
        %v564 = vpop.xlane.xlu0 %563
        %565 = vadd.xlane.f32.xlu0 %v477
        %v566 = vpop.xlane.xlu0 %565
        %567 = vadd.xlane.f32.xlu0 %v478
        %v568 = vpop.xlane.xlu0 %567
        %569 = vadd.xlane.f32.xlu0 %v479
        %v570 = vpop.xlane.xlu0 %569
        %571 = vadd.xlane.f32.xlu0 %v480
        %v572 = vpop.xlane.xlu0 %571
        %573 = vadd.xlane.f32.xlu0 %v481
        %v574 = vpop.xlane.xlu0 %573
        %575 = vadd.xlane.f32.xlu0 %v482
        %v576 = vpop.xlane.xlu0 %575
        %577 = vadd.xlane.f32.xlu0 %v483
        %v578 = vpop.xlane.xlu0 %577
        %579 = vadd.xlane.f32.xlu0 %v484
        %v580 = vpop.xlane.xlu0 %579
        %v581 = vrcp.pop 128.0
        %v582 = vmul.f32 %v518, %v581
        %v583 = vmul.f32 %v520, %v581
        %v584 = vmul.f32 %v522, %v581
        %v585 = vmul.f32 %v524, %v581
        %v586 = vmul.f32 %v526, %v581
        %v587 = vmul.f32 %v528, %v581
        %v588 = vmul.f32 %v530, %v581
        %v589 = vmul.f32 %v532, %v581
        %v590 = vmul.f32 %v534, %v581
        %v591 = vmul.f32 %v536, %v581
        %v592 = vmul.f32 %v538, %v581
        %v593 = vmul.f32 %v540, %v581
        %v594 = vmul.f32 %v542, %v581
        %v595 = vmul.f32 %v544, %v581
        %v596 = vmul.f32 %v546, %v581
        %v597 = vmul.f32 %v548, %v581
        %v598 = vmul.f32 %v550, %v581
        %v599 = vmul.f32 %v552, %v581
        %v600 = vmul.f32 %v554, %v581
        %v601 = vmul.f32 %v556, %v581
        %v602 = vmul.f32 %v558, %v581
        %v603 = vmul.f32 %v560, %v581
        %v604 = vmul.f32 %v562, %v581
        %v605 = vmul.f32 %v564, %v581
        %v606 = vmul.f32 %v566, %v581
        %v607 = vmul.f32 %v568, %v581
        %v608 = vmul.f32 %v570, %v581
        %v609 = vmul.f32 %v572, %v581
        %v610 = vmul.f32 %v574, %v581
        %v611 = vmul.f32 %v576, %v581
        %v612 = vmul.f32 %v578, %v581
        %v613 = vmul.f32 %v580, %v581
        %v614 = vsub.f32 %v453, %v582
        %v615 = vsub.f32 %v454, %v583
        %v616 = vsub.f32 %v455, %v584
        %v617 = vsub.f32 %v456, %v585
        %v618 = vsub.f32 %v457, %v586
        %v619 = vsub.f32 %v458, %v587
        %v620 = vsub.f32 %v459, %v588
        %v621 = vsub.f32 %v460, %v589
        %v622 = vsub.f32 %v461, %v590
        %v623 = vsub.f32 %v462, %v591
        %v624 = vsub.f32 %v463, %v592
        %v625 = vsub.f32 %v464, %v593
        %v626 = vsub.f32 %v465, %v594
        %v627 = vsub.f32 %v466, %v595
        %v628 = vsub.f32 %v467, %v596
        %v629 = vsub.f32 %v468, %v597
        %v630 = vsub.f32 %v469, %v598
        %v631 = vsub.f32 %v470, %v599
        %v632 = vsub.f32 %v471, %v600
        %v633 = vsub.f32 %v472, %v601
        %v634 = vsub.f32 %v473, %v602
        %v635 = vsub.f32 %v474, %v603
        %v636 = vsub.f32 %v475, %v604
        %v637 = vsub.f32 %v476, %v605
        %v638 = vsub.f32 %v477, %v606
        %v639 = vsub.f32 %v478, %v607
        %v640 = vsub.f32 %v479, %v608
        %v641 = vsub.f32 %v480, %v609
        %v642 = vsub.f32 %v481, %v610
        %v643 = vsub.f32 %v482, %v611
        %v644 = vsub.f32 %v483, %v612
        %v645 = vsub.f32 %v484, %v613
        %v646 = vmul.f32 %v614, %v614
        %v647 = vmul.f32 %v615, %v615
        %v648 = vmul.f32 %v616, %v616
        %v649 = vmul.f32 %v617, %v617
        %v650 = vmul.f32 %v618, %v618
        %v651 = vmul.f32 %v619, %v619
        %v652 = vmul.f32 %v620, %v620
        %v653 = vmul.f32 %v621, %v621
        %v654 = vmul.f32 %v622, %v622
        %v655 = vmul.f32 %v623, %v623
        %v656 = vmul.f32 %v624, %v624
        %v657 = vmul.f32 %v625, %v625
        %v658 = vmul.f32 %v626, %v626
        %v659 = vmul.f32 %v627, %v627
        %v660 = vmul.f32 %v628, %v628
        %v661 = vmul.f32 %v629, %v629
        %v662 = vmul.f32 %v630, %v630
        %v663 = vmul.f32 %v631, %v631
        %v664 = vmul.f32 %v632, %v632
        %v665 = vmul.f32 %v633, %v633
        %v666 = vmul.f32 %v634, %v634
        %v667 = vmul.f32 %v635, %v635
        %v668 = vmul.f32 %v636, %v636
        %v669 = vmul.f32 %v637, %v637
        %v670 = vmul.f32 %v638, %v638
        %v671 = vmul.f32 %v639, %v639
        %v672 = vmul.f32 %v640, %v640
        %v673 = vmul.f32 %v641, %v641
        %v674 = vmul.f32 %v642, %v642
        %v675 = vmul.f32 %v643, %v643
        %v676 = vmul.f32 %v644, %v644
        %v677 = vmul.f32 %v645, %v645
        %678 = vadd.xlane.f32.xlu0 %v646
        %v679 = vpop.xlane.xlu0 %678
        %680 = vadd.xlane.f32.xlu0 %v647
        %v681 = vpop.xlane.xlu0 %680
        %682 = vadd.xlane.f32.xlu0 %v648
        %v683 = vpop.xlane.xlu0 %682
        %684 = vadd.xlane.f32.xlu0 %v649
        %v685 = vpop.xlane.xlu0 %684
        %686 = vadd.xlane.f32.xlu0 %v650
        %v687 = vpop.xlane.xlu0 %686
        %688 = vadd.xlane.f32.xlu0 %v651
        %v689 = vpop.xlane.xlu0 %688
        %690 = vadd.xlane.f32.xlu0 %v652
        %v691 = vpop.xlane.xlu0 %690
        %692 = vadd.xlane.f32.xlu0 %v653
        %v693 = vpop.xlane.xlu0 %692
        %694 = vadd.xlane.f32.xlu0 %v654
        %v695 = vpop.xlane.xlu0 %694
        %696 = vadd.xlane.f32.xlu0 %v655
        %v697 = vpop.xlane.xlu0 %696
        %698 = vadd.xlane.f32.xlu0 %v656
        %v699 = vpop.xlane.xlu0 %698
        %700 = vadd.xlane.f32.xlu0 %v657
        %v701 = vpop.xlane.xlu0 %700
        %702 = vadd.xlane.f32.xlu0 %v658
        %v703 = vpop.xlane.xlu0 %702
        %704 = vadd.xlane.f32.xlu0 %v659
        %v705 = vpop.xlane.xlu0 %704
        %706 = vadd.xlane.f32.xlu0 %v660
        %v707 = vpop.xlane.xlu0 %706
        %708 = vadd.xlane.f32.xlu0 %v661
        %v709 = vpop.xlane.xlu0 %708
        %710 = vadd.xlane.f32.xlu0 %v662
        %v711 = vpop.xlane.xlu0 %710
        %712 = vadd.xlane.f32.xlu0 %v663
        %v713 = vpop.xlane.xlu0 %712
        %714 = vadd.xlane.f32.xlu0 %v664
        %v715 = vpop.xlane.xlu0 %714
        %716 = vadd.xlane.f32.xlu0 %v665
        %v717 = vpop.xlane.xlu0 %716
        %718 = vadd.xlane.f32.xlu0 %v666
        %v719 = vpop.xlane.xlu0 %718
        %720 = vadd.xlane.f32.xlu0 %v667
        %v721 = vpop.xlane.xlu0 %720
        %722 = vadd.xlane.f32.xlu0 %v668
        %v723 = vpop.xlane.xlu0 %722
        %724 = vadd.xlane.f32.xlu0 %v669
        %v725 = vpop.xlane.xlu0 %724
        %726 = vadd.xlane.f32.xlu0 %v670
        %v727 = vpop.xlane.xlu0 %726
        %728 = vadd.xlane.f32.xlu0 %v671
        %v729 = vpop.xlane.xlu0 %728
        %730 = vadd.xlane.f32.xlu0 %v672
        %v731 = vpop.xlane.xlu0 %730
        %732 = vadd.xlane.f32.xlu0 %v673
        %v733 = vpop.xlane.xlu0 %732
        %734 = vadd.xlane.f32.xlu0 %v674
        %v735 = vpop.xlane.xlu0 %734
        %736 = vadd.xlane.f32.xlu0 %v675
        %v737 = vpop.xlane.xlu0 %736
        %738 = vadd.xlane.f32.xlu0 %v676
        %v739 = vpop.xlane.xlu0 %738
        %740 = vadd.xlane.f32.xlu0 %v677
        %v741 = vpop.xlane.xlu0 %740
        %v742 = vmul.f32 %v679, %v581
        %v743 = vmul.f32 %v681, %v581
        %v744 = vmul.f32 %v683, %v581
        %v745 = vmul.f32 %v685, %v581
        %v746 = vmul.f32 %v687, %v581
        %v747 = vmul.f32 %v689, %v581
        %v748 = vmul.f32 %v691, %v581
        %v749 = vmul.f32 %v693, %v581
        %v750 = vmul.f32 %v695, %v581
        %v751 = vmul.f32 %v697, %v581
        %v752 = vmul.f32 %v699, %v581
        %v753 = vmul.f32 %v701, %v581
        %v754 = vmul.f32 %v703, %v581
        %v755 = vmul.f32 %v705, %v581
        %v756 = vmul.f32 %v707, %v581
        %v757 = vmul.f32 %v709, %v581
        %v758 = vmul.f32 %v711, %v581
        %v759 = vmul.f32 %v713, %v581
        %v760 = vmul.f32 %v715, %v581
        %v761 = vmul.f32 %v717, %v581
        %v762 = vmul.f32 %v719, %v581
        %v763 = vmul.f32 %v721, %v581
        %v764 = vmul.f32 %v723, %v581
        %v765 = vmul.f32 %v725, %v581
        %v766 = vmul.f32 %v727, %v581
        %v767 = vmul.f32 %v729, %v581
        %v768 = vmul.f32 %v731, %v581
        %v769 = vmul.f32 %v733, %v581
        %v770 = vmul.f32 %v735, %v581
        %v771 = vmul.f32 %v737, %v581
        %v772 = vmul.f32 %v739, %v581
        %v773 = vmul.f32 %v741, %v581
        %v774 = vadd.f32 %v742, 1e-05
        %v775 = vadd.f32 %v743, 1e-05
        %v776 = vadd.f32 %v744, 1e-05
        %v777 = vadd.f32 %v745, 1e-05
        %v778 = vadd.f32 %v746, 1e-05
        %v779 = vadd.f32 %v747, 1e-05
        %v780 = vadd.f32 %v748, 1e-05
        %v781 = vadd.f32 %v749, 1e-05
        %v782 = vadd.f32 %v750, 1e-05
        %v783 = vadd.f32 %v751, 1e-05
        %v784 = vadd.f32 %v752, 1e-05
        %v785 = vadd.f32 %v753, 1e-05
        %v786 = vadd.f32 %v754, 1e-05
        %v787 = vadd.f32 %v755, 1e-05
        %v788 = vadd.f32 %v756, 1e-05
        %v789 = vadd.f32 %v757, 1e-05
        %v790 = vadd.f32 %v758, 1e-05
        %v791 = vadd.f32 %v759, 1e-05
        %v792 = vadd.f32 %v760, 1e-05
        %v793 = vadd.f32 %v761, 1e-05
        %v794 = vadd.f32 %v762, 1e-05
        %v795 = vadd.f32 %v763, 1e-05
        %v796 = vadd.f32 %v764, 1e-05
        %v797 = vadd.f32 %v765, 1e-05
        %v798 = vadd.f32 %v766, 1e-05
        %v799 = vadd.f32 %v767, 1e-05
        %v800 = vadd.f32 %v768, 1e-05
        %v801 = vadd.f32 %v769, 1e-05
        %v802 = vadd.f32 %v770, 1e-05
        %v803 = vadd.f32 %v771, 1e-05
        %v804 = vadd.f32 %v772, 1e-05
        %v805 = vadd.f32 %v773, 1e-05
        %v806 = vrsqrt.pop %v774
        %v807 = vrsqrt.pop %v775
        %v808 = vrsqrt.pop %v776
        %v809 = vrsqrt.pop %v777
        %v810 = vrsqrt.pop %v778
        %v811 = vrsqrt.pop %v779
        %v812 = vrsqrt.pop %v780
        %v813 = vrsqrt.pop %v781
        %v814 = vrsqrt.pop %v782
        %v815 = vrsqrt.pop %v783
        %v816 = vrsqrt.pop %v784
        %v817 = vrsqrt.pop %v785
        %v818 = vrsqrt.pop %v786
        %v819 = vrsqrt.pop %v787
        %v820 = vrsqrt.pop %v788
        %v821 = vrsqrt.pop %v789
        %v822 = vrsqrt.pop %v790
        %v823 = vrsqrt.pop %v791
        %v824 = vrsqrt.pop %v792
        %v825 = vrsqrt.pop %v793
        %v826 = vrsqrt.pop %v794
        %v827 = vrsqrt.pop %v795
        %v828 = vrsqrt.pop %v796
        %v829 = vrsqrt.pop %v797
        %v830 = vrsqrt.pop %v798
        %v831 = vrsqrt.pop %v799
        %v832 = vrsqrt.pop %v800
        %v833 = vrsqrt.pop %v801
        %v834 = vrsqrt.pop %v802
        %v835 = vrsqrt.pop %v803
        %v836 = vrsqrt.pop %v804
        %v837 = vrsqrt.pop %v805
        %v838 = vmul.f32 %v614, %v806
        %v839 = vmul.f32 %v615, %v807
        %v840 = vmul.f32 %v616, %v808
        %v841 = vmul.f32 %v617, %v809
        %v842 = vmul.f32 %v618, %v810
        %v843 = vmul.f32 %v619, %v811
        %v844 = vmul.f32 %v620, %v812
        %v845 = vmul.f32 %v621, %v813
        %v846 = vmul.f32 %v622, %v814
        %v847 = vmul.f32 %v623, %v815
        %v848 = vmul.f32 %v624, %v816
        %v849 = vmul.f32 %v625, %v817
        %v850 = vmul.f32 %v626, %v818
        %v851 = vmul.f32 %v627, %v819
        %v852 = vmul.f32 %v628, %v820
        %v853 = vmul.f32 %v629, %v821
        %v854 = vmul.f32 %v630, %v822
        %v855 = vmul.f32 %v631, %v823
        %v856 = vmul.f32 %v632, %v824
        %v857 = vmul.f32 %v633, %v825
        %v858 = vmul.f32 %v634, %v826
        %v859 = vmul.f32 %v635, %v827
        %v860 = vmul.f32 %v636, %v828
        %v861 = vmul.f32 %v637, %v829
        %v862 = vmul.f32 %v638, %v830
        %v863 = vmul.f32 %v639, %v831
        %v864 = vmul.f32 %v640, %v832
        %v865 = vmul.f32 %v641, %v833
        %v866 = vmul.f32 %v642, %v834
        %v867 = vmul.f32 %v643, %v835
        %v868 = vmul.f32 %v644, %v836
        %v869 = vmul.f32 %v645, %v837
        %870 = vadd.xlane.f32.xlu0 %v485
        %v871 = vpop.xlane.xlu0 %870
        %872 = vadd.xlane.f32.xlu0 %v486
        %v873 = vpop.xlane.xlu0 %872
        %874 = vadd.xlane.f32.xlu0 %v487
        %v875 = vpop.xlane.xlu0 %874
        %876 = vadd.xlane.f32.xlu0 %v488
        %v877 = vpop.xlane.xlu0 %876
        %878 = vadd.xlane.f32.xlu0 %v489
        %v879 = vpop.xlane.xlu0 %878
        %880 = vadd.xlane.f32.xlu0 %v490
        %v881 = vpop.xlane.xlu0 %880
        %882 = vadd.xlane.f32.xlu0 %v491
        %v883 = vpop.xlane.xlu0 %882
        %884 = vadd.xlane.f32.xlu0 %v492
        %v885 = vpop.xlane.xlu0 %884
        %886 = vadd.xlane.f32.xlu0 %v493
        %v887 = vpop.xlane.xlu0 %886
        %888 = vadd.xlane.f32.xlu0 %v494
        %v889 = vpop.xlane.xlu0 %888
        %890 = vadd.xlane.f32.xlu0 %v495
        %v891 = vpop.xlane.xlu0 %890
        %892 = vadd.xlane.f32.xlu0 %v496
        %v893 = vpop.xlane.xlu0 %892
        %894 = vadd.xlane.f32.xlu0 %v497
        %v895 = vpop.xlane.xlu0 %894
        %896 = vadd.xlane.f32.xlu0 %v498
        %v897 = vpop.xlane.xlu0 %896
        %898 = vadd.xlane.f32.xlu0 %v499
        %v899 = vpop.xlane.xlu0 %898
        %900 = vadd.xlane.f32.xlu0 %v500
        %v901 = vpop.xlane.xlu0 %900
        %902 = vadd.xlane.f32.xlu0 %v501
        %v903 = vpop.xlane.xlu0 %902
        %904 = vadd.xlane.f32.xlu0 %v502
        %v905 = vpop.xlane.xlu0 %904
        %906 = vadd.xlane.f32.xlu0 %v503
        %v907 = vpop.xlane.xlu0 %906
        %908 = vadd.xlane.f32.xlu0 %v504
        %v909 = vpop.xlane.xlu0 %908
        %910 = vadd.xlane.f32.xlu0 %v505
        %v911 = vpop.xlane.xlu0 %910
        %912 = vadd.xlane.f32.xlu0 %v506
        %v913 = vpop.xlane.xlu0 %912
        %914 = vadd.xlane.f32.xlu0 %v507
        %v915 = vpop.xlane.xlu0 %914
        %916 = vadd.xlane.f32.xlu0 %v508
        %v917 = vpop.xlane.xlu0 %916
        %918 = vadd.xlane.f32.xlu0 %v509
        %v919 = vpop.xlane.xlu0 %918
        %920 = vadd.xlane.f32.xlu0 %v510
        %v921 = vpop.xlane.xlu0 %920
        %922 = vadd.xlane.f32.xlu0 %v511
        %v923 = vpop.xlane.xlu0 %922
        %924 = vadd.xlane.f32.xlu0 %v512
        %v925 = vpop.xlane.xlu0 %924
        %926 = vadd.xlane.f32.xlu0 %v513
        %v927 = vpop.xlane.xlu0 %926
        %928 = vadd.xlane.f32.xlu0 %v514
        %v929 = vpop.xlane.xlu0 %928
        %930 = vadd.xlane.f32.xlu0 %v515
        %v931 = vpop.xlane.xlu0 %930
        %932 = vadd.xlane.f32.xlu0 %v516
        %v933 = vpop.xlane.xlu0 %932
        %v934 = vmul.f32 %v871, %v581
        %v935 = vmul.f32 %v873, %v581
        %v936 = vmul.f32 %v875, %v581
        %v937 = vmul.f32 %v877, %v581
        %v938 = vmul.f32 %v879, %v581
        %v939 = vmul.f32 %v881, %v581
        %v940 = vmul.f32 %v883, %v581
        %v941 = vmul.f32 %v885, %v581
        %v942 = vmul.f32 %v887, %v581
        %v943 = vmul.f32 %v889, %v581
        %v944 = vmul.f32 %v891, %v581
        %v945 = vmul.f32 %v893, %v581
        %v946 = vmul.f32 %v895, %v581
        %v947 = vmul.f32 %v897, %v581
        %v948 = vmul.f32 %v899, %v581
        %v949 = vmul.f32 %v901, %v581
        %v950 = vmul.f32 %v903, %v581
        %v951 = vmul.f32 %v905, %v581
        %v952 = vmul.f32 %v907, %v581
        %v953 = vmul.f32 %v909, %v581
        %v954 = vmul.f32 %v911, %v581
        %v955 = vmul.f32 %v913, %v581
        %v956 = vmul.f32 %v915, %v581
        %v957 = vmul.f32 %v917, %v581
        %v958 = vmul.f32 %v919, %v581
        %v959 = vmul.f32 %v921, %v581
        %v960 = vmul.f32 %v923, %v581
        %v961 = vmul.f32 %v925, %v581
        %v962 = vmul.f32 %v927, %v581
        %v963 = vmul.f32 %v929, %v581
        %v964 = vmul.f32 %v931, %v581
        %v965 = vmul.f32 %v933, %v581
        %v966 = vsub.f32 %v485, %v934
        %v967 = vsub.f32 %v486, %v935
        %v968 = vsub.f32 %v487, %v936
        %v969 = vsub.f32 %v488, %v937
        %v970 = vsub.f32 %v489, %v938
        %v971 = vsub.f32 %v490, %v939
        %v972 = vsub.f32 %v491, %v940
        %v973 = vsub.f32 %v492, %v941
        %v974 = vsub.f32 %v493, %v942
        %v975 = vsub.f32 %v494, %v943
        %v976 = vsub.f32 %v495, %v944
        %v977 = vsub.f32 %v496, %v945
        %v978 = vsub.f32 %v497, %v946
        %v979 = vsub.f32 %v498, %v947
        %v980 = vsub.f32 %v499, %v948
        %v981 = vsub.f32 %v500, %v949
        %v982 = vsub.f32 %v501, %v950
        %v983 = vsub.f32 %v502, %v951
        %v984 = vsub.f32 %v503, %v952
        %v985 = vsub.f32 %v504, %v953
        %v986 = vsub.f32 %v505, %v954
        %v987 = vsub.f32 %v506, %v955
        %v988 = vsub.f32 %v507, %v956
        %v989 = vsub.f32 %v508, %v957
        %v990 = vsub.f32 %v509, %v958
        %v991 = vsub.f32 %v510, %v959
        %v992 = vsub.f32 %v511, %v960
        %v993 = vsub.f32 %v512, %v961
        %v994 = vsub.f32 %v513, %v962
        %v995 = vsub.f32 %v514, %v963
        %v996 = vsub.f32 %v515, %v964
        %v997 = vsub.f32 %v516, %v965
        %v998 = vmul.f32 %v966, %v966
        %v999 = vmul.f32 %v967, %v967
        %v1000 = vmul.f32 %v968, %v968
        %v1001 = vmul.f32 %v969, %v969
        %v1002 = vmul.f32 %v970, %v970
        %v1003 = vmul.f32 %v971, %v971
        %v1004 = vmul.f32 %v972, %v972
        %v1005 = vmul.f32 %v973, %v973
        %v1006 = vmul.f32 %v974, %v974
        %v1007 = vmul.f32 %v975, %v975
        %v1008 = vmul.f32 %v976, %v976
        %v1009 = vmul.f32 %v977, %v977
        %v1010 = vmul.f32 %v978, %v978
        %v1011 = vmul.f32 %v979, %v979
        %v1012 = vmul.f32 %v980, %v980
        %v1013 = vmul.f32 %v981, %v981
        %v1014 = vmul.f32 %v982, %v982
        %v1015 = vmul.f32 %v983, %v983
        %v1016 = vmul.f32 %v984, %v984
        %v1017 = vmul.f32 %v985, %v985
        %v1018 = vmul.f32 %v986, %v986
        %v1019 = vmul.f32 %v987, %v987
        %v1020 = vmul.f32 %v988, %v988
        %v1021 = vmul.f32 %v989, %v989
        %v1022 = vmul.f32 %v990, %v990
        %v1023 = vmul.f32 %v991, %v991
        %v1024 = vmul.f32 %v992, %v992
        %v1025 = vmul.f32 %v993, %v993
        %v1026 = vmul.f32 %v994, %v994
        %v1027 = vmul.f32 %v995, %v995
        %v1028 = vmul.f32 %v996, %v996
        %v1029 = vmul.f32 %v997, %v997
        %1030 = vadd.xlane.f32.xlu0 %v998
        %v1031 = vpop.xlane.xlu0 %1030
        %1032 = vadd.xlane.f32.xlu0 %v999
        %v1033 = vpop.xlane.xlu0 %1032
        %1034 = vadd.xlane.f32.xlu0 %v1000
        %v1035 = vpop.xlane.xlu0 %1034
        %1036 = vadd.xlane.f32.xlu0 %v1001
        %v1037 = vpop.xlane.xlu0 %1036
        %1038 = vadd.xlane.f32.xlu0 %v1002
        %v1039 = vpop.xlane.xlu0 %1038
        %1040 = vadd.xlane.f32.xlu0 %v1003
        %v1041 = vpop.xlane.xlu0 %1040
        %1042 = vadd.xlane.f32.xlu0 %v1004
        %v1043 = vpop.xlane.xlu0 %1042
        %1044 = vadd.xlane.f32.xlu0 %v1005
        %v1045 = vpop.xlane.xlu0 %1044
        %1046 = vadd.xlane.f32.xlu0 %v1006
        %v1047 = vpop.xlane.xlu0 %1046
        %1048 = vadd.xlane.f32.xlu0 %v1007
        %v1049 = vpop.xlane.xlu0 %1048
        %1050 = vadd.xlane.f32.xlu0 %v1008
        %v1051 = vpop.xlane.xlu0 %1050
        %1052 = vadd.xlane.f32.xlu0 %v1009
        %v1053 = vpop.xlane.xlu0 %1052
        %1054 = vadd.xlane.f32.xlu0 %v1010
        %v1055 = vpop.xlane.xlu0 %1054
        %1056 = vadd.xlane.f32.xlu0 %v1011
        %v1057 = vpop.xlane.xlu0 %1056
        %1058 = vadd.xlane.f32.xlu0 %v1012
        %v1059 = vpop.xlane.xlu0 %1058
        %1060 = vadd.xlane.f32.xlu0 %v1013
        %v1061 = vpop.xlane.xlu0 %1060
        %1062 = vadd.xlane.f32.xlu0 %v1014
        %v1063 = vpop.xlane.xlu0 %1062
        %1064 = vadd.xlane.f32.xlu0 %v1015
        %v1065 = vpop.xlane.xlu0 %1064
        %1066 = vadd.xlane.f32.xlu0 %v1016
        %v1067 = vpop.xlane.xlu0 %1066
        %1068 = vadd.xlane.f32.xlu0 %v1017
        %v1069 = vpop.xlane.xlu0 %1068
        %1070 = vadd.xlane.f32.xlu0 %v1018
        %v1071 = vpop.xlane.xlu0 %1070
        %1072 = vadd.xlane.f32.xlu0 %v1019
        %v1073 = vpop.xlane.xlu0 %1072
        %1074 = vadd.xlane.f32.xlu0 %v1020
        %v1075 = vpop.xlane.xlu0 %1074
        %1076 = vadd.xlane.f32.xlu0 %v1021
        %v1077 = vpop.xlane.xlu0 %1076
        %1078 = vadd.xlane.f32.xlu0 %v1022
        %v1079 = vpop.xlane.xlu0 %1078
        %1080 = vadd.xlane.f32.xlu0 %v1023
        %v1081 = vpop.xlane.xlu0 %1080
        %1082 = vadd.xlane.f32.xlu0 %v1024
        %v1083 = vpop.xlane.xlu0 %1082
        %1084 = vadd.xlane.f32.xlu0 %v1025
        %v1085 = vpop.xlane.xlu0 %1084
        %1086 = vadd.xlane.f32.xlu0 %v1026
        %v1087 = vpop.xlane.xlu0 %1086
        %1088 = vadd.xlane.f32.xlu0 %v1027
        %v1089 = vpop.xlane.xlu0 %1088
        %1090 = vadd.xlane.f32.xlu0 %v1028
        %v1091 = vpop.xlane.xlu0 %1090
        %1092 = vadd.xlane.f32.xlu0 %v1029
        %v1093 = vpop.xlane.xlu0 %1092
        %v1094 = vmul.f32 %v1031, %v581
        %v1095 = vmul.f32 %v1033, %v581
        %v1096 = vmul.f32 %v1035, %v581
        %v1097 = vmul.f32 %v1037, %v581
        %v1098 = vmul.f32 %v1039, %v581
        %v1099 = vmul.f32 %v1041, %v581
        %v1100 = vmul.f32 %v1043, %v581
        %v1101 = vmul.f32 %v1045, %v581
        %v1102 = vmul.f32 %v1047, %v581
        %v1103 = vmul.f32 %v1049, %v581
        %v1104 = vmul.f32 %v1051, %v581
        %v1105 = vmul.f32 %v1053, %v581
        %v1106 = vmul.f32 %v1055, %v581
        %v1107 = vmul.f32 %v1057, %v581
        %v1108 = vmul.f32 %v1059, %v581
        %v1109 = vmul.f32 %v1061, %v581
        %v1110 = vmul.f32 %v1063, %v581
        %v1111 = vmul.f32 %v1065, %v581
        %v1112 = vmul.f32 %v1067, %v581
        %v1113 = vmul.f32 %v1069, %v581
        %v1114 = vmul.f32 %v1071, %v581
        %v1115 = vmul.f32 %v1073, %v581
        %v1116 = vmul.f32 %v1075, %v581
        %v1117 = vmul.f32 %v1077, %v581
        %v1118 = vmul.f32 %v1079, %v581
        %v1119 = vmul.f32 %v1081, %v581
        %v1120 = vmul.f32 %v1083, %v581
        %v1121 = vmul.f32 %v1085, %v581
        %v1122 = vmul.f32 %v1087, %v581
        %v1123 = vmul.f32 %v1089, %v581
        %v1124 = vmul.f32 %v1091, %v581
        %v1125 = vmul.f32 %v1093, %v581
        %v1126 = vadd.f32 %v1094, 1e-05
        %v1127 = vadd.f32 %v1095, 1e-05
        %v1128 = vadd.f32 %v1096, 1e-05
        %v1129 = vadd.f32 %v1097, 1e-05
        %v1130 = vadd.f32 %v1098, 1e-05
        %v1131 = vadd.f32 %v1099, 1e-05
        %v1132 = vadd.f32 %v1100, 1e-05
        %v1133 = vadd.f32 %v1101, 1e-05
        %v1134 = vadd.f32 %v1102, 1e-05
        %v1135 = vadd.f32 %v1103, 1e-05
        %v1136 = vadd.f32 %v1104, 1e-05
        %v1137 = vadd.f32 %v1105, 1e-05
        %v1138 = vadd.f32 %v1106, 1e-05
        %v1139 = vadd.f32 %v1107, 1e-05
        %v1140 = vadd.f32 %v1108, 1e-05
        %v1141 = vadd.f32 %v1109, 1e-05
        %v1142 = vadd.f32 %v1110, 1e-05
        %v1143 = vadd.f32 %v1111, 1e-05
        %v1144 = vadd.f32 %v1112, 1e-05
        %v1145 = vadd.f32 %v1113, 1e-05
        %v1146 = vadd.f32 %v1114, 1e-05
        %v1147 = vadd.f32 %v1115, 1e-05
        %v1148 = vadd.f32 %v1116, 1e-05
        %v1149 = vadd.f32 %v1117, 1e-05
        %v1150 = vadd.f32 %v1118, 1e-05
        %v1151 = vadd.f32 %v1119, 1e-05
        %v1152 = vadd.f32 %v1120, 1e-05
        %v1153 = vadd.f32 %v1121, 1e-05
        %v1154 = vadd.f32 %v1122, 1e-05
        %v1155 = vadd.f32 %v1123, 1e-05
        %v1156 = vadd.f32 %v1124, 1e-05
        %v1157 = vadd.f32 %v1125, 1e-05
        %v1158 = vrsqrt.pop %v1126
        %v1159 = vrsqrt.pop %v1127
        %v1160 = vrsqrt.pop %v1128
        %v1161 = vrsqrt.pop %v1129
        %v1162 = vrsqrt.pop %v1130
        %v1163 = vrsqrt.pop %v1131
        %v1164 = vrsqrt.pop %v1132
        %v1165 = vrsqrt.pop %v1133
        %v1166 = vrsqrt.pop %v1134
        %v1167 = vrsqrt.pop %v1135
        %v1168 = vrsqrt.pop %v1136
        %v1169 = vrsqrt.pop %v1137
        %v1170 = vrsqrt.pop %v1138
        %v1171 = vrsqrt.pop %v1139
        %v1172 = vrsqrt.pop %v1140
        %v1173 = vrsqrt.pop %v1141
        %v1174 = vrsqrt.pop %v1142
        %v1175 = vrsqrt.pop %v1143
        %v1176 = vrsqrt.pop %v1144
        %v1177 = vrsqrt.pop %v1145
        %v1178 = vrsqrt.pop %v1146
        %v1179 = vrsqrt.pop %v1147
        %v1180 = vrsqrt.pop %v1148
        %v1181 = vrsqrt.pop %v1149
        %v1182 = vrsqrt.pop %v1150
        %v1183 = vrsqrt.pop %v1151
        %v1184 = vrsqrt.pop %v1152
        %v1185 = vrsqrt.pop %v1153
        %v1186 = vrsqrt.pop %v1154
        %v1187 = vrsqrt.pop %v1155
        %v1188 = vrsqrt.pop %v1156
        %v1189 = vrsqrt.pop %v1157
        %v1190 = vmul.f32 %v966, %v1158
        %v1191 = vmul.f32 %v967, %v1159
        %v1192 = vmul.f32 %v968, %v1160
        %v1193 = vmul.f32 %v969, %v1161
        %v1194 = vmul.f32 %v970, %v1162
        %v1195 = vmul.f32 %v971, %v1163
        %v1196 = vmul.f32 %v972, %v1164
        %v1197 = vmul.f32 %v973, %v1165
        %v1198 = vmul.f32 %v974, %v1166
        %v1199 = vmul.f32 %v975, %v1167
        %v1200 = vmul.f32 %v976, %v1168
        %v1201 = vmul.f32 %v977, %v1169
        %v1202 = vmul.f32 %v978, %v1170
        %v1203 = vmul.f32 %v979, %v1171
        %v1204 = vmul.f32 %v980, %v1172
        %v1205 = vmul.f32 %v981, %v1173
        %v1206 = vmul.f32 %v982, %v1174
        %v1207 = vmul.f32 %v983, %v1175
        %v1208 = vmul.f32 %v984, %v1176
        %v1209 = vmul.f32 %v985, %v1177
        %v1210 = vmul.f32 %v986, %v1178
        %v1211 = vmul.f32 %v987, %v1179
        %v1212 = vmul.f32 %v988, %v1180
        %v1213 = vmul.f32 %v989, %v1181
        %v1214 = vmul.f32 %v990, %v1182
        %v1215 = vmul.f32 %v991, %v1183
        %v1216 = vmul.f32 %v992, %v1184
        %v1217 = vmul.f32 %v993, %v1185
        %v1218 = vmul.f32 %v994, %v1186
        %v1219 = vmul.f32 %v995, %v1187
        %v1220 = vmul.f32 %v996, %v1188
        %v1221 = vmul.f32 %v997, %v1189
        %v1222 = vld [vmem:[%s2] sm:$0x1]
        %v1224 = vlaneseq
        %v1225 = vshrl.u32 %v1224, 7
        %v1226 = vsub.s32 0, %v1225
        %v1227 = vrot.slane %v1222, %v1226
        %v1229 = vmul.f32 %v1190, %v1227
        %v1230 = vmul.f32 %v1191, %v1227
        %v1231 = vmul.f32 %v1192, %v1227
        %v1232 = vmul.f32 %v1193, %v1227
        %v1233 = vmul.f32 %v1194, %v1227
        %v1234 = vmul.f32 %v1195, %v1227
        %v1235 = vmul.f32 %v1196, %v1227
        %v1236 = vmul.f32 %v1197, %v1227
        %v1237 = vmul.f32 %v1198, %v1227
        %v1238 = vmul.f32 %v1199, %v1227
        %v1239 = vmul.f32 %v1200, %v1227
        %v1240 = vmul.f32 %v1201, %v1227
        %v1241 = vmul.f32 %v1202, %v1227
        %v1242 = vmul.f32 %v1203, %v1227
        %v1243 = vmul.f32 %v1204, %v1227
        %v1244 = vmul.f32 %v1205, %v1227
        %v1245 = vmul.f32 %v1206, %v1227
        %v1246 = vmul.f32 %v1207, %v1227
        %v1247 = vmul.f32 %v1208, %v1227
        %v1248 = vmul.f32 %v1209, %v1227
        %v1249 = vmul.f32 %v1210, %v1227
        %v1250 = vmul.f32 %v1211, %v1227
        %v1251 = vmul.f32 %v1212, %v1227
        %v1252 = vmul.f32 %v1213, %v1227
        %v1253 = vmul.f32 %v1214, %v1227
        %v1254 = vmul.f32 %v1215, %v1227
        %v1255 = vmul.f32 %v1216, %v1227
        %v1256 = vmul.f32 %v1217, %v1227
        %v1257 = vmul.f32 %v1218, %v1227
        %v1258 = vmul.f32 %v1219, %v1227
        %v1259 = vmul.f32 %v1220, %v1227
        %v1260 = vmul.f32 %v1221, %v1227
        %v1261 = vpack.c.bf16 %v1230, %v1229
        %v1262 = vpack.c.bf16 %v1232, %v1231
        %v1263 = vpack.c.bf16 %v1234, %v1233
        %v1264 = vpack.c.bf16 %v1236, %v1235
        %v1265 = vpack.c.bf16 %v1238, %v1237
        %v1266 = vpack.c.bf16 %v1240, %v1239
        %v1267 = vpack.c.bf16 %v1242, %v1241
        %v1268 = vpack.c.bf16 %v1244, %v1243
        %v1269 = vpack.c.bf16 %v1246, %v1245
        %v1270 = vpack.c.bf16 %v1248, %v1247
        %v1271 = vpack.c.bf16 %v1250, %v1249
        %v1272 = vpack.c.bf16 %v1252, %v1251
        %v1273 = vpack.c.bf16 %v1254, %v1253
        %v1274 = vpack.c.bf16 %v1256, %v1255
        %v1275 = vpack.c.bf16 %v1258, %v1257
        %v1276 = vpack.c.bf16 %v1260, %v1259
        %v1277 = vld [vmem:[#allocation7] sm:$0xff]
        %v1278 = vld [vmem:[#allocation7 + $0x8] sm:$0xff]
        %v1279 = vld [vmem:[#allocation7 + $0x10] sm:$0xff]
        %v1280 = vld [vmem:[#allocation7 + $0x18] sm:$0xff]
        %v1281 = vld [vmem:[#allocation7 + $0x20] sm:$0xff]
        %v1282 = vld [vmem:[#allocation7 + $0x28] sm:$0xff]
        %v1283 = vld [vmem:[#allocation7 + $0x30] sm:$0xff]
        %v1284 = vld [vmem:[#allocation7 + $0x38] sm:$0xff]
        %v1285 = vld [vmem:[#allocation7 + $0x40] sm:$0xff]
        %v1286 = vld [vmem:[#allocation7 + $0x48] sm:$0xff]
        %v1287 = vld [vmem:[#allocation7 + $0x50] sm:$0xff]
        %v1288 = vld [vmem:[#allocation7 + $0x58] sm:$0xff]
        %v1289 = vld [vmem:[#allocation7 + $0x60] sm:$0xff]
        %v1290 = vld [vmem:[#allocation7 + $0x68] sm:$0xff]
        %v1291 = vld [vmem:[#allocation7 + $0x70] sm:$0xff]
        %v1292 = vld [vmem:[#allocation7 + $0x78] sm:$0xff]
        %v1309 = vunpack.c.l.b16 %v1277
        %v1310 = vunpack.c.h.b16 %v1277
        %v1311 = vunpack.c.l.b16 %v1278
        %v1312 = vunpack.c.h.b16 %v1278
        %v1313 = vunpack.c.l.b16 %v1279
        %v1314 = vunpack.c.h.b16 %v1279
        %v1315 = vunpack.c.l.b16 %v1280
        %v1316 = vunpack.c.h.b16 %v1280
        %v1317 = vunpack.c.l.b16 %v1281
        %v1318 = vunpack.c.h.b16 %v1281
        %v1319 = vunpack.c.l.b16 %v1282
        %v1320 = vunpack.c.h.b16 %v1282
        %v1321 = vunpack.c.l.b16 %v1283
        %v1322 = vunpack.c.h.b16 %v1283
        %v1323 = vunpack.c.l.b16 %v1284
        %v1324 = vunpack.c.h.b16 %v1284
        %v1325 = vunpack.c.l.b16 %v1285
        %v1326 = vunpack.c.h.b16 %v1285
        %v1327 = vunpack.c.l.b16 %v1286
        %v1328 = vunpack.c.h.b16 %v1286
        %v1329 = vunpack.c.l.b16 %v1287
        %v1330 = vunpack.c.h.b16 %v1287
        %v1331 = vunpack.c.l.b16 %v1288
        %v1332 = vunpack.c.h.b16 %v1288
        %v1333 = vunpack.c.l.b16 %v1289
        %v1334 = vunpack.c.h.b16 %v1289
        %v1335 = vunpack.c.l.b16 %v1290
        %v1336 = vunpack.c.h.b16 %v1290
        %v1337 = vunpack.c.l.b16 %v1291
        %v1338 = vunpack.c.h.b16 %v1291
        %v1339 = vunpack.c.l.b16 %v1292
        %v1340 = vunpack.c.h.b16 %v1292
        %v1341 = vpack.c.b16 %v1311, %v1309
        %v1342 = vpack.c.b16 %v1312, %v1310
        %v1343 = vpack.c.b16 %v1315, %v1313
        %v1344 = vpack.c.b16 %v1316, %v1314
        %v1345 = vpack.c.b16 %v1319, %v1317
        %v1346 = vpack.c.b16 %v1320, %v1318
        %v1347 = vpack.c.b16 %v1323, %v1321
        %v1348 = vpack.c.b16 %v1324, %v1322
        %v1349 = vpack.c.b16 %v1327, %v1325
        %v1350 = vpack.c.b16 %v1328, %v1326
        %v1351 = vpack.c.b16 %v1331, %v1329
        %v1352 = vpack.c.b16 %v1332, %v1330
        %v1353 = vpack.c.b16 %v1335, %v1333
        %v1354 = vpack.c.b16 %v1336, %v1334
        %v1355 = vpack.c.b16 %v1339, %v1337
        %v1356 = vpack.c.b16 %v1340, %v1338
        %1373 = vmatprep.subr.bf16.mxu0 %v1342
        %1374 = vmatpush1.bf16.msra.mxu0 %v1341
        %1375 = vmatprep.subr.bf16.mxu0 %v1344
        %1376 = vmatpush1.bf16.msra.mxu0 %v1343
        %1377 = vmatprep.subr.bf16.mxu0 %v1346
        %1378 = vmatpush1.bf16.msra.mxu0 %v1345
        %1379 = vmatprep.subr.bf16.mxu0 %v1348
        %1380 = vmatpush1.bf16.msra.mxu0 %v1347
        %1381 = vmatprep.subr.bf16.mxu0 %v1350
        %1382 = vmatpush1.bf16.msra.mxu0 %v1349
        %1383 = vmatprep.subr.bf16.mxu0 %v1352
        %1384 = vmatpush1.bf16.msra.mxu0 %v1351
        %1385 = vmatprep.subr.bf16.mxu0 %v1354
        %1386 = vmatpush1.bf16.msra.mxu0 %v1353
        %1387 = vmatprep.subr.bf16.mxu0 %v1356
        %1388 = vmatpush1.bf16.msra.mxu0 %v1355
        %1389 = vmatprep.subr.bf16.mxu0 0
        %1390 = vmatpush1.bf16.msra.mxu0 0
        %1391 = vmatprep.subr.bf16.mxu0 0
        %1392 = vmatpush1.bf16.msra.mxu0 0
        %1393 = vmatprep.subr.bf16.mxu0 0
        %1394 = vmatpush1.bf16.msra.mxu0 0
        %1395 = vmatprep.subr.bf16.mxu0 0
        %1396 = vmatpush1.bf16.msra.mxu0 0
        %1397 = vmatprep.subr.bf16.mxu0 0
        %1398 = vmatpush1.bf16.msra.mxu0 0
        %1399 = vmatprep.subr.bf16.mxu0 0
        %1400 = vmatpush1.bf16.msra.mxu0 0
        %1401 = vmatprep.subr.bf16.mxu0 0
        %1402 = vmatpush1.bf16.msra.mxu0 0
        %1403 = vmatprep.subr.bf16.mxu0 0
        %1404 = vmatpush1.bf16.msra.mxu0 0
        %1405 = vmatprep.mubr.bf16.mxu0 0
        %1406 = vmatmul.mubr.bf16.gmra.mrb[0].mxu0 %v1261
        %v1407 = vpop.f32.mrb[0].mxu0
        %v1408 = vadd.f32 0.0, %v1407
        %v1409 = vpop.f32.mrb[0].mxu0
        %v1410 = vadd.f32 0.0, %v1409
        %v1411 = vpop.f32.mrb[0].mxu0
        %v1412 = vadd.f32 0.0, %v1411
        %v1413 = vpop.f32.mrb[0].mxu0
        %v1414 = vadd.f32 0.0, %v1413
        %1415 = vmatprep.mubr.bf16.mxu0 0
        %1416 = vmatmul.mubr.bf16.gmra.mrb[0].mxu0 %v1262
        %v1417 = vpop.f32.mrb[0].mxu0
        %v1418 = vadd.f32 0.0, %v1417
        %v1419 = vpop.f32.mrb[0].mxu0
        %v1420 = vadd.f32 0.0, %v1419
        %v1421 = vpop.f32.mrb[0].mxu0
        %v1422 = vadd.f32 0.0, %v1421
        %v1423 = vpop.f32.mrb[0].mxu0
        %v1424 = vadd.f32 0.0, %v1423
        %1425 = vmatprep.mubr.bf16.mxu0 0
        %1426 = vmatmul.mubr.bf16.gmra.mrb[0].mxu0 %v1263
        %v1427 = vpop.f32.mrb[0].mxu0
        %v1428 = vadd.f32 0.0, %v1427
        %v1429 = vpop.f32.mrb[0].mxu0
        %v1430 = vadd.f32 0.0, %v1429
        %v1431 = vpop.f32.mrb[0].mxu0
        %v1432 = vadd.f32 0.0, %v1431
        %v1433 = vpop.f32.mrb[0].mxu0
        %v1434 = vadd.f32 0.0, %v1433
        %1435 = vmatprep.mubr.bf16.mxu0 0
        %1436 = vmatmul.mubr.bf16.gmra.mrb[0].mxu0 %v1264
        %v1437 = vpop.f32.mrb[0].mxu0
        %v1438 = vadd.f32 0.0, %v1437
        %v1439 = vpop.f32.mrb[0].mxu0
        %v1440 = vadd.f32 0.0, %v1439
        %v1441 = vpop.f32.mrb[0].mxu0
        %v1442 = vadd.f32 0.0, %v1441
        %v1443 = vpop.f32.mrb[0].mxu0
        %v1444 = vadd.f32 0.0, %v1443
        %1445 = vmatprep.mubr.bf16.mxu0 0
        %1446 = vmatmul.mubr.bf16.gmra.mrb[0].mxu0 %v1265
        %v1447 = vpop.f32.mrb[0].mxu0
        %v1448 = vadd.f32 0.0, %v1447
        %v1449 = vpop.f32.mrb[0].mxu0
        %v1450 = vadd.f32 0.0, %v1449
        %v1451 = vpop.f32.mrb[0].mxu0
        %v1452 = vadd.f32 0.0, %v1451
        %v1453 = vpop.f32.mrb[0].mxu0
        %v1454 = vadd.f32 0.0, %v1453
        %1455 = vmatprep.mubr.bf16.mxu0 0
        %1456 = vmatmul.mubr.bf16.gmra.mrb[0].mxu0 %v1266
        %v1457 = vpop.f32.mrb[0].mxu0
        %v1458 = vadd.f32 0.0, %v1457
        %v1459 = vpop.f32.mrb[0].mxu0
        %v1460 = vadd.f32 0.0, %v1459
        %v1461 = vpop.f32.mrb[0].mxu0
        %v1462 = vadd.f32 0.0, %v1461
        %v1463 = vpop.f32.mrb[0].mxu0
        %v1464 = vadd.f32 0.0, %v1463
        %1465 = vmatprep.mubr.bf16.mxu0 0
        %1466 = vmatmul.mubr.bf16.gmra.mrb[0].mxu0 %v1267
        %v1467 = vpop.f32.mrb[0].mxu0
        %v1468 = vadd.f32 0.0, %v1467
        %v1469 = vpop.f32.mrb[0].mxu0
        %v1470 = vadd.f32 0.0, %v1469
        %v1471 = vpop.f32.mrb[0].mxu0
        %v1472 = vadd.f32 0.0, %v1471
        %v1473 = vpop.f32.mrb[0].mxu0
        %v1474 = vadd.f32 0.0, %v1473
        %1475 = vmatprep.mubr.bf16.mxu0 0
        %1476 = vmatmul.mubr.bf16.gmra.mrb[0].mxu0 %v1268
        %v1477 = vpop.f32.mrb[0].mxu0
        %v1478 = vadd.f32 0.0, %v1477
        %v1479 = vpop.f32.mrb[0].mxu0
        %v1480 = vadd.f32 0.0, %v1479
        %v1481 = vpop.f32.mrb[0].mxu0
        %v1482 = vadd.f32 0.0, %v1481
        %v1483 = vpop.f32.mrb[0].mxu0
        %v1484 = vadd.f32 0.0, %v1483
        %1485 = vmatprep.mubr.bf16.mxu0 0
        %1486 = vmatmul.mubr.bf16.gmra.mrb[0].mxu0 %v1269
        %v1487 = vpop.f32.mrb[0].mxu0
        %v1488 = vadd.f32 0.0, %v1487
        %v1489 = vpop.f32.mrb[0].mxu0
        %v1490 = vadd.f32 0.0, %v1489
        %v1491 = vpop.f32.mrb[0].mxu0
        %v1492 = vadd.f32 0.0, %v1491
        %v1493 = vpop.f32.mrb[0].mxu0
        %v1494 = vadd.f32 0.0, %v1493
        %1495 = vmatprep.mubr.bf16.mxu0 0
        %1496 = vmatmul.mubr.bf16.gmra.mrb[0].mxu0 %v1270
        %v1497 = vpop.f32.mrb[0].mxu0
        %v1498 = vadd.f32 0.0, %v1497
        %v1499 = vpop.f32.mrb[0].mxu0
        %v1500 = vadd.f32 0.0, %v1499
        %v1501 = vpop.f32.mrb[0].mxu0
        %v1502 = vadd.f32 0.0, %v1501
        %v1503 = vpop.f32.mrb[0].mxu0
        %v1504 = vadd.f32 0.0, %v1503
        %1505 = vmatprep.mubr.bf16.mxu0 0
        %1506 = vmatmul.mubr.bf16.gmra.mrb[0].mxu0 %v1271
        %v1507 = vpop.f32.mrb[0].mxu0
        %v1508 = vadd.f32 0.0, %v1507
        %v1509 = vpop.f32.mrb[0].mxu0
        %v1510 = vadd.f32 0.0, %v1509
        %v1511 = vpop.f32.mrb[0].mxu0
        %v1512 = vadd.f32 0.0, %v1511
        %v1513 = vpop.f32.mrb[0].mxu0
        %v1514 = vadd.f32 0.0, %v1513
        %1515 = vmatprep.mubr.bf16.mxu0 0
        %1516 = vmatmul.mubr.bf16.gmra.mrb[0].mxu0 %v1272
        %v1517 = vpop.f32.mrb[0].mxu0
        %v1518 = vadd.f32 0.0, %v1517
        %v1519 = vpop.f32.mrb[0].mxu0
        %v1520 = vadd.f32 0.0, %v1519
        %v1521 = vpop.f32.mrb[0].mxu0
        %v1522 = vadd.f32 0.0, %v1521
        %v1523 = vpop.f32.mrb[0].mxu0
        %v1524 = vadd.f32 0.0, %v1523
        %1525 = vmatprep.mubr.bf16.mxu0 0
        %1526 = vmatmul.mubr.bf16.gmra.mrb[0].mxu0 %v1273
        %v1527 = vpop.f32.mrb[0].mxu0
        %v1528 = vadd.f32 0.0, %v1527
        %v1529 = vpop.f32.mrb[0].mxu0
        %v1530 = vadd.f32 0.0, %v1529
        %v1531 = vpop.f32.mrb[0].mxu0
        %v1532 = vadd.f32 0.0, %v1531
        %v1533 = vpop.f32.mrb[0].mxu0
        %v1534 = vadd.f32 0.0, %v1533
        %1535 = vmatprep.mubr.bf16.mxu0 0
        %1536 = vmatmul.mubr.bf16.gmra.mrb[0].mxu0 %v1274
        %v1537 = vpop.f32.mrb[0].mxu0
        %v1538 = vadd.f32 0.0, %v1537
        %v1539 = vpop.f32.mrb[0].mxu0
        %v1540 = vadd.f32 0.0, %v1539
        %v1541 = vpop.f32.mrb[0].mxu0
        %v1542 = vadd.f32 0.0, %v1541
        %v1543 = vpop.f32.mrb[0].mxu0
        %v1544 = vadd.f32 0.0, %v1543
        %1545 = vmatprep.mubr.bf16.mxu0 0
        %1546 = vmatmul.mubr.bf16.gmra.mrb[0].mxu0 %v1275
        %v1547 = vpop.f32.mrb[0].mxu0
        %v1548 = vadd.f32 0.0, %v1547
        %v1549 = vpop.f32.mrb[0].mxu0
        %v1550 = vadd.f32 0.0, %v1549
        %v1551 = vpop.f32.mrb[0].mxu0
        %v1552 = vadd.f32 0.0, %v1551
        %v1553 = vpop.f32.mrb[0].mxu0
        %v1554 = vadd.f32 0.0, %v1553
        %1555 = vmatprep.mubr.bf16.mxu0 0
        %1556 = vmatmul.mubr.bf16.gmra.mrb[0].mxu0 %v1276
        %v1557 = vpop.f32.mrb[0].mxu0
        %v1558 = vadd.f32 0.0, %v1557
        %v1559 = vpop.f32.mrb[0].mxu0
        %v1560 = vadd.f32 0.0, %v1559
        %v1561 = vpop.f32.mrb[0].mxu0
        %v1562 = vadd.f32 0.0, %v1561
        %v1563 = vpop.f32.mrb[0].mxu0
        %v1564 = vadd.f32 0.0, %v1563
        %1565 = vdwg.mxu0
        %v1566 = vld [vmem:[%s3] sm:$0x1]
        %v1568 = vlaneseq
        %v1569 = vshrl.u32 %v1568, 7
        %v1570 = vsub.s32 0, %v1569
        %v1571 = vrot.slane %v1566, %v1570
        %v1573 = vadd.f32 %v1408, %v1571
        %v1574 = vadd.f32 %v1412, %v1571
        %v1575 = vadd.f32 %v1418, %v1571
        %v1576 = vadd.f32 %v1422, %v1571
        %v1577 = vadd.f32 %v1428, %v1571
        %v1578 = vadd.f32 %v1432, %v1571
        %v1579 = vadd.f32 %v1438, %v1571
        %v1580 = vadd.f32 %v1442, %v1571
        %v1581 = vadd.f32 %v1448, %v1571
        %v1582 = vadd.f32 %v1452, %v1571
        %v1583 = vadd.f32 %v1458, %v1571
        %v1584 = vadd.f32 %v1462, %v1571
        %v1585 = vadd.f32 %v1468, %v1571
        %v1586 = vadd.f32 %v1472, %v1571
        %v1587 = vadd.f32 %v1478, %v1571
        %v1588 = vadd.f32 %v1482, %v1571
        %v1589 = vadd.f32 %v1488, %v1571
        %v1590 = vadd.f32 %v1492, %v1571
        %v1591 = vadd.f32 %v1498, %v1571
        %v1592 = vadd.f32 %v1502, %v1571
        %v1593 = vadd.f32 %v1508, %v1571
        %v1594 = vadd.f32 %v1512, %v1571
        %v1595 = vadd.f32 %v1518, %v1571
        %v1596 = vadd.f32 %v1522, %v1571
        %v1597 = vadd.f32 %v1528, %v1571
        %v1598 = vadd.f32 %v1532, %v1571
        %v1599 = vadd.f32 %v1538, %v1571
        %v1600 = vadd.f32 %v1542, %v1571
        %v1601 = vadd.f32 %v1548, %v1571
        %v1602 = vadd.f32 %v1552, %v1571
        %v1603 = vadd.f32 %v1558, %v1571
        %v1604 = vadd.f32 %v1562, %v1571
        %v1605 = vxor.u32 %v1573, 2147483648
        %v1606 = vxor.u32 %v1574, 2147483648
        %v1607 = vxor.u32 %v1575, 2147483648
        %v1608 = vxor.u32 %v1576, 2147483648
        %v1609 = vxor.u32 %v1577, 2147483648
        %v1610 = vxor.u32 %v1578, 2147483648
        %v1611 = vxor.u32 %v1579, 2147483648
        %v1612 = vxor.u32 %v1580, 2147483648
        %v1613 = vxor.u32 %v1581, 2147483648
        %v1614 = vxor.u32 %v1582, 2147483648
        %v1615 = vxor.u32 %v1583, 2147483648
        %v1616 = vxor.u32 %v1584, 2147483648
        %v1617 = vxor.u32 %v1585, 2147483648
        %v1618 = vxor.u32 %v1586, 2147483648
        %v1619 = vxor.u32 %v1587, 2147483648
        %v1620 = vxor.u32 %v1588, 2147483648
        %v1621 = vxor.u32 %v1589, 2147483648
        %v1622 = vxor.u32 %v1590, 2147483648
        %v1623 = vxor.u32 %v1591, 2147483648
        %v1624 = vxor.u32 %v1592, 2147483648
        %v1625 = vxor.u32 %v1593, 2147483648
        %v1626 = vxor.u32 %v1594, 2147483648
        %v1627 = vxor.u32 %v1595, 2147483648
        %v1628 = vxor.u32 %v1596, 2147483648
        %v1629 = vxor.u32 %v1597, 2147483648
        %v1630 = vxor.u32 %v1598, 2147483648
        %v1631 = vxor.u32 %v1599, 2147483648
        %v1632 = vxor.u32 %v1600, 2147483648
        %v1633 = vxor.u32 %v1601, 2147483648
        %v1634 = vxor.u32 %v1602, 2147483648
        %v1635 = vxor.u32 %v1603, 2147483648
        %v1636 = vxor.u32 %v1604, 2147483648
        %v1637 = vmul.f32 %v1605, 1.442695
        %v1638 = vpow.pop %v1637
        %v1639 = vmul.f32 %v1606, 1.442695
        %v1640 = vpow.pop %v1639
        %v1641 = vmul.f32 %v1607, 1.442695
        %v1642 = vpow.pop %v1641
        %v1643 = vmul.f32 %v1608, 1.442695
        %v1644 = vpow.pop %v1643
        %v1645 = vmul.f32 %v1609, 1.442695
        %v1646 = vpow.pop %v1645
        %v1647 = vmul.f32 %v1610, 1.442695
        %v1648 = vpow.pop %v1647
        %v1649 = vmul.f32 %v1611, 1.442695
        %v1650 = vpow.pop %v1649
        %v1651 = vmul.f32 %v1612, 1.442695
        %v1652 = vpow.pop %v1651
        %v1653 = vmul.f32 %v1613, 1.442695
        %v1654 = vpow.pop %v1653
        %v1655 = vmul.f32 %v1614, 1.442695
        %v1656 = vpow.pop %v1655
        %v1657 = vmul.f32 %v1615, 1.442695
        %v1658 = vpow.pop %v1657
        %v1659 = vmul.f32 %v1616, 1.442695
        %v1660 = vpow.pop %v1659
        %v1661 = vmul.f32 %v1617, 1.442695
        %v1662 = vpow.pop %v1661
        %v1663 = vmul.f32 %v1618, 1.442695
        %v1664 = vpow.pop %v1663
        %v1665 = vmul.f32 %v1619, 1.442695
        %v1666 = vpow.pop %v1665
        %v1667 = vmul.f32 %v1620, 1.442695
        %v1668 = vpow.pop %v1667
        %v1669 = vmul.f32 %v1621, 1.442695
        %v1670 = vpow.pop %v1669
        %v1671 = vmul.f32 %v1622, 1.442695
        %v1672 = vpow.pop %v1671
        %v1673 = vmul.f32 %v1623, 1.442695
        %v1674 = vpow.pop %v1673
        %v1675 = vmul.f32 %v1624, 1.442695
        %v1676 = vpow.pop %v1675
        %v1677 = vmul.f32 %v1625, 1.442695
        %v1678 = vpow.pop %v1677
        %v1679 = vmul.f32 %v1626, 1.442695
        %v1680 = vpow.pop %v1679
        %v1681 = vmul.f32 %v1627, 1.442695
        %v1682 = vpow.pop %v1681
        %v1683 = vmul.f32 %v1628, 1.442695
        %v1684 = vpow.pop %v1683
        %v1685 = vmul.f32 %v1629, 1.442695
        %v1686 = vpow.pop %v1685
        %v1687 = vmul.f32 %v1630, 1.442695
        %v1688 = vpow.pop %v1687
        %v1689 = vmul.f32 %v1631, 1.442695
        %v1690 = vpow.pop %v1689
        %v1691 = vmul.f32 %v1632, 1.442695
        %v1692 = vpow.pop %v1691
        %v1693 = vmul.f32 %v1633, 1.442695
        %v1694 = vpow.pop %v1693
        %v1695 = vmul.f32 %v1634, 1.442695
        %v1696 = vpow.pop %v1695
        %v1697 = vmul.f32 %v1635, 1.442695
        %v1698 = vpow.pop %v1697
        %v1699 = vmul.f32 %v1636, 1.442695
        %v1700 = vpow.pop %v1699
        %v1701 = vadd.f32 %v1638, 1.0
        %v1702 = vadd.f32 %v1640, 1.0
        %v1703 = vadd.f32 %v1642, 1.0
        %v1704 = vadd.f32 %v1644, 1.0
        %v1705 = vadd.f32 %v1646, 1.0
        %v1706 = vadd.f32 %v1648, 1.0
        %v1707 = vadd.f32 %v1650, 1.0
        %v1708 = vadd.f32 %v1652, 1.0
        %v1709 = vadd.f32 %v1654, 1.0
        %v1710 = vadd.f32 %v1656, 1.0
        %v1711 = vadd.f32 %v1658, 1.0
        %v1712 = vadd.f32 %v1660, 1.0
        %v1713 = vadd.f32 %v1662, 1.0
        %v1714 = vadd.f32 %v1664, 1.0
        %v1715 = vadd.f32 %v1666, 1.0
        %v1716 = vadd.f32 %v1668, 1.0
        %v1717 = vadd.f32 %v1670, 1.0
        %v1718 = vadd.f32 %v1672, 1.0
        %v1719 = vadd.f32 %v1674, 1.0
        %v1720 = vadd.f32 %v1676, 1.0
        %v1721 = vadd.f32 %v1678, 1.0
        %v1722 = vadd.f32 %v1680, 1.0
        %v1723 = vadd.f32 %v1682, 1.0
        %v1724 = vadd.f32 %v1684, 1.0
        %v1725 = vadd.f32 %v1686, 1.0
        %v1726 = vadd.f32 %v1688, 1.0
        %v1727 = vadd.f32 %v1690, 1.0
        %v1728 = vadd.f32 %v1692, 1.0
        %v1729 = vadd.f32 %v1694, 1.0
        %v1730 = vadd.f32 %v1696, 1.0
        %v1731 = vadd.f32 %v1698, 1.0
        %v1732 = vadd.f32 %v1700, 1.0
        %v1733 = vrcp.pop %v1701
        %v1734 = vmul.f32 1.0, %v1733
        %v1735 = vrcp.pop %v1702
        %v1736 = vmul.f32 1.0, %v1735
        %v1737 = vrcp.pop %v1703
        %v1738 = vmul.f32 1.0, %v1737
        %v1739 = vrcp.pop %v1704
        %v1740 = vmul.f32 1.0, %v1739
        %v1741 = vrcp.pop %v1705
        %v1742 = vmul.f32 1.0, %v1741
        %v1743 = vrcp.pop %v1706
        %v1744 = vmul.f32 1.0, %v1743
        %v1745 = vrcp.pop %v1707
        %v1746 = vmul.f32 1.0, %v1745
        %v1747 = vrcp.pop %v1708
        %v1748 = vmul.f32 1.0, %v1747
        %v1749 = vrcp.pop %v1709
        %v1750 = vmul.f32 1.0, %v1749
        %v1751 = vrcp.pop %v1710
        %v1752 = vmul.f32 1.0, %v1751
        %v1753 = vrcp.pop %v1711
        %v1754 = vmul.f32 1.0, %v1753
        %v1755 = vrcp.pop %v1712
        %v1756 = vmul.f32 1.0, %v1755
        %v1757 = vrcp.pop %v1713
        %v1758 = vmul.f32 1.0, %v1757
        %v1759 = vrcp.pop %v1714
        %v1760 = vmul.f32 1.0, %v1759
        %v1761 = vrcp.pop %v1715
        %v1762 = vmul.f32 1.0, %v1761
        %v1763 = vrcp.pop %v1716
        %v1764 = vmul.f32 1.0, %v1763
        %v1765 = vrcp.pop %v1717
        %v1766 = vmul.f32 1.0, %v1765
        %v1767 = vrcp.pop %v1718
        %v1768 = vmul.f32 1.0, %v1767
        %v1769 = vrcp.pop %v1719
        %v1770 = vmul.f32 1.0, %v1769
        %v1771 = vrcp.pop %v1720
        %v1772 = vmul.f32 1.0, %v1771
        %v1773 = vrcp.pop %v1721
        %v1774 = vmul.f32 1.0, %v1773
        %v1775 = vrcp.pop %v1722
        %v1776 = vmul.f32 1.0, %v1775
        %v1777 = vrcp.pop %v1723
        %v1778 = vmul.f32 1.0, %v1777
        %v1779 = vrcp.pop %v1724
        %v1780 = vmul.f32 1.0, %v1779
        %v1781 = vrcp.pop %v1725
        %v1782 = vmul.f32 1.0, %v1781
        %v1783 = vrcp.pop %v1726
        %v1784 = vmul.f32 1.0, %v1783
        %v1785 = vrcp.pop %v1727
        %v1786 = vmul.f32 1.0, %v1785
        %v1787 = vrcp.pop %v1728
        %v1788 = vmul.f32 1.0, %v1787
        %v1789 = vrcp.pop %v1729
        %v1790 = vmul.f32 1.0, %v1789
        %v1791 = vrcp.pop %v1730
        %v1792 = vmul.f32 1.0, %v1791
        %v1793 = vrcp.pop %v1731
        %v1794 = vmul.f32 1.0, %v1793
        %v1795 = vrcp.pop %v1732
        %v1796 = vmul.f32 1.0, %v1795
        %v1797 = vmul.f32 %v1734, %v838
        %v1798 = vmul.f32 %v1736, %v839
        %v1799 = vmul.f32 %v1738, %v840
        %v1800 = vmul.f32 %v1740, %v841
        %v1801 = vmul.f32 %v1742, %v842
        %v1802 = vmul.f32 %v1744, %v843
        %v1803 = vmul.f32 %v1746, %v844
        %v1804 = vmul.f32 %v1748, %v845
        %v1805 = vmul.f32 %v1750, %v846
        %v1806 = vmul.f32 %v1752, %v847
        %v1807 = vmul.f32 %v1754, %v848
        %v1808 = vmul.f32 %v1756, %v849
        %v1809 = vmul.f32 %v1758, %v850
        %v1810 = vmul.f32 %v1760, %v851
        %v1811 = vmul.f32 %v1762, %v852
        %v1812 = vmul.f32 %v1764, %v853
        %v1813 = vmul.f32 %v1766, %v854
        %v1814 = vmul.f32 %v1768, %v855
        %v1815 = vmul.f32 %v1770, %v856
        %v1816 = vmul.f32 %v1772, %v857
        %v1817 = vmul.f32 %v1774, %v858
        %v1818 = vmul.f32 %v1776, %v859
        %v1819 = vmul.f32 %v1778, %v860
        %v1820 = vmul.f32 %v1780, %v861
        %v1821 = vmul.f32 %v1782, %v862
        %v1822 = vmul.f32 %v1784, %v863
        %v1823 = vmul.f32 %v1786, %v864
        %v1824 = vmul.f32 %v1788, %v865
        %v1825 = vmul.f32 %v1790, %v866
        %v1826 = vmul.f32 %v1792, %v867
        %v1827 = vmul.f32 %v1794, %v868
        %v1828 = vmul.f32 %v1796, %v869
        %v1829 = vadd.f32 %v1797, %v1410
        %v1830 = vadd.f32 %v1798, %v1414
        %v1831 = vadd.f32 %v1799, %v1420
        %v1832 = vadd.f32 %v1800, %v1424
        %v1833 = vadd.f32 %v1801, %v1430
        %v1834 = vadd.f32 %v1802, %v1434
        %v1835 = vadd.f32 %v1803, %v1440
        %v1836 = vadd.f32 %v1804, %v1444
        %v1837 = vadd.f32 %v1805, %v1450
        %v1838 = vadd.f32 %v1806, %v1454
        %v1839 = vadd.f32 %v1807, %v1460
        %v1840 = vadd.f32 %v1808, %v1464
        %v1841 = vadd.f32 %v1809, %v1470
        %v1842 = vadd.f32 %v1810, %v1474
        %v1843 = vadd.f32 %v1811, %v1480
        %v1844 = vadd.f32 %v1812, %v1484
        %v1845 = vadd.f32 %v1813, %v1490
        %v1846 = vadd.f32 %v1814, %v1494
        %v1847 = vadd.f32 %v1815, %v1500
        %v1848 = vadd.f32 %v1816, %v1504
        %v1849 = vadd.f32 %v1817, %v1510
        %v1850 = vadd.f32 %v1818, %v1514
        %v1851 = vadd.f32 %v1819, %v1520
        %v1852 = vadd.f32 %v1820, %v1524
        %v1853 = vadd.f32 %v1821, %v1530
        %v1854 = vadd.f32 %v1822, %v1534
        %v1855 = vadd.f32 %v1823, %v1540
        %v1856 = vadd.f32 %v1824, %v1544
        %v1857 = vadd.f32 %v1825, %v1550
        %v1858 = vadd.f32 %v1826, %v1554
        %v1859 = vadd.f32 %v1827, %v1560
        %v1860 = vadd.f32 %v1828, %v1564
        %v1861 = vpack.c.bf16 %v1830, %v1829
        %v1862 = vpack.c.bf16 %v1832, %v1831
        %v1863 = vpack.c.bf16 %v1834, %v1833
        %v1864 = vpack.c.bf16 %v1836, %v1835
        %v1865 = vpack.c.bf16 %v1838, %v1837
        %v1866 = vpack.c.bf16 %v1840, %v1839
        %v1867 = vpack.c.bf16 %v1842, %v1841
        %v1868 = vpack.c.bf16 %v1844, %v1843
        %v1869 = vpack.c.bf16 %v1846, %v1845
        %v1870 = vpack.c.bf16 %v1848, %v1847
        %v1871 = vpack.c.bf16 %v1850, %v1849
        %v1872 = vpack.c.bf16 %v1852, %v1851
        %v1873 = vpack.c.bf16 %v1854, %v1853
        %v1874 = vpack.c.bf16 %v1856, %v1855
        %v1875 = vpack.c.bf16 %v1858, %v1857
        %v1876 = vpack.c.bf16 %v1860, %v1859
        %v1877 = vld [vmem:[#allocation8] sm:$0xff]
        %v1878 = vld [vmem:[#allocation8 + $0x8] sm:$0xff]
        %v1879 = vld [vmem:[#allocation8 + $0x10] sm:$0xff]
        %v1880 = vld [vmem:[#allocation8 + $0x18] sm:$0xff]
        %v1881 = vld [vmem:[#allocation8 + $0x20] sm:$0xff]
        %v1882 = vld [vmem:[#allocation8 + $0x28] sm:$0xff]
        %v1883 = vld [vmem:[#allocation8 + $0x30] sm:$0xff]
        %v1884 = vld [vmem:[#allocation8 + $0x38] sm:$0xff]
        %v1885 = vld [vmem:[#allocation8 + $0x40] sm:$0xff]
        %v1886 = vld [vmem:[#allocation8 + $0x48] sm:$0xff]
        %v1887 = vld [vmem:[#allocation8 + $0x50] sm:$0xff]
        %v1888 = vld [vmem:[#allocation8 + $0x58] sm:$0xff]
        %v1889 = vld [vmem:[#allocation8 + $0x60] sm:$0xff]
        %v1890 = vld [vmem:[#allocation8 + $0x68] sm:$0xff]
        %v1891 = vld [vmem:[#allocation8 + $0x70] sm:$0xff]
        %v1892 = vld [vmem:[#allocation8 + $0x78] sm:$0xff]
        %v1893 = vld [vmem:[#allocation8 + $0x80] sm:$0xff]
        %v1894 = vld [vmem:[#allocation8 + $0x88] sm:$0xff]
        %v1895 = vld [vmem:[#allocation8 + $0x90] sm:$0xff]
        %v1896 = vld [vmem:[#allocation8 + $0x98] sm:$0xff]
        %v1897 = vld [vmem:[#allocation8 + $0xa0] sm:$0xff]
        %v1898 = vld [vmem:[#allocation8 + $0xa8] sm:$0xff]
        %v1899 = vld [vmem:[#allocation8 + $0xb0] sm:$0xff]
        %v1900 = vld [vmem:[#allocation8 + $0xb8] sm:$0xff]
        %v1901 = vld [vmem:[#allocation8 + $0xc0] sm:$0xff]
        %v1902 = vld [vmem:[#allocation8 + $0xc8] sm:$0xff]
        %v1903 = vld [vmem:[#allocation8 + $0xd0] sm:$0xff]
        %v1904 = vld [vmem:[#allocation8 + $0xd8] sm:$0xff]
        %v1905 = vld [vmem:[#allocation8 + $0xe0] sm:$0xff]
        %v1906 = vld [vmem:[#allocation8 + $0xe8] sm:$0xff]
        %v1907 = vld [vmem:[#allocation8 + $0xf0] sm:$0xff]
        %v1908 = vld [vmem:[#allocation8 + $0xf8] sm:$0xff]
        %v1941 = vunpack.c.l.b16 %v1877
        %v1942 = vunpack.c.h.b16 %v1877
        %v1943 = vunpack.c.l.b16 %v1878
        %v1944 = vunpack.c.h.b16 %v1878
        %v1945 = vunpack.c.l.b16 %v1879
        %v1946 = vunpack.c.h.b16 %v1879
        %v1947 = vunpack.c.l.b16 %v1880
        %v1948 = vunpack.c.h.b16 %v1880
        %v1949 = vunpack.c.l.b16 %v1881
        %v1950 = vunpack.c.h.b16 %v1881
        %v1951 = vunpack.c.l.b16 %v1882
        %v1952 = vunpack.c.h.b16 %v1882
        %v1953 = vunpack.c.l.b16 %v1883
        %v1954 = vunpack.c.h.b16 %v1883
        %v1955 = vunpack.c.l.b16 %v1884
        %v1956 = vunpack.c.h.b16 %v1884
        %v1957 = vunpack.c.l.b16 %v1885
        %v1958 = vunpack.c.h.b16 %v1885
        %v1959 = vunpack.c.l.b16 %v1886
        %v1960 = vunpack.c.h.b16 %v1886
        %v1961 = vunpack.c.l.b16 %v1887
        %v1962 = vunpack.c.h.b16 %v1887
        %v1963 = vunpack.c.l.b16 %v1888
        %v1964 = vunpack.c.h.b16 %v1888
        %v1965 = vunpack.c.l.b16 %v1889
        %v1966 = vunpack.c.h.b16 %v1889
        %v1967 = vunpack.c.l.b16 %v1890
        %v1968 = vunpack.c.h.b16 %v1890
        %v1969 = vunpack.c.l.b16 %v1891
        %v1970 = vunpack.c.h.b16 %v1891
        %v1971 = vunpack.c.l.b16 %v1892
        %v1972 = vunpack.c.h.b16 %v1892
        %v1973 = vunpack.c.l.b16 %v1893
        %v1974 = vunpack.c.h.b16 %v1893
        %v1975 = vunpack.c.l.b16 %v1894
        %v1976 = vunpack.c.h.b16 %v1894
        %v1977 = vunpack.c.l.b16 %v1895
        %v1978 = vunpack.c.h.b16 %v1895
        %v1979 = vunpack.c.l.b16 %v1896
        %v1980 = vunpack.c.h.b16 %v1896
        %v1981 = vunpack.c.l.b16 %v1897
        %v1982 = vunpack.c.h.b16 %v1897
        %v1983 = vunpack.c.l.b16 %v1898
        %v1984 = vunpack.c.h.b16 %v1898
        %v1985 = vunpack.c.l.b16 %v1899
        %v1986 = vunpack.c.h.b16 %v1899
        %v1987 = vunpack.c.l.b16 %v1900
        %v1988 = vunpack.c.h.b16 %v1900
        %v1989 = vunpack.c.l.b16 %v1901
        %v1990 = vunpack.c.h.b16 %v1901
        %v1991 = vunpack.c.l.b16 %v1902
        %v1992 = vunpack.c.h.b16 %v1902
        %v1993 = vunpack.c.l.b16 %v1903
        %v1994 = vunpack.c.h.b16 %v1903
        %v1995 = vunpack.c.l.b16 %v1904
        %v1996 = vunpack.c.h.b16 %v1904
        %v1997 = vunpack.c.l.b16 %v1905
        %v1998 = vunpack.c.h.b16 %v1905
        %v1999 = vunpack.c.l.b16 %v1906
        %v2000 = vunpack.c.h.b16 %v1906
        %v2001 = vunpack.c.l.b16 %v1907
        %v2002 = vunpack.c.h.b16 %v1907
        %v2003 = vunpack.c.l.b16 %v1908
        %v2004 = vunpack.c.h.b16 %v1908
        %v2005 = vpack.c.b16 %v1945, %v1941
        %v2006 = vpack.c.b16 %v1946, %v1942
        %v2007 = vpack.c.b16 %v1947, %v1943
        %v2008 = vpack.c.b16 %v1948, %v1944
        %v2009 = vpack.c.b16 %v1953, %v1949
        %v2010 = vpack.c.b16 %v1954, %v1950
        %v2011 = vpack.c.b16 %v1955, %v1951
        %v2012 = vpack.c.b16 %v1956, %v1952
        %v2013 = vpack.c.b16 %v1961, %v1957
        %v2014 = vpack.c.b16 %v1962, %v1958
        %v2015 = vpack.c.b16 %v1963, %v1959
        %v2016 = vpack.c.b16 %v1964, %v1960
        %v2017 = vpack.c.b16 %v1969, %v1965
        %v2018 = vpack.c.b16 %v1970, %v1966
        %v2019 = vpack.c.b16 %v1971, %v1967
        %v2020 = vpack.c.b16 %v1972, %v1968
        %v2021 = vpack.c.b16 %v1977, %v1973
        %v2022 = vpack.c.b16 %v1978, %v1974
        %v2023 = vpack.c.b16 %v1979, %v1975
        %v2024 = vpack.c.b16 %v1980, %v1976
        %v2025 = vpack.c.b16 %v1985, %v1981
        %v2026 = vpack.c.b16 %v1986, %v1982
        %v2027 = vpack.c.b16 %v1987, %v1983
        %v2028 = vpack.c.b16 %v1988, %v1984
        %v2029 = vpack.c.b16 %v1993, %v1989
        %v2030 = vpack.c.b16 %v1994, %v1990
        %v2031 = vpack.c.b16 %v1995, %v1991
        %v2032 = vpack.c.b16 %v1996, %v1992
        %v2033 = vpack.c.b16 %v2001, %v1997
        %v2034 = vpack.c.b16 %v2002, %v1998
        %v2035 = vpack.c.b16 %v2003, %v1999
        %v2036 = vpack.c.b16 %v2004, %v2000
        %2069 = vmatprep.subr.bf16.mxu0 %v2006
        %2070 = vmatpush1.bf16.msra.mxu0 %v2005
        %2071 = vmatprep.subr.bf16.mxu0 %v2010
        %2072 = vmatpush1.bf16.msra.mxu0 %v2009
        %2073 = vmatprep.subr.bf16.mxu0 %v2014
        %2074 = vmatpush1.bf16.msra.mxu0 %v2013
        %2075 = vmatprep.subr.bf16.mxu0 %v2018
        %2076 = vmatpush1.bf16.msra.mxu0 %v2017
        %2077 = vmatprep.subr.bf16.mxu0 %v2022
        %2078 = vmatpush1.bf16.msra.mxu0 %v2021
        %2079 = vmatprep.subr.bf16.mxu0 %v2026
        %2080 = vmatpush1.bf16.msra.mxu0 %v2025
        %2081 = vmatprep.subr.bf16.mxu0 %v2030
        %2082 = vmatpush1.bf16.msra.mxu0 %v2029
        %2083 = vmatprep.subr.bf16.mxu0 %v2034
        %2084 = vmatpush1.bf16.msra.mxu0 %v2033
        %2085 = vmatprep.subr.bf16.mxu0 0
        %2086 = vmatpush1.bf16.msra.mxu0 0
        %2087 = vmatprep.subr.bf16.mxu0 0
        %2088 = vmatpush1.bf16.msra.mxu0 0
        %2089 = vmatprep.subr.bf16.mxu0 0
        %2090 = vmatpush1.bf16.msra.mxu0 0
        %2091 = vmatprep.subr.bf16.mxu0 0
        %2092 = vmatpush1.bf16.msra.mxu0 0
        %2093 = vmatprep.subr.bf16.mxu0 0
        %2094 = vmatpush1.bf16.msra.mxu0 0
        %2095 = vmatprep.subr.bf16.mxu0 0
        %2096 = vmatpush1.bf16.msra.mxu0 0
        %2097 = vmatprep.subr.bf16.mxu0 0
        %2098 = vmatpush1.bf16.msra.mxu0 0
        %2099 = vmatprep.subr.bf16.mxu0 0
        %2100 = vmatpush1.bf16.msra.mxu0 0
        %2101 = vmatprep.mubr.bf16.mxu0 0
        %2102 = vmatmul.mubr.bf16.gmra.mrb[0].mxu0 %v1861
        %v2103 = vpop.f32.mrb[0].mxu0
        %v2104 = vadd.f32 0.0, %v2103
        %v2105 = vpop.f32.mrb[0].mxu0
        %v2106 = vadd.f32 0.0, %v2105
        %v2107 = vpop.f32.mrb[0].mxu0
        %v2108 = vadd.f32 0.0, %v2107
        %v2109 = vpop.f32.mrb[0].mxu0
        %v2110 = vadd.f32 0.0, %v2109
        %2111 = vmatprep.mubr.bf16.mxu0 0
        %2112 = vmatmul.mubr.bf16.gmra.mrb[0].mxu0 %v1862
        %v2113 = vpop.f32.mrb[0].mxu0
        %v2114 = vadd.f32 0.0, %v2113
        %v2115 = vpop.f32.mrb[0].mxu0
        %v2116 = vadd.f32 0.0, %v2115
        %v2117 = vpop.f32.mrb[0].mxu0
        %v2118 = vadd.f32 0.0, %v2117
        %v2119 = vpop.f32.mrb[0].mxu0
        %v2120 = vadd.f32 0.0, %v2119
        %2121 = vmatprep.mubr.bf16.mxu0 0
        %2122 = vmatmul.mubr.bf16.gmra.mrb[0].mxu0 %v1863
        %v2123 = vpop.f32.mrb[0].mxu0
        %v2124 = vadd.f32 0.0, %v2123
        %v2125 = vpop.f32.mrb[0].mxu0
        %v2126 = vadd.f32 0.0, %v2125
        %v2127 = vpop.f32.mrb[0].mxu0
        %v2128 = vadd.f32 0.0, %v2127
        %v2129 = vpop.f32.mrb[0].mxu0
        %v2130 = vadd.f32 0.0, %v2129
        %2131 = vmatprep.mubr.bf16.mxu0 0
        %2132 = vmatmul.mubr.bf16.gmra.mrb[0].mxu0 %v1864
        %v2133 = vpop.f32.mrb[0].mxu0
        %v2134 = vadd.f32 0.0, %v2133
        %v2135 = vpop.f32.mrb[0].mxu0
        %v2136 = vadd.f32 0.0, %v2135
        %v2137 = vpop.f32.mrb[0].mxu0
        %v2138 = vadd.f32 0.0, %v2137
        %v2139 = vpop.f32.mrb[0].mxu0
        %v2140 = vadd.f32 0.0, %v2139
        %2141 = vmatprep.mubr.bf16.mxu0 0
        %2142 = vmatmul.mubr.bf16.gmra.mrb[0].mxu0 %v1865
        %v2143 = vpop.f32.mrb[0].mxu0
        %v2144 = vadd.f32 0.0, %v2143
        %v2145 = vpop.f32.mrb[0].mxu0
        %v2146 = vadd.f32 0.0, %v2145
        %v2147 = vpop.f32.mrb[0].mxu0
        %v2148 = vadd.f32 0.0, %v2147
        %v2149 = vpop.f32.mrb[0].mxu0
        %v2150 = vadd.f32 0.0, %v2149
        %2151 = vmatprep.mubr.bf16.mxu0 0
        %2152 = vmatmul.mubr.bf16.gmra.mrb[0].mxu0 %v1866
        %v2153 = vpop.f32.mrb[0].mxu0
        %v2154 = vadd.f32 0.0, %v2153
        %v2155 = vpop.f32.mrb[0].mxu0
        %v2156 = vadd.f32 0.0, %v2155
        %v2157 = vpop.f32.mrb[0].mxu0
        %v2158 = vadd.f32 0.0, %v2157
        %v2159 = vpop.f32.mrb[0].mxu0
        %v2160 = vadd.f32 0.0, %v2159
        %2161 = vmatprep.mubr.bf16.mxu0 0
        %2162 = vmatmul.mubr.bf16.gmra.mrb[0].mxu0 %v1867
        %v2163 = vpop.f32.mrb[0].mxu0
        %v2164 = vadd.f32 0.0, %v2163
        %v2165 = vpop.f32.mrb[0].mxu0
        %v2166 = vadd.f32 0.0, %v2165
        %v2167 = vpop.f32.mrb[0].mxu0
        %v2168 = vadd.f32 0.0, %v2167
        %v2169 = vpop.f32.mrb[0].mxu0
        %v2170 = vadd.f32 0.0, %v2169
        %2171 = vmatprep.mubr.bf16.mxu0 0
        %2172 = vmatmul.mubr.bf16.gmra.mrb[0].mxu0 %v1868
        %v2173 = vpop.f32.mrb[0].mxu0
        %v2174 = vadd.f32 0.0, %v2173
        %v2175 = vpop.f32.mrb[0].mxu0
        %v2176 = vadd.f32 0.0, %v2175
        %v2177 = vpop.f32.mrb[0].mxu0
        %v2178 = vadd.f32 0.0, %v2177
        %v2179 = vpop.f32.mrb[0].mxu0
        %v2180 = vadd.f32 0.0, %v2179
        %2181 = vmatprep.mubr.bf16.mxu0 0
        %2182 = vmatmul.mubr.bf16.gmra.mrb[0].mxu0 %v1869
        %v2183 = vpop.f32.mrb[0].mxu0
        %v2184 = vadd.f32 0.0, %v2183
        %v2185 = vpop.f32.mrb[0].mxu0
        %v2186 = vadd.f32 0.0, %v2185
        %v2187 = vpop.f32.mrb[0].mxu0
        %v2188 = vadd.f32 0.0, %v2187
        %v2189 = vpop.f32.mrb[0].mxu0
        %v2190 = vadd.f32 0.0, %v2189
        %2191 = vmatprep.mubr.bf16.mxu0 0
        %2192 = vmatmul.mubr.bf16.gmra.mrb[0].mxu0 %v1870
        %v2193 = vpop.f32.mrb[0].mxu0
        %v2194 = vadd.f32 0.0, %v2193
        %v2195 = vpop.f32.mrb[0].mxu0
        %v2196 = vadd.f32 0.0, %v2195
        %v2197 = vpop.f32.mrb[0].mxu0
        %v2198 = vadd.f32 0.0, %v2197
        %v2199 = vpop.f32.mrb[0].mxu0
        %v2200 = vadd.f32 0.0, %v2199
        %2201 = vmatprep.mubr.bf16.mxu0 0
        %2202 = vmatmul.mubr.bf16.gmra.mrb[0].mxu0 %v1871
        %v2203 = vpop.f32.mrb[0].mxu0
        %v2204 = vadd.f32 0.0, %v2203
        %v2205 = vpop.f32.mrb[0].mxu0
        %v2206 = vadd.f32 0.0, %v2205
        %v2207 = vpop.f32.mrb[0].mxu0
        %v2208 = vadd.f32 0.0, %v2207
        %v2209 = vpop.f32.mrb[0].mxu0
        %v2210 = vadd.f32 0.0, %v2209
        %2211 = vmatprep.mubr.bf16.mxu0 0
        %2212 = vmatmul.mubr.bf16.gmra.mrb[0].mxu0 %v1872
        %v2213 = vpop.f32.mrb[0].mxu0
        %v2214 = vadd.f32 0.0, %v2213
        %v2215 = vpop.f32.mrb[0].mxu0
        %v2216 = vadd.f32 0.0, %v2215
        %v2217 = vpop.f32.mrb[0].mxu0
        %v2218 = vadd.f32 0.0, %v2217
        %v2219 = vpop.f32.mrb[0].mxu0
        %v2220 = vadd.f32 0.0, %v2219
        %2221 = vmatprep.mubr.bf16.mxu0 0
        %2222 = vmatmul.mubr.bf16.gmra.mrb[0].mxu0 %v1873
        %v2223 = vpop.f32.mrb[0].mxu0
        %v2224 = vadd.f32 0.0, %v2223
        %v2225 = vpop.f32.mrb[0].mxu0
        %v2226 = vadd.f32 0.0, %v2225
        %v2227 = vpop.f32.mrb[0].mxu0
        %v2228 = vadd.f32 0.0, %v2227
        %v2229 = vpop.f32.mrb[0].mxu0
        %v2230 = vadd.f32 0.0, %v2229
        %2231 = vmatprep.mubr.bf16.mxu0 0
        %2232 = vmatmul.mubr.bf16.gmra.mrb[0].mxu0 %v1874
        %v2233 = vpop.f32.mrb[0].mxu0
        %v2234 = vadd.f32 0.0, %v2233
        %v2235 = vpop.f32.mrb[0].mxu0
        %v2236 = vadd.f32 0.0, %v2235
        %v2237 = vpop.f32.mrb[0].mxu0
        %v2238 = vadd.f32 0.0, %v2237
        %v2239 = vpop.f32.mrb[0].mxu0
        %v2240 = vadd.f32 0.0, %v2239
        %2241 = vmatprep.mubr.bf16.mxu0 0
        %2242 = vmatmul.mubr.bf16.gmra.mrb[0].mxu0 %v1875
        %v2243 = vpop.f32.mrb[0].mxu0
        %v2244 = vadd.f32 0.0, %v2243
        %v2245 = vpop.f32.mrb[0].mxu0
        %v2246 = vadd.f32 0.0, %v2245
        %v2247 = vpop.f32.mrb[0].mxu0
        %v2248 = vadd.f32 0.0, %v2247
        %v2249 = vpop.f32.mrb[0].mxu0
        %v2250 = vadd.f32 0.0, %v2249
        %2251 = vmatprep.mubr.bf16.mxu0 0
        %2252 = vmatmul.mubr.bf16.gmra.mrb[0].mxu0 %v1876
        %v2253 = vpop.f32.mrb[0].mxu0
        %v2254 = vadd.f32 0.0, %v2253
        %v2255 = vpop.f32.mrb[0].mxu0
        %v2256 = vadd.f32 0.0, %v2255
        %v2257 = vpop.f32.mrb[0].mxu0
        %v2258 = vadd.f32 0.0, %v2257
        %v2259 = vpop.f32.mrb[0].mxu0
        %v2260 = vadd.f32 0.0, %v2259
        %2261 = vdwg.mxu0
        %2262 = vmatprep.subr.bf16.mxu0 %v2008
        %2263 = vmatpush1.bf16.msra.mxu0 %v2007
        %2264 = vmatprep.subr.bf16.mxu0 %v2012
        %2265 = vmatpush1.bf16.msra.mxu0 %v2011
        %2266 = vmatprep.subr.bf16.mxu0 %v2016
        %2267 = vmatpush1.bf16.msra.mxu0 %v2015
        %2268 = vmatprep.subr.bf16.mxu0 %v2020
        %2269 = vmatpush1.bf16.msra.mxu0 %v2019
        %2270 = vmatprep.subr.bf16.mxu0 %v2024
        %2271 = vmatpush1.bf16.msra.mxu0 %v2023
        %2272 = vmatprep.subr.bf16.mxu0 %v2028
        %2273 = vmatpush1.bf16.msra.mxu0 %v2027
        %2274 = vmatprep.subr.bf16.mxu0 %v2032
        %2275 = vmatpush1.bf16.msra.mxu0 %v2031
        %2276 = vmatprep.subr.bf16.mxu0 %v2036
        %2277 = vmatpush1.bf16.msra.mxu0 %v2035
        %2278 = vmatprep.subr.bf16.mxu0 0
        %2279 = vmatpush1.bf16.msra.mxu0 0
        %2280 = vmatprep.subr.bf16.mxu0 0
        %2281 = vmatpush1.bf16.msra.mxu0 0
        %2282 = vmatprep.subr.bf16.mxu0 0
        %2283 = vmatpush1.bf16.msra.mxu0 0
        %2284 = vmatprep.subr.bf16.mxu0 0
        %2285 = vmatpush1.bf16.msra.mxu0 0
        %2286 = vmatprep.subr.bf16.mxu0 0
        %2287 = vmatpush1.bf16.msra.mxu0 0
        %2288 = vmatprep.subr.bf16.mxu0 0
        %2289 = vmatpush1.bf16.msra.mxu0 0
        %2290 = vmatprep.subr.bf16.mxu0 0
        %2291 = vmatpush1.bf16.msra.mxu0 0
        %2292 = vmatprep.subr.bf16.mxu0 0
        %2293 = vmatpush1.bf16.msra.mxu0 0
        %2294 = vmatprep.mubr.bf16.mxu0 0
        %2295 = vmatmul.mubr.bf16.gmra.mrb[0].mxu0 %v1861
        %v2296 = vpop.f32.mrb[0].mxu0
        %v2297 = vadd.f32 0.0, %v2296
        %v2298 = vpop.f32.mrb[0].mxu0
        %v2299 = vadd.f32 0.0, %v2298
        %v2300 = vpop.f32.mrb[0].mxu0
        %v2301 = vadd.f32 0.0, %v2300
        %v2302 = vpop.f32.mrb[0].mxu0
        %v2303 = vadd.f32 0.0, %v2302
        %2304 = vmatprep.mubr.bf16.mxu0 0
        %2305 = vmatmul.mubr.bf16.gmra.mrb[0].mxu0 %v1862
        %v2306 = vpop.f32.mrb[0].mxu0
        %v2307 = vadd.f32 0.0, %v2306
        %v2308 = vpop.f32.mrb[0].mxu0
        %v2309 = vadd.f32 0.0, %v2308
        %v2310 = vpop.f32.mrb[0].mxu0
        %v2311 = vadd.f32 0.0, %v2310
        %v2312 = vpop.f32.mrb[0].mxu0
        %v2313 = vadd.f32 0.0, %v2312
        %2314 = vmatprep.mubr.bf16.mxu0 0
        %2315 = vmatmul.mubr.bf16.gmra.mrb[0].mxu0 %v1863
        %v2316 = vpop.f32.mrb[0].mxu0
        %v2317 = vadd.f32 0.0, %v2316
        %v2318 = vpop.f32.mrb[0].mxu0
        %v2319 = vadd.f32 0.0, %v2318
        %v2320 = vpop.f32.mrb[0].mxu0
        %v2321 = vadd.f32 0.0, %v2320
        %v2322 = vpop.f32.mrb[0].mxu0
        %v2323 = vadd.f32 0.0, %v2322
        %2324 = vmatprep.mubr.bf16.mxu0 0
        %2325 = vmatmul.mubr.bf16.gmra.mrb[0].mxu0 %v1864
        %v2326 = vpop.f32.mrb[0].mxu0
        %v2327 = vadd.f32 0.0, %v2326
        %v2328 = vpop.f32.mrb[0].mxu0
        %v2329 = vadd.f32 0.0, %v2328
        %v2330 = vpop.f32.mrb[0].mxu0
        %v2331 = vadd.f32 0.0, %v2330
        %v2332 = vpop.f32.mrb[0].mxu0
        %v2333 = vadd.f32 0.0, %v2332
        %2334 = vmatprep.mubr.bf16.mxu0 0
        %2335 = vmatmul.mubr.bf16.gmra.mrb[0].mxu0 %v1865
        %v2336 = vpop.f32.mrb[0].mxu0
        %v2337 = vadd.f32 0.0, %v2336
        %v2338 = vpop.f32.mrb[0].mxu0
        %v2339 = vadd.f32 0.0, %v2338
        %v2340 = vpop.f32.mrb[0].mxu0
        %v2341 = vadd.f32 0.0, %v2340
        %v2342 = vpop.f32.mrb[0].mxu0
        %v2343 = vadd.f32 0.0, %v2342
        %2344 = vmatprep.mubr.bf16.mxu0 0
        %2345 = vmatmul.mubr.bf16.gmra.mrb[0].mxu0 %v1866
        %v2346 = vpop.f32.mrb[0].mxu0
        %v2347 = vadd.f32 0.0, %v2346
        %v2348 = vpop.f32.mrb[0].mxu0
        %v2349 = vadd.f32 0.0, %v2348
        %v2350 = vpop.f32.mrb[0].mxu0
        %v2351 = vadd.f32 0.0, %v2350
        %v2352 = vpop.f32.mrb[0].mxu0
        %v2353 = vadd.f32 0.0, %v2352
        %2354 = vmatprep.mubr.bf16.mxu0 0
        %2355 = vmatmul.mubr.bf16.gmra.mrb[0].mxu0 %v1867
        %v2356 = vpop.f32.mrb[0].mxu0
        %v2357 = vadd.f32 0.0, %v2356
        %v2358 = vpop.f32.mrb[0].mxu0
        %v2359 = vadd.f32 0.0, %v2358
        %v2360 = vpop.f32.mrb[0].mxu0
        %v2361 = vadd.f32 0.0, %v2360
        %v2362 = vpop.f32.mrb[0].mxu0
        %v2363 = vadd.f32 0.0, %v2362
        %2364 = vmatprep.mubr.bf16.mxu0 0
        %2365 = vmatmul.mubr.bf16.gmra.mrb[0].mxu0 %v1868
        %v2366 = vpop.f32.mrb[0].mxu0
        %v2367 = vadd.f32 0.0, %v2366
        %v2368 = vpop.f32.mrb[0].mxu0
        %v2369 = vadd.f32 0.0, %v2368
        %v2370 = vpop.f32.mrb[0].mxu0
        %v2371 = vadd.f32 0.0, %v2370
        %v2372 = vpop.f32.mrb[0].mxu0
        %v2373 = vadd.f32 0.0, %v2372
        %2374 = vmatprep.mubr.bf16.mxu0 0
        %2375 = vmatmul.mubr.bf16.gmra.mrb[0].mxu0 %v1869
        %v2376 = vpop.f32.mrb[0].mxu0
        %v2377 = vadd.f32 0.0, %v2376
        %v2378 = vpop.f32.mrb[0].mxu0
        %v2379 = vadd.f32 0.0, %v2378
        %v2380 = vpop.f32.mrb[0].mxu0
        %v2381 = vadd.f32 0.0, %v2380
        %v2382 = vpop.f32.mrb[0].mxu0
        %v2383 = vadd.f32 0.0, %v2382
        %2384 = vmatprep.mubr.bf16.mxu0 0
        %2385 = vmatmul.mubr.bf16.gmra.mrb[0].mxu0 %v1870
        %v2386 = vpop.f32.mrb[0].mxu0
        %v2387 = vadd.f32 0.0, %v2386
        %v2388 = vpop.f32.mrb[0].mxu0
        %v2389 = vadd.f32 0.0, %v2388
        %v2390 = vpop.f32.mrb[0].mxu0
        %v2391 = vadd.f32 0.0, %v2390
        %v2392 = vpop.f32.mrb[0].mxu0
        %v2393 = vadd.f32 0.0, %v2392
        %2394 = vmatprep.mubr.bf16.mxu0 0
        %2395 = vmatmul.mubr.bf16.gmra.mrb[0].mxu0 %v1871
        %v2396 = vpop.f32.mrb[0].mxu0
        %v2397 = vadd.f32 0.0, %v2396
        %v2398 = vpop.f32.mrb[0].mxu0
        %v2399 = vadd.f32 0.0, %v2398
        %v2400 = vpop.f32.mrb[0].mxu0
        %v2401 = vadd.f32 0.0, %v2400
        %v2402 = vpop.f32.mrb[0].mxu0
        %v2403 = vadd.f32 0.0, %v2402
        %2404 = vmatprep.mubr.bf16.mxu0 0
        %2405 = vmatmul.mubr.bf16.gmra.mrb[0].mxu0 %v1872
        %v2406 = vpop.f32.mrb[0].mxu0
        %v2407 = vadd.f32 0.0, %v2406
        %v2408 = vpop.f32.mrb[0].mxu0
        %v2409 = vadd.f32 0.0, %v2408
        %v2410 = vpop.f32.mrb[0].mxu0
        %v2411 = vadd.f32 0.0, %v2410
        %v2412 = vpop.f32.mrb[0].mxu0
        %v2413 = vadd.f32 0.0, %v2412
        %2414 = vmatprep.mubr.bf16.mxu0 0
        %2415 = vmatmul.mubr.bf16.gmra.mrb[0].mxu0 %v1873
        %v2416 = vpop.f32.mrb[0].mxu0
        %v2417 = vadd.f32 0.0, %v2416
        %v2418 = vpop.f32.mrb[0].mxu0
        %v2419 = vadd.f32 0.0, %v2418
        %v2420 = vpop.f32.mrb[0].mxu0
        %v2421 = vadd.f32 0.0, %v2420
        %v2422 = vpop.f32.mrb[0].mxu0
        %v2423 = vadd.f32 0.0, %v2422
        %2424 = vmatprep.mubr.bf16.mxu0 0
        %2425 = vmatmul.mubr.bf16.gmra.mrb[0].mxu0 %v1874
        %v2426 = vpop.f32.mrb[0].mxu0
        %v2427 = vadd.f32 0.0, %v2426
        %v2428 = vpop.f32.mrb[0].mxu0
        %v2429 = vadd.f32 0.0, %v2428
        %v2430 = vpop.f32.mrb[0].mxu0
        %v2431 = vadd.f32 0.0, %v2430
        %v2432 = vpop.f32.mrb[0].mxu0
        %v2433 = vadd.f32 0.0, %v2432
        %2434 = vmatprep.mubr.bf16.mxu0 0
        %2435 = vmatmul.mubr.bf16.gmra.mrb[0].mxu0 %v1875
        %v2436 = vpop.f32.mrb[0].mxu0
        %v2437 = vadd.f32 0.0, %v2436
        %v2438 = vpop.f32.mrb[0].mxu0
        %v2439 = vadd.f32 0.0, %v2438
        %v2440 = vpop.f32.mrb[0].mxu0
        %v2441 = vadd.f32 0.0, %v2440
        %v2442 = vpop.f32.mrb[0].mxu0
        %v2443 = vadd.f32 0.0, %v2442
        %2444 = vmatprep.mubr.bf16.mxu0 0
        %2445 = vmatmul.mubr.bf16.gmra.mrb[0].mxu0 %v1876
        %v2446 = vpop.f32.mrb[0].mxu0
        %v2447 = vadd.f32 0.0, %v2446
        %v2448 = vpop.f32.mrb[0].mxu0
        %v2449 = vadd.f32 0.0, %v2448
        %v2450 = vpop.f32.mrb[0].mxu0
        %v2451 = vadd.f32 0.0, %v2450
        %v2452 = vpop.f32.mrb[0].mxu0
        %v2453 = vadd.f32 0.0, %v2452
        %2454 = vdwg.mxu0
        %v2455 = vxor.u32 %v2104, 2147483648
        %v2456 = vxor.u32 %v2106, 2147483648
        %v2457 = vxor.u32 %v2108, 2147483648
        %v2458 = vxor.u32 %v2110, 2147483648
        %v2459 = vxor.u32 %v2114, 2147483648
        %v2460 = vxor.u32 %v2116, 2147483648
        %v2461 = vxor.u32 %v2118, 2147483648
        %v2462 = vxor.u32 %v2120, 2147483648
        %v2463 = vxor.u32 %v2124, 2147483648
        %v2464 = vxor.u32 %v2126, 2147483648
        %v2465 = vxor.u32 %v2128, 2147483648
        %v2466 = vxor.u32 %v2130, 2147483648
        %v2467 = vxor.u32 %v2134, 2147483648
        %v2468 = vxor.u32 %v2136, 2147483648
        %v2469 = vxor.u32 %v2138, 2147483648
        %v2470 = vxor.u32 %v2140, 2147483648
        %v2471 = vxor.u32 %v2144, 2147483648
        %v2472 = vxor.u32 %v2146, 2147483648
        %v2473 = vxor.u32 %v2148, 2147483648
        %v2474 = vxor.u32 %v2150, 2147483648
        %v2475 = vxor.u32 %v2154, 2147483648
        %v2476 = vxor.u32 %v2156, 2147483648
        %v2477 = vxor.u32 %v2158, 2147483648
        %v2478 = vxor.u32 %v2160, 2147483648
        %v2479 = vxor.u32 %v2164, 2147483648
        %v2480 = vxor.u32 %v2166, 2147483648
        %v2481 = vxor.u32 %v2168, 2147483648
        %v2482 = vxor.u32 %v2170, 2147483648
        %v2483 = vxor.u32 %v2174, 2147483648
        %v2484 = vxor.u32 %v2176, 2147483648
        %v2485 = vxor.u32 %v2178, 2147483648
        %v2486 = vxor.u32 %v2180, 2147483648
        %v2487 = vxor.u32 %v2184, 2147483648
        %v2488 = vxor.u32 %v2186, 2147483648
        %v2489 = vxor.u32 %v2188, 2147483648
        %v2490 = vxor.u32 %v2190, 2147483648
        %v2491 = vxor.u32 %v2194, 2147483648
        %v2492 = vxor.u32 %v2196, 2147483648
        %v2493 = vxor.u32 %v2198, 2147483648
        %v2494 = vxor.u32 %v2200, 2147483648
        %v2495 = vxor.u32 %v2204, 2147483648
        %v2496 = vxor.u32 %v2206, 2147483648
        %v2497 = vxor.u32 %v2208, 2147483648
        %v2498 = vxor.u32 %v2210, 2147483648
        %v2499 = vxor.u32 %v2214, 2147483648
        %v2500 = vxor.u32 %v2216, 2147483648
        %v2501 = vxor.u32 %v2218, 2147483648
        %v2502 = vxor.u32 %v2220, 2147483648
        %v2503 = vxor.u32 %v2224, 2147483648
        %v2504 = vxor.u32 %v2226, 2147483648
        %v2505 = vxor.u32 %v2228, 2147483648
        %v2506 = vxor.u32 %v2230, 2147483648
        %v2507 = vxor.u32 %v2234, 2147483648
        %v2508 = vxor.u32 %v2236, 2147483648
        %v2509 = vxor.u32 %v2238, 2147483648
        %v2510 = vxor.u32 %v2240, 2147483648
        %v2511 = vxor.u32 %v2244, 2147483648
        %v2512 = vxor.u32 %v2246, 2147483648
        %v2513 = vxor.u32 %v2248, 2147483648
        %v2514 = vxor.u32 %v2250, 2147483648
        %v2515 = vxor.u32 %v2254, 2147483648
        %v2516 = vxor.u32 %v2256, 2147483648
        %v2517 = vxor.u32 %v2258, 2147483648
        %v2518 = vxor.u32 %v2260, 2147483648
        %v2519 = vmul.f32 %v2455, 1.442695
        %v2520 = vpow.pop %v2519
        %v2521 = vmul.f32 %v2456, 1.442695
        %v2522 = vpow.pop %v2521
        %v2523 = vmul.f32 %v2457, 1.442695
        %v2524 = vpow.pop %v2523
        %v2525 = vmul.f32 %v2458, 1.442695
        %v2526 = vpow.pop %v2525
        %v2527 = vmul.f32 %v2459, 1.442695
        %v2528 = vpow.pop %v2527
        %v2529 = vmul.f32 %v2460, 1.442695
        %v2530 = vpow.pop %v2529
        %v2531 = vmul.f32 %v2461, 1.442695
        %v2532 = vpow.pop %v2531
        %v2533 = vmul.f32 %v2462, 1.442695
        %v2534 = vpow.pop %v2533
        %v2535 = vmul.f32 %v2463, 1.442695
        %v2536 = vpow.pop %v2535
        %v2537 = vmul.f32 %v2464, 1.442695
        %v2538 = vpow.pop %v2537
        %v2539 = vmul.f32 %v2465, 1.442695
        %v2540 = vpow.pop %v2539
        %v2541 = vmul.f32 %v2466, 1.442695
        %v2542 = vpow.pop %v2541
        %v2543 = vmul.f32 %v2467, 1.442695
        %v2544 = vpow.pop %v2543
        %v2545 = vmul.f32 %v2468, 1.442695
        %v2546 = vpow.pop %v2545
        %v2547 = vmul.f32 %v2469, 1.442695
        %v2548 = vpow.pop %v2547
        %v2549 = vmul.f32 %v2470, 1.442695
        %v2550 = vpow.pop %v2549
        %v2551 = vmul.f32 %v2471, 1.442695
        %v2552 = vpow.pop %v2551
        %v2553 = vmul.f32 %v2472, 1.442695
        %v2554 = vpow.pop %v2553
        %v2555 = vmul.f32 %v2473, 1.442695
        %v2556 = vpow.pop %v2555
        %v2557 = vmul.f32 %v2474, 1.442695
        %v2558 = vpow.pop %v2557
        %v2559 = vmul.f32 %v2475, 1.442695
        %v2560 = vpow.pop %v2559
        %v2561 = vmul.f32 %v2476, 1.442695
        %v2562 = vpow.pop %v2561
        %v2563 = vmul.f32 %v2477, 1.442695
        %v2564 = vpow.pop %v2563
        %v2565 = vmul.f32 %v2478, 1.442695
        %v2566 = vpow.pop %v2565
        %v2567 = vmul.f32 %v2479, 1.442695
        %v2568 = vpow.pop %v2567
        %v2569 = vmul.f32 %v2480, 1.442695
        %v2570 = vpow.pop %v2569
        %v2571 = vmul.f32 %v2481, 1.442695
        %v2572 = vpow.pop %v2571
        %v2573 = vmul.f32 %v2482, 1.442695
        %v2574 = vpow.pop %v2573
        %v2575 = vmul.f32 %v2483, 1.442695
        %v2576 = vpow.pop %v2575
        %v2577 = vmul.f32 %v2484, 1.442695
        %v2578 = vpow.pop %v2577
        %v2579 = vmul.f32 %v2485, 1.442695
        %v2580 = vpow.pop %v2579
        %v2581 = vmul.f32 %v2486, 1.442695
        %v2582 = vpow.pop %v2581
        %v2583 = vmul.f32 %v2487, 1.442695
        %v2584 = vpow.pop %v2583
        %v2585 = vmul.f32 %v2488, 1.442695
        %v2586 = vpow.pop %v2585
        %v2587 = vmul.f32 %v2489, 1.442695
        %v2588 = vpow.pop %v2587
        %v2589 = vmul.f32 %v2490, 1.442695
        %v2590 = vpow.pop %v2589
        %v2591 = vmul.f32 %v2491, 1.442695
        %v2592 = vpow.pop %v2591
        %v2593 = vmul.f32 %v2492, 1.442695
        %v2594 = vpow.pop %v2593
        %v2595 = vmul.f32 %v2493, 1.442695
        %v2596 = vpow.pop %v2595
        %v2597 = vmul.f32 %v2494, 1.442695
        %v2598 = vpow.pop %v2597
        %v2599 = vmul.f32 %v2495, 1.442695
        %v2600 = vpow.pop %v2599
        %v2601 = vmul.f32 %v2496, 1.442695
        %v2602 = vpow.pop %v2601
        %v2603 = vmul.f32 %v2497, 1.442695
        %v2604 = vpow.pop %v2603
        %v2605 = vmul.f32 %v2498, 1.442695
        %v2606 = vpow.pop %v2605
        %v2607 = vmul.f32 %v2499, 1.442695
        %v2608 = vpow.pop %v2607
        %v2609 = vmul.f32 %v2500, 1.442695
        %v2610 = vpow.pop %v2609
        %v2611 = vmul.f32 %v2501, 1.442695
        %v2612 = vpow.pop %v2611
        %v2613 = vmul.f32 %v2502, 1.442695
        %v2614 = vpow.pop %v2613
        %v2615 = vmul.f32 %v2503, 1.442695
        %v2616 = vpow.pop %v2615
        %v2617 = vmul.f32 %v2504, 1.442695
        %v2618 = vpow.pop %v2617
        %v2619 = vmul.f32 %v2505, 1.442695
        %v2620 = vpow.pop %v2619
        %v2621 = vmul.f32 %v2506, 1.442695
        %v2622 = vpow.pop %v2621
        %v2623 = vmul.f32 %v2507, 1.442695
        %v2624 = vpow.pop %v2623
        %v2625 = vmul.f32 %v2508, 1.442695
        %v2626 = vpow.pop %v2625
        %v2627 = vmul.f32 %v2509, 1.442695
        %v2628 = vpow.pop %v2627
        %v2629 = vmul.f32 %v2510, 1.442695
        %v2630 = vpow.pop %v2629
        %v2631 = vmul.f32 %v2511, 1.442695
        %v2632 = vpow.pop %v2631
        %v2633 = vmul.f32 %v2512, 1.442695
        %v2634 = vpow.pop %v2633
        %v2635 = vmul.f32 %v2513, 1.442695
        %v2636 = vpow.pop %v2635
        %v2637 = vmul.f32 %v2514, 1.442695
        %v2638 = vpow.pop %v2637
        %v2639 = vmul.f32 %v2515, 1.442695
        %v2640 = vpow.pop %v2639
        %v2641 = vmul.f32 %v2516, 1.442695
        %v2642 = vpow.pop %v2641
        %v2643 = vmul.f32 %v2517, 1.442695
        %v2644 = vpow.pop %v2643
        %v2645 = vmul.f32 %v2518, 1.442695
        %v2646 = vpow.pop %v2645
        %v2647 = vadd.f32 %v2520, 1.0
        %v2648 = vadd.f32 %v2522, 1.0
        %v2649 = vadd.f32 %v2524, 1.0
        %v2650 = vadd.f32 %v2526, 1.0
        %v2651 = vadd.f32 %v2528, 1.0
        %v2652 = vadd.f32 %v2530, 1.0
        %v2653 = vadd.f32 %v2532, 1.0
        %v2654 = vadd.f32 %v2534, 1.0
        %v2655 = vadd.f32 %v2536, 1.0
        %v2656 = vadd.f32 %v2538, 1.0
        %v2657 = vadd.f32 %v2540, 1.0
        %v2658 = vadd.f32 %v2542, 1.0
        %v2659 = vadd.f32 %v2544, 1.0
        %v2660 = vadd.f32 %v2546, 1.0
        %v2661 = vadd.f32 %v2548, 1.0
        %v2662 = vadd.f32 %v2550, 1.0
        %v2663 = vadd.f32 %v2552, 1.0
        %v2664 = vadd.f32 %v2554, 1.0
        %v2665 = vadd.f32 %v2556, 1.0
        %v2666 = vadd.f32 %v2558, 1.0
        %v2667 = vadd.f32 %v2560, 1.0
        %v2668 = vadd.f32 %v2562, 1.0
        %v2669 = vadd.f32 %v2564, 1.0
        %v2670 = vadd.f32 %v2566, 1.0
        %v2671 = vadd.f32 %v2568, 1.0
        %v2672 = vadd.f32 %v2570, 1.0
        %v2673 = vadd.f32 %v2572, 1.0
        %v2674 = vadd.f32 %v2574, 1.0
        %v2675 = vadd.f32 %v2576, 1.0
        %v2676 = vadd.f32 %v2578, 1.0
        %v2677 = vadd.f32 %v2580, 1.0
        %v2678 = vadd.f32 %v2582, 1.0
        %v2679 = vadd.f32 %v2584, 1.0
        %v2680 = vadd.f32 %v2586, 1.0
        %v2681 = vadd.f32 %v2588, 1.0
        %v2682 = vadd.f32 %v2590, 1.0
        %v2683 = vadd.f32 %v2592, 1.0
        %v2684 = vadd.f32 %v2594, 1.0
        %v2685 = vadd.f32 %v2596, 1.0
        %v2686 = vadd.f32 %v2598, 1.0
        %v2687 = vadd.f32 %v2600, 1.0
        %v2688 = vadd.f32 %v2602, 1.0
        %v2689 = vadd.f32 %v2604, 1.0
        %v2690 = vadd.f32 %v2606, 1.0
        %v2691 = vadd.f32 %v2608, 1.0
        %v2692 = vadd.f32 %v2610, 1.0
        %v2693 = vadd.f32 %v2612, 1.0
        %v2694 = vadd.f32 %v2614, 1.0
        %v2695 = vadd.f32 %v2616, 1.0
        %v2696 = vadd.f32 %v2618, 1.0
        %v2697 = vadd.f32 %v2620, 1.0
        %v2698 = vadd.f32 %v2622, 1.0
        %v2699 = vadd.f32 %v2624, 1.0
        %v2700 = vadd.f32 %v2626, 1.0
        %v2701 = vadd.f32 %v2628, 1.0
        %v2702 = vadd.f32 %v2630, 1.0
        %v2703 = vadd.f32 %v2632, 1.0
        %v2704 = vadd.f32 %v2634, 1.0
        %v2705 = vadd.f32 %v2636, 1.0
        %v2706 = vadd.f32 %v2638, 1.0
        %v2707 = vadd.f32 %v2640, 1.0
        %v2708 = vadd.f32 %v2642, 1.0
        %v2709 = vadd.f32 %v2644, 1.0
        %v2710 = vadd.f32 %v2646, 1.0
        %v2711 = vrcp.pop %v2647
        %v2712 = vmul.f32 1.0, %v2711
        %v2713 = vrcp.pop %v2648
        %v2714 = vmul.f32 1.0, %v2713
        %v2715 = vrcp.pop %v2649
        %v2716 = vmul.f32 1.0, %v2715
        %v2717 = vrcp.pop %v2650
        %v2718 = vmul.f32 1.0, %v2717
        %v2719 = vrcp.pop %v2651
        %v2720 = vmul.f32 1.0, %v2719
        %v2721 = vrcp.pop %v2652
        %v2722 = vmul.f32 1.0, %v2721
        %v2723 = vrcp.pop %v2653
        %v2724 = vmul.f32 1.0, %v2723
        %v2725 = vrcp.pop %v2654
        %v2726 = vmul.f32 1.0, %v2725
        %v2727 = vrcp.pop %v2655
        %v2728 = vmul.f32 1.0, %v2727
        %v2729 = vrcp.pop %v2656
        %v2730 = vmul.f32 1.0, %v2729
        %v2731 = vrcp.pop %v2657
        %v2732 = vmul.f32 1.0, %v2731
        %v2733 = vrcp.pop %v2658
        %v2734 = vmul.f32 1.0, %v2733
        %v2735 = vrcp.pop %v2659
        %v2736 = vmul.f32 1.0, %v2735
        %v2737 = vrcp.pop %v2660
        %v2738 = vmul.f32 1.0, %v2737
        %v2739 = vrcp.pop %v2661
        %v2740 = vmul.f32 1.0, %v2739
        %v2741 = vrcp.pop %v2662
        %v2742 = vmul.f32 1.0, %v2741
        %v2743 = vrcp.pop %v2663
        %v2744 = vmul.f32 1.0, %v2743
        %v2745 = vrcp.pop %v2664
        %v2746 = vmul.f32 1.0, %v2745
        %v2747 = vrcp.pop %v2665
        %v2748 = vmul.f32 1.0, %v2747
        %v2749 = vrcp.pop %v2666
        %v2750 = vmul.f32 1.0, %v2749
        %v2751 = vrcp.pop %v2667
        %v2752 = vmul.f32 1.0, %v2751
        %v2753 = vrcp.pop %v2668
        %v2754 = vmul.f32 1.0, %v2753
        %v2755 = vrcp.pop %v2669
        %v2756 = vmul.f32 1.0, %v2755
        %v2757 = vrcp.pop %v2670
        %v2758 = vmul.f32 1.0, %v2757
        %v2759 = vrcp.pop %v2671
        %v2760 = vmul.f32 1.0, %v2759
        %v2761 = vrcp.pop %v2672
        %v2762 = vmul.f32 1.0, %v2761
        %v2763 = vrcp.pop %v2673
        %v2764 = vmul.f32 1.0, %v2763
        %v2765 = vrcp.pop %v2674
        %v2766 = vmul.f32 1.0, %v2765
        %v2767 = vrcp.pop %v2675
        %v2768 = vmul.f32 1.0, %v2767
        %v2769 = vrcp.pop %v2676
        %v2770 = vmul.f32 1.0, %v2769
        %v2771 = vrcp.pop %v2677
        %v2772 = vmul.f32 1.0, %v2771
        %v2773 = vrcp.pop %v2678
        %v2774 = vmul.f32 1.0, %v2773
        %v2775 = vrcp.pop %v2679
        %v2776 = vmul.f32 1.0, %v2775
        %v2777 = vrcp.pop %v2680
        %v2778 = vmul.f32 1.0, %v2777
        %v2779 = vrcp.pop %v2681
        %v2780 = vmul.f32 1.0, %v2779
        %v2781 = vrcp.pop %v2682
        %v2782 = vmul.f32 1.0, %v2781
        %v2783 = vrcp.pop %v2683
        %v2784 = vmul.f32 1.0, %v2783
        %v2785 = vrcp.pop %v2684
        %v2786 = vmul.f32 1.0, %v2785
        %v2787 = vrcp.pop %v2685
        %v2788 = vmul.f32 1.0, %v2787
        %v2789 = vrcp.pop %v2686
        %v2790 = vmul.f32 1.0, %v2789
        %v2791 = vrcp.pop %v2687
        %v2792 = vmul.f32 1.0, %v2791
        %v2793 = vrcp.pop %v2688
        %v2794 = vmul.f32 1.0, %v2793
        %v2795 = vrcp.pop %v2689
        %v2796 = vmul.f32 1.0, %v2795
        %v2797 = vrcp.pop %v2690
        %v2798 = vmul.f32 1.0, %v2797
        %v2799 = vrcp.pop %v2691
        %v2800 = vmul.f32 1.0, %v2799
        %v2801 = vrcp.pop %v2692
        %v2802 = vmul.f32 1.0, %v2801
        %v2803 = vrcp.pop %v2693
        %v2804 = vmul.f32 1.0, %v2803
        %v2805 = vrcp.pop %v2694
        %v2806 = vmul.f32 1.0, %v2805
        %v2807 = vrcp.pop %v2695
        %v2808 = vmul.f32 1.0, %v2807
        %v2809 = vrcp.pop %v2696
        %v2810 = vmul.f32 1.0, %v2809
        %v2811 = vrcp.pop %v2697
        %v2812 = vmul.f32 1.0, %v2811
        %v2813 = vrcp.pop %v2698
        %v2814 = vmul.f32 1.0, %v2813
        %v2815 = vrcp.pop %v2699
        %v2816 = vmul.f32 1.0, %v2815
        %v2817 = vrcp.pop %v2700
        %v2818 = vmul.f32 1.0, %v2817
        %v2819 = vrcp.pop %v2701
        %v2820 = vmul.f32 1.0, %v2819
        %v2821 = vrcp.pop %v2702
        %v2822 = vmul.f32 1.0, %v2821
        %v2823 = vrcp.pop %v2703
        %v2824 = vmul.f32 1.0, %v2823
        %v2825 = vrcp.pop %v2704
        %v2826 = vmul.f32 1.0, %v2825
        %v2827 = vrcp.pop %v2705
        %v2828 = vmul.f32 1.0, %v2827
        %v2829 = vrcp.pop %v2706
        %v2830 = vmul.f32 1.0, %v2829
        %v2831 = vrcp.pop %v2707
        %v2832 = vmul.f32 1.0, %v2831
        %v2833 = vrcp.pop %v2708
        %v2834 = vmul.f32 1.0, %v2833
        %v2835 = vrcp.pop %v2709
        %v2836 = vmul.f32 1.0, %v2835
        %v2837 = vrcp.pop %v2710
        %v2838 = vmul.f32 1.0, %v2837
        %v2839 = vmul.f32 %v2104, %v2712
        %v2840 = vmul.f32 %v2106, %v2714
        %v2841 = vmul.f32 %v2108, %v2716
        %v2842 = vmul.f32 %v2110, %v2718
        %v2843 = vmul.f32 %v2114, %v2720
        %v2844 = vmul.f32 %v2116, %v2722
        %v2845 = vmul.f32 %v2118, %v2724
        %v2846 = vmul.f32 %v2120, %v2726
        %v2847 = vmul.f32 %v2124, %v2728
        %v2848 = vmul.f32 %v2126, %v2730
        %v2849 = vmul.f32 %v2128, %v2732
        %v2850 = vmul.f32 %v2130, %v2734
        %v2851 = vmul.f32 %v2134, %v2736
        %v2852 = vmul.f32 %v2136, %v2738
        %v2853 = vmul.f32 %v2138, %v2740
        %v2854 = vmul.f32 %v2140, %v2742
        %v2855 = vmul.f32 %v2144, %v2744
        %v2856 = vmul.f32 %v2146, %v2746
        %v2857 = vmul.f32 %v2148, %v2748
        %v2858 = vmul.f32 %v2150, %v2750
        %v2859 = vmul.f32 %v2154, %v2752
        %v2860 = vmul.f32 %v2156, %v2754
        %v2861 = vmul.f32 %v2158, %v2756
        %v2862 = vmul.f32 %v2160, %v2758
        %v2863 = vmul.f32 %v2164, %v2760
        %v2864 = vmul.f32 %v2166, %v2762
        %v2865 = vmul.f32 %v2168, %v2764
        %v2866 = vmul.f32 %v2170, %v2766
        %v2867 = vmul.f32 %v2174, %v2768
        %v2868 = vmul.f32 %v2176, %v2770
        %v2869 = vmul.f32 %v2178, %v2772
        %v2870 = vmul.f32 %v2180, %v2774
        %v2871 = vmul.f32 %v2184, %v2776
        %v2872 = vmul.f32 %v2186, %v2778
        %v2873 = vmul.f32 %v2188, %v2780
        %v2874 = vmul.f32 %v2190, %v2782
        %v2875 = vmul.f32 %v2194, %v2784
        %v2876 = vmul.f32 %v2196, %v2786
        %v2877 = vmul.f32 %v2198, %v2788
        %v2878 = vmul.f32 %v2200, %v2790
        %v2879 = vmul.f32 %v2204, %v2792
        %v2880 = vmul.f32 %v2206, %v2794
        %v2881 = vmul.f32 %v2208, %v2796
        %v2882 = vmul.f32 %v2210, %v2798
        %v2883 = vmul.f32 %v2214, %v2800
        %v2884 = vmul.f32 %v2216, %v2802
        %v2885 = vmul.f32 %v2218, %v2804
        %v2886 = vmul.f32 %v2220, %v2806
        %v2887 = vmul.f32 %v2224, %v2808
        %v2888 = vmul.f32 %v2226, %v2810
        %v2889 = vmul.f32 %v2228, %v2812
        %v2890 = vmul.f32 %v2230, %v2814
        %v2891 = vmul.f32 %v2234, %v2816
        %v2892 = vmul.f32 %v2236, %v2818
        %v2893 = vmul.f32 %v2238, %v2820
        %v2894 = vmul.f32 %v2240, %v2822
        %v2895 = vmul.f32 %v2244, %v2824
        %v2896 = vmul.f32 %v2246, %v2826
        %v2897 = vmul.f32 %v2248, %v2828
        %v2898 = vmul.f32 %v2250, %v2830
        %v2899 = vmul.f32 %v2254, %v2832
        %v2900 = vmul.f32 %v2256, %v2834
        %v2901 = vmul.f32 %v2258, %v2836
        %v2902 = vmul.f32 %v2260, %v2838
        %v2903 = vmul.f32 %v2839, %v2297
        %v2904 = vmul.f32 %v2840, %v2299
        %v2905 = vmul.f32 %v2841, %v2301
        %v2906 = vmul.f32 %v2842, %v2303
        %v2907 = vmul.f32 %v2843, %v2307
        %v2908 = vmul.f32 %v2844, %v2309
        %v2909 = vmul.f32 %v2845, %v2311
        %v2910 = vmul.f32 %v2846, %v2313
        %v2911 = vmul.f32 %v2847, %v2317
        %v2912 = vmul.f32 %v2848, %v2319
        %v2913 = vmul.f32 %v2849, %v2321
        %v2914 = vmul.f32 %v2850, %v2323
        %v2915 = vmul.f32 %v2851, %v2327
        %v2916 = vmul.f32 %v2852, %v2329
        %v2917 = vmul.f32 %v2853, %v2331
        %v2918 = vmul.f32 %v2854, %v2333
        %v2919 = vmul.f32 %v2855, %v2337
        %v2920 = vmul.f32 %v2856, %v2339
        %v2921 = vmul.f32 %v2857, %v2341
        %v2922 = vmul.f32 %v2858, %v2343
        %v2923 = vmul.f32 %v2859, %v2347
        %v2924 = vmul.f32 %v2860, %v2349
        %v2925 = vmul.f32 %v2861, %v2351
        %v2926 = vmul.f32 %v2862, %v2353
        %v2927 = vmul.f32 %v2863, %v2357
        %v2928 = vmul.f32 %v2864, %v2359
        %v2929 = vmul.f32 %v2865, %v2361
        %v2930 = vmul.f32 %v2866, %v2363
        %v2931 = vmul.f32 %v2867, %v2367
        %v2932 = vmul.f32 %v2868, %v2369
        %v2933 = vmul.f32 %v2869, %v2371
        %v2934 = vmul.f32 %v2870, %v2373
        %v2935 = vmul.f32 %v2871, %v2377
        %v2936 = vmul.f32 %v2872, %v2379
        %v2937 = vmul.f32 %v2873, %v2381
        %v2938 = vmul.f32 %v2874, %v2383
        %v2939 = vmul.f32 %v2875, %v2387
        %v2940 = vmul.f32 %v2876, %v2389
        %v2941 = vmul.f32 %v2877, %v2391
        %v2942 = vmul.f32 %v2878, %v2393
        %v2943 = vmul.f32 %v2879, %v2397
        %v2944 = vmul.f32 %v2880, %v2399
        %v2945 = vmul.f32 %v2881, %v2401
        %v2946 = vmul.f32 %v2882, %v2403
        %v2947 = vmul.f32 %v2883, %v2407
        %v2948 = vmul.f32 %v2884, %v2409
        %v2949 = vmul.f32 %v2885, %v2411
        %v2950 = vmul.f32 %v2886, %v2413
        %v2951 = vmul.f32 %v2887, %v2417
        %v2952 = vmul.f32 %v2888, %v2419
        %v2953 = vmul.f32 %v2889, %v2421
        %v2954 = vmul.f32 %v2890, %v2423
        %v2955 = vmul.f32 %v2891, %v2427
        %v2956 = vmul.f32 %v2892, %v2429
        %v2957 = vmul.f32 %v2893, %v2431
        %v2958 = vmul.f32 %v2894, %v2433
        %v2959 = vmul.f32 %v2895, %v2437
        %v2960 = vmul.f32 %v2896, %v2439
        %v2961 = vmul.f32 %v2897, %v2441
        %v2962 = vmul.f32 %v2898, %v2443
        %v2963 = vmul.f32 %v2899, %v2447
        %v2964 = vmul.f32 %v2900, %v2449
        %v2965 = vmul.f32 %v2901, %v2451
        %v2966 = vmul.f32 %v2902, %v2453
        %v2967 = vpack.c.bf16 %v486, %v485
        %v2968 = vpack.c.bf16 %v488, %v487
        %v2969 = vpack.c.bf16 %v490, %v489
        %v2970 = vpack.c.bf16 %v492, %v491
        %v2971 = vpack.c.bf16 %v494, %v493
        %v2972 = vpack.c.bf16 %v496, %v495
        %v2973 = vpack.c.bf16 %v498, %v497
        %v2974 = vpack.c.bf16 %v500, %v499
        %v2975 = vpack.c.bf16 %v502, %v501
        %v2976 = vpack.c.bf16 %v504, %v503
        %v2977 = vpack.c.bf16 %v506, %v505
        %v2978 = vpack.c.bf16 %v508, %v507
        %v2979 = vpack.c.bf16 %v510, %v509
        %v2980 = vpack.c.bf16 %v512, %v511
        %v2981 = vpack.c.bf16 %v514, %v513
        %v2982 = vpack.c.bf16 %v516, %v515
        %v2983 = vld [vmem:[#allocation11] sm:$0xf]
        %v2984 = vld [vmem:[#allocation11 + $0x4] sm:$0xf]
        %v2985 = vld [vmem:[#allocation11 + $0x8] sm:$0xf]
        %v2986 = vld [vmem:[#allocation11 + $0xc] sm:$0xf]
        %v2987 = vld [vmem:[#allocation11 + $0x10] sm:$0xf]
        %v2988 = vld [vmem:[#allocation11 + $0x14] sm:$0xf]
        %v2989 = vld [vmem:[#allocation11 + $0x18] sm:$0xf]
        %v2990 = vld [vmem:[#allocation11 + $0x1c] sm:$0xf]
        %v2991 = vld [vmem:[#allocation11 + $0x20] sm:$0xf]
        %v2992 = vld [vmem:[#allocation11 + $0x24] sm:$0xf]
        %v2993 = vld [vmem:[#allocation11 + $0x28] sm:$0xf]
        %v2994 = vld [vmem:[#allocation11 + $0x2c] sm:$0xf]
        %v2995 = vld [vmem:[#allocation11 + $0x30] sm:$0xf]
        %v2996 = vld [vmem:[#allocation11 + $0x34] sm:$0xf]
        %v2997 = vld [vmem:[#allocation11 + $0x38] sm:$0xf]
        %v2998 = vld [vmem:[#allocation11 + $0x3c] sm:$0xf]
        %v2999 = vld [vmem:[%s4] sm:$0x1]
        %v3001 = vlaneseq
        %v3002 = vshrl.u32 %v3001, 7
        %v3003 = vsub.s32 0, %v3002
        %v3004 = vrot.slane %v2999, %v3003
        %v3022 = vunpack.c.l.b16 %v2983
        %v3023 = vunpack.c.l.b16 %v2984
        %v3024 = vunpack.c.l.b16 %v2985
        %v3025 = vunpack.c.l.b16 %v2986
        %v3026 = vunpack.c.l.b16 %v2987
        %v3027 = vunpack.c.l.b16 %v2988
        %v3028 = vunpack.c.l.b16 %v2989
        %v3029 = vunpack.c.l.b16 %v2990
        %v3030 = vunpack.c.l.b16 %v2991
        %v3031 = vunpack.c.l.b16 %v2992
        %v3032 = vunpack.c.l.b16 %v2993
        %v3033 = vunpack.c.l.b16 %v2994
        %v3034 = vunpack.c.l.b16 %v2995
        %v3035 = vunpack.c.l.b16 %v2996
        %v3036 = vunpack.c.l.b16 %v2997
        %v3037 = vunpack.c.l.b16 %v2998
        %v3038 = vpack.c.b16 %v3023, %v3022
        %v3039 = vpack.c.b16 %v3025, %v3024
        %v3040 = vpack.c.b16 %v3027, %v3026
        %v3041 = vpack.c.b16 %v3029, %v3028
        %v3042 = vpack.c.b16 %v3031, %v3030
        %v3043 = vpack.c.b16 %v3033, %v3032
        %v3044 = vpack.c.b16 %v3035, %v3034
        %v3045 = vpack.c.b16 %v3037, %v3036
        %3054 = vmatprep.subr.bf16.mxu0 0
        %3055 = vmatpush1.bf16.msra.mxu0 %v3038
        %3056 = vmatprep.subr.bf16.mxu0 0
        %3057 = vmatpush1.bf16.msra.mxu0 %v3039
        %3058 = vmatprep.subr.bf16.mxu0 0
        %3059 = vmatpush1.bf16.msra.mxu0 %v3040
        %3060 = vmatprep.subr.bf16.mxu0 0
        %3061 = vmatpush1.bf16.msra.mxu0 %v3041
        %3062 = vmatprep.subr.bf16.mxu0 0
        %3063 = vmatpush1.bf16.msra.mxu0 %v3042
        %3064 = vmatprep.subr.bf16.mxu0 0
        %3065 = vmatpush1.bf16.msra.mxu0 %v3043
        %3066 = vmatprep.subr.bf16.mxu0 0
        %3067 = vmatpush1.bf16.msra.mxu0 %v3044
        %3068 = vmatprep.subr.bf16.mxu0 0
        %3069 = vmatpush1.bf16.msra.mxu0 %v3045
        %3070 = vmatprep.subr.bf16.mxu0 0
        %3071 = vmatpush1.bf16.msra.mxu0 0
        %3072 = vmatprep.subr.bf16.mxu0 0
        %3073 = vmatpush1.bf16.msra.mxu0 0
        %3074 = vmatprep.subr.bf16.mxu0 0
        %3075 = vmatpush1.bf16.msra.mxu0 0
        %3076 = vmatprep.subr.bf16.mxu0 0
        %3077 = vmatpush1.bf16.msra.mxu0 0
        %3078 = vmatprep.subr.bf16.mxu0 0
        %3079 = vmatpush1.bf16.msra.mxu0 0
        %3080 = vmatprep.subr.bf16.mxu0 0
        %3081 = vmatpush1.bf16.msra.mxu0 0
        %3082 = vmatprep.subr.bf16.mxu0 0
        %3083 = vmatpush1.bf16.msra.mxu0 0
        %3084 = vmatprep.subr.bf16.mxu0 0
        %3085 = vmatpush1.bf16.msra.mxu0 0
        %3086 = vmatprep.mubr.bf16.mxu0 0
        %3087 = vmatmul.mubr.bf16.gmra.mrb[0].mxu0 %v2967
        %v3088 = vpop.f32.mrb[0].mxu0
        %v3089 = vadd.f32 %v3004, %v3088
        %v3090 = vpop.f32.mrb[0].mxu0
        %v3091 = vpop.f32.mrb[0].mxu0
        %v3092 = vadd.f32 %v3004, %v3091
        %v3093 = vpop.f32.mrb[0].mxu0
        %3094 = vmatprep.mubr.bf16.mxu0 0
        %3095 = vmatmul.mubr.bf16.gmra.mrb[0].mxu0 %v2968
        %v3096 = vpop.f32.mrb[0].mxu0
        %v3097 = vadd.f32 %v3004, %v3096
        %v3098 = vpop.f32.mrb[0].mxu0
        %v3099 = vpop.f32.mrb[0].mxu0
        %v3100 = vadd.f32 %v3004, %v3099
        %v3101 = vpop.f32.mrb[0].mxu0
        %3102 = vmatprep.mubr.bf16.mxu0 0
        %3103 = vmatmul.mubr.bf16.gmra.mrb[0].mxu0 %v2969
        %v3104 = vpop.f32.mrb[0].mxu0
        %v3105 = vadd.f32 %v3004, %v3104
        %v3106 = vpop.f32.mrb[0].mxu0
        %v3107 = vpop.f32.mrb[0].mxu0
        %v3108 = vadd.f32 %v3004, %v3107
        %v3109 = vpop.f32.mrb[0].mxu0
        %3110 = vmatprep.mubr.bf16.mxu0 0
        %3111 = vmatmul.mubr.bf16.gmra.mrb[0].mxu0 %v2970
        %v3112 = vpop.f32.mrb[0].mxu0
        %v3113 = vadd.f32 %v3004, %v3112
        %v3114 = vpop.f32.mrb[0].mxu0
        %v3115 = vpop.f32.mrb[0].mxu0
        %v3116 = vadd.f32 %v3004, %v3115
        %v3117 = vpop.f32.mrb[0].mxu0
        %3118 = vmatprep.mubr.bf16.mxu0 0
        %3119 = vmatmul.mubr.bf16.gmra.mrb[0].mxu0 %v2971
        %v3120 = vpop.f32.mrb[0].mxu0
        %v3121 = vadd.f32 %v3004, %v3120
        %v3122 = vpop.f32.mrb[0].mxu0
        %v3123 = vpop.f32.mrb[0].mxu0
        %v3124 = vadd.f32 %v3004, %v3123
        %v3125 = vpop.f32.mrb[0].mxu0
        %3126 = vmatprep.mubr.bf16.mxu0 0
        %3127 = vmatmul.mubr.bf16.gmra.mrb[0].mxu0 %v2972
        %v3128 = vpop.f32.mrb[0].mxu0
        %v3129 = vadd.f32 %v3004, %v3128
        %v3130 = vpop.f32.mrb[0].mxu0
        %v3131 = vpop.f32.mrb[0].mxu0
        %v3132 = vadd.f32 %v3004, %v3131
        %v3133 = vpop.f32.mrb[0].mxu0
        %3134 = vmatprep.mubr.bf16.mxu0 0
        %3135 = vmatmul.mubr.bf16.gmra.mrb[0].mxu0 %v2973
        %v3136 = vpop.f32.mrb[0].mxu0
        %v3137 = vadd.f32 %v3004, %v3136
        %v3138 = vpop.f32.mrb[0].mxu0
        %v3139 = vpop.f32.mrb[0].mxu0
        %v3140 = vadd.f32 %v3004, %v3139
        %v3141 = vpop.f32.mrb[0].mxu0
        %3142 = vmatprep.mubr.bf16.mxu0 0
        %3143 = vmatmul.mubr.bf16.gmra.mrb[0].mxu0 %v2974
        %v3144 = vpop.f32.mrb[0].mxu0
        %v3145 = vadd.f32 %v3004, %v3144
        %v3146 = vpop.f32.mrb[0].mxu0
        %v3147 = vpop.f32.mrb[0].mxu0
        %v3148 = vadd.f32 %v3004, %v3147
        %v3149 = vpop.f32.mrb[0].mxu0
        %3150 = vmatprep.mubr.bf16.mxu0 0
        %3151 = vmatmul.mubr.bf16.gmra.mrb[0].mxu0 %v2975
        %v3152 = vpop.f32.mrb[0].mxu0
        %v3153 = vadd.f32 %v3004, %v3152
        %v3154 = vpop.f32.mrb[0].mxu0
        %v3155 = vpop.f32.mrb[0].mxu0
        %v3156 = vadd.f32 %v3004, %v3155
        %v3157 = vpop.f32.mrb[0].mxu0
        %3158 = vmatprep.mubr.bf16.mxu0 0
        %3159 = vmatmul.mubr.bf16.gmra.mrb[0].mxu0 %v2976
        %v3160 = vpop.f32.mrb[0].mxu0
        %v3161 = vadd.f32 %v3004, %v3160
        %v3162 = vpop.f32.mrb[0].mxu0
        %v3163 = vpop.f32.mrb[0].mxu0
        %v3164 = vadd.f32 %v3004, %v3163
        %v3165 = vpop.f32.mrb[0].mxu0
        %3166 = vmatprep.mubr.bf16.mxu0 0
        %3167 = vmatmul.mubr.bf16.gmra.mrb[0].mxu0 %v2977
        %v3168 = vpop.f32.mrb[0].mxu0
        %v3169 = vadd.f32 %v3004, %v3168
        %v3170 = vpop.f32.mrb[0].mxu0
        %v3171 = vpop.f32.mrb[0].mxu0
        %v3172 = vadd.f32 %v3004, %v3171
        %v3173 = vpop.f32.mrb[0].mxu0
        %3174 = vmatprep.mubr.bf16.mxu0 0
        %3175 = vmatmul.mubr.bf16.gmra.mrb[0].mxu0 %v2978
        %v3176 = vpop.f32.mrb[0].mxu0
        %v3177 = vadd.f32 %v3004, %v3176
        %v3178 = vpop.f32.mrb[0].mxu0
        %v3179 = vpop.f32.mrb[0].mxu0
        %v3180 = vadd.f32 %v3004, %v3179
        %v3181 = vpop.f32.mrb[0].mxu0
        %3182 = vmatprep.mubr.bf16.mxu0 0
        %3183 = vmatmul.mubr.bf16.gmra.mrb[0].mxu0 %v2979
        %v3184 = vpop.f32.mrb[0].mxu0
        %v3185 = vadd.f32 %v3004, %v3184
        %v3186 = vpop.f32.mrb[0].mxu0
        %v3187 = vpop.f32.mrb[0].mxu0
        %v3188 = vadd.f32 %v3004, %v3187
        %v3189 = vpop.f32.mrb[0].mxu0
        %3190 = vmatprep.mubr.bf16.mxu0 0
        %3191 = vmatmul.mubr.bf16.gmra.mrb[0].mxu0 %v2980
        %v3192 = vpop.f32.mrb[0].mxu0
        %v3193 = vadd.f32 %v3004, %v3192
        %v3194 = vpop.f32.mrb[0].mxu0
        %v3195 = vpop.f32.mrb[0].mxu0
        %v3196 = vadd.f32 %v3004, %v3195
        %v3197 = vpop.f32.mrb[0].mxu0
        %3198 = vmatprep.mubr.bf16.mxu0 0
        %3199 = vmatmul.mubr.bf16.gmra.mrb[0].mxu0 %v2981
        %v3200 = vpop.f32.mrb[0].mxu0
        %v3201 = vadd.f32 %v3004, %v3200
        %v3202 = vpop.f32.mrb[0].mxu0
        %v3203 = vpop.f32.mrb[0].mxu0
        %v3204 = vadd.f32 %v3004, %v3203
        %v3205 = vpop.f32.mrb[0].mxu0
        %3206 = vmatprep.mubr.bf16.mxu0 0
        %3207 = vmatmul.mubr.bf16.gmra.mrb[0].mxu0 %v2982
        %v3208 = vpop.f32.mrb[0].mxu0
        %v3209 = vadd.f32 %v3004, %v3208
        %v3210 = vpop.f32.mrb[0].mxu0
        %v3211 = vpop.f32.mrb[0].mxu0
        %v3212 = vadd.f32 %v3004, %v3211
        %v3213 = vpop.f32.mrb[0].mxu0
        %3214 = vdwg.mxu0
        %v3215 = vxor.u32 %v3089, 2147483648
        %v3216 = vxor.u32 %v3092, 2147483648
        %v3217 = vxor.u32 %v3097, 2147483648
        %v3218 = vxor.u32 %v3100, 2147483648
        %v3219 = vxor.u32 %v3105, 2147483648
        %v3220 = vxor.u32 %v3108, 2147483648
        %v3221 = vxor.u32 %v3113, 2147483648
        %v3222 = vxor.u32 %v3116, 2147483648
        %v3223 = vxor.u32 %v3121, 2147483648
        %v3224 = vxor.u32 %v3124, 2147483648
        %v3225 = vxor.u32 %v3129, 2147483648
        %v3226 = vxor.u32 %v3132, 2147483648
        %v3227 = vxor.u32 %v3137, 2147483648
        %v3228 = vxor.u32 %v3140, 2147483648
        %v3229 = vxor.u32 %v3145, 2147483648
        %v3230 = vxor.u32 %v3148, 2147483648
        %v3231 = vxor.u32 %v3153, 2147483648
        %v3232 = vxor.u32 %v3156, 2147483648
        %v3233 = vxor.u32 %v3161, 2147483648
        %v3234 = vxor.u32 %v3164, 2147483648
        %v3235 = vxor.u32 %v3169, 2147483648
        %v3236 = vxor.u32 %v3172, 2147483648
        %v3237 = vxor.u32 %v3177, 2147483648
        %v3238 = vxor.u32 %v3180, 2147483648
        %v3239 = vxor.u32 %v3185, 2147483648
        %v3240 = vxor.u32 %v3188, 2147483648
        %v3241 = vxor.u32 %v3193, 2147483648
        %v3242 = vxor.u32 %v3196, 2147483648
        %v3243 = vxor.u32 %v3201, 2147483648
        %v3244 = vxor.u32 %v3204, 2147483648
        %v3245 = vxor.u32 %v3209, 2147483648
        %v3246 = vxor.u32 %v3212, 2147483648
        %v3247 = vmul.f32 %v3215, 1.442695
        %v3248 = vpow.pop %v3247
        %v3249 = vmul.f32 %v3216, 1.442695
        %v3250 = vpow.pop %v3249
        %v3251 = vmul.f32 %v3217, 1.442695
        %v3252 = vpow.pop %v3251
        %v3253 = vmul.f32 %v3218, 1.442695
        %v3254 = vpow.pop %v3253
        %v3255 = vmul.f32 %v3219, 1.442695
        %v3256 = vpow.pop %v3255
        %v3257 = vmul.f32 %v3220, 1.442695
        %v3258 = vpow.pop %v3257
        %v3259 = vmul.f32 %v3221, 1.442695
        %v3260 = vpow.pop %v3259
        %v3261 = vmul.f32 %v3222, 1.442695
        %v3262 = vpow.pop %v3261
        %v3263 = vmul.f32 %v3223, 1.442695
        %v3264 = vpow.pop %v3263
        %v3265 = vmul.f32 %v3224, 1.442695
        %v3266 = vpow.pop %v3265
        %v3267 = vmul.f32 %v3225, 1.442695
        %v3268 = vpow.pop %v3267
        %v3269 = vmul.f32 %v3226, 1.442695
        %v3270 = vpow.pop %v3269
        %v3271 = vmul.f32 %v3227, 1.442695
        %v3272 = vpow.pop %v3271
        %v3273 = vmul.f32 %v3228, 1.442695
        %v3274 = vpow.pop %v3273
        %v3275 = vmul.f32 %v3229, 1.442695
        %v3276 = vpow.pop %v3275
        %v3277 = vmul.f32 %v3230, 1.442695
        %v3278 = vpow.pop %v3277
        %v3279 = vmul.f32 %v3231, 1.442695
        %v3280 = vpow.pop %v3279
        %v3281 = vmul.f32 %v3232, 1.442695
        %v3282 = vpow.pop %v3281
        %v3283 = vmul.f32 %v3233, 1.442695
        %v3284 = vpow.pop %v3283
        %v3285 = vmul.f32 %v3234, 1.442695
        %v3286 = vpow.pop %v3285
        %v3287 = vmul.f32 %v3235, 1.442695
        %v3288 = vpow.pop %v3287
        %v3289 = vmul.f32 %v3236, 1.442695
        %v3290 = vpow.pop %v3289
        %v3291 = vmul.f32 %v3237, 1.442695
        %v3292 = vpow.pop %v3291
        %v3293 = vmul.f32 %v3238, 1.442695
        %v3294 = vpow.pop %v3293
        %v3295 = vmul.f32 %v3239, 1.442695
        %v3296 = vpow.pop %v3295
        %v3297 = vmul.f32 %v3240, 1.442695
        %v3298 = vpow.pop %v3297
        %v3299 = vmul.f32 %v3241, 1.442695
        %v3300 = vpow.pop %v3299
        %v3301 = vmul.f32 %v3242, 1.442695
        %v3302 = vpow.pop %v3301
        %v3303 = vmul.f32 %v3243, 1.442695
        %v3304 = vpow.pop %v3303
        %v3305 = vmul.f32 %v3244, 1.442695
        %v3306 = vpow.pop %v3305
        %v3307 = vmul.f32 %v3245, 1.442695
        %v3308 = vpow.pop %v3307
        %v3309 = vmul.f32 %v3246, 1.442695
        %v3310 = vpow.pop %v3309
        %v3311 = vadd.f32 %v3248, 1.0
        %v3312 = vadd.f32 %v3250, 1.0
        %v3313 = vadd.f32 %v3252, 1.0
        %v3314 = vadd.f32 %v3254, 1.0
        %v3315 = vadd.f32 %v3256, 1.0
        %v3316 = vadd.f32 %v3258, 1.0
        %v3317 = vadd.f32 %v3260, 1.0
        %v3318 = vadd.f32 %v3262, 1.0
        %v3319 = vadd.f32 %v3264, 1.0
        %v3320 = vadd.f32 %v3266, 1.0
        %v3321 = vadd.f32 %v3268, 1.0
        %v3322 = vadd.f32 %v3270, 1.0
        %v3323 = vadd.f32 %v3272, 1.0
        %v3324 = vadd.f32 %v3274, 1.0
        %v3325 = vadd.f32 %v3276, 1.0
        %v3326 = vadd.f32 %v3278, 1.0
        %v3327 = vadd.f32 %v3280, 1.0
        %v3328 = vadd.f32 %v3282, 1.0
        %v3329 = vadd.f32 %v3284, 1.0
        %v3330 = vadd.f32 %v3286, 1.0
        %v3331 = vadd.f32 %v3288, 1.0
        %v3332 = vadd.f32 %v3290, 1.0
        %v3333 = vadd.f32 %v3292, 1.0
        %v3334 = vadd.f32 %v3294, 1.0
        %v3335 = vadd.f32 %v3296, 1.0
        %v3336 = vadd.f32 %v3298, 1.0
        %v3337 = vadd.f32 %v3300, 1.0
        %v3338 = vadd.f32 %v3302, 1.0
        %v3339 = vadd.f32 %v3304, 1.0
        %v3340 = vadd.f32 %v3306, 1.0
        %v3341 = vadd.f32 %v3308, 1.0
        %v3342 = vadd.f32 %v3310, 1.0
        %v3343 = vrcp.pop %v3311
        %v3344 = vmul.f32 1.0, %v3343
        %v3345 = vrcp.pop %v3312
        %v3346 = vmul.f32 1.0, %v3345
        %v3347 = vrcp.pop %v3313
        %v3348 = vmul.f32 1.0, %v3347
        %v3349 = vrcp.pop %v3314
        %v3350 = vmul.f32 1.0, %v3349
        %v3351 = vrcp.pop %v3315
        %v3352 = vmul.f32 1.0, %v3351
        %v3353 = vrcp.pop %v3316
        %v3354 = vmul.f32 1.0, %v3353
        %v3355 = vrcp.pop %v3317
        %v3356 = vmul.f32 1.0, %v3355
        %v3357 = vrcp.pop %v3318
        %v3358 = vmul.f32 1.0, %v3357
        %v3359 = vrcp.pop %v3319
        %v3360 = vmul.f32 1.0, %v3359
        %v3361 = vrcp.pop %v3320
        %v3362 = vmul.f32 1.0, %v3361
        %v3363 = vrcp.pop %v3321
        %v3364 = vmul.f32 1.0, %v3363
        %v3365 = vrcp.pop %v3322
        %v3366 = vmul.f32 1.0, %v3365
        %v3367 = vrcp.pop %v3323
        %v3368 = vmul.f32 1.0, %v3367
        %v3369 = vrcp.pop %v3324
        %v3370 = vmul.f32 1.0, %v3369
        %v3371 = vrcp.pop %v3325
        %v3372 = vmul.f32 1.0, %v3371
        %v3373 = vrcp.pop %v3326
        %v3374 = vmul.f32 1.0, %v3373
        %v3375 = vrcp.pop %v3327
        %v3376 = vmul.f32 1.0, %v3375
        %v3377 = vrcp.pop %v3328
        %v3378 = vmul.f32 1.0, %v3377
        %v3379 = vrcp.pop %v3329
        %v3380 = vmul.f32 1.0, %v3379
        %v3381 = vrcp.pop %v3330
        %v3382 = vmul.f32 1.0, %v3381
        %v3383 = vrcp.pop %v3331
        %v3384 = vmul.f32 1.0, %v3383
        %v3385 = vrcp.pop %v3332
        %v3386 = vmul.f32 1.0, %v3385
        %v3387 = vrcp.pop %v3333
        %v3388 = vmul.f32 1.0, %v3387
        %v3389 = vrcp.pop %v3334
        %v3390 = vmul.f32 1.0, %v3389
        %v3391 = vrcp.pop %v3335
        %v3392 = vmul.f32 1.0, %v3391
        %v3393 = vrcp.pop %v3336
        %v3394 = vmul.f32 1.0, %v3393
        %v3395 = vrcp.pop %v3337
        %v3396 = vmul.f32 1.0, %v3395
        %v3397 = vrcp.pop %v3338
        %v3398 = vmul.f32 1.0, %v3397
        %v3399 = vrcp.pop %v3339
        %v3400 = vmul.f32 1.0, %v3399
        %v3401 = vrcp.pop %v3340
        %v3402 = vmul.f32 1.0, %v3401
        %v3403 = vrcp.pop %v3341
        %v3404 = vmul.f32 1.0, %v3403
        %v3405 = vrcp.pop %v3342
        %v3406 = vmul.f32 1.0, %v3405
        %v3407 = vpack.c.bf16 %v2905, %v2903
        %v3408 = vpack.c.bf16 %v2906, %v2904
        %v3409 = vpack.c.bf16 %v2909, %v2907
        %v3410 = vpack.c.bf16 %v2910, %v2908
        %v3411 = vpack.c.bf16 %v2913, %v2911
        %v3412 = vpack.c.bf16 %v2914, %v2912
        %v3413 = vpack.c.bf16 %v2917, %v2915
        %v3414 = vpack.c.bf16 %v2918, %v2916
        %v3415 = vpack.c.bf16 %v2921, %v2919
        %v3416 = vpack.c.bf16 %v2922, %v2920
        %v3417 = vpack.c.bf16 %v2925, %v2923
        %v3418 = vpack.c.bf16 %v2926, %v2924
        %v3419 = vpack.c.bf16 %v2929, %v2927
        %v3420 = vpack.c.bf16 %v2930, %v2928
        %v3421 = vpack.c.bf16 %v2933, %v2931
        %v3422 = vpack.c.bf16 %v2934, %v2932
        %v3423 = vpack.c.bf16 %v2937, %v2935
        %v3424 = vpack.c.bf16 %v2938, %v2936
        %v3425 = vpack.c.bf16 %v2941, %v2939
        %v3426 = vpack.c.bf16 %v2942, %v2940
        %v3427 = vpack.c.bf16 %v2945, %v2943
        %v3428 = vpack.c.bf16 %v2946, %v2944
        %v3429 = vpack.c.bf16 %v2949, %v2947
        %v3430 = vpack.c.bf16 %v2950, %v2948
        %v3431 = vpack.c.bf16 %v2953, %v2951
        %v3432 = vpack.c.bf16 %v2954, %v2952
        %v3433 = vpack.c.bf16 %v2957, %v2955
        %v3434 = vpack.c.bf16 %v2958, %v2956
        %v3435 = vpack.c.bf16 %v2961, %v2959
        %v3436 = vpack.c.bf16 %v2962, %v2960
        %v3437 = vpack.c.bf16 %v2965, %v2963
        %v3438 = vpack.c.bf16 %v2966, %v2964
        %v3439 = vld [vmem:[#allocation10] sm:$0xf]
        %v3440 = vld [vmem:[#allocation10 + $0x4] sm:$0xf]
        %v3441 = vld [vmem:[#allocation10 + $0x8] sm:$0xf]
        %v3442 = vld [vmem:[#allocation10 + $0xc] sm:$0xf]
        %v3443 = vld [vmem:[#allocation10 + $0x10] sm:$0xf]
        %v3444 = vld [vmem:[#allocation10 + $0x14] sm:$0xf]
        %v3445 = vld [vmem:[#allocation10 + $0x18] sm:$0xf]
        %v3446 = vld [vmem:[#allocation10 + $0x1c] sm:$0xf]
        %v3447 = vld [vmem:[#allocation10 + $0x20] sm:$0xf]
        %v3448 = vld [vmem:[#allocation10 + $0x24] sm:$0xf]
        %v3449 = vld [vmem:[#allocation10 + $0x28] sm:$0xf]
        %v3450 = vld [vmem:[#allocation10 + $0x2c] sm:$0xf]
        %v3451 = vld [vmem:[#allocation10 + $0x30] sm:$0xf]
        %v3452 = vld [vmem:[#allocation10 + $0x34] sm:$0xf]
        %v3453 = vld [vmem:[#allocation10 + $0x38] sm:$0xf]
        %v3454 = vld [vmem:[#allocation10 + $0x3c] sm:$0xf]
        %v3455 = vld [vmem:[#allocation10 + $0x40] sm:$0xf]
        %v3456 = vld [vmem:[#allocation10 + $0x44] sm:$0xf]
        %v3457 = vld [vmem:[#allocation10 + $0x48] sm:$0xf]
        %v3458 = vld [vmem:[#allocation10 + $0x4c] sm:$0xf]
        %v3459 = vld [vmem:[#allocation10 + $0x50] sm:$0xf]
        %v3460 = vld [vmem:[#allocation10 + $0x54] sm:$0xf]
        %v3461 = vld [vmem:[#allocation10 + $0x58] sm:$0xf]
        %v3462 = vld [vmem:[#allocation10 + $0x5c] sm:$0xf]
        %v3463 = vld [vmem:[#allocation10 + $0x60] sm:$0xf]
        %v3464 = vld [vmem:[#allocation10 + $0x64] sm:$0xf]
        %v3465 = vld [vmem:[#allocation10 + $0x68] sm:$0xf]
        %v3466 = vld [vmem:[#allocation10 + $0x6c] sm:$0xf]
        %v3467 = vld [vmem:[#allocation10 + $0x70] sm:$0xf]
        %v3468 = vld [vmem:[#allocation10 + $0x74] sm:$0xf]
        %v3469 = vld [vmem:[#allocation10 + $0x78] sm:$0xf]
        %v3470 = vld [vmem:[#allocation10 + $0x7c] sm:$0xf]
        %v3503 = vunpack.c.l.b16 %v3439
        %v3504 = vunpack.c.l.b16 %v3440
        %v3505 = vunpack.c.l.b16 %v3441
        %v3506 = vunpack.c.l.b16 %v3442
        %v3507 = vunpack.c.l.b16 %v3443
        %v3508 = vunpack.c.l.b16 %v3444
        %v3509 = vunpack.c.l.b16 %v3445
        %v3510 = vunpack.c.l.b16 %v3446
        %v3511 = vunpack.c.l.b16 %v3447
        %v3512 = vunpack.c.l.b16 %v3448
        %v3513 = vunpack.c.l.b16 %v3449
        %v3514 = vunpack.c.l.b16 %v3450
        %v3515 = vunpack.c.l.b16 %v3451
        %v3516 = vunpack.c.l.b16 %v3452
        %v3517 = vunpack.c.l.b16 %v3453
        %v3518 = vunpack.c.l.b16 %v3454
        %v3519 = vunpack.c.l.b16 %v3455
        %v3520 = vunpack.c.l.b16 %v3456
        %v3521 = vunpack.c.l.b16 %v3457
        %v3522 = vunpack.c.l.b16 %v3458
        %v3523 = vunpack.c.l.b16 %v3459
        %v3524 = vunpack.c.l.b16 %v3460
        %v3525 = vunpack.c.l.b16 %v3461
        %v3526 = vunpack.c.l.b16 %v3462
        %v3527 = vunpack.c.l.b16 %v3463
        %v3528 = vunpack.c.l.b16 %v3464
        %v3529 = vunpack.c.l.b16 %v3465
        %v3530 = vunpack.c.l.b16 %v3466
        %v3531 = vunpack.c.l.b16 %v3467
        %v3532 = vunpack.c.l.b16 %v3468
        %v3533 = vunpack.c.l.b16 %v3469
        %v3534 = vunpack.c.l.b16 %v3470
        %v3535 = vpack.c.b16 %v3504, %v3503
        %v3536 = vpack.c.b16 %v3506, %v3505
        %v3537 = vpack.c.b16 %v3508, %v3507
        %v3538 = vpack.c.b16 %v3510, %v3509
        %v3539 = vpack.c.b16 %v3512, %v3511
        %v3540 = vpack.c.b16 %v3514, %v3513
        %v3541 = vpack.c.b16 %v3516, %v3515
        %v3542 = vpack.c.b16 %v3518, %v3517
        %v3543 = vpack.c.b16 %v3520, %v3519
        %v3544 = vpack.c.b16 %v3522, %v3521
        %v3545 = vpack.c.b16 %v3524, %v3523
        %v3546 = vpack.c.b16 %v3526, %v3525
        %v3547 = vpack.c.b16 %v3528, %v3527
        %v3548 = vpack.c.b16 %v3530, %v3529
        %v3549 = vpack.c.b16 %v3532, %v3531
        %v3550 = vpack.c.b16 %v3534, %v3533
        %3567 = vmatprep.subr.bf16.mxu0 0
        %3568 = vmatpush1.bf16.msra.mxu0 %v3535
        %3569 = vmatprep.subr.bf16.mxu0 0
        %3570 = vmatpush1.bf16.msra.mxu0 %v3536
        %3571 = vmatprep.subr.bf16.mxu0 0
        %3572 = vmatpush1.bf16.msra.mxu0 %v3537
        %3573 = vmatprep.subr.bf16.mxu0 0
        %3574 = vmatpush1.bf16.msra.mxu0 %v3538
        %3575 = vmatprep.subr.bf16.mxu0 0
        %3576 = vmatpush1.bf16.msra.mxu0 %v3539
        %3577 = vmatprep.subr.bf16.mxu0 0
        %3578 = vmatpush1.bf16.msra.mxu0 %v3540
        %3579 = vmatprep.subr.bf16.mxu0 0
        %3580 = vmatpush1.bf16.msra.mxu0 %v3541
        %3581 = vmatprep.subr.bf16.mxu0 0
        %3582 = vmatpush1.bf16.msra.mxu0 %v3542
        %3583 = vmatprep.subr.bf16.mxu0 0
        %3584 = vmatpush1.bf16.msra.mxu0 %v3543
        %3585 = vmatprep.subr.bf16.mxu0 0
        %3586 = vmatpush1.bf16.msra.mxu0 %v3544
        %3587 = vmatprep.subr.bf16.mxu0 0
        %3588 = vmatpush1.bf16.msra.mxu0 %v3545
        %3589 = vmatprep.subr.bf16.mxu0 0
        %3590 = vmatpush1.bf16.msra.mxu0 %v3546
        %3591 = vmatprep.subr.bf16.mxu0 0
        %3592 = vmatpush1.bf16.msra.mxu0 %v3547
        %3593 = vmatprep.subr.bf16.mxu0 0
        %3594 = vmatpush1.bf16.msra.mxu0 %v3548
        %3595 = vmatprep.subr.bf16.mxu0 0
        %3596 = vmatpush1.bf16.msra.mxu0 %v3549
        %3597 = vmatprep.subr.bf16.mxu0 0
        %3598 = vmatpush1.bf16.msra.mxu0 %v3550
        %3599 = vmatprep.mubr.bf16.mxu0 %v3408
        %3600 = vmatmul.mubr.bf16.gmra.mrb[0].mxu0 %v3407
        %v3601 = vpop.f32.mrb[0].mxu0
        %v3602 = vadd.f32 0.0, %v3601
        %v3603 = vpop.f32.mrb[0].mxu0
        %v3604 = vpop.f32.mrb[0].mxu0
        %v3605 = vadd.f32 0.0, %v3604
        %v3606 = vpop.f32.mrb[0].mxu0
        %3607 = vmatprep.mubr.bf16.mxu0 %v3410
        %3608 = vmatmul.mubr.bf16.gmra.mrb[0].mxu0 %v3409
        %v3609 = vpop.f32.mrb[0].mxu0
        %v3610 = vadd.f32 0.0, %v3609
        %v3611 = vpop.f32.mrb[0].mxu0
        %v3612 = vpop.f32.mrb[0].mxu0
        %v3613 = vadd.f32 0.0, %v3612
        %v3614 = vpop.f32.mrb[0].mxu0
        %3615 = vmatprep.mubr.bf16.mxu0 %v3412
        %3616 = vmatmul.mubr.bf16.gmra.mrb[0].mxu0 %v3411
        %v3617 = vpop.f32.mrb[0].mxu0
        %v3618 = vadd.f32 0.0, %v3617
        %v3619 = vpop.f32.mrb[0].mxu0
        %v3620 = vpop.f32.mrb[0].mxu0
        %v3621 = vadd.f32 0.0, %v3620
        %v3622 = vpop.f32.mrb[0].mxu0
        %3623 = vmatprep.mubr.bf16.mxu0 %v3414
        %3624 = vmatmul.mubr.bf16.gmra.mrb[0].mxu0 %v3413
        %v3625 = vpop.f32.mrb[0].mxu0
        %v3626 = vadd.f32 0.0, %v3625
        %v3627 = vpop.f32.mrb[0].mxu0
        %v3628 = vpop.f32.mrb[0].mxu0
        %v3629 = vadd.f32 0.0, %v3628
        %v3630 = vpop.f32.mrb[0].mxu0
        %3631 = vmatprep.mubr.bf16.mxu0 %v3416
        %3632 = vmatmul.mubr.bf16.gmra.mrb[0].mxu0 %v3415
        %v3633 = vpop.f32.mrb[0].mxu0
        %v3634 = vadd.f32 0.0, %v3633
        %v3635 = vpop.f32.mrb[0].mxu0
        %v3636 = vpop.f32.mrb[0].mxu0
        %v3637 = vadd.f32 0.0, %v3636
        %v3638 = vpop.f32.mrb[0].mxu0
        %3639 = vmatprep.mubr.bf16.mxu0 %v3418
        %3640 = vmatmul.mubr.bf16.gmra.mrb[0].mxu0 %v3417
        %v3641 = vpop.f32.mrb[0].mxu0
        %v3642 = vadd.f32 0.0, %v3641
        %v3643 = vpop.f32.mrb[0].mxu0
        %v3644 = vpop.f32.mrb[0].mxu0
        %v3645 = vadd.f32 0.0, %v3644
        %v3646 = vpop.f32.mrb[0].mxu0
        %3647 = vmatprep.mubr.bf16.mxu0 %v3420
        %3648 = vmatmul.mubr.bf16.gmra.mrb[0].mxu0 %v3419
        %v3649 = vpop.f32.mrb[0].mxu0
        %v3650 = vadd.f32 0.0, %v3649
        %v3651 = vpop.f32.mrb[0].mxu0
        %v3652 = vpop.f32.mrb[0].mxu0
        %v3653 = vadd.f32 0.0, %v3652
        %v3654 = vpop.f32.mrb[0].mxu0
        %3655 = vmatprep.mubr.bf16.mxu0 %v3422
        %3656 = vmatmul.mubr.bf16.gmra.mrb[0].mxu0 %v3421
        %v3657 = vpop.f32.mrb[0].mxu0
        %v3658 = vadd.f32 0.0, %v3657
        %v3659 = vpop.f32.mrb[0].mxu0
        %v3660 = vpop.f32.mrb[0].mxu0
        %v3661 = vadd.f32 0.0, %v3660
        %v3662 = vpop.f32.mrb[0].mxu0
        %3663 = vmatprep.mubr.bf16.mxu0 %v3424
        %3664 = vmatmul.mubr.bf16.gmra.mrb[0].mxu0 %v3423
        %v3665 = vpop.f32.mrb[0].mxu0
        %v3666 = vadd.f32 0.0, %v3665
        %v3667 = vpop.f32.mrb[0].mxu0
        %v3668 = vpop.f32.mrb[0].mxu0
        %v3669 = vadd.f32 0.0, %v3668
        %v3670 = vpop.f32.mrb[0].mxu0
        %3671 = vmatprep.mubr.bf16.mxu0 %v3426
        %3672 = vmatmul.mubr.bf16.gmra.mrb[0].mxu0 %v3425
        %v3673 = vpop.f32.mrb[0].mxu0
        %v3674 = vadd.f32 0.0, %v3673
        %v3675 = vpop.f32.mrb[0].mxu0
        %v3676 = vpop.f32.mrb[0].mxu0
        %v3677 = vadd.f32 0.0, %v3676
        %v3678 = vpop.f32.mrb[0].mxu0
        %3679 = vmatprep.mubr.bf16.mxu0 %v3428
        %3680 = vmatmul.mubr.bf16.gmra.mrb[0].mxu0 %v3427
        %v3681 = vpop.f32.mrb[0].mxu0
        %v3682 = vadd.f32 0.0, %v3681
        %v3683 = vpop.f32.mrb[0].mxu0
        %v3684 = vpop.f32.mrb[0].mxu0
        %v3685 = vadd.f32 0.0, %v3684
        %v3686 = vpop.f32.mrb[0].mxu0
        %3687 = vmatprep.mubr.bf16.mxu0 %v3430
        %3688 = vmatmul.mubr.bf16.gmra.mrb[0].mxu0 %v3429
        %v3689 = vpop.f32.mrb[0].mxu0
        %v3690 = vadd.f32 0.0, %v3689
        %v3691 = vpop.f32.mrb[0].mxu0
        %v3692 = vpop.f32.mrb[0].mxu0
        %v3693 = vadd.f32 0.0, %v3692
        %v3694 = vpop.f32.mrb[0].mxu0
        %3695 = vmatprep.mubr.bf16.mxu0 %v3432
        %3696 = vmatmul.mubr.bf16.gmra.mrb[0].mxu0 %v3431
        %v3697 = vpop.f32.mrb[0].mxu0
        %v3698 = vadd.f32 0.0, %v3697
        %v3699 = vpop.f32.mrb[0].mxu0
        %v3700 = vpop.f32.mrb[0].mxu0
        %v3701 = vadd.f32 0.0, %v3700
        %v3702 = vpop.f32.mrb[0].mxu0
        %3703 = vmatprep.mubr.bf16.mxu0 %v3434
        %3704 = vmatmul.mubr.bf16.gmra.mrb[0].mxu0 %v3433
        %v3705 = vpop.f32.mrb[0].mxu0
        %v3706 = vadd.f32 0.0, %v3705
        %v3707 = vpop.f32.mrb[0].mxu0
        %v3708 = vpop.f32.mrb[0].mxu0
        %v3709 = vadd.f32 0.0, %v3708
        %v3710 = vpop.f32.mrb[0].mxu0
        %3711 = vmatprep.mubr.bf16.mxu0 %v3436
        %3712 = vmatmul.mubr.bf16.gmra.mrb[0].mxu0 %v3435
        %v3713 = vpop.f32.mrb[0].mxu0
        %v3714 = vadd.f32 0.0, %v3713
        %v3715 = vpop.f32.mrb[0].mxu0
        %v3716 = vpop.f32.mrb[0].mxu0
        %v3717 = vadd.f32 0.0, %v3716
        %v3718 = vpop.f32.mrb[0].mxu0
        %3719 = vmatprep.mubr.bf16.mxu0 %v3438
        %3720 = vmatmul.mubr.bf16.gmra.mrb[0].mxu0 %v3437
        %v3721 = vpop.f32.mrb[0].mxu0
        %v3722 = vadd.f32 0.0, %v3721
        %v3723 = vpop.f32.mrb[0].mxu0
        %v3724 = vpop.f32.mrb[0].mxu0
        %v3725 = vadd.f32 0.0, %v3724
        %v3726 = vpop.f32.mrb[0].mxu0
        %3727 = vdwg.mxu0
        %v3728 = vmul.f32 %v3344, %v3602
        %v3729 = vmul.f32 %v3346, %v3605
        %v3730 = vmul.f32 %v3348, %v3610
        %v3731 = vmul.f32 %v3350, %v3613
        %v3732 = vmul.f32 %v3352, %v3618
        %v3733 = vmul.f32 %v3354, %v3621
        %v3734 = vmul.f32 %v3356, %v3626
        %v3735 = vmul.f32 %v3358, %v3629
        %v3736 = vmul.f32 %v3360, %v3634
        %v3737 = vmul.f32 %v3362, %v3637
        %v3738 = vmul.f32 %v3364, %v3642
        %v3739 = vmul.f32 %v3366, %v3645
        %v3740 = vmul.f32 %v3368, %v3650
        %v3741 = vmul.f32 %v3370, %v3653
        %v3742 = vmul.f32 %v3372, %v3658
        %v3743 = vmul.f32 %v3374, %v3661
        %v3744 = vmul.f32 %v3376, %v3666
        %v3745 = vmul.f32 %v3378, %v3669
        %v3746 = vmul.f32 %v3380, %v3674
        %v3747 = vmul.f32 %v3382, %v3677
        %v3748 = vmul.f32 %v3384, %v3682
        %v3749 = vmul.f32 %v3386, %v3685
        %v3750 = vmul.f32 %v3388, %v3690
        %v3751 = vmul.f32 %v3390, %v3693
        %v3752 = vmul.f32 %v3392, %v3698
        %v3753 = vmul.f32 %v3394, %v3701
        %v3754 = vmul.f32 %v3396, %v3706
        %v3755 = vmul.f32 %v3398, %v3709
        %v3756 = vmul.f32 %v3400, %v3714
        %v3757 = vmul.f32 %v3402, %v3717
        %v3758 = vmul.f32 %v3404, %v3722
        %v3759 = vmul.f32 %v3406, %v3725
        %3760 = vst [vmem:[%s448] sm:$0xff] %v3728
        %3761 = vst [vmem:[%s448 + $0x8] sm:$0xff] %v3729
        %3762 = vst [vmem:[%s448 + $0x10] sm:$0xff] %v3730
        %3763 = vst [vmem:[%s448 + $0x18] sm:$0xff] %v3731
        %3764 = vst [vmem:[%s448 + $0x20] sm:$0xff] %v3732
        %3765 = vst [vmem:[%s448 + $0x28] sm:$0xff] %v3733
        %3766 = vst [vmem:[%s448 + $0x30] sm:$0xff] %v3734
        %3767 = vst [vmem:[%s448 + $0x38] sm:$0xff] %v3735
        %3768 = vst [vmem:[%s448 + $0x40] sm:$0xff] %v3736
        %3769 = vst [vmem:[%s448 + $0x48] sm:$0xff] %v3737
        %3770 = vst [vmem:[%s448 + $0x50] sm:$0xff] %v3738
        %3771 = vst [vmem:[%s448 + $0x58] sm:$0xff] %v3739
        %3772 = vst [vmem:[%s448 + $0x60] sm:$0xff] %v3740
        %3773 = vst [vmem:[%s448 + $0x68] sm:$0xff] %v3741
        %3774 = vst [vmem:[%s448 + $0x70] sm:$0xff] %v3742
        %3775 = vst [vmem:[%s448 + $0x78] sm:$0xff] %v3743
        %3776 = vst [vmem:[%s448 + $0x80] sm:$0xff] %v3744
        %3777 = vst [vmem:[%s448 + $0x88] sm:$0xff] %v3745
        %3778 = vst [vmem:[%s448 + $0x90] sm:$0xff] %v3746
        %3779 = vst [vmem:[%s448 + $0x98] sm:$0xff] %v3747
        %3780 = vst [vmem:[%s448 + $0xa0] sm:$0xff] %v3748
        %3781 = vst [vmem:[%s448 + $0xa8] sm:$0xff] %v3749
        %3782 = vst [vmem:[%s448 + $0xb0] sm:$0xff] %v3750
        %3783 = vst [vmem:[%s448 + $0xb8] sm:$0xff] %v3751
        %3784 = vst [vmem:[%s448 + $0xc0] sm:$0xff] %v3752
        %3785 = vst [vmem:[%s448 + $0xc8] sm:$0xff] %v3753
        %3786 = vst [vmem:[%s448 + $0xd0] sm:$0xff] %v3754
        %3787 = vst [vmem:[%s448 + $0xd8] sm:$0xff] %v3755
        %3788 = vst [vmem:[%s448 + $0xe0] sm:$0xff] %v3756
        %3789 = vst [vmem:[%s448 + $0xe8] sm:$0xff] %v3757
        %3790 = vst [vmem:[%s448 + $0xf0] sm:$0xff] %v3758
        %3791 = vst [vmem:[%s448 + $0xf8] sm:$0xff] %v3759
        %s3792 = sand.u32 %s238, 1
        %s3793 = scalar_lea.sflag [#allocation4], %s3792
        %s3794 = sand.u32 %s238, 1
        %s3795 = smul.addr %s3794, 256
        %s3796 = scalar_lea.vmem [#allocation13], %s3795
        // Predicated region
        $region81: #{_ctb_call.1} parent=55 // pred_check
          %p3797 = pneg %p248
        $region82: #{_ctb_call.1} parent=55 // pred_check_branch
          %3799 = sbr.rel (%p3797) target = $region84
        $region83: #{_ctb_call.1} parent=55 // pred_region
          %s3800 = smul.u32 32, %s31
          %s3802 = ssub.s32 4096, 4096
          %3803 = vsyncadd %s3793, %s3802
          %s3804 = smul.addr %s3800, 128
          %s3805 = scalar_lea.hbm %s9, %s3804
          %s3806 = sshll.u32 %s3796, 4
          %s3807 = int_to_ptr.vmem [resolvable:$true] %s3806
          %3812 = dma.vmem_to_hbm [thread:$0]  %s3807, 4096, %s3805, %s3793, 128, 128, 8
        $region84: #{_ctb_call.1} parent=55 // pred_fallthru
          _
      $region56: #{_ctb_call.1} parent=5 // pred_fallthru
        _
      %p3813 = scmp.le.s32.totalorder 2, %s26
      // Predicated region
      $region85: #{_ctb_call.1} parent=5 // pred_check
        %p3814 = pneg %p3813
      $region86: #{_ctb_call.1} parent=5 // pred_check_branch
        %3816 = sbr.rel (%p3814) target = $region88
      $region87: #{_ctb_call.1} parent=5 // pred_region
        %s3817 = ssub.s32 %s26, 2
        // Predicated region
        $region89: #{_ctb_call.1} parent=87 // pred_check
          %p3818 = pneg %p254
        $region90: #{_ctb_call.1} parent=87 // pred_check_branch
          %3820 = sbr.rel (%p3818) target = $region92
        $region91: #{_ctb_call.1} parent=87 // pred_region
          %s3821 = sand.u32 %s239, 1
          %s3822 = scalar_lea.sflag [#allocation4], %s3821
          %s3823 = sand.u32 %s239, 1
          %s3824 = smul.addr %s3823, 256
          %s3825 = scalar_lea.vmem [#allocation13], %s3824
          %3826 = dma.done %s3822, 4096
        $region92: #{_ctb_call.1} parent=87 // pred_fallthru
          _
      $region88: #{_ctb_call.1} parent=5 // pred_fallthru
        _
    $region6: #{_ctb_call.1} parent=1 // loop_footer
      %s30 = sadd.s32 1, %s26
    $region7: #{_ctb_call.1} parent=1 // loop_footer_branch
      %25 = sbr.rel target = $region3
    $region8: #{_ctb_call.1} parent=1 // loop_exit
      _
    %3827 = vsyncpa [#allocation3], 1
    %s3828 = scalar_lea.sflag [#allocation3], 1
    %3829 = vsyncpa %s3828, 1
    %3830 = vsyncpa [#allocation6], 1
    %s3831 = scalar_lea.sflag [#allocation6], 1
    %3832 = vsyncpa %s3831, 1
    %3833 = vsyncpa [#allocation9], 1
    %3834 = vsyncpa [#allocation12], 1
    %3835 = vsyncpa [#allocation4], 1
    %s3836 = scalar_lea.sflag [#allocation4], 1
    %3837 = vsyncpa %s3836, 1

// kernel: _ctb_call.1
$region0: #{_ctb_call.1}
  #allocation0 [shape = 'u32[]', space=smem, size = 0x4, offset = 0x4, fixed_abs, tag = 'smem constant byte address 0x4 - core index']
  #allocation1 [shape = 'u32[144,128]{1,0:T(1,128)}', space=vmem, size = 0x12000, scoped, tag = 'internal scratch']
  %s0 = inlined_call_operand.hbm [shape: f32[1024,128], index: 0, kind: input, shape index: {}]
  %s1 = inlined_call_operand.hbm [shape: f32[1024,128], index: 1, kind: input, shape index: {}]
  %s2 = inlined_call_operand.vmem [shape: f32[1,128], index: 2, kind: input, shape index: {}]
  %s3 = inlined_call_operand.vmem [shape: f32[1,128], index: 3, kind: input, shape index: {}]
  %s4 = inlined_call_operand.vmem [shape: f32[1,128], index: 4, kind: input, shape index: {}]
  %s5 = inlined_call_operand.hbm [shape: bf16[128,256], index: 5, kind: input, shape index: {}]
  %s6 = inlined_call_operand.hbm [shape: bf16[128,512], index: 6, kind: input, shape index: {}]
  %s7 = inlined_call_operand.hbm [shape: bf16[256,128], index: 7, kind: input, shape index: {}]
  %s8 = inlined_call_operand.hbm [shape: bf16[128,128], index: 8, kind: input, shape index: {}]
  %s9 = inlined_call_operand.hbm [shape: f32[1024,128], index: 9, kind: output, shape index: {}]
  %s10 = sld [smem:[#allocation0]]
  $region93: #{_ctb_call.1} parent=0
    _
  %s12 = ssub.s32 1, %s10
  %s13 = scalar_select 0, %s12, %s10
  $region1: #{_ctb_call.1} parent=0
    #allocation2 [shape = 'u8[262144]{0}', space=vmem, size = 0x40000, scoped, tag = 'input window, operand 0']
    #allocation3 [shape = 's32[2]{0}', space=sflag, size = 0x8, scoped, tag = 'scoped memory for _ctb_call.1']
    #allocation4 [shape = 's32[2]{0}', space=sflag, size = 0x8, scoped, tag = 'scoped memory for _ctb_call.1']
    #allocation5 [shape = 'u8[262144]{0}', space=vmem, size = 0x40000, scoped, tag = 'input window, operand 1']
    #allocation6 [shape = 's32[2]{0}', space=sflag, size = 0x8, scoped, tag = 'scoped memory for _ctb_call.1']
    #allocation7 [shape = 'u8[65536]{0}', space=vmem, size = 0x10000, scoped, tag = 'input window, operand 5, single buffered']
    #allocation8 [shape = 'u8[131072]{0}', space=vmem, size = 0x20000, scoped, tag = 'input window, operand 6, single buffered']
    #allocation9 [shape = 's32[1]{0}', space=sflag, size = 0x4, scoped, tag = 'scoped memory for _ctb_call.1']
    #allocation10 [shape = 'u8[65536]{0}', space=vmem, size = 0x10000, scoped, tag = 'input window, operand 7, single buffered']
    #allocation11 [shape = 'u8[32768]{0}', space=vmem, size = 0x8000, scoped, tag = 'input window, operand 8, single buffered']
    #allocation12 [shape = 's32[1]{0}', space=sflag, size = 0x4, scoped, tag = 'scoped memory for _ctb_call.1']
    #allocation13 [shape = 'u8[262144]{0}', space=vmem, size = 0x40000, scoped, tag = 'output window, operand 0']
    %14 = vsyncpa [#allocation3], 0
    %s15 = scalar_lea.sflag [#allocation3], 1
    %16 = vsyncpa %s15, 0
    %17 = vsyncpa [#allocation6], 0
    %s18 = scalar_lea.sflag [#allocation6], 1
    %19 = vsyncpa %s18, 0
    %20 = vsyncpa [#allocation9], 0
    %21 = vsyncpa [#allocation12], 0
    %22 = vsyncpa [#allocation4], 0
    %s23 = scalar_lea.sflag [#allocation4], 1
    %24 = vsyncpa %s23, 0
    loop: start=0, step=1, limit=6
    $region2: #{_ctb_call.1} parent=1 // loop_pre_header
      _
    $region3: #{_ctb_call.1} parent=1 // loop_header
      %s26 = sphi 0, %s30
      %p27 = scmp.ge.s32.totalorder %s26, 6
      %s36 = sphi 0, %s38
      %s39 = sphi 0, %s36
      %s40 = sphi 0, %s39
      %s56 = sphi 0, %s40
      %s62 = sphi 0, %s64
      %s65 = sphi 0, %s62
      %s66 = sphi 0, %s65
      %s82 = sphi 0, %s66
      %s86 = sphi 0, %s86
      %s88 = sphi 0, %s86
      %s89 = sphi 0, %s88
      %s103 = sphi 0, %s89
      %s107 = sphi 0, %s107
      %s109 = sphi 0, %s107
      %s110 = sphi 0, %s109
      %s124 = sphi 0, %s110
      %s128 = sphi 0, %s128
      %s130 = sphi 0, %s128
      %s131 = sphi 0, %s130
      %s145 = sphi 0, %s131
      %s149 = sphi 0, %s149
      %s151 = sphi 0, %s149
      %s152 = sphi 0, %s151
      %s166 = sphi 0, %s152
      %s170 = sphi 0, %s170
      %s172 = sphi 0, %s170
      %s173 = sphi 0, %s172
      %s187 = sphi 0, %s173
      %s191 = sphi 0, %s191
      %s193 = sphi 0, %s191
      %s194 = sphi 0, %s193
      %s208 = sphi 0, %s194
      %s212 = sphi 0, %s212
      %s214 = sphi 0, %s212
      %s215 = sphi 0, %s214
      %s229 = sphi 0, %s215
      %s235 = sphi 0, %s237
      %s238 = sphi 0, %s235
      %s239 = sphi 0, %s238
      %s255 = sphi 0, %s239
    $region4: #{_ctb_call.1} parent=1 // loop_header_branch
      %29 = sbr.rel (%p27) target = $region8
    $region5: #{_ctb_call.1} parent=1 // loop_body
      %s31 = ssub.s32 %s26, 1
      %s32 = ssub.s32 %s26, 2
      %s33 = sadd.s32 %s26, 1
      %s34 = ssub.s32 %s26, %s33
      %p35 = scmp.eq.s32.totalorder %s34, 0
      %s37 = sadd.s32 %s36, 1
      %s38 = scalar_select %p35, %s36, %s37
      %p41 = pneg %p35
      %p42 = scmp.eq.s32.totalorder %s26, 3
      %p43 = por %p41, %p42
      %p44 = scmp.ne.s32.totalorder %s36, %s39
      %p45 = scmp.eq.s32.totalorder %s26, 0
      %p46 = por %p44, %p45
      %p47 = scmp.ne.s32.totalorder %s36, %s39
      %p48 = scmp.eq.s32.totalorder %s31, 3
      %p49 = por %p47, %p48
      %p50 = scmp.ne.s32.totalorder %s39, %s40
      %p51 = scmp.eq.s32.totalorder %s31, 0
      %p52 = por %p50, %p51
      %p53 = scmp.ne.s32.totalorder %s39, %s40
      %p54 = scmp.eq.s32.totalorder %s32, 3
      %p55 = por %p53, %p54
      %p57 = scmp.ne.s32.totalorder %s40, %s56
      %p58 = scmp.eq.s32.totalorder %s32, 0
      %p59 = por %p57, %p58
      %s60 = ssub.s32 %s26, %s33
      %p61 = scmp.eq.s32.totalorder %s60, 0
      %s63 = sadd.s32 %s62, 1
      %s64 = scalar_select %p61, %s62, %s63
      %p67 = pneg %p61
      %p68 = scmp.eq.s32.totalorder %s26, 3
      %p69 = por %p67, %p68
      %p70 = scmp.ne.s32.totalorder %s62, %s65
      %p71 = scmp.eq.s32.totalorder %s26, 0
      %p72 = por %p70, %p71
      %p73 = scmp.ne.s32.totalorder %s62, %s65
      %p74 = scmp.eq.s32.totalorder %s31, 3
      %p75 = por %p73, %p74
      %p76 = scmp.ne.s32.totalorder %s65, %s66
      %p77 = scmp.eq.s32.totalorder %s31, 0
      %p78 = por %p76, %p77
      %p79 = scmp.ne.s32.totalorder %s65, %s66
      %p80 = scmp.eq.s32.totalorder %s32, 3
      %p81 = por %p79, %p80
      %p83 = scmp.ne.s32.totalorder %s66, %s82
      %p84 = scmp.eq.s32.totalorder %s32, 0
      %p85 = por %p83, %p84
      %s87 = sadd.s32 %s86, 1
      %p90 = scmp.eq.s32.totalorder %s26, 3
      %p91 = scmp.ne.s32.totalorder %s86, %s88
      %p92 = scmp.eq.s32.totalorder %s26, 0
      %p93 = por %p91, %p92
      %p94 = scmp.ne.s32.totalorder %s86, %s88
      %p95 = scmp.eq.s32.totalorder %s31, 3
      %p96 = por %p94, %p95
      %p97 = scmp.ne.s32.totalorder %s88, %s89
      %p98 = scmp.eq.s32.totalorder %s31, 0
      %p99 = por %p97, %p98
      %p100 = scmp.ne.s32.totalorder %s88, %s89
      %p101 = scmp.eq.s32.totalorder %s32, 3
      %p102 = por %p100, %p101
      %p104 = scmp.ne.s32.totalorder %s89, %s103
      %p105 = scmp.eq.s32.totalorder %s32, 0
      %p106 = por %p104, %p105
      %s108 = sadd.s32 %s107, 1
      %p111 = scmp.eq.s32.totalorder %s26, 3
      %p112 = scmp.ne.s32.totalorder %s107, %s109
      %p113 = scmp.eq.s32.totalorder %s26, 0
      %p114 = por %p112, %p113
      %p115 = scmp.ne.s32.totalorder %s107, %s109
      %p116 = scmp.eq.s32.totalorder %s31, 3
      %p117 = por %p115, %p116
      %p118 = scmp.ne.s32.totalorder %s109, %s110
      %p119 = scmp.eq.s32.totalorder %s31, 0
      %p120 = por %p118, %p119
      %p121 = scmp.ne.s32.totalorder %s109, %s110
      %p122 = scmp.eq.s32.totalorder %s32, 3
      %p123 = por %p121, %p122
      %p125 = scmp.ne.s32.totalorder %s110, %s124
      %p126 = scmp.eq.s32.totalorder %s32, 0
      %p127 = por %p125, %p126
      %s129 = sadd.s32 %s128, 1
      %p132 = scmp.eq.s32.totalorder %s26, 3
      %p133 = scmp.ne.s32.totalorder %s128, %s130
      %p134 = scmp.eq.s32.totalorder %s26, 0
      %p135 = por %p133, %p134
      %p136 = scmp.ne.s32.totalorder %s128, %s130
      %p137 = scmp.eq.s32.totalorder %s31, 3
      %p138 = por %p136, %p137
      %p139 = scmp.ne.s32.totalorder %s130, %s131
      %p140 = scmp.eq.s32.totalorder %s31, 0
      %p141 = por %p139, %p140
      %p142 = scmp.ne.s32.totalorder %s130, %s131
      %p143 = scmp.eq.s32.totalorder %s32, 3
      %p144 = por %p142, %p143
      %p146 = scmp.ne.s32.totalorder %s131, %s145
      %p147 = scmp.eq.s32.totalorder %s32, 0
      %p148 = por %p146, %p147
      %s150 = sadd.s32 %s149, 1
      %p153 = scmp.eq.s32.totalorder %s26, 3
      %p154 = scmp.ne.s32.totalorder %s149, %s151
      %p155 = scmp.eq.s32.totalorder %s26, 0
      %p156 = por %p154, %p155
      %p157 = scmp.ne.s32.totalorder %s149, %s151
      %p158 = scmp.eq.s32.totalorder %s31, 3
      %p159 = por %p157, %p158
      %p160 = scmp.ne.s32.totalorder %s151, %s152
      %p161 = scmp.eq.s32.totalorder %s31, 0
      %p162 = por %p160, %p161
      %p163 = scmp.ne.s32.totalorder %s151, %s152
      %p164 = scmp.eq.s32.totalorder %s32, 3
      %p165 = por %p163, %p164
      %p167 = scmp.ne.s32.totalorder %s152, %s166
      %p168 = scmp.eq.s32.totalorder %s32, 0
      %p169 = por %p167, %p168
      %s171 = sadd.s32 %s170, 1
      %p174 = scmp.eq.s32.totalorder %s26, 3
      %p175 = scmp.ne.s32.totalorder %s170, %s172
      %p176 = scmp.eq.s32.totalorder %s26, 0
      %p177 = por %p175, %p176
      %p178 = scmp.ne.s32.totalorder %s170, %s172
      %p179 = scmp.eq.s32.totalorder %s31, 3
      %p180 = por %p178, %p179
      %p181 = scmp.ne.s32.totalorder %s172, %s173
      %p182 = scmp.eq.s32.totalorder %s31, 0
      %p183 = por %p181, %p182
      %p184 = scmp.ne.s32.totalorder %s172, %s173
      %p185 = scmp.eq.s32.totalorder %s32, 3
      %p186 = por %p184, %p185
      %p188 = scmp.ne.s32.totalorder %s173, %s187
      %p189 = scmp.eq.s32.totalorder %s32, 0
      %p190 = por %p188, %p189
      %s192 = sadd.s32 %s191, 1
      %p195 = scmp.eq.s32.totalorder %s26, 3
      %p196 = scmp.ne.s32.totalorder %s191, %s193
      %p197 = scmp.eq.s32.totalorder %s26, 0
      %p198 = por %p196, %p197
      %p199 = scmp.ne.s32.totalorder %s191, %s193
      %p200 = scmp.eq.s32.totalorder %s31, 3
      %p201 = por %p199, %p200
      %p202 = scmp.ne.s32.totalorder %s193, %s194
      %p203 = scmp.eq.s32.totalorder %s31, 0
      %p204 = por %p202, %p203
      %p205 = scmp.ne.s32.totalorder %s193, %s194
      %p206 = scmp.eq.s32.totalorder %s32, 3
      %p207 = por %p205, %p206
      %p209 = scmp.ne.s32.totalorder %s194, %s208
      %p210 = scmp.eq.s32.totalorder %s32, 0
      %p211 = por %p209, %p210
      %s213 = sadd.s32 %s212, 1
      %p216 = scmp.eq.s32.totalorder %s26, 3
      %p217 = scmp.ne.s32.totalorder %s212, %s214
      %p218 = scmp.eq.s32.totalorder %s26, 0
      %p219 = por %p217, %p218
      %p220 = scmp.ne.s32.totalorder %s212, %s214
      %p221 = scmp.eq.s32.totalorder %s31, 3
      %p222 = por %p220, %p221
      %p223 = scmp.ne.s32.totalorder %s214, %s215
      %p224 = scmp.eq.s32.totalorder %s31, 0
      %p225 = por %p223, %p224
      %p226 = scmp.ne.s32.totalorder %s214, %s215
      %p227 = scmp.eq.s32.totalorder %s32, 3
      %p228 = por %p226, %p227
      %p230 = scmp.ne.s32.totalorder %s215, %s229
      %p231 = scmp.eq.s32.totalorder %s32, 0
      %p232 = por %p230, %p231
      %s233 = ssub.s32 %s26, %s33
      %p234 = scmp.eq.s32.totalorder %s233, 0
      %s236 = sadd.s32 %s235, 1
      %s237 = scalar_select %p234, %s235, %s236
      %p240 = pneg %p234
      %p241 = scmp.eq.s32.totalorder %s26, 3
      %p242 = por %p240, %p241
      %p243 = scmp.ne.s32.totalorder %s235, %s238
      %p244 = scmp.eq.s32.totalorder %s26, 0
      %p245 = por %p243, %p244
      %p246 = scmp.ne.s32.totalorder %s235, %s238
      %p247 = scmp.eq.s32.totalorder %s31, 3
      %p248 = por %p246, %p247
      %p249 = scmp.ne.s32.totalorder %s238, %s239
      %p250 = scmp.eq.s32.totalorder %s31, 0
      %p251 = por %p249, %p250
      %p252 = scmp.ne.s32.totalorder %s238, %s239
      %p253 = scmp.eq.s32.totalorder %s32, 3
      %p254 = por %p252, %p253
      %p256 = scmp.ne.s32.totalorder %s239, %s255
      %p257 = scmp.eq.s32.totalorder %s32, 0
      %p258 = por %p256, %p257
      %p259 = scmp.le.s32.totalorder 1, %s26
      %p260 = scmp.lt.s32.totalorder %s26, 5
      %p261 = pnand %p259, %p260
      %p262 = pneg %p261
      // Predicated region
      $region9: #{_ctb_call.1} parent=5 // pred_check
        _
      $region10: #{_ctb_call.1} parent=5 // pred_check_branch
        %264 = sbr.rel (%p261) target = $region12
      $region11: #{_ctb_call.1} parent=5 // pred_region
        %s265 = ssub.s32 %s26, 1
        // Predicated region
        $region13: #{_ctb_call.1} parent=11 // pred_check
          %p266 = pneg %p99
        $region14: #{_ctb_call.1} parent=11 // pred_check_branch
          %268 = sbr.rel (%p266) target = $region16
        $region15: #{_ctb_call.1} parent=11 // pred_region
          _
        $region16: #{_ctb_call.1} parent=11 // pred_fallthru
          _
        // Predicated region
        $region17: #{_ctb_call.1} parent=11 // pred_check
          %p269 = pneg %p120
        $region18: #{_ctb_call.1} parent=11 // pred_check_branch
          %271 = sbr.rel (%p269) target = $region20
        $region19: #{_ctb_call.1} parent=11 // pred_region
          _
        $region20: #{_ctb_call.1} parent=11 // pred_fallthru
          _
        // Predicated region
        $region21: #{_ctb_call.1} parent=11 // pred_check
          %p272 = pneg %p141
        $region22: #{_ctb_call.1} parent=11 // pred_check_branch
          %274 = sbr.rel (%p272) target = $region24
        $region23: #{_ctb_call.1} parent=11 // pred_region
          _
        $region24: #{_ctb_call.1} parent=11 // pred_fallthru
          _
        // Predicated region
        $region25: #{_ctb_call.1} parent=11 // pred_check
          %p275 = pneg %p162
        $region26: #{_ctb_call.1} parent=11 // pred_check_branch
          %277 = sbr.rel (%p275) target = $region28
        $region27: #{_ctb_call.1} parent=11 // pred_region
          %s279 = ssub.s32 2048, 2048
          %280 = vsyncadd [#allocation6], %s279
          %s281 = sshll.u32 [#allocation7], 4
          %s282 = int_to_ptr.vmem [resolvable:$true] %s281
          %287 = dma.hbm_to_vmem [thread:$0]  %s5, 2048, %s282, [#allocation6], 128, 128, 8
        $region28: #{_ctb_call.1} parent=11 // pred_fallthru
          _
        // Predicated region
        $region29: #{_ctb_call.1} parent=11 // pred_check
          %p288 = pneg %p183
        $region30: #{_ctb_call.1} parent=11 // pred_check_branch
          %290 = sbr.rel (%p288) target = $region32
        $region31: #{_ctb_call.1} parent=11 // pred_region
          %s292 = ssub.s32 4096, 4096
          %293 = vsyncadd [#allocation9], %s292
          %s294 = sshll.u32 [#allocation8], 4
          %s295 = int_to_ptr.vmem [resolvable:$true] %s294
          %300 = dma.hbm_to_vmem [thread:$0]  %s6, 4096, %s295, [#allocation9], 256, 256, 16
        $region32: #{_ctb_call.1} parent=11 // pred_fallthru
          _
        // Predicated region
        $region33: #{_ctb_call.1} parent=11 // pred_check
          %p301 = pneg %p204
        $region34: #{_ctb_call.1} parent=11 // pred_check_branch
          %303 = sbr.rel (%p301) target = $region36
        $region35: #{_ctb_call.1} parent=11 // pred_region
          %s305 = ssub.s32 2048, 2048
          %306 = vsyncadd [#allocation9], %s305
          %s307 = sshll.u32 [#allocation10], 4
          %s308 = int_to_ptr.vmem [resolvable:$true] %s307
          %313 = dma.hbm_to_vmem [thread:$0]  %s7, 2048, %s308, [#allocation9], 64, 64, 4
        $region36: #{_ctb_call.1} parent=11 // pred_fallthru
          _
        // Predicated region
        $region37: #{_ctb_call.1} parent=11 // pred_check
          %p314 = pneg %p225
        $region38: #{_ctb_call.1} parent=11 // pred_check_branch
          %316 = sbr.rel (%p314) target = $region40
        $region39: #{_ctb_call.1} parent=11 // pred_region
          %s318 = ssub.s32 1024, 1024
          %319 = vsyncadd [#allocation12], %s318
          %s320 = sshll.u32 [#allocation11], 4
          %s321 = int_to_ptr.vmem [resolvable:$true] %s320
          %326 = dma.hbm_to_vmem [thread:$0]  %s8, 1024, %s321, [#allocation12], 64, 64, 4
        $region40: #{_ctb_call.1} parent=11 // pred_fallthru
          _
      $region12: #{_ctb_call.1} parent=5 // pred_fallthru
        _
      %p327 = scmp.lt.s32.totalorder %s26, 4
      // Predicated region
      $region41: #{_ctb_call.1} parent=5 // pred_check
        %p328 = pneg %p327
      $region42: #{_ctb_call.1} parent=5 // pred_check_branch
        %330 = sbr.rel (%p328) target = $region44
      $region43: #{_ctb_call.1} parent=5 // pred_region
        // Predicated region
        $region45: #{_ctb_call.1} parent=43 // pred_check
          %p331 = pneg %p46
        $region46: #{_ctb_call.1} parent=43 // pred_check_branch
          %333 = sbr.rel (%p331) target = $region48
        $region47: #{_ctb_call.1} parent=43 // pred_region
          %s334 = sand.u32 %s36, 1
          %s335 = scalar_lea.sflag [#allocation3], %s334
          %s336 = sand.u32 %s36, 1
          %s337 = smul.addr %s336, 256
          %s338 = scalar_lea.vmem [#allocation2], %s337
          %s339 = smul.u32 32, %s26
          %s341 = ssub.s32 4096, 4096
          %342 = vsyncadd %s335, %s341
          %s343 = smul.addr %s339, 128
          %s344 = scalar_lea.hbm %s0, %s343
          %s345 = sshll.u32 %s338, 4
          %s346 = int_to_ptr.vmem [resolvable:$true] %s345
          %351 = dma.hbm_to_vmem [thread:$0]  %s344, 4096, %s346, %s335, 128, 128, 8
        $region48: #{_ctb_call.1} parent=43 // pred_fallthru
          _
        // Predicated region
        $region49: #{_ctb_call.1} parent=43 // pred_check
          %p352 = pneg %p72
        $region50: #{_ctb_call.1} parent=43 // pred_check_branch
          %354 = sbr.rel (%p352) target = $region52
        $region51: #{_ctb_call.1} parent=43 // pred_region
          %s355 = sand.u32 %s26, 1
          %s356 = scalar_lea.sflag [#allocation6], %s355
          %s357 = sand.u32 %s62, 1
          %s358 = smul.addr %s357, 256
          %s359 = scalar_lea.vmem [#allocation5], %s358
          %s360 = smul.u32 32, %s26
          %s362 = ssub.s32 4096, 4096
          %363 = vsyncadd %s356, %s362
          %s364 = smul.addr %s360, 128
          %s365 = scalar_lea.hbm %s1, %s364
          %s366 = sshll.u32 %s359, 4
          %s367 = int_to_ptr.vmem [resolvable:$true] %s366
          %372 = dma.hbm_to_vmem [thread:$0]  %s365, 4096, %s367, %s356, 128, 128, 8
        $region52: #{_ctb_call.1} parent=43 // pred_fallthru
          _
      $region44: #{_ctb_call.1} parent=5 // pred_fallthru
        _
      %p373 = scmp.le.s32.totalorder 1, %s26
      %p374 = scmp.lt.s32.totalorder %s26, 5
      %p375 = pnand %p373, %p374
      %p376 = pneg %p375
      // Predicated region
      $region53: #{_ctb_call.1} parent=5 // pred_check
        _
      $region54: #{_ctb_call.1} parent=5 // pred_check_branch
        %378 = sbr.rel (%p375) target = $region56
      $region55: #{_ctb_call.1} parent=5 // pred_region
        %s379 = ssub.s32 %s26, 1
        %s380 = sand.u32 %s39, 1
        %s381 = scalar_lea.sflag [#allocation3], %s380
        %s382 = sand.u32 %s39, 1
        %s383 = smul.addr %s382, 256
        %s384 = scalar_lea.vmem [#allocation2], %s383
        // Predicated region
        $region57: #{_ctb_call.1} parent=55 // pred_check
          %p385 = pneg %p52
        $region58: #{_ctb_call.1} parent=55 // pred_check_branch
          %387 = sbr.rel (%p385) target = $region60
        $region59: #{_ctb_call.1} parent=55 // pred_region
          %388 = dma.done %s381, 4096
        $region60: #{_ctb_call.1} parent=55 // pred_fallthru
          _
        %s389 = sand.u32 %s31, 1
        %s390 = scalar_lea.sflag [#allocation6], %s389
        %s391 = sand.u32 %s65, 1
        %s392 = smul.addr %s391, 256
        %s393 = scalar_lea.vmem [#allocation5], %s392
        // Predicated region
        $region61: #{_ctb_call.1} parent=55 // pred_check
          %p394 = pneg %p78
        $region62: #{_ctb_call.1} parent=55 // pred_check_branch
          %396 = sbr.rel (%p394) target = $region64
        $region63: #{_ctb_call.1} parent=55 // pred_region
          %397 = dma.done %s390, 4096
        $region64: #{_ctb_call.1} parent=55 // pred_fallthru
          _
        // Predicated region
        $region65: #{_ctb_call.1} parent=55 // pred_check
          %p398 = pneg %p162
        $region66: #{_ctb_call.1} parent=55 // pred_check_branch
          %400 = sbr.rel (%p398) target = $region68
        $region67: #{_ctb_call.1} parent=55 // pred_region
          %401 = dma.done [#allocation6], 2048
        $region68: #{_ctb_call.1} parent=55 // pred_fallthru
          _
        // Predicated region
        $region69: #{_ctb_call.1} parent=55 // pred_check
          %p402 = pneg %p183
        $region70: #{_ctb_call.1} parent=55 // pred_check_branch
          %404 = sbr.rel (%p402) target = $region72
        $region71: #{_ctb_call.1} parent=55 // pred_region
          %405 = dma.done [#allocation9], 4096
        $region72: #{_ctb_call.1} parent=55 // pred_fallthru
          _
        // Predicated region
        $region73: #{_ctb_call.1} parent=55 // pred_check
          %p406 = pneg %p204
        $region74: #{_ctb_call.1} parent=55 // pred_check_branch
          %408 = sbr.rel (%p406) target = $region76
        $region75: #{_ctb_call.1} parent=55 // pred_region
          %409 = dma.done [#allocation9], 2048
        $region76: #{_ctb_call.1} parent=55 // pred_fallthru
          _
        // Predicated region
        $region77: #{_ctb_call.1} parent=55 // pred_check
          %p410 = pneg %p225
        $region78: #{_ctb_call.1} parent=55 // pred_check_branch
          %412 = sbr.rel (%p410) target = $region80
        $region79: #{_ctb_call.1} parent=55 // pred_region
          %413 = dma.done [#allocation12], 1024
        $region80: #{_ctb_call.1} parent=55 // pred_fallthru
          _
        %s414 = sand.u32 %s39, 1
        %s415 = scalar_lea.sflag [#allocation3], %s414
        %s416 = sand.u32 %s39, 1
        %s417 = smul.addr %s416, 256
        %s418 = scalar_lea.vmem [#allocation2], %s417
        %p419 = pneg %p52
        %p420 = pneg %p49
        %s421 = sand.u32 %s31, 1
        %s422 = scalar_lea.sflag [#allocation6], %s421
        %s423 = sand.u32 %s65, 1
        %s424 = smul.addr %s423, 256
        %s425 = scalar_lea.vmem [#allocation5], %s424
        %p426 = pneg %p78
        %p427 = pneg %p75
        %p428 = pneg %p99
        %p429 = pneg %p96
        %p430 = pneg %p120
        %p431 = pneg %p117
        %p432 = pneg %p141
        %p433 = pneg %p138
        %p434 = pneg %p162
        %p435 = pneg %p159
        %p436 = pneg %p183
        %p437 = pneg %p180
        %p438 = pneg %p204
        %p439 = pneg %p201
        %p440 = pneg %p225
        %p441 = pneg %p222
        %p442 = pneg %p251
        %p443 = pneg %p248
        %s444 = sand.u32 %s238, 1
        %s445 = scalar_lea.sflag [#allocation4], %s444
        %s446 = sand.u32 %s238, 1
        %s447 = smul.addr %s446, 256
        %s448 = scalar_lea.vmem [#allocation13], %s447
        %s449 = smul.u32 32, %s31
        %s450 = smul.u32 32, %s31
        %s451 = smul.u32 32, %s31
        %v453 = vld [vmem:[%s384] sm:$0xff]
        %v454 = vld [vmem:[%s384 + $0x8] sm:$0xff]
        %v455 = vld [vmem:[%s384 + $0x10] sm:$0xff]
        %v456 = vld [vmem:[%s384 + $0x18] sm:$0xff]
        %v457 = vld [vmem:[%s384 + $0x20] sm:$0xff]
        %v458 = vld [vmem:[%s384 + $0x28] sm:$0xff]
        %v459 = vld [vmem:[%s384 + $0x30] sm:$0xff]
        %v460 = vld [vmem:[%s384 + $0x38] sm:$0xff]
        %v461 = vld [vmem:[%s384 + $0x40] sm:$0xff]
        %v462 = vld [vmem:[%s384 + $0x48] sm:$0xff]
        %v463 = vld [vmem:[%s384 + $0x50] sm:$0xff]
        %v464 = vld [vmem:[%s384 + $0x58] sm:$0xff]
        %v465 = vld [vmem:[%s384 + $0x60] sm:$0xff]
        %v466 = vld [vmem:[%s384 + $0x68] sm:$0xff]
        %v467 = vld [vmem:[%s384 + $0x70] sm:$0xff]
        %v468 = vld [vmem:[%s384 + $0x78] sm:$0xff]
        %v469 = vld [vmem:[%s384 + $0x80] sm:$0xff]
        %v470 = vld [vmem:[%s384 + $0x88] sm:$0xff]
        %v471 = vld [vmem:[%s384 + $0x90] sm:$0xff]
        %v472 = vld [vmem:[%s384 + $0x98] sm:$0xff]
        %v473 = vld [vmem:[%s384 + $0xa0] sm:$0xff]
        %v474 = vld [vmem:[%s384 + $0xa8] sm:$0xff]
        %v475 = vld [vmem:[%s384 + $0xb0] sm:$0xff]
        %v476 = vld [vmem:[%s384 + $0xb8] sm:$0xff]
        %v477 = vld [vmem:[%s384 + $0xc0] sm:$0xff]
        %v478 = vld [vmem:[%s384 + $0xc8] sm:$0xff]
        %v479 = vld [vmem:[%s384 + $0xd0] sm:$0xff]
        %v480 = vld [vmem:[%s384 + $0xd8] sm:$0xff]
        %v481 = vld [vmem:[%s384 + $0xe0] sm:$0xff]
        %v482 = vld [vmem:[%s384 + $0xe8] sm:$0xff]
        %v483 = vld [vmem:[%s384 + $0xf0] sm:$0xff]
        %v484 = vld [vmem:[%s384 + $0xf8] sm:$0xff]
        %v485 = vld [vmem:[%s393] sm:$0xff]
        %v486 = vld [vmem:[%s393 + $0x8] sm:$0xff]
        %v487 = vld [vmem:[%s393 + $0x10] sm:$0xff]
        %v488 = vld [vmem:[%s393 + $0x18] sm:$0xff]
        %v489 = vld [vmem:[%s393 + $0x20] sm:$0xff]
        %v490 = vld [vmem:[%s393 + $0x28] sm:$0xff]
        %v491 = vld [vmem:[%s393 + $0x30] sm:$0xff]
        %v492 = vld [vmem:[%s393 + $0x38] sm:$0xff]
        %v493 = vld [vmem:[%s393 + $0x40] sm:$0xff]
        %v494 = vld [vmem:[%s393 + $0x48] sm:$0xff]
        %v495 = vld [vmem:[%s393 + $0x50] sm:$0xff]
        %v496 = vld [vmem:[%s393 + $0x58] sm:$0xff]
        %v497 = vld [vmem:[%s393 + $0x60] sm:$0xff]
        %v498 = vld [vmem:[%s393 + $0x68] sm:$0xff]
        %v499 = vld [vmem:[%s393 + $0x70] sm:$0xff]
        %v500 = vld [vmem:[%s393 + $0x78] sm:$0xff]
        %v501 = vld [vmem:[%s393 + $0x80] sm:$0xff]
        %v502 = vld [vmem:[%s393 + $0x88] sm:$0xff]
        %v503 = vld [vmem:[%s393 + $0x90] sm:$0xff]
        %v504 = vld [vmem:[%s393 + $0x98] sm:$0xff]
        %v505 = vld [vmem:[%s393 + $0xa0] sm:$0xff]
        %v506 = vld [vmem:[%s393 + $0xa8] sm:$0xff]
        %v507 = vld [vmem:[%s393 + $0xb0] sm:$0xff]
        %v508 = vld [vmem:[%s393 + $0xb8] sm:$0xff]
        %v509 = vld [vmem:[%s393 + $0xc0] sm:$0xff]
        %v510 = vld [vmem:[%s393 + $0xc8] sm:$0xff]
        %v511 = vld [vmem:[%s393 + $0xd0] sm:$0xff]
        %v512 = vld [vmem:[%s393 + $0xd8] sm:$0xff]
        %v513 = vld [vmem:[%s393 + $0xe0] sm:$0xff]
        %v514 = vld [vmem:[%s393 + $0xe8] sm:$0xff]
        %v515 = vld [vmem:[%s393 + $0xf0] sm:$0xff]
        %v516 = vld [vmem:[%s393 + $0xf8] sm:$0xff]
        %517 = vadd.xlane.f32.xlu0 %v453
        %v518 = vpop.xlane.xlu0 %517
        %519 = vadd.xlane.f32.xlu0 %v454
        %v520 = vpop.xlane.xlu0 %519
        %521 = vadd.xlane.f32.xlu0 %v455
        %v522 = vpop.xlane.xlu0 %521
        %523 = vadd.xlane.f32.xlu0 %v456
        %v524 = vpop.xlane.xlu0 %523
        %525 = vadd.xlane.f32.xlu0 %v457
        %v526 = vpop.xlane.xlu0 %525
        %527 = vadd.xlane.f32.xlu0 %v458
        %v528 = vpop.xlane.xlu0 %527
        %529 = vadd.xlane.f32.xlu0 %v459
        %v530 = vpop.xlane.xlu0 %529
        %531 = vadd.xlane.f32.xlu0 %v460
        %v532 = vpop.xlane.xlu0 %531
        %533 = vadd.xlane.f32.xlu0 %v461
        %v534 = vpop.xlane.xlu0 %533
        %535 = vadd.xlane.f32.xlu0 %v462
        %v536 = vpop.xlane.xlu0 %535
        %537 = vadd.xlane.f32.xlu0 %v463
        %v538 = vpop.xlane.xlu0 %537
        %539 = vadd.xlane.f32.xlu0 %v464
        %v540 = vpop.xlane.xlu0 %539
        %541 = vadd.xlane.f32.xlu0 %v465
        %v542 = vpop.xlane.xlu0 %541
        %543 = vadd.xlane.f32.xlu0 %v466
        %v544 = vpop.xlane.xlu0 %543
        %545 = vadd.xlane.f32.xlu0 %v467
        %v546 = vpop.xlane.xlu0 %545
        %547 = vadd.xlane.f32.xlu0 %v468
        %v548 = vpop.xlane.xlu0 %547
        %549 = vadd.xlane.f32.xlu0 %v469
        %v550 = vpop.xlane.xlu0 %549
        %551 = vadd.xlane.f32.xlu0 %v470
        %v552 = vpop.xlane.xlu0 %551
        %553 = vadd.xlane.f32.xlu0 %v471
        %v554 = vpop.xlane.xlu0 %553
        %555 = vadd.xlane.f32.xlu0 %v472
        %v556 = vpop.xlane.xlu0 %555
        %557 = vadd.xlane.f32.xlu0 %v473
        %v558 = vpop.xlane.xlu0 %557
        %559 = vadd.xlane.f32.xlu0 %v474
        %v560 = vpop.xlane.xlu0 %559
        %561 = vadd.xlane.f32.xlu0 %v475
        %v562 = vpop.xlane.xlu0 %561
        %563 = vadd.xlane.f32.xlu0 %v476
        %v564 = vpop.xlane.xlu0 %563
        %565 = vadd.xlane.f32.xlu0 %v477
        %v566 = vpop.xlane.xlu0 %565
        %567 = vadd.xlane.f32.xlu0 %v478
        %v568 = vpop.xlane.xlu0 %567
        %569 = vadd.xlane.f32.xlu0 %v479
        %v570 = vpop.xlane.xlu0 %569
        %571 = vadd.xlane.f32.xlu0 %v480
        %v572 = vpop.xlane.xlu0 %571
        %573 = vadd.xlane.f32.xlu0 %v481
        %v574 = vpop.xlane.xlu0 %573
        %575 = vadd.xlane.f32.xlu0 %v482
        %v576 = vpop.xlane.xlu0 %575
        %577 = vadd.xlane.f32.xlu0 %v483
        %v578 = vpop.xlane.xlu0 %577
        %579 = vadd.xlane.f32.xlu0 %v484
        %v580 = vpop.xlane.xlu0 %579
        %v581 = vrcp.pop 128.0
        %v582 = vmul.f32 %v518, %v581
        %v583 = vmul.f32 %v520, %v581
        %v584 = vmul.f32 %v522, %v581
        %v585 = vmul.f32 %v524, %v581
        %v586 = vmul.f32 %v526, %v581
        %v587 = vmul.f32 %v528, %v581
        %v588 = vmul.f32 %v530, %v581
        %v589 = vmul.f32 %v532, %v581
        %v590 = vmul.f32 %v534, %v581
        %v591 = vmul.f32 %v536, %v581
        %v592 = vmul.f32 %v538, %v581
        %v593 = vmul.f32 %v540, %v581
        %v594 = vmul.f32 %v542, %v581
        %v595 = vmul.f32 %v544, %v581
        %v596 = vmul.f32 %v546, %v581
        %v597 = vmul.f32 %v548, %v581
        %v598 = vmul.f32 %v550, %v581
        %v599 = vmul.f32 %v552, %v581
        %v600 = vmul.f32 %v554, %v581
        %v601 = vmul.f32 %v556, %v581
        %v602 = vmul.f32 %v558, %v581
        %v603 = vmul.f32 %v560, %v581
        %v604 = vmul.f32 %v562, %v581
        %v605 = vmul.f32 %v564, %v581
        %v606 = vmul.f32 %v566, %v581
        %v607 = vmul.f32 %v568, %v581
        %v608 = vmul.f32 %v570, %v581
        %v609 = vmul.f32 %v572, %v581
        %v610 = vmul.f32 %v574, %v581
        %v611 = vmul.f32 %v576, %v581
        %v612 = vmul.f32 %v578, %v581
        %v613 = vmul.f32 %v580, %v581
        %v614 = vsub.f32 %v453, %v582
        %v615 = vsub.f32 %v454, %v583
        %v616 = vsub.f32 %v455, %v584
        %v617 = vsub.f32 %v456, %v585
        %v618 = vsub.f32 %v457, %v586
        %v619 = vsub.f32 %v458, %v587
        %v620 = vsub.f32 %v459, %v588
        %v621 = vsub.f32 %v460, %v589
        %v622 = vsub.f32 %v461, %v590
        %v623 = vsub.f32 %v462, %v591
        %v624 = vsub.f32 %v463, %v592
        %v625 = vsub.f32 %v464, %v593
        %v626 = vsub.f32 %v465, %v594
        %v627 = vsub.f32 %v466, %v595
        %v628 = vsub.f32 %v467, %v596
        %v629 = vsub.f32 %v468, %v597
        %v630 = vsub.f32 %v469, %v598
        %v631 = vsub.f32 %v470, %v599
        %v632 = vsub.f32 %v471, %v600
        %v633 = vsub.f32 %v472, %v601
        %v634 = vsub.f32 %v473, %v602
        %v635 = vsub.f32 %v474, %v603
        %v636 = vsub.f32 %v475, %v604
        %v637 = vsub.f32 %v476, %v605
        %v638 = vsub.f32 %v477, %v606
        %v639 = vsub.f32 %v478, %v607
        %v640 = vsub.f32 %v479, %v608
        %v641 = vsub.f32 %v480, %v609
        %v642 = vsub.f32 %v481, %v610
        %v643 = vsub.f32 %v482, %v611
        %v644 = vsub.f32 %v483, %v612
        %v645 = vsub.f32 %v484, %v613
        %v646 = vmul.f32 %v614, %v614
        %v647 = vmul.f32 %v615, %v615
        %v648 = vmul.f32 %v616, %v616
        %v649 = vmul.f32 %v617, %v617
        %v650 = vmul.f32 %v618, %v618
        %v651 = vmul.f32 %v619, %v619
        %v652 = vmul.f32 %v620, %v620
        %v653 = vmul.f32 %v621, %v621
        %v654 = vmul.f32 %v622, %v622
        %v655 = vmul.f32 %v623, %v623
        %v656 = vmul.f32 %v624, %v624
        %v657 = vmul.f32 %v625, %v625
        %v658 = vmul.f32 %v626, %v626
        %v659 = vmul.f32 %v627, %v627
        %v660 = vmul.f32 %v628, %v628
        %v661 = vmul.f32 %v629, %v629
        %v662 = vmul.f32 %v630, %v630
        %v663 = vmul.f32 %v631, %v631
        %v664 = vmul.f32 %v632, %v632
        %v665 = vmul.f32 %v633, %v633
        %v666 = vmul.f32 %v634, %v634
        %v667 = vmul.f32 %v635, %v635
        %v668 = vmul.f32 %v636, %v636
        %v669 = vmul.f32 %v637, %v637
        %v670 = vmul.f32 %v638, %v638
        %v671 = vmul.f32 %v639, %v639
        %v672 = vmul.f32 %v640, %v640
        %v673 = vmul.f32 %v641, %v641
        %v674 = vmul.f32 %v642, %v642
        %v675 = vmul.f32 %v643, %v643
        %v676 = vmul.f32 %v644, %v644
        %v677 = vmul.f32 %v645, %v645
        %678 = vadd.xlane.f32.xlu0 %v646
        %v679 = vpop.xlane.xlu0 %678
        %680 = vadd.xlane.f32.xlu0 %v647
        %v681 = vpop.xlane.xlu0 %680
        %682 = vadd.xlane.f32.xlu0 %v648
        %v683 = vpop.xlane.xlu0 %682
        %684 = vadd.xlane.f32.xlu0 %v649
        %v685 = vpop.xlane.xlu0 %684
        %686 = vadd.xlane.f32.xlu0 %v650
        %v687 = vpop.xlane.xlu0 %686
        %688 = vadd.xlane.f32.xlu0 %v651
        %v689 = vpop.xlane.xlu0 %688
        %690 = vadd.xlane.f32.xlu0 %v652
        %v691 = vpop.xlane.xlu0 %690
        %692 = vadd.xlane.f32.xlu0 %v653
        %v693 = vpop.xlane.xlu0 %692
        %694 = vadd.xlane.f32.xlu0 %v654
        %v695 = vpop.xlane.xlu0 %694
        %696 = vadd.xlane.f32.xlu0 %v655
        %v697 = vpop.xlane.xlu0 %696
        %698 = vadd.xlane.f32.xlu0 %v656
        %v699 = vpop.xlane.xlu0 %698
        %700 = vadd.xlane.f32.xlu0 %v657
        %v701 = vpop.xlane.xlu0 %700
        %702 = vadd.xlane.f32.xlu0 %v658
        %v703 = vpop.xlane.xlu0 %702
        %704 = vadd.xlane.f32.xlu0 %v659
        %v705 = vpop.xlane.xlu0 %704
        %706 = vadd.xlane.f32.xlu0 %v660
        %v707 = vpop.xlane.xlu0 %706
        %708 = vadd.xlane.f32.xlu0 %v661
        %v709 = vpop.xlane.xlu0 %708
        %710 = vadd.xlane.f32.xlu0 %v662
        %v711 = vpop.xlane.xlu0 %710
        %712 = vadd.xlane.f32.xlu0 %v663
        %v713 = vpop.xlane.xlu0 %712
        %714 = vadd.xlane.f32.xlu0 %v664
        %v715 = vpop.xlane.xlu0 %714
        %716 = vadd.xlane.f32.xlu0 %v665
        %v717 = vpop.xlane.xlu0 %716
        %718 = vadd.xlane.f32.xlu0 %v666
        %v719 = vpop.xlane.xlu0 %718
        %720 = vadd.xlane.f32.xlu0 %v667
        %v721 = vpop.xlane.xlu0 %720
        %722 = vadd.xlane.f32.xlu0 %v668
        %v723 = vpop.xlane.xlu0 %722
        %724 = vadd.xlane.f32.xlu0 %v669
        %v725 = vpop.xlane.xlu0 %724
        %726 = vadd.xlane.f32.xlu0 %v670
        %v727 = vpop.xlane.xlu0 %726
        %728 = vadd.xlane.f32.xlu0 %v671
        %v729 = vpop.xlane.xlu0 %728
        %730 = vadd.xlane.f32.xlu0 %v672
        %v731 = vpop.xlane.xlu0 %730
        %732 = vadd.xlane.f32.xlu0 %v673
        %v733 = vpop.xlane.xlu0 %732
        %734 = vadd.xlane.f32.xlu0 %v674
        %v735 = vpop.xlane.xlu0 %734
        %736 = vadd.xlane.f32.xlu0 %v675
        %v737 = vpop.xlane.xlu0 %736
        %738 = vadd.xlane.f32.xlu0 %v676
        %v739 = vpop.xlane.xlu0 %738
        %740 = vadd.xlane.f32.xlu0 %v677
        %v741 = vpop.xlane.xlu0 %740
        %v742 = vmul.f32 %v679, %v581
        %v743 = vmul.f32 %v681, %v581
        %v744 = vmul.f32 %v683, %v581
        %v745 = vmul.f32 %v685, %v581
        %v746 = vmul.f32 %v687, %v581
        %v747 = vmul.f32 %v689, %v581
        %v748 = vmul.f32 %v691, %v581
        %v749 = vmul.f32 %v693, %v581
        %v750 = vmul.f32 %v695, %v581
        %v751 = vmul.f32 %v697, %v581
        %v752 = vmul.f32 %v699, %v581
        %v753 = vmul.f32 %v701, %v581
        %v754 = vmul.f32 %v703, %v581
        %v755 = vmul.f32 %v705, %v581
        %v756 = vmul.f32 %v707, %v581
        %v757 = vmul.f32 %v709, %v581
        %v758 = vmul.f32 %v711, %v581
        %v759 = vmul.f32 %v713, %v581
        %v760 = vmul.f32 %v715, %v581
        %v761 = vmul.f32 %v717, %v581
        %v762 = vmul.f32 %v719, %v581
        %v763 = vmul.f32 %v721, %v581
        %v764 = vmul.f32 %v723, %v581
        %v765 = vmul.f32 %v725, %v581
        %v766 = vmul.f32 %v727, %v581
        %v767 = vmul.f32 %v729, %v581
        %v768 = vmul.f32 %v731, %v581
        %v769 = vmul.f32 %v733, %v581
        %v770 = vmul.f32 %v735, %v581
        %v771 = vmul.f32 %v737, %v581
        %v772 = vmul.f32 %v739, %v581
        %v773 = vmul.f32 %v741, %v581
        %v774 = vadd.f32 %v742, 1e-05
        %v775 = vadd.f32 %v743, 1e-05
        %v776 = vadd.f32 %v744, 1e-05
        %v777 = vadd.f32 %v745, 1e-05
        %v778 = vadd.f32 %v746, 1e-05
        %v779 = vadd.f32 %v747, 1e-05
        %v780 = vadd.f32 %v748, 1e-05
        %v781 = vadd.f32 %v749, 1e-05
        %v782 = vadd.f32 %v750, 1e-05
        %v783 = vadd.f32 %v751, 1e-05
        %v784 = vadd.f32 %v752, 1e-05
        %v785 = vadd.f32 %v753, 1e-05
        %v786 = vadd.f32 %v754, 1e-05
        %v787 = vadd.f32 %v755, 1e-05
        %v788 = vadd.f32 %v756, 1e-05
        %v789 = vadd.f32 %v757, 1e-05
        %v790 = vadd.f32 %v758, 1e-05
        %v791 = vadd.f32 %v759, 1e-05
        %v792 = vadd.f32 %v760, 1e-05
        %v793 = vadd.f32 %v761, 1e-05
        %v794 = vadd.f32 %v762, 1e-05
        %v795 = vadd.f32 %v763, 1e-05
        %v796 = vadd.f32 %v764, 1e-05
        %v797 = vadd.f32 %v765, 1e-05
        %v798 = vadd.f32 %v766, 1e-05
        %v799 = vadd.f32 %v767, 1e-05
        %v800 = vadd.f32 %v768, 1e-05
        %v801 = vadd.f32 %v769, 1e-05
        %v802 = vadd.f32 %v770, 1e-05
        %v803 = vadd.f32 %v771, 1e-05
        %v804 = vadd.f32 %v772, 1e-05
        %v805 = vadd.f32 %v773, 1e-05
        %v806 = vrsqrt.pop %v774
        %v807 = vrsqrt.pop %v775
        %v808 = vrsqrt.pop %v776
        %v809 = vrsqrt.pop %v777
        %v810 = vrsqrt.pop %v778
        %v811 = vrsqrt.pop %v779
        %v812 = vrsqrt.pop %v780
        %v813 = vrsqrt.pop %v781
        %v814 = vrsqrt.pop %v782
        %v815 = vrsqrt.pop %v783
        %v816 = vrsqrt.pop %v784
        %v817 = vrsqrt.pop %v785
        %v818 = vrsqrt.pop %v786
        %v819 = vrsqrt.pop %v787
        %v820 = vrsqrt.pop %v788
        %v821 = vrsqrt.pop %v789
        %v822 = vrsqrt.pop %v790
        %v823 = vrsqrt.pop %v791
        %v824 = vrsqrt.pop %v792
        %v825 = vrsqrt.pop %v793
        %v826 = vrsqrt.pop %v794
        %v827 = vrsqrt.pop %v795
        %v828 = vrsqrt.pop %v796
        %v829 = vrsqrt.pop %v797
        %v830 = vrsqrt.pop %v798
        %v831 = vrsqrt.pop %v799
        %v832 = vrsqrt.pop %v800
        %v833 = vrsqrt.pop %v801
        %v834 = vrsqrt.pop %v802
        %v835 = vrsqrt.pop %v803
        %v836 = vrsqrt.pop %v804
        %v837 = vrsqrt.pop %v805
        %v838 = vmul.f32 %v614, %v806
        %v839 = vmul.f32 %v615, %v807
        %v840 = vmul.f32 %v616, %v808
        %v841 = vmul.f32 %v617, %v809
        %v842 = vmul.f32 %v618, %v810
        %v843 = vmul.f32 %v619, %v811
        %v844 = vmul.f32 %v620, %v812
        %v845 = vmul.f32 %v621, %v813
        %v846 = vmul.f32 %v622, %v814
        %v847 = vmul.f32 %v623, %v815
        %v848 = vmul.f32 %v624, %v816
        %v849 = vmul.f32 %v625, %v817
        %v850 = vmul.f32 %v626, %v818
        %v851 = vmul.f32 %v627, %v819
        %v852 = vmul.f32 %v628, %v820
        %v853 = vmul.f32 %v629, %v821
        %v854 = vmul.f32 %v630, %v822
        %v855 = vmul.f32 %v631, %v823
        %v856 = vmul.f32 %v632, %v824
        %v857 = vmul.f32 %v633, %v825
        %v858 = vmul.f32 %v634, %v826
        %v859 = vmul.f32 %v635, %v827
        %v860 = vmul.f32 %v636, %v828
        %v861 = vmul.f32 %v637, %v829
        %v862 = vmul.f32 %v638, %v830
        %v863 = vmul.f32 %v639, %v831
        %v864 = vmul.f32 %v640, %v832
        %v865 = vmul.f32 %v641, %v833
        %v866 = vmul.f32 %v642, %v834
        %v867 = vmul.f32 %v643, %v835
        %v868 = vmul.f32 %v644, %v836
        %v869 = vmul.f32 %v645, %v837
        %870 = vadd.xlane.f32.xlu0 %v485
        %v871 = vpop.xlane.xlu0 %870
        %872 = vadd.xlane.f32.xlu0 %v486
        %v873 = vpop.xlane.xlu0 %872
        %874 = vadd.xlane.f32.xlu0 %v487
        %v875 = vpop.xlane.xlu0 %874
        %876 = vadd.xlane.f32.xlu0 %v488
        %v877 = vpop.xlane.xlu0 %876
        %878 = vadd.xlane.f32.xlu0 %v489
        %v879 = vpop.xlane.xlu0 %878
        %880 = vadd.xlane.f32.xlu0 %v490
        %v881 = vpop.xlane.xlu0 %880
        %882 = vadd.xlane.f32.xlu0 %v491
        %v883 = vpop.xlane.xlu0 %882
        %884 = vadd.xlane.f32.xlu0 %v492
        %v885 = vpop.xlane.xlu0 %884
        %886 = vadd.xlane.f32.xlu0 %v493
        %v887 = vpop.xlane.xlu0 %886
        %888 = vadd.xlane.f32.xlu0 %v494
        %v889 = vpop.xlane.xlu0 %888
        %890 = vadd.xlane.f32.xlu0 %v495
        %v891 = vpop.xlane.xlu0 %890
        %892 = vadd.xlane.f32.xlu0 %v496
        %v893 = vpop.xlane.xlu0 %892
        %894 = vadd.xlane.f32.xlu0 %v497
        %v895 = vpop.xlane.xlu0 %894
        %896 = vadd.xlane.f32.xlu0 %v498
        %v897 = vpop.xlane.xlu0 %896
        %898 = vadd.xlane.f32.xlu0 %v499
        %v899 = vpop.xlane.xlu0 %898
        %900 = vadd.xlane.f32.xlu0 %v500
        %v901 = vpop.xlane.xlu0 %900
        %902 = vadd.xlane.f32.xlu0 %v501
        %v903 = vpop.xlane.xlu0 %902
        %904 = vadd.xlane.f32.xlu0 %v502
        %v905 = vpop.xlane.xlu0 %904
        %906 = vadd.xlane.f32.xlu0 %v503
        %v907 = vpop.xlane.xlu0 %906
        %908 = vadd.xlane.f32.xlu0 %v504
        %v909 = vpop.xlane.xlu0 %908
        %910 = vadd.xlane.f32.xlu0 %v505
        %v911 = vpop.xlane.xlu0 %910
        %912 = vadd.xlane.f32.xlu0 %v506
        %v913 = vpop.xlane.xlu0 %912
        %914 = vadd.xlane.f32.xlu0 %v507
        %v915 = vpop.xlane.xlu0 %914
        %916 = vadd.xlane.f32.xlu0 %v508
        %v917 = vpop.xlane.xlu0 %916
        %918 = vadd.xlane.f32.xlu0 %v509
        %v919 = vpop.xlane.xlu0 %918
        %920 = vadd.xlane.f32.xlu0 %v510
        %v921 = vpop.xlane.xlu0 %920
        %922 = vadd.xlane.f32.xlu0 %v511
        %v923 = vpop.xlane.xlu0 %922
        %924 = vadd.xlane.f32.xlu0 %v512
        %v925 = vpop.xlane.xlu0 %924
        %926 = vadd.xlane.f32.xlu0 %v513
        %v927 = vpop.xlane.xlu0 %926
        %928 = vadd.xlane.f32.xlu0 %v514
        %v929 = vpop.xlane.xlu0 %928
        %930 = vadd.xlane.f32.xlu0 %v515
        %v931 = vpop.xlane.xlu0 %930
        %932 = vadd.xlane.f32.xlu0 %v516
        %v933 = vpop.xlane.xlu0 %932
        %v934 = vmul.f32 %v871, %v581
        %v935 = vmul.f32 %v873, %v581
        %v936 = vmul.f32 %v875, %v581
        %v937 = vmul.f32 %v877, %v581
        %v938 = vmul.f32 %v879, %v581
        %v939 = vmul.f32 %v881, %v581
        %v940 = vmul.f32 %v883, %v581
        %v941 = vmul.f32 %v885, %v581
        %v942 = vmul.f32 %v887, %v581
        %v943 = vmul.f32 %v889, %v581
        %v944 = vmul.f32 %v891, %v581
        %v945 = vmul.f32 %v893, %v581
        %v946 = vmul.f32 %v895, %v581
        %v947 = vmul.f32 %v897, %v581
        %v948 = vmul.f32 %v899, %v581
        %v949 = vmul.f32 %v901, %v581
        %v950 = vmul.f32 %v903, %v581
        %v951 = vmul.f32 %v905, %v581
        %v952 = vmul.f32 %v907, %v581
        %v953 = vmul.f32 %v909, %v581
        %v954 = vmul.f32 %v911, %v581
        %v955 = vmul.f32 %v913, %v581
        %v956 = vmul.f32 %v915, %v581
        %v957 = vmul.f32 %v917, %v581
        %v958 = vmul.f32 %v919, %v581
        %v959 = vmul.f32 %v921, %v581
        %v960 = vmul.f32 %v923, %v581
        %v961 = vmul.f32 %v925, %v581
        %v962 = vmul.f32 %v927, %v581
        %v963 = vmul.f32 %v929, %v581
        %v964 = vmul.f32 %v931, %v581
        %v965 = vmul.f32 %v933, %v581
        %v966 = vsub.f32 %v485, %v934
        %v967 = vsub.f32 %v486, %v935
        %v968 = vsub.f32 %v487, %v936
        %v969 = vsub.f32 %v488, %v937
        %v970 = vsub.f32 %v489, %v938
        %v971 = vsub.f32 %v490, %v939
        %v972 = vsub.f32 %v491, %v940
        %v973 = vsub.f32 %v492, %v941
        %v974 = vsub.f32 %v493, %v942
        %v975 = vsub.f32 %v494, %v943
        %v976 = vsub.f32 %v495, %v944
        %v977 = vsub.f32 %v496, %v945
        %v978 = vsub.f32 %v497, %v946
        %v979 = vsub.f32 %v498, %v947
        %v980 = vsub.f32 %v499, %v948
        %v981 = vsub.f32 %v500, %v949
        %v982 = vsub.f32 %v501, %v950
        %v983 = vsub.f32 %v502, %v951
        %v984 = vsub.f32 %v503, %v952
        %v985 = vsub.f32 %v504, %v953
        %v986 = vsub.f32 %v505, %v954
        %v987 = vsub.f32 %v506, %v955
        %v988 = vsub.f32 %v507, %v956
        %v989 = vsub.f32 %v508, %v957
        %v990 = vsub.f32 %v509, %v958
        %v991 = vsub.f32 %v510, %v959
        %v992 = vsub.f32 %v511, %v960
        %v993 = vsub.f32 %v512, %v961
        %v994 = vsub.f32 %v513, %v962
        %v995 = vsub.f32 %v514, %v963
        %v996 = vsub.f32 %v515, %v964
        %v997 = vsub.f32 %v516, %v965
        %v998 = vmul.f32 %v966, %v966
        %v999 = vmul.f32 %v967, %v967
        %v1000 = vmul.f32 %v968, %v968
        %v1001 = vmul.f32 %v969, %v969
        %v1002 = vmul.f32 %v970, %v970
        %v1003 = vmul.f32 %v971, %v971
        %v1004 = vmul.f32 %v972, %v972
        %v1005 = vmul.f32 %v973, %v973
        %v1006 = vmul.f32 %v974, %v974
        %v1007 = vmul.f32 %v975, %v975
        %v1008 = vmul.f32 %v976, %v976
        %v1009 = vmul.f32 %v977, %v977
        %v1010 = vmul.f32 %v978, %v978
        %v1011 = vmul.f32 %v979, %v979
        %v1012 = vmul.f32 %v980, %v980
        %v1013 = vmul.f32 %v981, %v981
        %v1014 = vmul.f32 %v982, %v982
        %v1015 = vmul.f32 %v983, %v983
        %v1016 = vmul.f32 %v984, %v984
        %v1017 = vmul.f32 %v985, %v985
        %v1018 = vmul.f32 %v986, %v986
        %v1019 = vmul.f32 %v987, %v987
        %v1020 = vmul.f32 %v988, %v988
        %v1021 = vmul.f32 %v989, %v989
        %v1022 = vmul.f32 %v990, %v990
        %v1023 = vmul.f32 %v991, %v991
        %v1024 = vmul.f32 %v992, %v992
        %v1025 = vmul.f32 %v993, %v993
        %v1026 = vmul.f32 %v994, %v994
        %v1027 = vmul.f32 %v995, %v995
        %v1028 = vmul.f32 %v996, %v996
        %v1029 = vmul.f32 %v997, %v997
        %1030 = vadd.xlane.f32.xlu0 %v998
        %v1031 = vpop.xlane.xlu0 %1030
        %1032 = vadd.xlane.f32.xlu0 %v999
        %v1033 = vpop.xlane.xlu0 %1032
        %1034 = vadd.xlane.f32.xlu0 %v1000
        %v1035 = vpop.xlane.xlu0 %1034
        %1036 = vadd.xlane.f32.xlu0 %v1001
        %v1037 = vpop.xlane.xlu0 %1036
        %1038 = vadd.xlane.f32.xlu0 %v1002
        %v1039 = vpop.xlane.xlu0 %1038
        %1040 = vadd.xlane.f32.xlu0 %v1003
        %v1041 = vpop.xlane.xlu0 %1040
        %1042 = vadd.xlane.f32.xlu0 %v1004
        %v1043 = vpop.xlane.xlu0 %1042
        %1044 = vadd.xlane.f32.xlu0 %v1005
        %v1045 = vpop.xlane.xlu0 %1044
        %1046 = vadd.xlane.f32.xlu0 %v1006
        %v1047 = vpop.xlane.xlu0 %1046
        %1048 = vadd.xlane.f32.xlu0 %v1007
        %v1049 = vpop.xlane.xlu0 %1048
        %1050 = vadd.xlane.f32.xlu0 %v1008
        %v1051 = vpop.xlane.xlu0 %1050
        %1052 = vadd.xlane.f32.xlu0 %v1009
        %v1053 = vpop.xlane.xlu0 %1052
        %1054 = vadd.xlane.f32.xlu0 %v1010
        %v1055 = vpop.xlane.xlu0 %1054
        %1056 = vadd.xlane.f32.xlu0 %v1011
        %v1057 = vpop.xlane.xlu0 %1056
        %1058 = vadd.xlane.f32.xlu0 %v1012
        %v1059 = vpop.xlane.xlu0 %1058
        %1060 = vadd.xlane.f32.xlu0 %v1013
        %v1061 = vpop.xlane.xlu0 %1060
        %1062 = vadd.xlane.f32.xlu0 %v1014
        %v1063 = vpop.xlane.xlu0 %1062
        %1064 = vadd.xlane.f32.xlu0 %v1015
        %v1065 = vpop.xlane.xlu0 %1064
        %1066 = vadd.xlane.f32.xlu0 %v1016
        %v1067 = vpop.xlane.xlu0 %1066
        %1068 = vadd.xlane.f32.xlu0 %v1017
        %v1069 = vpop.xlane.xlu0 %1068
        %1070 = vadd.xlane.f32.xlu0 %v1018
        %v1071 = vpop.xlane.xlu0 %1070
        %1072 = vadd.xlane.f32.xlu0 %v1019
        %v1073 = vpop.xlane.xlu0 %1072
        %1074 = vadd.xlane.f32.xlu0 %v1020
        %v1075 = vpop.xlane.xlu0 %1074
        %1076 = vadd.xlane.f32.xlu0 %v1021
        %v1077 = vpop.xlane.xlu0 %1076
        %1078 = vadd.xlane.f32.xlu0 %v1022
        %v1079 = vpop.xlane.xlu0 %1078
        %1080 = vadd.xlane.f32.xlu0 %v1023
        %v1081 = vpop.xlane.xlu0 %1080
        %1082 = vadd.xlane.f32.xlu0 %v1024
        %v1083 = vpop.xlane.xlu0 %1082
        %1084 = vadd.xlane.f32.xlu0 %v1025
        %v1085 = vpop.xlane.xlu0 %1084
        %1086 = vadd.xlane.f32.xlu0 %v1026
        %v1087 = vpop.xlane.xlu0 %1086
        %1088 = vadd.xlane.f32.xlu0 %v1027
        %v1089 = vpop.xlane.xlu0 %1088
        %1090 = vadd.xlane.f32.xlu0 %v1028
        %v1091 = vpop.xlane.xlu0 %1090
        %1092 = vadd.xlane.f32.xlu0 %v1029
        %v1093 = vpop.xlane.xlu0 %1092
        %v1094 = vmul.f32 %v1031, %v581
        %v1095 = vmul.f32 %v1033, %v581
        %v1096 = vmul.f32 %v1035, %v581
        %v1097 = vmul.f32 %v1037, %v581
        %v1098 = vmul.f32 %v1039, %v581
        %v1099 = vmul.f32 %v1041, %v581
        %v1100 = vmul.f32 %v1043, %v581
        %v1101 = vmul.f32 %v1045, %v581
        %v1102 = vmul.f32 %v1047, %v581
        %v1103 = vmul.f32 %v1049, %v581
        %v1104 = vmul.f32 %v1051, %v581
        %v1105 = vmul.f32 %v1053, %v581
        %v1106 = vmul.f32 %v1055, %v581
        %v1107 = vmul.f32 %v1057, %v581
        %v1108 = vmul.f32 %v1059, %v581
        %v1109 = vmul.f32 %v1061, %v581
        %v1110 = vmul.f32 %v1063, %v581
        %v1111 = vmul.f32 %v1065, %v581
        %v1112 = vmul.f32 %v1067, %v581
        %v1113 = vmul.f32 %v1069, %v581
        %v1114 = vmul.f32 %v1071, %v581
        %v1115 = vmul.f32 %v1073, %v581
        %v1116 = vmul.f32 %v1075, %v581
        %v1117 = vmul.f32 %v1077, %v581
        %v1118 = vmul.f32 %v1079, %v581
        %v1119 = vmul.f32 %v1081, %v581
        %v1120 = vmul.f32 %v1083, %v581
        %v1121 = vmul.f32 %v1085, %v581
        %v1122 = vmul.f32 %v1087, %v581
        %v1123 = vmul.f32 %v1089, %v581
        %v1124 = vmul.f32 %v1091, %v581
        %v1125 = vmul.f32 %v1093, %v581
        %v1126 = vadd.f32 %v1094, 1e-05
        %v1127 = vadd.f32 %v1095, 1e-05
        %v1128 = vadd.f32 %v1096, 1e-05
        %v1129 = vadd.f32 %v1097, 1e-05
        %v1130 = vadd.f32 %v1098, 1e-05
        %v1131 = vadd.f32 %v1099, 1e-05
        %v1132 = vadd.f32 %v1100, 1e-05
        %v1133 = vadd.f32 %v1101, 1e-05
        %v1134 = vadd.f32 %v1102, 1e-05
        %v1135 = vadd.f32 %v1103, 1e-05
        %v1136 = vadd.f32 %v1104, 1e-05
        %v1137 = vadd.f32 %v1105, 1e-05
        %v1138 = vadd.f32 %v1106, 1e-05
        %v1139 = vadd.f32 %v1107, 1e-05
        %v1140 = vadd.f32 %v1108, 1e-05
        %v1141 = vadd.f32 %v1109, 1e-05
        %v1142 = vadd.f32 %v1110, 1e-05
        %v1143 = vadd.f32 %v1111, 1e-05
        %v1144 = vadd.f32 %v1112, 1e-05
        %v1145 = vadd.f32 %v1113, 1e-05
        %v1146 = vadd.f32 %v1114, 1e-05
        %v1147 = vadd.f32 %v1115, 1e-05
        %v1148 = vadd.f32 %v1116, 1e-05
        %v1149 = vadd.f32 %v1117, 1e-05
        %v1150 = vadd.f32 %v1118, 1e-05
        %v1151 = vadd.f32 %v1119, 1e-05
        %v1152 = vadd.f32 %v1120, 1e-05
        %v1153 = vadd.f32 %v1121, 1e-05
        %v1154 = vadd.f32 %v1122, 1e-05
        %v1155 = vadd.f32 %v1123, 1e-05
        %v1156 = vadd.f32 %v1124, 1e-05
        %v1157 = vadd.f32 %v1125, 1e-05
        %v1158 = vrsqrt.pop %v1126
        %v1159 = vrsqrt.pop %v1127
        %v1160 = vrsqrt.pop %v1128
        %v1161 = vrsqrt.pop %v1129
        %v1162 = vrsqrt.pop %v1130
        %v1163 = vrsqrt.pop %v1131
        %v1164 = vrsqrt.pop %v1132
        %v1165 = vrsqrt.pop %v1133
        %v1166 = vrsqrt.pop %v1134
        %v1167 = vrsqrt.pop %v1135
        %v1168 = vrsqrt.pop %v1136
        %v1169 = vrsqrt.pop %v1137
        %v1170 = vrsqrt.pop %v1138
        %v1171 = vrsqrt.pop %v1139
        %v1172 = vrsqrt.pop %v1140
        %v1173 = vrsqrt.pop %v1141
        %v1174 = vrsqrt.pop %v1142
        %v1175 = vrsqrt.pop %v1143
        %v1176 = vrsqrt.pop %v1144
        %v1177 = vrsqrt.pop %v1145
        %v1178 = vrsqrt.pop %v1146
        %v1179 = vrsqrt.pop %v1147
        %v1180 = vrsqrt.pop %v1148
        %v1181 = vrsqrt.pop %v1149
        %v1182 = vrsqrt.pop %v1150
        %v1183 = vrsqrt.pop %v1151
        %v1184 = vrsqrt.pop %v1152
        %v1185 = vrsqrt.pop %v1153
        %v1186 = vrsqrt.pop %v1154
        %v1187 = vrsqrt.pop %v1155
        %v1188 = vrsqrt.pop %v1156
        %v1189 = vrsqrt.pop %v1157
        %v1190 = vmul.f32 %v966, %v1158
        %v1191 = vmul.f32 %v967, %v1159
        %v1192 = vmul.f32 %v968, %v1160
        %v1193 = vmul.f32 %v969, %v1161
        %v1194 = vmul.f32 %v970, %v1162
        %v1195 = vmul.f32 %v971, %v1163
        %v1196 = vmul.f32 %v972, %v1164
        %v1197 = vmul.f32 %v973, %v1165
        %v1198 = vmul.f32 %v974, %v1166
        %v1199 = vmul.f32 %v975, %v1167
        %v1200 = vmul.f32 %v976, %v1168
        %v1201 = vmul.f32 %v977, %v1169
        %v1202 = vmul.f32 %v978, %v1170
        %v1203 = vmul.f32 %v979, %v1171
        %v1204 = vmul.f32 %v980, %v1172
        %v1205 = vmul.f32 %v981, %v1173
        %v1206 = vmul.f32 %v982, %v1174
        %v1207 = vmul.f32 %v983, %v1175
        %v1208 = vmul.f32 %v984, %v1176
        %v1209 = vmul.f32 %v985, %v1177
        %v1210 = vmul.f32 %v986, %v1178
        %v1211 = vmul.f32 %v987, %v1179
        %v1212 = vmul.f32 %v988, %v1180
        %v1213 = vmul.f32 %v989, %v1181
        %v1214 = vmul.f32 %v990, %v1182
        %v1215 = vmul.f32 %v991, %v1183
        %v1216 = vmul.f32 %v992, %v1184
        %v1217 = vmul.f32 %v993, %v1185
        %v1218 = vmul.f32 %v994, %v1186
        %v1219 = vmul.f32 %v995, %v1187
        %v1220 = vmul.f32 %v996, %v1188
        %v1221 = vmul.f32 %v997, %v1189
        %v1222 = vld [vmem:[%s2] sm:$0x1]
        %v1224 = vlaneseq
        %v1225 = vshrl.u32 %v1224, 7
        %v1226 = vsub.s32 0, %v1225
        %v1227 = vrot.slane %v1222, %v1226
        %v1229 = vmul.f32 %v1190, %v1227
        %v1230 = vmul.f32 %v1191, %v1227
        %v1231 = vmul.f32 %v1192, %v1227
        %v1232 = vmul.f32 %v1193, %v1227
        %v1233 = vmul.f32 %v1194, %v1227
        %v1234 = vmul.f32 %v1195, %v1227
        %v1235 = vmul.f32 %v1196, %v1227
        %v1236 = vmul.f32 %v1197, %v1227
        %v1237 = vmul.f32 %v1198, %v1227
        %v1238 = vmul.f32 %v1199, %v1227
        %v1239 = vmul.f32 %v1200, %v1227
        %v1240 = vmul.f32 %v1201, %v1227
        %v1241 = vmul.f32 %v1202, %v1227
        %v1242 = vmul.f32 %v1203, %v1227
        %v1243 = vmul.f32 %v1204, %v1227
        %v1244 = vmul.f32 %v1205, %v1227
        %v1245 = vmul.f32 %v1206, %v1227
        %v1246 = vmul.f32 %v1207, %v1227
        %v1247 = vmul.f32 %v1208, %v1227
        %v1248 = vmul.f32 %v1209, %v1227
        %v1249 = vmul.f32 %v1210, %v1227
        %v1250 = vmul.f32 %v1211, %v1227
        %v1251 = vmul.f32 %v1212, %v1227
        %v1252 = vmul.f32 %v1213, %v1227
        %v1253 = vmul.f32 %v1214, %v1227
        %v1254 = vmul.f32 %v1215, %v1227
        %v1255 = vmul.f32 %v1216, %v1227
        %v1256 = vmul.f32 %v1217, %v1227
        %v1257 = vmul.f32 %v1218, %v1227
        %v1258 = vmul.f32 %v1219, %v1227
        %v1259 = vmul.f32 %v1220, %v1227
        %v1260 = vmul.f32 %v1221, %v1227
        %v1261 = vpack.c.bf16 %v1230, %v1229
        %v1262 = vpack.c.bf16 %v1232, %v1231
        %v1263 = vpack.c.bf16 %v1234, %v1233
        %v1264 = vpack.c.bf16 %v1236, %v1235
        %v1265 = vpack.c.bf16 %v1238, %v1237
        %v1266 = vpack.c.bf16 %v1240, %v1239
        %v1267 = vpack.c.bf16 %v1242, %v1241
        %v1268 = vpack.c.bf16 %v1244, %v1243
        %v1269 = vpack.c.bf16 %v1246, %v1245
        %v1270 = vpack.c.bf16 %v1248, %v1247
        %v1271 = vpack.c.bf16 %v1250, %v1249
        %v1272 = vpack.c.bf16 %v1252, %v1251
        %v1273 = vpack.c.bf16 %v1254, %v1253
        %v1274 = vpack.c.bf16 %v1256, %v1255
        %v1275 = vpack.c.bf16 %v1258, %v1257
        %v1276 = vpack.c.bf16 %v1260, %v1259
        %v1277 = vld [vmem:[#allocation7] sm:$0xff]
        %v1278 = vld [vmem:[#allocation7 + $0x8] sm:$0xff]
        %v1279 = vld [vmem:[#allocation7 + $0x10] sm:$0xff]
        %v1280 = vld [vmem:[#allocation7 + $0x18] sm:$0xff]
        %v1281 = vld [vmem:[#allocation7 + $0x20] sm:$0xff]
        %v1282 = vld [vmem:[#allocation7 + $0x28] sm:$0xff]
        %v1283 = vld [vmem:[#allocation7 + $0x30] sm:$0xff]
        %v1284 = vld [vmem:[#allocation7 + $0x38] sm:$0xff]
        %v1285 = vld [vmem:[#allocation7 + $0x40] sm:$0xff]
        %v1286 = vld [vmem:[#allocation7 + $0x48] sm:$0xff]
        %v1287 = vld [vmem:[#allocation7 + $0x50] sm:$0xff]
        %v1288 = vld [vmem:[#allocation7 + $0x58] sm:$0xff]
        %v1289 = vld [vmem:[#allocation7 + $0x60] sm:$0xff]
        %v1290 = vld [vmem:[#allocation7 + $0x68] sm:$0xff]
        %v1291 = vld [vmem:[#allocation7 + $0x70] sm:$0xff]
        %v1292 = vld [vmem:[#allocation7 + $0x78] sm:$0xff]
        %v1309 = vunpack.c.l.b16 %v1277
        %v1310 = vunpack.c.h.b16 %v1277
        %v1311 = vunpack.c.l.b16 %v1278
        %v1312 = vunpack.c.h.b16 %v1278
        %v1313 = vunpack.c.l.b16 %v1279
        %v1314 = vunpack.c.h.b16 %v1279
        %v1315 = vunpack.c.l.b16 %v1280
        %v1316 = vunpack.c.h.b16 %v1280
        %v1317 = vunpack.c.l.b16 %v1281
        %v1318 = vunpack.c.h.b16 %v1281
        %v1319 = vunpack.c.l.b16 %v1282
        %v1320 = vunpack.c.h.b16 %v1282
        %v1321 = vunpack.c.l.b16 %v1283
        %v1322 = vunpack.c.h.b16 %v1283
        %v1323 = vunpack.c.l.b16 %v1284
        %v1324 = vunpack.c.h.b16 %v1284
        %v1325 = vunpack.c.l.b16 %v1285
        %v1326 = vunpack.c.h.b16 %v1285
        %v1327 = vunpack.c.l.b16 %v1286
        %v1328 = vunpack.c.h.b16 %v1286
        %v1329 = vunpack.c.l.b16 %v1287
        %v1330 = vunpack.c.h.b16 %v1287
        %v1331 = vunpack.c.l.b16 %v1288
        %v1332 = vunpack.c.h.b16 %v1288
        %v1333 = vunpack.c.l.b16 %v1289
        %v1334 = vunpack.c.h.b16 %v1289
        %v1335 = vunpack.c.l.b16 %v1290
        %v1336 = vunpack.c.h.b16 %v1290
        %v1337 = vunpack.c.l.b16 %v1291
        %v1338 = vunpack.c.h.b16 %v1291
        %v1339 = vunpack.c.l.b16 %v1292
        %v1340 = vunpack.c.h.b16 %v1292
        %v1341 = vpack.c.b16 %v1311, %v1309
        %v1342 = vpack.c.b16 %v1312, %v1310
        %v1343 = vpack.c.b16 %v1315, %v1313
        %v1344 = vpack.c.b16 %v1316, %v1314
        %v1345 = vpack.c.b16 %v1319, %v1317
        %v1346 = vpack.c.b16 %v1320, %v1318
        %v1347 = vpack.c.b16 %v1323, %v1321
        %v1348 = vpack.c.b16 %v1324, %v1322
        %v1349 = vpack.c.b16 %v1327, %v1325
        %v1350 = vpack.c.b16 %v1328, %v1326
        %v1351 = vpack.c.b16 %v1331, %v1329
        %v1352 = vpack.c.b16 %v1332, %v1330
        %v1353 = vpack.c.b16 %v1335, %v1333
        %v1354 = vpack.c.b16 %v1336, %v1334
        %v1355 = vpack.c.b16 %v1339, %v1337
        %v1356 = vpack.c.b16 %v1340, %v1338
        %1373 = vmatprep.subr.bf16.mxu0 %v1342
        %1374 = vmatpush1.bf16.msra.mxu0 %v1341
        %1375 = vmatprep.subr.bf16.mxu0 %v1344
        %1376 = vmatpush1.bf16.msra.mxu0 %v1343
        %1377 = vmatprep.subr.bf16.mxu0 %v1346
        %1378 = vmatpush1.bf16.msra.mxu0 %v1345
        %1379 = vmatprep.subr.bf16.mxu0 %v1348
        %1380 = vmatpush1.bf16.msra.mxu0 %v1347
        %1381 = vmatprep.subr.bf16.mxu0 %v1350
        %1382 = vmatpush1.bf16.msra.mxu0 %v1349
        %1383 = vmatprep.subr.bf16.mxu0 %v1352
        %1384 = vmatpush1.bf16.msra.mxu0 %v1351
        %1385 = vmatprep.subr.bf16.mxu0 %v1354
        %1386 = vmatpush1.bf16.msra.mxu0 %v1353
        %1387 = vmatprep.subr.bf16.mxu0 %v1356
        %1388 = vmatpush1.bf16.msra.mxu0 %v1355
        %1389 = vmatprep.subr.bf16.mxu0 0
        %1390 = vmatpush1.bf16.msra.mxu0 0
        %1391 = vmatprep.subr.bf16.mxu0 0
        %1392 = vmatpush1.bf16.msra.mxu0 0
        %1393 = vmatprep.subr.bf16.mxu0 0
        %1394 = vmatpush1.bf16.msra.mxu0 0
        %1395 = vmatprep.subr.bf16.mxu0 0
        %1396 = vmatpush1.bf16.msra.mxu0 0
        %1397 = vmatprep.subr.bf16.mxu0 0
        %1398 = vmatpush1.bf16.msra.mxu0 0
        %1399 = vmatprep.subr.bf16.mxu0 0
        %1400 = vmatpush1.bf16.msra.mxu0 0
        %1401 = vmatprep.subr.bf16.mxu0 0
        %1402 = vmatpush1.bf16.msra.mxu0 0
        %1403 = vmatprep.subr.bf16.mxu0 0
        %1404 = vmatpush1.bf16.msra.mxu0 0
        %1405 = vmatprep.mubr.bf16.mxu0 0
        %1406 = vmatmul.mubr.bf16.gmra.mrb[0].mxu0 %v1261
        %v1407 = vpop.f32.mrb[0].mxu0
        %v1408 = vadd.f32 0.0, %v1407
        %v1409 = vpop.f32.mrb[0].mxu0
        %v1410 = vadd.f32 0.0, %v1409
        %v1411 = vpop.f32.mrb[0].mxu0
        %v1412 = vadd.f32 0.0, %v1411
        %v1413 = vpop.f32.mrb[0].mxu0
        %v1414 = vadd.f32 0.0, %v1413
        %1415 = vmatprep.mubr.bf16.mxu0 0
        %1416 = vmatmul.mubr.bf16.gmra.mrb[0].mxu0 %v1262
        %v1417 = vpop.f32.mrb[0].mxu0
        %v1418 = vadd.f32 0.0, %v1417
        %v1419 = vpop.f32.mrb[0].mxu0
        %v1420 = vadd.f32 0.0, %v1419
        %v1421 = vpop.f32.mrb[0].mxu0
        %v1422 = vadd.f32 0.0, %v1421
        %v1423 = vpop.f32.mrb[0].mxu0
        %v1424 = vadd.f32 0.0, %v1423
        %1425 = vmatprep.mubr.bf16.mxu0 0
        %1426 = vmatmul.mubr.bf16.gmra.mrb[0].mxu0 %v1263
        %v1427 = vpop.f32.mrb[0].mxu0
        %v1428 = vadd.f32 0.0, %v1427
        %v1429 = vpop.f32.mrb[0].mxu0
        %v1430 = vadd.f32 0.0, %v1429
        %v1431 = vpop.f32.mrb[0].mxu0
        %v1432 = vadd.f32 0.0, %v1431
        %v1433 = vpop.f32.mrb[0].mxu0
        %v1434 = vadd.f32 0.0, %v1433
        %1435 = vmatprep.mubr.bf16.mxu0 0
        %1436 = vmatmul.mubr.bf16.gmra.mrb[0].mxu0 %v1264
        %v1437 = vpop.f32.mrb[0].mxu0
        %v1438 = vadd.f32 0.0, %v1437
        %v1439 = vpop.f32.mrb[0].mxu0
        %v1440 = vadd.f32 0.0, %v1439
        %v1441 = vpop.f32.mrb[0].mxu0
        %v1442 = vadd.f32 0.0, %v1441
        %v1443 = vpop.f32.mrb[0].mxu0
        %v1444 = vadd.f32 0.0, %v1443
        %1445 = vmatprep.mubr.bf16.mxu0 0
        %1446 = vmatmul.mubr.bf16.gmra.mrb[0].mxu0 %v1265
        %v1447 = vpop.f32.mrb[0].mxu0
        %v1448 = vadd.f32 0.0, %v1447
        %v1449 = vpop.f32.mrb[0].mxu0
        %v1450 = vadd.f32 0.0, %v1449
        %v1451 = vpop.f32.mrb[0].mxu0
        %v1452 = vadd.f32 0.0, %v1451
        %v1453 = vpop.f32.mrb[0].mxu0
        %v1454 = vadd.f32 0.0, %v1453
        %1455 = vmatprep.mubr.bf16.mxu0 0
        %1456 = vmatmul.mubr.bf16.gmra.mrb[0].mxu0 %v1266
        %v1457 = vpop.f32.mrb[0].mxu0
        %v1458 = vadd.f32 0.0, %v1457
        %v1459 = vpop.f32.mrb[0].mxu0
        %v1460 = vadd.f32 0.0, %v1459
        %v1461 = vpop.f32.mrb[0].mxu0
        %v1462 = vadd.f32 0.0, %v1461
        %v1463 = vpop.f32.mrb[0].mxu0
        %v1464 = vadd.f32 0.0, %v1463
        %1465 = vmatprep.mubr.bf16.mxu0 0
        %1466 = vmatmul.mubr.bf16.gmra.mrb[0].mxu0 %v1267
        %v1467 = vpop.f32.mrb[0].mxu0
        %v1468 = vadd.f32 0.0, %v1467
        %v1469 = vpop.f32.mrb[0].mxu0
        %v1470 = vadd.f32 0.0, %v1469
        %v1471 = vpop.f32.mrb[0].mxu0
        %v1472 = vadd.f32 0.0, %v1471
        %v1473 = vpop.f32.mrb[0].mxu0
        %v1474 = vadd.f32 0.0, %v1473
        %1475 = vmatprep.mubr.bf16.mxu0 0
        %1476 = vmatmul.mubr.bf16.gmra.mrb[0].mxu0 %v1268
        %v1477 = vpop.f32.mrb[0].mxu0
        %v1478 = vadd.f32 0.0, %v1477
        %v1479 = vpop.f32.mrb[0].mxu0
        %v1480 = vadd.f32 0.0, %v1479
        %v1481 = vpop.f32.mrb[0].mxu0
        %v1482 = vadd.f32 0.0, %v1481
        %v1483 = vpop.f32.mrb[0].mxu0
        %v1484 = vadd.f32 0.0, %v1483
        %1485 = vmatprep.mubr.bf16.mxu0 0
        %1486 = vmatmul.mubr.bf16.gmra.mrb[0].mxu0 %v1269
        %v1487 = vpop.f32.mrb[0].mxu0
        %v1488 = vadd.f32 0.0, %v1487
        %v1489 = vpop.f32.mrb[0].mxu0
        %v1490 = vadd.f32 0.0, %v1489
        %v1491 = vpop.f32.mrb[0].mxu0
        %v1492 = vadd.f32 0.0, %v1491
        %v1493 = vpop.f32.mrb[0].mxu0
        %v1494 = vadd.f32 0.0, %v1493
        %1495 = vmatprep.mubr.bf16.mxu0 0
        %1496 = vmatmul.mubr.bf16.gmra.mrb[0].mxu0 %v1270
        %v1497 = vpop.f32.mrb[0].mxu0
        %v1498 = vadd.f32 0.0, %v1497
        %v1499 = vpop.f32.mrb[0].mxu0
        %v1500 = vadd.f32 0.0, %v1499
        %v1501 = vpop.f32.mrb[0].mxu0
        %v1502 = vadd.f32 0.0, %v1501
        %v1503 = vpop.f32.mrb[0].mxu0
        %v1504 = vadd.f32 0.0, %v1503
        %1505 = vmatprep.mubr.bf16.mxu0 0
        %1506 = vmatmul.mubr.bf16.gmra.mrb[0].mxu0 %v1271
        %v1507 = vpop.f32.mrb[0].mxu0
        %v1508 = vadd.f32 0.0, %v1507
        %v1509 = vpop.f32.mrb[0].mxu0
        %v1510 = vadd.f32 0.0, %v1509
        %v1511 = vpop.f32.mrb[0].mxu0
        %v1512 = vadd.f32 0.0, %v1511
        %v1513 = vpop.f32.mrb[0].mxu0
        %v1514 = vadd.f32 0.0, %v1513
        %1515 = vmatprep.mubr.bf16.mxu0 0
        %1516 = vmatmul.mubr.bf16.gmra.mrb[0].mxu0 %v1272
        %v1517 = vpop.f32.mrb[0].mxu0
        %v1518 = vadd.f32 0.0, %v1517
        %v1519 = vpop.f32.mrb[0].mxu0
        %v1520 = vadd.f32 0.0, %v1519
        %v1521 = vpop.f32.mrb[0].mxu0
        %v1522 = vadd.f32 0.0, %v1521
        %v1523 = vpop.f32.mrb[0].mxu0
        %v1524 = vadd.f32 0.0, %v1523
        %1525 = vmatprep.mubr.bf16.mxu0 0
        %1526 = vmatmul.mubr.bf16.gmra.mrb[0].mxu0 %v1273
        %v1527 = vpop.f32.mrb[0].mxu0
        %v1528 = vadd.f32 0.0, %v1527
        %v1529 = vpop.f32.mrb[0].mxu0
        %v1530 = vadd.f32 0.0, %v1529
        %v1531 = vpop.f32.mrb[0].mxu0
        %v1532 = vadd.f32 0.0, %v1531
        %v1533 = vpop.f32.mrb[0].mxu0
        %v1534 = vadd.f32 0.0, %v1533
        %1535 = vmatprep.mubr.bf16.mxu0 0
        %1536 = vmatmul.mubr.bf16.gmra.mrb[0].mxu0 %v1274
        %v1537 = vpop.f32.mrb[0].mxu0
        %v1538 = vadd.f32 0.0, %v1537
        %v1539 = vpop.f32.mrb[0].mxu0
        %v1540 = vadd.f32 0.0, %v1539
        %v1541 = vpop.f32.mrb[0].mxu0
        %v1542 = vadd.f32 0.0, %v1541
        %v1543 = vpop.f32.mrb[0].mxu0
        %v1544 = vadd.f32 0.0, %v1543
        %1545 = vmatprep.mubr.bf16.mxu0 0
        %1546 = vmatmul.mubr.bf16.gmra.mrb[0].mxu0 %v1275
        %v1547 = vpop.f32.mrb[0].mxu0
        %v1548 = vadd.f32 0.0, %v1547
        %v1549 = vpop.f32.mrb[0].mxu0
        %v1550 = vadd.f32 0.0, %v1549
        %v1551 = vpop.f32.mrb[0].mxu0
        %v1552 = vadd.f32 0.0, %v1551
        %v1553 = vpop.f32.mrb[0].mxu0
        %v1554 = vadd.f32 0.0, %v1553
        %1555 = vmatprep.mubr.bf16.mxu0 0
        %1556 = vmatmul.mubr.bf16.gmra.mrb[0].mxu0 %v1276
        %v1557 = vpop.f32.mrb[0].mxu0
        %v1558 = vadd.f32 0.0, %v1557
        %v1559 = vpop.f32.mrb[0].mxu0
        %v1560 = vadd.f32 0.0, %v1559
        %v1561 = vpop.f32.mrb[0].mxu0
        %v1562 = vadd.f32 0.0, %v1561
        %v1563 = vpop.f32.mrb[0].mxu0
        %v1564 = vadd.f32 0.0, %v1563
        %1565 = vdwg.mxu0
        %v1566 = vld [vmem:[%s3] sm:$0x1]
        %v1568 = vlaneseq
        %v1569 = vshrl.u32 %v1568, 7
        %v1570 = vsub.s32 0, %v1569
        %v1571 = vrot.slane %v1566, %v1570
        %v1573 = vadd.f32 %v1408, %v1571
        %v1574 = vadd.f32 %v1412, %v1571
        %v1575 = vadd.f32 %v1418, %v1571
        %v1576 = vadd.f32 %v1422, %v1571
        %v1577 = vadd.f32 %v1428, %v1571
        %v1578 = vadd.f32 %v1432, %v1571
        %v1579 = vadd.f32 %v1438, %v1571
        %v1580 = vadd.f32 %v1442, %v1571
        %v1581 = vadd.f32 %v1448, %v1571
        %v1582 = vadd.f32 %v1452, %v1571
        %v1583 = vadd.f32 %v1458, %v1571
        %v1584 = vadd.f32 %v1462, %v1571
        %v1585 = vadd.f32 %v1468, %v1571
        %v1586 = vadd.f32 %v1472, %v1571
        %v1587 = vadd.f32 %v1478, %v1571
        %v1588 = vadd.f32 %v1482, %v1571
        %v1589 = vadd.f32 %v1488, %v1571
        %v1590 = vadd.f32 %v1492, %v1571
        %v1591 = vadd.f32 %v1498, %v1571
        %v1592 = vadd.f32 %v1502, %v1571
        %v1593 = vadd.f32 %v1508, %v1571
        %v1594 = vadd.f32 %v1512, %v1571
        %v1595 = vadd.f32 %v1518, %v1571
        %v1596 = vadd.f32 %v1522, %v1571
        %v1597 = vadd.f32 %v1528, %v1571
        %v1598 = vadd.f32 %v1532, %v1571
        %v1599 = vadd.f32 %v1538, %v1571
        %v1600 = vadd.f32 %v1542, %v1571
        %v1601 = vadd.f32 %v1548, %v1571
        %v1602 = vadd.f32 %v1552, %v1571
        %v1603 = vadd.f32 %v1558, %v1571
        %v1604 = vadd.f32 %v1562, %v1571
        %v1605 = vxor.u32 %v1573, 2147483648
        %v1606 = vxor.u32 %v1574, 2147483648
        %v1607 = vxor.u32 %v1575, 2147483648
        %v1608 = vxor.u32 %v1576, 2147483648
        %v1609 = vxor.u32 %v1577, 2147483648
        %v1610 = vxor.u32 %v1578, 2147483648
        %v1611 = vxor.u32 %v1579, 2147483648
        %v1612 = vxor.u32 %v1580, 2147483648
        %v1613 = vxor.u32 %v1581, 2147483648
        %v1614 = vxor.u32 %v1582, 2147483648
        %v1615 = vxor.u32 %v1583, 2147483648
        %v1616 = vxor.u32 %v1584, 2147483648
        %v1617 = vxor.u32 %v1585, 2147483648
        %v1618 = vxor.u32 %v1586, 2147483648
        %v1619 = vxor.u32 %v1587, 2147483648
        %v1620 = vxor.u32 %v1588, 2147483648
        %v1621 = vxor.u32 %v1589, 2147483648
        %v1622 = vxor.u32 %v1590, 2147483648
        %v1623 = vxor.u32 %v1591, 2147483648
        %v1624 = vxor.u32 %v1592, 2147483648
        %v1625 = vxor.u32 %v1593, 2147483648
        %v1626 = vxor.u32 %v1594, 2147483648
        %v1627 = vxor.u32 %v1595, 2147483648
        %v1628 = vxor.u32 %v1596, 2147483648
        %v1629 = vxor.u32 %v1597, 2147483648
        %v1630 = vxor.u32 %v1598, 2147483648
        %v1631 = vxor.u32 %v1599, 2147483648
        %v1632 = vxor.u32 %v1600, 2147483648
        %v1633 = vxor.u32 %v1601, 2147483648
        %v1634 = vxor.u32 %v1602, 2147483648
        %v1635 = vxor.u32 %v1603, 2147483648
        %v1636 = vxor.u32 %v1604, 2147483648
        %v1637 = vmul.f32 %v1605, 1.442695
        %v1638 = vpow.pop %v1637
        %v1639 = vmul.f32 %v1606, 1.442695
        %v1640 = vpow.pop %v1639
        %v1641 = vmul.f32 %v1607, 1.442695
        %v1642 = vpow.pop %v1641
        %v1643 = vmul.f32 %v1608, 1.442695
        %v1644 = vpow.pop %v1643
        %v1645 = vmul.f32 %v1609, 1.442695
        %v1646 = vpow.pop %v1645
        %v1647 = vmul.f32 %v1610, 1.442695
        %v1648 = vpow.pop %v1647
        %v1649 = vmul.f32 %v1611, 1.442695
        %v1650 = vpow.pop %v1649
        %v1651 = vmul.f32 %v1612, 1.442695
        %v1652 = vpow.pop %v1651
        %v1653 = vmul.f32 %v1613, 1.442695
        %v1654 = vpow.pop %v1653
        %v1655 = vmul.f32 %v1614, 1.442695
        %v1656 = vpow.pop %v1655
        %v1657 = vmul.f32 %v1615, 1.442695
        %v1658 = vpow.pop %v1657
        %v1659 = vmul.f32 %v1616, 1.442695
        %v1660 = vpow.pop %v1659
        %v1661 = vmul.f32 %v1617, 1.442695
        %v1662 = vpow.pop %v1661
        %v1663 = vmul.f32 %v1618, 1.442695
        %v1664 = vpow.pop %v1663
        %v1665 = vmul.f32 %v1619, 1.442695
        %v1666 = vpow.pop %v1665
        %v1667 = vmul.f32 %v1620, 1.442695
        %v1668 = vpow.pop %v1667
        %v1669 = vmul.f32 %v1621, 1.442695
        %v1670 = vpow.pop %v1669
        %v1671 = vmul.f32 %v1622, 1.442695
        %v1672 = vpow.pop %v1671
        %v1673 = vmul.f32 %v1623, 1.442695
        %v1674 = vpow.pop %v1673
        %v1675 = vmul.f32 %v1624, 1.442695
        %v1676 = vpow.pop %v1675
        %v1677 = vmul.f32 %v1625, 1.442695
        %v1678 = vpow.pop %v1677
        %v1679 = vmul.f32 %v1626, 1.442695
        %v1680 = vpow.pop %v1679
        %v1681 = vmul.f32 %v1627, 1.442695
        %v1682 = vpow.pop %v1681
        %v1683 = vmul.f32 %v1628, 1.442695
        %v1684 = vpow.pop %v1683
        %v1685 = vmul.f32 %v1629, 1.442695
        %v1686 = vpow.pop %v1685
        %v1687 = vmul.f32 %v1630, 1.442695
        %v1688 = vpow.pop %v1687
        %v1689 = vmul.f32 %v1631, 1.442695
        %v1690 = vpow.pop %v1689
        %v1691 = vmul.f32 %v1632, 1.442695
        %v1692 = vpow.pop %v1691
        %v1693 = vmul.f32 %v1633, 1.442695
        %v1694 = vpow.pop %v1693
        %v1695 = vmul.f32 %v1634, 1.442695
        %v1696 = vpow.pop %v1695
        %v1697 = vmul.f32 %v1635, 1.442695
        %v1698 = vpow.pop %v1697
        %v1699 = vmul.f32 %v1636, 1.442695
        %v1700 = vpow.pop %v1699
        %v1701 = vadd.f32 %v1638, 1.0
        %v1702 = vadd.f32 %v1640, 1.0
        %v1703 = vadd.f32 %v1642, 1.0
        %v1704 = vadd.f32 %v1644, 1.0
        %v1705 = vadd.f32 %v1646, 1.0
        %v1706 = vadd.f32 %v1648, 1.0
        %v1707 = vadd.f32 %v1650, 1.0
        %v1708 = vadd.f32 %v1652, 1.0
        %v1709 = vadd.f32 %v1654, 1.0
        %v1710 = vadd.f32 %v1656, 1.0
        %v1711 = vadd.f32 %v1658, 1.0
        %v1712 = vadd.f32 %v1660, 1.0
        %v1713 = vadd.f32 %v1662, 1.0
        %v1714 = vadd.f32 %v1664, 1.0
        %v1715 = vadd.f32 %v1666, 1.0
        %v1716 = vadd.f32 %v1668, 1.0
        %v1717 = vadd.f32 %v1670, 1.0
        %v1718 = vadd.f32 %v1672, 1.0
        %v1719 = vadd.f32 %v1674, 1.0
        %v1720 = vadd.f32 %v1676, 1.0
        %v1721 = vadd.f32 %v1678, 1.0
        %v1722 = vadd.f32 %v1680, 1.0
        %v1723 = vadd.f32 %v1682, 1.0
        %v1724 = vadd.f32 %v1684, 1.0
        %v1725 = vadd.f32 %v1686, 1.0
        %v1726 = vadd.f32 %v1688, 1.0
        %v1727 = vadd.f32 %v1690, 1.0
        %v1728 = vadd.f32 %v1692, 1.0
        %v1729 = vadd.f32 %v1694, 1.0
        %v1730 = vadd.f32 %v1696, 1.0
        %v1731 = vadd.f32 %v1698, 1.0
        %v1732 = vadd.f32 %v1700, 1.0
        %v1733 = vrcp.pop %v1701
        %v1734 = vmul.f32 1.0, %v1733
        %v1735 = vrcp.pop %v1702
        %v1736 = vmul.f32 1.0, %v1735
        %v1737 = vrcp.pop %v1703
        %v1738 = vmul.f32 1.0, %v1737
        %v1739 = vrcp.pop %v1704
        %v1740 = vmul.f32 1.0, %v1739
        %v1741 = vrcp.pop %v1705
        %v1742 = vmul.f32 1.0, %v1741
        %v1743 = vrcp.pop %v1706
        %v1744 = vmul.f32 1.0, %v1743
        %v1745 = vrcp.pop %v1707
        %v1746 = vmul.f32 1.0, %v1745
        %v1747 = vrcp.pop %v1708
        %v1748 = vmul.f32 1.0, %v1747
        %v1749 = vrcp.pop %v1709
        %v1750 = vmul.f32 1.0, %v1749
        %v1751 = vrcp.pop %v1710
        %v1752 = vmul.f32 1.0, %v1751
        %v1753 = vrcp.pop %v1711
        %v1754 = vmul.f32 1.0, %v1753
        %v1755 = vrcp.pop %v1712
        %v1756 = vmul.f32 1.0, %v1755
        %v1757 = vrcp.pop %v1713
        %v1758 = vmul.f32 1.0, %v1757
        %v1759 = vrcp.pop %v1714
        %v1760 = vmul.f32 1.0, %v1759
        %v1761 = vrcp.pop %v1715
        %v1762 = vmul.f32 1.0, %v1761
        %v1763 = vrcp.pop %v1716
        %v1764 = vmul.f32 1.0, %v1763
        %v1765 = vrcp.pop %v1717
        %v1766 = vmul.f32 1.0, %v1765
        %v1767 = vrcp.pop %v1718
        %v1768 = vmul.f32 1.0, %v1767
        %v1769 = vrcp.pop %v1719
        %v1770 = vmul.f32 1.0, %v1769
        %v1771 = vrcp.pop %v1720
        %v1772 = vmul.f32 1.0, %v1771
        %v1773 = vrcp.pop %v1721
        %v1774 = vmul.f32 1.0, %v1773
        %v1775 = vrcp.pop %v1722
        %v1776 = vmul.f32 1.0, %v1775
        %v1777 = vrcp.pop %v1723
        %v1778 = vmul.f32 1.0, %v1777
        %v1779 = vrcp.pop %v1724
        %v1780 = vmul.f32 1.0, %v1779
        %v1781 = vrcp.pop %v1725
        %v1782 = vmul.f32 1.0, %v1781
        %v1783 = vrcp.pop %v1726
        %v1784 = vmul.f32 1.0, %v1783
        %v1785 = vrcp.pop %v1727
        %v1786 = vmul.f32 1.0, %v1785
        %v1787 = vrcp.pop %v1728
        %v1788 = vmul.f32 1.0, %v1787
        %v1789 = vrcp.pop %v1729
        %v1790 = vmul.f32 1.0, %v1789
        %v1791 = vrcp.pop %v1730
        %v1792 = vmul.f32 1.0, %v1791
        %v1793 = vrcp.pop %v1731
        %v1794 = vmul.f32 1.0, %v1793
        %v1795 = vrcp.pop %v1732
        %v1796 = vmul.f32 1.0, %v1795
        %v1797 = vmul.f32 %v1734, %v838
        %v1798 = vmul.f32 %v1736, %v839
        %v1799 = vmul.f32 %v1738, %v840
        %v1800 = vmul.f32 %v1740, %v841
        %v1801 = vmul.f32 %v1742, %v842
        %v1802 = vmul.f32 %v1744, %v843
        %v1803 = vmul.f32 %v1746, %v844
        %v1804 = vmul.f32 %v1748, %v845
        %v1805 = vmul.f32 %v1750, %v846
        %v1806 = vmul.f32 %v1752, %v847
        %v1807 = vmul.f32 %v1754, %v848
        %v1808 = vmul.f32 %v1756, %v849
        %v1809 = vmul.f32 %v1758, %v850
        %v1810 = vmul.f32 %v1760, %v851
        %v1811 = vmul.f32 %v1762, %v852
        %v1812 = vmul.f32 %v1764, %v853
        %v1813 = vmul.f32 %v1766, %v854
        %v1814 = vmul.f32 %v1768, %v855
        %v1815 = vmul.f32 %v1770, %v856
        %v1816 = vmul.f32 %v1772, %v857
        %v1817 = vmul.f32 %v1774, %v858
        %v1818 = vmul.f32 %v1776, %v859
        %v1819 = vmul.f32 %v1778, %v860
        %v1820 = vmul.f32 %v1780, %v861
        %v1821 = vmul.f32 %v1782, %v862
        %v1822 = vmul.f32 %v1784, %v863
        %v1823 = vmul.f32 %v1786, %v864
        %v1824 = vmul.f32 %v1788, %v865
        %v1825 = vmul.f32 %v1790, %v866
        %v1826 = vmul.f32 %v1792, %v867
        %v1827 = vmul.f32 %v1794, %v868
        %v1828 = vmul.f32 %v1796, %v869
        %v1829 = vadd.f32 %v1797, %v1410
        %v1830 = vadd.f32 %v1798, %v1414
        %v1831 = vadd.f32 %v1799, %v1420
        %v1832 = vadd.f32 %v1800, %v1424
        %v1833 = vadd.f32 %v1801, %v1430
        %v1834 = vadd.f32 %v1802, %v1434
        %v1835 = vadd.f32 %v1803, %v1440
        %v1836 = vadd.f32 %v1804, %v1444
        %v1837 = vadd.f32 %v1805, %v1450
        %v1838 = vadd.f32 %v1806, %v1454
        %v1839 = vadd.f32 %v1807, %v1460
        %v1840 = vadd.f32 %v1808, %v1464
        %v1841 = vadd.f32 %v1809, %v1470
        %v1842 = vadd.f32 %v1810, %v1474
        %v1843 = vadd.f32 %v1811, %v1480
        %v1844 = vadd.f32 %v1812, %v1484
        %v1845 = vadd.f32 %v1813, %v1490
        %v1846 = vadd.f32 %v1814, %v1494
        %v1847 = vadd.f32 %v1815, %v1500
        %v1848 = vadd.f32 %v1816, %v1504
        %v1849 = vadd.f32 %v1817, %v1510
        %v1850 = vadd.f32 %v1818, %v1514
        %v1851 = vadd.f32 %v1819, %v1520
        %v1852 = vadd.f32 %v1820, %v1524
        %v1853 = vadd.f32 %v1821, %v1530
        %v1854 = vadd.f32 %v1822, %v1534
        %v1855 = vadd.f32 %v1823, %v1540
        %v1856 = vadd.f32 %v1824, %v1544
        %v1857 = vadd.f32 %v1825, %v1550
        %v1858 = vadd.f32 %v1826, %v1554
        %v1859 = vadd.f32 %v1827, %v1560
        %v1860 = vadd.f32 %v1828, %v1564
        %v1861 = vpack.c.bf16 %v1830, %v1829
        %v1862 = vpack.c.bf16 %v1832, %v1831
        %v1863 = vpack.c.bf16 %v1834, %v1833
        %v1864 = vpack.c.bf16 %v1836, %v1835
        %v1865 = vpack.c.bf16 %v1838, %v1837
        %v1866 = vpack.c.bf16 %v1840, %v1839
        %v1867 = vpack.c.bf16 %v1842, %v1841
        %v1868 = vpack.c.bf16 %v1844, %v1843
        %v1869 = vpack.c.bf16 %v1846, %v1845
        %v1870 = vpack.c.bf16 %v1848, %v1847
        %v1871 = vpack.c.bf16 %v1850, %v1849
        %v1872 = vpack.c.bf16 %v1852, %v1851
        %v1873 = vpack.c.bf16 %v1854, %v1853
        %v1874 = vpack.c.bf16 %v1856, %v1855
        %v1875 = vpack.c.bf16 %v1858, %v1857
        %v1876 = vpack.c.bf16 %v1860, %v1859
        %v1877 = vld [vmem:[#allocation8] sm:$0xff]
        %v1878 = vld [vmem:[#allocation8 + $0x8] sm:$0xff]
        %v1879 = vld [vmem:[#allocation8 + $0x10] sm:$0xff]
        %v1880 = vld [vmem:[#allocation8 + $0x18] sm:$0xff]
        %v1881 = vld [vmem:[#allocation8 + $0x20] sm:$0xff]
        %v1882 = vld [vmem:[#allocation8 + $0x28] sm:$0xff]
        %v1883 = vld [vmem:[#allocation8 + $0x30] sm:$0xff]
        %v1884 = vld [vmem:[#allocation8 + $0x38] sm:$0xff]
        %v1885 = vld [vmem:[#allocation8 + $0x40] sm:$0xff]
        %v1886 = vld [vmem:[#allocation8 + $0x48] sm:$0xff]
        %v1887 = vld [vmem:[#allocation8 + $0x50] sm:$0xff]
        %v1888 = vld [vmem:[#allocation8 + $0x58] sm:$0xff]
        %v1889 = vld [vmem:[#allocation8 + $0x60] sm:$0xff]
        %v1890 = vld [vmem:[#allocation8 + $0x68] sm:$0xff]
        %v1891 = vld [vmem:[#allocation8 + $0x70] sm:$0xff]
        %v1892 = vld [vmem:[#allocation8 + $0x78] sm:$0xff]
        %v1893 = vld [vmem:[#allocation8 + $0x80] sm:$0xff]
        %v1894 = vld [vmem:[#allocation8 + $0x88] sm:$0xff]
        %v1895 = vld [vmem:[#allocation8 + $0x90] sm:$0xff]
        %v1896 = vld [vmem:[#allocation8 + $0x98] sm:$0xff]
        %v1897 = vld [vmem:[#allocation8 + $0xa0] sm:$0xff]
        %v1898 = vld [vmem:[#allocation8 + $0xa8] sm:$0xff]
        %v1899 = vld [vmem:[#allocation8 + $0xb0] sm:$0xff]
        %v1900 = vld [vmem:[#allocation8 + $0xb8] sm:$0xff]
        %v1901 = vld [vmem:[#allocation8 + $0xc0] sm:$0xff]
        %v1902 = vld [vmem:[#allocation8 + $0xc8] sm:$0xff]
        %v1903 = vld [vmem:[#allocation8 + $0xd0] sm:$0xff]
        %v1904 = vld [vmem:[#allocation8 + $0xd8] sm:$0xff]
        %v1905 = vld [vmem:[#allocation8 + $0xe0] sm:$0xff]
        %v1906 = vld [vmem:[#allocation8 + $0xe8] sm:$0xff]
        %v1907 = vld [vmem:[#allocation8 + $0xf0] sm:$0xff]
        %v1908 = vld [vmem:[#allocation8 + $0xf8] sm:$0xff]
        %v1941 = vunpack.c.l.b16 %v1877
        %v1942 = vunpack.c.h.b16 %v1877
        %v1943 = vunpack.c.l.b16 %v1878
        %v1944 = vunpack.c.h.b16 %v1878
        %v1945 = vunpack.c.l.b16 %v1879
        %v1946 = vunpack.c.h.b16 %v1879
        %v1947 = vunpack.c.l.b16 %v1880
        %v1948 = vunpack.c.h.b16 %v1880
        %v1949 = vunpack.c.l.b16 %v1881
        %v1950 = vunpack.c.h.b16 %v1881
        %v1951 = vunpack.c.l.b16 %v1882
        %v1952 = vunpack.c.h.b16 %v1882
        %v1953 = vunpack.c.l.b16 %v1883
        %v1954 = vunpack.c.h.b16 %v1883
        %v1955 = vunpack.c.l.b16 %v1884
        %v1956 = vunpack.c.h.b16 %v1884
        %v1957 = vunpack.c.l.b16 %v1885
        %v1958 = vunpack.c.h.b16 %v1885
        %v1959 = vunpack.c.l.b16 %v1886
        %v1960 = vunpack.c.h.b16 %v1886
        %v1961 = vunpack.c.l.b16 %v1887
        %v1962 = vunpack.c.h.b16 %v1887
        %v1963 = vunpack.c.l.b16 %v1888
        %v1964 = vunpack.c.h.b16 %v1888
        %v1965 = vunpack.c.l.b16 %v1889
        %v1966 = vunpack.c.h.b16 %v1889
        %v1967 = vunpack.c.l.b16 %v1890
        %v1968 = vunpack.c.h.b16 %v1890
        %v1969 = vunpack.c.l.b16 %v1891
        %v1970 = vunpack.c.h.b16 %v1891
        %v1971 = vunpack.c.l.b16 %v1892
        %v1972 = vunpack.c.h.b16 %v1892
        %v1973 = vunpack.c.l.b16 %v1893
        %v1974 = vunpack.c.h.b16 %v1893
        %v1975 = vunpack.c.l.b16 %v1894
        %v1976 = vunpack.c.h.b16 %v1894
        %v1977 = vunpack.c.l.b16 %v1895
        %v1978 = vunpack.c.h.b16 %v1895
        %v1979 = vunpack.c.l.b16 %v1896
        %v1980 = vunpack.c.h.b16 %v1896
        %v1981 = vunpack.c.l.b16 %v1897
        %v1982 = vunpack.c.h.b16 %v1897
        %v1983 = vunpack.c.l.b16 %v1898
        %v1984 = vunpack.c.h.b16 %v1898
        %v1985 = vunpack.c.l.b16 %v1899
        %v1986 = vunpack.c.h.b16 %v1899
        %v1987 = vunpack.c.l.b16 %v1900
        %v1988 = vunpack.c.h.b16 %v1900
        %v1989 = vunpack.c.l.b16 %v1901
        %v1990 = vunpack.c.h.b16 %v1901
        %v1991 = vunpack.c.l.b16 %v1902
        %v1992 = vunpack.c.h.b16 %v1902
        %v1993 = vunpack.c.l.b16 %v1903
        %v1994 = vunpack.c.h.b16 %v1903
        %v1995 = vunpack.c.l.b16 %v1904
        %v1996 = vunpack.c.h.b16 %v1904
        %v1997 = vunpack.c.l.b16 %v1905
        %v1998 = vunpack.c.h.b16 %v1905
        %v1999 = vunpack.c.l.b16 %v1906
        %v2000 = vunpack.c.h.b16 %v1906
        %v2001 = vunpack.c.l.b16 %v1907
        %v2002 = vunpack.c.h.b16 %v1907
        %v2003 = vunpack.c.l.b16 %v1908
        %v2004 = vunpack.c.h.b16 %v1908
        %v2005 = vpack.c.b16 %v1945, %v1941
        %v2006 = vpack.c.b16 %v1946, %v1942
        %v2007 = vpack.c.b16 %v1947, %v1943
        %v2008 = vpack.c.b16 %v1948, %v1944
        %v2009 = vpack.c.b16 %v1953, %v1949
        %v2010 = vpack.c.b16 %v1954, %v1950
        %v2011 = vpack.c.b16 %v1955, %v1951
        %v2012 = vpack.c.b16 %v1956, %v1952
        %v2013 = vpack.c.b16 %v1961, %v1957
        %v2014 = vpack.c.b16 %v1962, %v1958
        %v2015 = vpack.c.b16 %v1963, %v1959
        %v2016 = vpack.c.b16 %v1964, %v1960
        %v2017 = vpack.c.b16 %v1969, %v1965
        %v2018 = vpack.c.b16 %v1970, %v1966
        %v2019 = vpack.c.b16 %v1971, %v1967
        %v2020 = vpack.c.b16 %v1972, %v1968
        %v2021 = vpack.c.b16 %v1977, %v1973
        %v2022 = vpack.c.b16 %v1978, %v1974
        %v2023 = vpack.c.b16 %v1979, %v1975
        %v2024 = vpack.c.b16 %v1980, %v1976
        %v2025 = vpack.c.b16 %v1985, %v1981
        %v2026 = vpack.c.b16 %v1986, %v1982
        %v2027 = vpack.c.b16 %v1987, %v1983
        %v2028 = vpack.c.b16 %v1988, %v1984
        %v2029 = vpack.c.b16 %v1993, %v1989
        %v2030 = vpack.c.b16 %v1994, %v1990
        %v2031 = vpack.c.b16 %v1995, %v1991
        %v2032 = vpack.c.b16 %v1996, %v1992
        %v2033 = vpack.c.b16 %v2001, %v1997
        %v2034 = vpack.c.b16 %v2002, %v1998
        %v2035 = vpack.c.b16 %v2003, %v1999
        %v2036 = vpack.c.b16 %v2004, %v2000
        %2069 = vmatprep.subr.bf16.mxu0 %v2006
        %2070 = vmatpush1.bf16.msra.mxu0 %v2005
        %2071 = vmatprep.subr.bf16.mxu0 %v2010
        %2072 = vmatpush1.bf16.msra.mxu0 %v2009
        %2073 = vmatprep.subr.bf16.mxu0 %v2014
        %2074 = vmatpush1.bf16.msra.mxu0 %v2013
        %2075 = vmatprep.subr.bf16.mxu0 %v2018
        %2076 = vmatpush1.bf16.msra.mxu0 %v2017
        %2077 = vmatprep.subr.bf16.mxu0 %v2022
        %2078 = vmatpush1.bf16.msra.mxu0 %v2021
        %2079 = vmatprep.subr.bf16.mxu0 %v2026
        %2080 = vmatpush1.bf16.msra.mxu0 %v2025
        %2081 = vmatprep.subr.bf16.mxu0 %v2030
        %2082 = vmatpush1.bf16.msra.mxu0 %v2029
        %2083 = vmatprep.subr.bf16.mxu0 %v2034
        %2084 = vmatpush1.bf16.msra.mxu0 %v2033
        %2085 = vmatprep.subr.bf16.mxu0 0
        %2086 = vmatpush1.bf16.msra.mxu0 0
        %2087 = vmatprep.subr.bf16.mxu0 0
        %2088 = vmatpush1.bf16.msra.mxu0 0
        %2089 = vmatprep.subr.bf16.mxu0 0
        %2090 = vmatpush1.bf16.msra.mxu0 0
        %2091 = vmatprep.subr.bf16.mxu0 0
        %2092 = vmatpush1.bf16.msra.mxu0 0
        %2093 = vmatprep.subr.bf16.mxu0 0
        %2094 = vmatpush1.bf16.msra.mxu0 0
        %2095 = vmatprep.subr.bf16.mxu0 0
        %2096 = vmatpush1.bf16.msra.mxu0 0
        %2097 = vmatprep.subr.bf16.mxu0 0
        %2098 = vmatpush1.bf16.msra.mxu0 0
        %2099 = vmatprep.subr.bf16.mxu0 0
        %2100 = vmatpush1.bf16.msra.mxu0 0
        %2101 = vmatprep.mubr.bf16.mxu0 0
        %2102 = vmatmul.mubr.bf16.gmra.mrb[0].mxu0 %v1861
        %v2103 = vpop.f32.mrb[0].mxu0
        %v2104 = vadd.f32 0.0, %v2103
        %v2105 = vpop.f32.mrb[0].mxu0
        %v2106 = vadd.f32 0.0, %v2105
        %v2107 = vpop.f32.mrb[0].mxu0
        %v2108 = vadd.f32 0.0, %v2107
        %v2109 = vpop.f32.mrb[0].mxu0
        %v2110 = vadd.f32 0.0, %v2109
        %2111 = vmatprep.mubr.bf16.mxu0 0
        %2112 = vmatmul.mubr.bf16.gmra.mrb[0].mxu0 %v1862
        %v2113 = vpop.f32.mrb[0].mxu0
        %v2114 = vadd.f32 0.0, %v2113
        %v2115 = vpop.f32.mrb[0].mxu0
        %v2116 = vadd.f32 0.0, %v2115
        %v2117 = vpop.f32.mrb[0].mxu0
        %v2118 = vadd.f32 0.0, %v2117
        %v2119 = vpop.f32.mrb[0].mxu0
        %v2120 = vadd.f32 0.0, %v2119
        %2121 = vmatprep.mubr.bf16.mxu0 0
        %2122 = vmatmul.mubr.bf16.gmra.mrb[0].mxu0 %v1863
        %v2123 = vpop.f32.mrb[0].mxu0
        %v2124 = vadd.f32 0.0, %v2123
        %v2125 = vpop.f32.mrb[0].mxu0
        %v2126 = vadd.f32 0.0, %v2125
        %v2127 = vpop.f32.mrb[0].mxu0
        %v2128 = vadd.f32 0.0, %v2127
        %v2129 = vpop.f32.mrb[0].mxu0
        %v2130 = vadd.f32 0.0, %v2129
        %2131 = vmatprep.mubr.bf16.mxu0 0
        %2132 = vmatmul.mubr.bf16.gmra.mrb[0].mxu0 %v1864
        %v2133 = vpop.f32.mrb[0].mxu0
        %v2134 = vadd.f32 0.0, %v2133
        %v2135 = vpop.f32.mrb[0].mxu0
        %v2136 = vadd.f32 0.0, %v2135
        %v2137 = vpop.f32.mrb[0].mxu0
        %v2138 = vadd.f32 0.0, %v2137
        %v2139 = vpop.f32.mrb[0].mxu0
        %v2140 = vadd.f32 0.0, %v2139
        %2141 = vmatprep.mubr.bf16.mxu0 0
        %2142 = vmatmul.mubr.bf16.gmra.mrb[0].mxu0 %v1865
        %v2143 = vpop.f32.mrb[0].mxu0
        %v2144 = vadd.f32 0.0, %v2143
        %v2145 = vpop.f32.mrb[0].mxu0
        %v2146 = vadd.f32 0.0, %v2145
        %v2147 = vpop.f32.mrb[0].mxu0
        %v2148 = vadd.f32 0.0, %v2147
        %v2149 = vpop.f32.mrb[0].mxu0
        %v2150 = vadd.f32 0.0, %v2149
        %2151 = vmatprep.mubr.bf16.mxu0 0
        %2152 = vmatmul.mubr.bf16.gmra.mrb[0].mxu0 %v1866
        %v2153 = vpop.f32.mrb[0].mxu0
        %v2154 = vadd.f32 0.0, %v2153
        %v2155 = vpop.f32.mrb[0].mxu0
        %v2156 = vadd.f32 0.0, %v2155
        %v2157 = vpop.f32.mrb[0].mxu0
        %v2158 = vadd.f32 0.0, %v2157
        %v2159 = vpop.f32.mrb[0].mxu0
        %v2160 = vadd.f32 0.0, %v2159
        %2161 = vmatprep.mubr.bf16.mxu0 0
        %2162 = vmatmul.mubr.bf16.gmra.mrb[0].mxu0 %v1867
        %v2163 = vpop.f32.mrb[0].mxu0
        %v2164 = vadd.f32 0.0, %v2163
        %v2165 = vpop.f32.mrb[0].mxu0
        %v2166 = vadd.f32 0.0, %v2165
        %v2167 = vpop.f32.mrb[0].mxu0
        %v2168 = vadd.f32 0.0, %v2167
        %v2169 = vpop.f32.mrb[0].mxu0
        %v2170 = vadd.f32 0.0, %v2169
        %2171 = vmatprep.mubr.bf16.mxu0 0
        %2172 = vmatmul.mubr.bf16.gmra.mrb[0].mxu0 %v1868
        %v2173 = vpop.f32.mrb[0].mxu0
        %v2174 = vadd.f32 0.0, %v2173
        %v2175 = vpop.f32.mrb[0].mxu0
        %v2176 = vadd.f32 0.0, %v2175
        %v2177 = vpop.f32.mrb[0].mxu0
        %v2178 = vadd.f32 0.0, %v2177
        %v2179 = vpop.f32.mrb[0].mxu0
        %v2180 = vadd.f32 0.0, %v2179
        %2181 = vmatprep.mubr.bf16.mxu0 0
        %2182 = vmatmul.mubr.bf16.gmra.mrb[0].mxu0 %v1869
        %v2183 = vpop.f32.mrb[0].mxu0
        %v2184 = vadd.f32 0.0, %v2183
        %v2185 = vpop.f32.mrb[0].mxu0
        %v2186 = vadd.f32 0.0, %v2185
        %v2187 = vpop.f32.mrb[0].mxu0
        %v2188 = vadd.f32 0.0, %v2187
        %v2189 = vpop.f32.mrb[0].mxu0
        %v2190 = vadd.f32 0.0, %v2189
        %2191 = vmatprep.mubr.bf16.mxu0 0
        %2192 = vmatmul.mubr.bf16.gmra.mrb[0].mxu0 %v1870
        %v2193 = vpop.f32.mrb[0].mxu0
        %v2194 = vadd.f32 0.0, %v2193
        %v2195 = vpop.f32.mrb[0].mxu0
        %v2196 = vadd.f32 0.0, %v2195
        %v2197 = vpop.f32.mrb[0].mxu0
        %v2198 = vadd.f32 0.0, %v2197
        %v2199 = vpop.f32.mrb[0].mxu0
        %v2200 = vadd.f32 0.0, %v2199
        %2201 = vmatprep.mubr.bf16.mxu0 0
        %2202 = vmatmul.mubr.bf16.gmra.mrb[0].mxu0 %v1871
        %v2203 = vpop.f32.mrb[0].mxu0
        %v2204 = vadd.f32 0.0, %v2203
        %v2205 = vpop.f32.mrb[0].mxu0
        %v2206 = vadd.f32 0.0, %v2205
        %v2207 = vpop.f32.mrb[0].mxu0
        %v2208 = vadd.f32 0.0, %v2207
        %v2209 = vpop.f32.mrb[0].mxu0
        %v2210 = vadd.f32 0.0, %v2209
        %2211 = vmatprep.mubr.bf16.mxu0 0
        %2212 = vmatmul.mubr.bf16.gmra.mrb[0].mxu0 %v1872
        %v2213 = vpop.f32.mrb[0].mxu0
        %v2214 = vadd.f32 0.0, %v2213
        %v2215 = vpop.f32.mrb[0].mxu0
        %v2216 = vadd.f32 0.0, %v2215
        %v2217 = vpop.f32.mrb[0].mxu0
        %v2218 = vadd.f32 0.0, %v2217
        %v2219 = vpop.f32.mrb[0].mxu0
        %v2220 = vadd.f32 0.0, %v2219
        %2221 = vmatprep.mubr.bf16.mxu0 0
        %2222 = vmatmul.mubr.bf16.gmra.mrb[0].mxu0 %v1873
        %v2223 = vpop.f32.mrb[0].mxu0
        %v2224 = vadd.f32 0.0, %v2223
        %v2225 = vpop.f32.mrb[0].mxu0
        %v2226 = vadd.f32 0.0, %v2225
        %v2227 = vpop.f32.mrb[0].mxu0
        %v2228 = vadd.f32 0.0, %v2227
        %v2229 = vpop.f32.mrb[0].mxu0
        %v2230 = vadd.f32 0.0, %v2229
        %2231 = vmatprep.mubr.bf16.mxu0 0
        %2232 = vmatmul.mubr.bf16.gmra.mrb[0].mxu0 %v1874
        %v2233 = vpop.f32.mrb[0].mxu0
        %v2234 = vadd.f32 0.0, %v2233
        %v2235 = vpop.f32.mrb[0].mxu0
        %v2236 = vadd.f32 0.0, %v2235
        %v2237 = vpop.f32.mrb[0].mxu0
        %v2238 = vadd.f32 0.0, %v2237
        %v2239 = vpop.f32.mrb[0].mxu0
        %v2240 = vadd.f32 0.0, %v2239
        %2241 = vmatprep.mubr.bf16.mxu0 0
        %2242 = vmatmul.mubr.bf16.gmra.mrb[0].mxu0 %v1875
        %v2243 = vpop.f32.mrb[0].mxu0
        %v2244 = vadd.f32 0.0, %v2243
        %v2245 = vpop.f32.mrb[0].mxu0
        %v2246 = vadd.f32 0.0, %v2245
        %v2247 = vpop.f32.mrb[0].mxu0
        %v2248 = vadd.f32 0.0, %v2247
        %v2249 = vpop.f32.mrb[0].mxu0
        %v2250 = vadd.f32 0.0, %v2249
        %2251 = vmatprep.mubr.bf16.mxu0 0
        %2252 = vmatmul.mubr.bf16.gmra.mrb[0].mxu0 %v1876
        %v2253 = vpop.f32.mrb[0].mxu0
        %v2254 = vadd.f32 0.0, %v2253
        %v2255 = vpop.f32.mrb[0].mxu0
        %v2256 = vadd.f32 0.0, %v2255
        %v2257 = vpop.f32.mrb[0].mxu0
        %v2258 = vadd.f32 0.0, %v2257
        %v2259 = vpop.f32.mrb[0].mxu0
        %v2260 = vadd.f32 0.0, %v2259
        %2261 = vdwg.mxu0
        %2262 = vmatprep.subr.bf16.mxu0 %v2008
        %2263 = vmatpush1.bf16.msra.mxu0 %v2007
        %2264 = vmatprep.subr.bf16.mxu0 %v2012
        %2265 = vmatpush1.bf16.msra.mxu0 %v2011
        %2266 = vmatprep.subr.bf16.mxu0 %v2016
        %2267 = vmatpush1.bf16.msra.mxu0 %v2015
        %2268 = vmatprep.subr.bf16.mxu0 %v2020
        %2269 = vmatpush1.bf16.msra.mxu0 %v2019
        %2270 = vmatprep.subr.bf16.mxu0 %v2024
        %2271 = vmatpush1.bf16.msra.mxu0 %v2023
        %2272 = vmatprep.subr.bf16.mxu0 %v2028
        %2273 = vmatpush1.bf16.msra.mxu0 %v2027
        %2274 = vmatprep.subr.bf16.mxu0 %v2032
        %2275 = vmatpush1.bf16.msra.mxu0 %v2031
        %2276 = vmatprep.subr.bf16.mxu0 %v2036
        %2277 = vmatpush1.bf16.msra.mxu0 %v2035
        %2278 = vmatprep.subr.bf16.mxu0 0
        %2279 = vmatpush1.bf16.msra.mxu0 0
        %2280 = vmatprep.subr.bf16.mxu0 0
        %2281 = vmatpush1.bf16.msra.mxu0 0
        %2282 = vmatprep.subr.bf16.mxu0 0
        %2283 = vmatpush1.bf16.msra.mxu0 0
        %2284 = vmatprep.subr.bf16.mxu0 0
        %2285 = vmatpush1.bf16.msra.mxu0 0
        %2286 = vmatprep.subr.bf16.mxu0 0
        %2287 = vmatpush1.bf16.msra.mxu0 0
        %2288 = vmatprep.subr.bf16.mxu0 0
        %2289 = vmatpush1.bf16.msra.mxu0 0
        %2290 = vmatprep.subr.bf16.mxu0 0
        %2291 = vmatpush1.bf16.msra.mxu0 0
        %2292 = vmatprep.subr.bf16.mxu0 0
        %2293 = vmatpush1.bf16.msra.mxu0 0
        %2294 = vmatprep.mubr.bf16.mxu0 0
        %2295 = vmatmul.mubr.bf16.gmra.mrb[0].mxu0 %v1861
        %v2296 = vpop.f32.mrb[0].mxu0
        %v2297 = vadd.f32 0.0, %v2296
        %v2298 = vpop.f32.mrb[0].mxu0
        %v2299 = vadd.f32 0.0, %v2298
        %v2300 = vpop.f32.mrb[0].mxu0
        %v2301 = vadd.f32 0.0, %v2300
        %v2302 = vpop.f32.mrb[0].mxu0
        %v2303 = vadd.f32 0.0, %v2302
        %2304 = vmatprep.mubr.bf16.mxu0 0
        %2305 = vmatmul.mubr.bf16.gmra.mrb[0].mxu0 %v1862
        %v2306 = vpop.f32.mrb[0].mxu0
        %v2307 = vadd.f32 0.0, %v2306
        %v2308 = vpop.f32.mrb[0].mxu0
        %v2309 = vadd.f32 0.0, %v2308
        %v2310 = vpop.f32.mrb[0].mxu0
        %v2311 = vadd.f32 0.0, %v2310
        %v2312 = vpop.f32.mrb[0].mxu0
        %v2313 = vadd.f32 0.0, %v2312
        %2314 = vmatprep.mubr.bf16.mxu0 0
        %2315 = vmatmul.mubr.bf16.gmra.mrb[0].mxu0 %v1863
        %v2316 = vpop.f32.mrb[0].mxu0
        %v2317 = vadd.f32 0.0, %v2316
        %v2318 = vpop.f32.mrb[0].mxu0
        %v2319 = vadd.f32 0.0, %v2318
        %v2320 = vpop.f32.mrb[0].mxu0
        %v2321 = vadd.f32 0.0, %v2320
        %v2322 = vpop.f32.mrb[0].mxu0
        %v2323 = vadd.f32 0.0, %v2322
        %2324 = vmatprep.mubr.bf16.mxu0 0
        %2325 = vmatmul.mubr.bf16.gmra.mrb[0].mxu0 %v1864
        %v2326 = vpop.f32.mrb[0].mxu0
        %v2327 = vadd.f32 0.0, %v2326
        %v2328 = vpop.f32.mrb[0].mxu0
        %v2329 = vadd.f32 0.0, %v2328
        %v2330 = vpop.f32.mrb[0].mxu0
        %v2331 = vadd.f32 0.0, %v2330
        %v2332 = vpop.f32.mrb[0].mxu0
        %v2333 = vadd.f32 0.0, %v2332
        %2334 = vmatprep.mubr.bf16.mxu0 0
        %2335 = vmatmul.mubr.bf16.gmra.mrb[0].mxu0 %v1865
        %v2336 = vpop.f32.mrb[0].mxu0
        %v2337 = vadd.f32 0.0, %v2336
        %v2338 = vpop.f32.mrb[0].mxu0
        %v2339 = vadd.f32 0.0, %v2338
        %v2340 = vpop.f32.mrb[0].mxu0
        %v2341 = vadd.f32 0.0, %v2340
        %v2342 = vpop.f32.mrb[0].mxu0
        %v2343 = vadd.f32 0.0, %v2342
        %2344 = vmatprep.mubr.bf16.mxu0 0
        %2345 = vmatmul.mubr.bf16.gmra.mrb[0].mxu0 %v1866
        %v2346 = vpop.f32.mrb[0].mxu0
        %v2347 = vadd.f32 0.0, %v2346
        %v2348 = vpop.f32.mrb[0].mxu0
        %v2349 = vadd.f32 0.0, %v2348
        %v2350 = vpop.f32.mrb[0].mxu0
        %v2351 = vadd.f32 0.0, %v2350
        %v2352 = vpop.f32.mrb[0].mxu0
        %v2353 = vadd.f32 0.0, %v2352
        %2354 = vmatprep.mubr.bf16.mxu0 0
        %2355 = vmatmul.mubr.bf16.gmra.mrb[0].mxu0 %v1867
        %v2356 = vpop.f32.mrb[0].mxu0
        %v2357 = vadd.f32 0.0, %v2356
        %v2358 = vpop.f32.mrb[0].mxu0
        %v2359 = vadd.f32 0.0, %v2358
        %v2360 = vpop.f32.mrb[0].mxu0
        %v2361 = vadd.f32 0.0, %v2360
        %v2362 = vpop.f32.mrb[0].mxu0
        %v2363 = vadd.f32 0.0, %v2362
        %2364 = vmatprep.mubr.bf16.mxu0 0
        %2365 = vmatmul.mubr.bf16.gmra.mrb[0].mxu0 %v1868
        %v2366 = vpop.f32.mrb[0].mxu0
        %v2367 = vadd.f32 0.0, %v2366
        %v2368 = vpop.f32.mrb[0].mxu0
        %v2369 = vadd.f32 0.0, %v2368
        %v2370 = vpop.f32.mrb[0].mxu0
        %v2371 = vadd.f32 0.0, %v2370
        %v2372 = vpop.f32.mrb[0].mxu0
        %v2373 = vadd.f32 0.0, %v2372
        %2374 = vmatprep.mubr.bf16.mxu0 0
        %2375 = vmatmul.mubr.bf16.gmra.mrb[0].mxu0 %v1869
        %v2376 = vpop.f32.mrb[0].mxu0
        %v2377 = vadd.f32 0.0, %v2376
        %v2378 = vpop.f32.mrb[0].mxu0
        %v2379 = vadd.f32 0.0, %v2378
        %v2380 = vpop.f32.mrb[0].mxu0
        %v2381 = vadd.f32 0.0, %v2380
        %v2382 = vpop.f32.mrb[0].mxu0
        %v2383 = vadd.f32 0.0, %v2382
        %2384 = vmatprep.mubr.bf16.mxu0 0
        %2385 = vmatmul.mubr.bf16.gmra.mrb[0].mxu0 %v1870
        %v2386 = vpop.f32.mrb[0].mxu0
        %v2387 = vadd.f32 0.0, %v2386
        %v2388 = vpop.f32.mrb[0].mxu0
        %v2389 = vadd.f32 0.0, %v2388
        %v2390 = vpop.f32.mrb[0].mxu0
        %v2391 = vadd.f32 0.0, %v2390
        %v2392 = vpop.f32.mrb[0].mxu0
        %v2393 = vadd.f32 0.0, %v2392
        %2394 = vmatprep.mubr.bf16.mxu0 0
        %2395 = vmatmul.mubr.bf16.gmra.mrb[0].mxu0 %v1871
        %v2396 = vpop.f32.mrb[0].mxu0
        %v2397 = vadd.f32 0.0, %v2396
        %v2398 = vpop.f32.mrb[0].mxu0
        %v2399 = vadd.f32 0.0, %v2398
        %v2400 = vpop.f32.mrb[0].mxu0
        %v2401 = vadd.f32 0.0, %v2400
        %v2402 = vpop.f32.mrb[0].mxu0
        %v2403 = vadd.f32 0.0, %v2402
        %2404 = vmatprep.mubr.bf16.mxu0 0
        %2405 = vmatmul.mubr.bf16.gmra.mrb[0].mxu0 %v1872
        %v2406 = vpop.f32.mrb[0].mxu0
        %v2407 = vadd.f32 0.0, %v2406
        %v2408 = vpop.f32.mrb[0].mxu0
        %v2409 = vadd.f32 0.0, %v2408
        %v2410 = vpop.f32.mrb[0].mxu0
        %v2411 = vadd.f32 0.0, %v2410
        %v2412 = vpop.f32.mrb[0].mxu0
        %v2413 = vadd.f32 0.0, %v2412
        %2414 = vmatprep.mubr.bf16.mxu0 0
        %2415 = vmatmul.mubr.bf16.gmra.mrb[0].mxu0 %v1873
        %v2416 = vpop.f32.mrb[0].mxu0
        %v2417 = vadd.f32 0.0, %v2416
        %v2418 = vpop.f32.mrb[0].mxu0
        %v2419 = vadd.f32 0.0, %v2418
        %v2420 = vpop.f32.mrb[0].mxu0
        %v2421 = vadd.f32 0.0, %v2420
        %v2422 = vpop.f32.mrb[0].mxu0
        %v2423 = vadd.f32 0.0, %v2422
        %2424 = vmatprep.mubr.bf16.mxu0 0
        %2425 = vmatmul.mubr.bf16.gmra.mrb[0].mxu0 %v1874
        %v2426 = vpop.f32.mrb[0].mxu0
        %v2427 = vadd.f32 0.0, %v2426
        %v2428 = vpop.f32.mrb[0].mxu0
        %v2429 = vadd.f32 0.0, %v2428
        %v2430 = vpop.f32.mrb[0].mxu0
        %v2431 = vadd.f32 0.0, %v2430
        %v2432 = vpop.f32.mrb[0].mxu0
        %v2433 = vadd.f32 0.0, %v2432
        %2434 = vmatprep.mubr.bf16.mxu0 0
        %2435 = vmatmul.mubr.bf16.gmra.mrb[0].mxu0 %v1875
        %v2436 = vpop.f32.mrb[0].mxu0
        %v2437 = vadd.f32 0.0, %v2436
        %v2438 = vpop.f32.mrb[0].mxu0
        %v2439 = vadd.f32 0.0, %v2438
        %v2440 = vpop.f32.mrb[0].mxu0
        %v2441 = vadd.f32 0.0, %v2440
        %v2442 = vpop.f32.mrb[0].mxu0
        %v2443 = vadd.f32 0.0, %v2442
        %2444 = vmatprep.mubr.bf16.mxu0 0
        %2445 = vmatmul.mubr.bf16.gmra.mrb[0].mxu0 %v1876
        %v2446 = vpop.f32.mrb[0].mxu0
        %v2447 = vadd.f32 0.0, %v2446
        %v2448 = vpop.f32.mrb[0].mxu0
        %v2449 = vadd.f32 0.0, %v2448
        %v2450 = vpop.f32.mrb[0].mxu0
        %v2451 = vadd.f32 0.0, %v2450
        %v2452 = vpop.f32.mrb[0].mxu0
        %v2453 = vadd.f32 0.0, %v2452
        %2454 = vdwg.mxu0
        %v2455 = vxor.u32 %v2104, 2147483648
        %v2456 = vxor.u32 %v2106, 2147483648
        %v2457 = vxor.u32 %v2108, 2147483648
        %v2458 = vxor.u32 %v2110, 2147483648
        %v2459 = vxor.u32 %v2114, 2147483648
        %v2460 = vxor.u32 %v2116, 2147483648
        %v2461 = vxor.u32 %v2118, 2147483648
        %v2462 = vxor.u32 %v2120, 2147483648
        %v2463 = vxor.u32 %v2124, 2147483648
        %v2464 = vxor.u32 %v2126, 2147483648
        %v2465 = vxor.u32 %v2128, 2147483648
        %v2466 = vxor.u32 %v2130, 2147483648
        %v2467 = vxor.u32 %v2134, 2147483648
        %v2468 = vxor.u32 %v2136, 2147483648
        %v2469 = vxor.u32 %v2138, 2147483648
        %v2470 = vxor.u32 %v2140, 2147483648
        %v2471 = vxor.u32 %v2144, 2147483648
        %v2472 = vxor.u32 %v2146, 2147483648
        %v2473 = vxor.u32 %v2148, 2147483648
        %v2474 = vxor.u32 %v2150, 2147483648
        %v2475 = vxor.u32 %v2154, 2147483648
        %v2476 = vxor.u32 %v2156, 2147483648
        %v2477 = vxor.u32 %v2158, 2147483648
        %v2478 = vxor.u32 %v2160, 2147483648
        %v2479 = vxor.u32 %v2164, 2147483648
        %v2480 = vxor.u32 %v2166, 2147483648
        %v2481 = vxor.u32 %v2168, 2147483648
        %v2482 = vxor.u32 %v2170, 2147483648
        %v2483 = vxor.u32 %v2174, 2147483648
        %v2484 = vxor.u32 %v2176, 2147483648
        %v2485 = vxor.u32 %v2178, 2147483648
        %v2486 = vxor.u32 %v2180, 2147483648
        %v2487 = vxor.u32 %v2184, 2147483648
        %v2488 = vxor.u32 %v2186, 2147483648
        %v2489 = vxor.u32 %v2188, 2147483648
        %v2490 = vxor.u32 %v2190, 2147483648
        %v2491 = vxor.u32 %v2194, 2147483648
        %v2492 = vxor.u32 %v2196, 2147483648
        %v2493 = vxor.u32 %v2198, 2147483648
        %v2494 = vxor.u32 %v2200, 2147483648
        %v2495 = vxor.u32 %v2204, 2147483648
        %v2496 = vxor.u32 %v2206, 2147483648
        %v2497 = vxor.u32 %v2208, 2147483648
        %v2498 = vxor.u32 %v2210, 2147483648
        %v2499 = vxor.u32 %v2214, 2147483648
        %v2500 = vxor.u32 %v2216, 2147483648
        %v2501 = vxor.u32 %v2218, 2147483648
        %v2502 = vxor.u32 %v2220, 2147483648
        %v2503 = vxor.u32 %v2224, 2147483648
        %v2504 = vxor.u32 %v2226, 2147483648
        %v2505 = vxor.u32 %v2228, 2147483648
        %v2506 = vxor.u32 %v2230, 2147483648
        %v2507 = vxor.u32 %v2234, 2147483648
        %v2508 = vxor.u32 %v2236, 2147483648
        %v2509 = vxor.u32 %v2238, 2147483648
        %v2510 = vxor.u32 %v2240, 2147483648
        %v2511 = vxor.u32 %v2244, 2147483648
        %v2512 = vxor.u32 %v2246, 2147483648
        %v2513 = vxor.u32 %v2248, 2147483648
        %v2514 = vxor.u32 %v2250, 2147483648
        %v2515 = vxor.u32 %v2254, 2147483648
        %v2516 = vxor.u32 %v2256, 2147483648
        %v2517 = vxor.u32 %v2258, 2147483648
        %v2518 = vxor.u32 %v2260, 2147483648
        %v2519 = vmul.f32 %v2455, 1.442695
        %v2520 = vpow.pop %v2519
        %v2521 = vmul.f32 %v2456, 1.442695
        %v2522 = vpow.pop %v2521
        %v2523 = vmul.f32 %v2457, 1.442695
        %v2524 = vpow.pop %v2523
        %v2525 = vmul.f32 %v2458, 1.442695
        %v2526 = vpow.pop %v2525
        %v2527 = vmul.f32 %v2459, 1.442695
        %v2528 = vpow.pop %v2527
        %v2529 = vmul.f32 %v2460, 1.442695
        %v2530 = vpow.pop %v2529
        %v2531 = vmul.f32 %v2461, 1.442695
        %v2532 = vpow.pop %v2531
        %v2533 = vmul.f32 %v2462, 1.442695
        %v2534 = vpow.pop %v2533
        %v2535 = vmul.f32 %v2463, 1.442695
        %v2536 = vpow.pop %v2535
        %v2537 = vmul.f32 %v2464, 1.442695
        %v2538 = vpow.pop %v2537
        %v2539 = vmul.f32 %v2465, 1.442695
        %v2540 = vpow.pop %v2539
        %v2541 = vmul.f32 %v2466, 1.442695
        %v2542 = vpow.pop %v2541
        %v2543 = vmul.f32 %v2467, 1.442695
        %v2544 = vpow.pop %v2543
        %v2545 = vmul.f32 %v2468, 1.442695
        %v2546 = vpow.pop %v2545
        %v2547 = vmul.f32 %v2469, 1.442695
        %v2548 = vpow.pop %v2547
        %v2549 = vmul.f32 %v2470, 1.442695
        %v2550 = vpow.pop %v2549
        %v2551 = vmul.f32 %v2471, 1.442695
        %v2552 = vpow.pop %v2551
        %v2553 = vmul.f32 %v2472, 1.442695
        %v2554 = vpow.pop %v2553
        %v2555 = vmul.f32 %v2473, 1.442695
        %v2556 = vpow.pop %v2555
        %v2557 = vmul.f32 %v2474, 1.442695
        %v2558 = vpow.pop %v2557
        %v2559 = vmul.f32 %v2475, 1.442695
        %v2560 = vpow.pop %v2559
        %v2561 = vmul.f32 %v2476, 1.442695
        %v2562 = vpow.pop %v2561
        %v2563 = vmul.f32 %v2477, 1.442695
        %v2564 = vpow.pop %v2563
        %v2565 = vmul.f32 %v2478, 1.442695
        %v2566 = vpow.pop %v2565
        %v2567 = vmul.f32 %v2479, 1.442695
        %v2568 = vpow.pop %v2567
        %v2569 = vmul.f32 %v2480, 1.442695
        %v2570 = vpow.pop %v2569
        %v2571 = vmul.f32 %v2481, 1.442695
        %v2572 = vpow.pop %v2571
        %v2573 = vmul.f32 %v2482, 1.442695
        %v2574 = vpow.pop %v2573
        %v2575 = vmul.f32 %v2483, 1.442695
        %v2576 = vpow.pop %v2575
        %v2577 = vmul.f32 %v2484, 1.442695
        %v2578 = vpow.pop %v2577
        %v2579 = vmul.f32 %v2485, 1.442695
        %v2580 = vpow.pop %v2579
        %v2581 = vmul.f32 %v2486, 1.442695
        %v2582 = vpow.pop %v2581
        %v2583 = vmul.f32 %v2487, 1.442695
        %v2584 = vpow.pop %v2583
        %v2585 = vmul.f32 %v2488, 1.442695
        %v2586 = vpow.pop %v2585
        %v2587 = vmul.f32 %v2489, 1.442695
        %v2588 = vpow.pop %v2587
        %v2589 = vmul.f32 %v2490, 1.442695
        %v2590 = vpow.pop %v2589
        %v2591 = vmul.f32 %v2491, 1.442695
        %v2592 = vpow.pop %v2591
        %v2593 = vmul.f32 %v2492, 1.442695
        %v2594 = vpow.pop %v2593
        %v2595 = vmul.f32 %v2493, 1.442695
        %v2596 = vpow.pop %v2595
        %v2597 = vmul.f32 %v2494, 1.442695
        %v2598 = vpow.pop %v2597
        %v2599 = vmul.f32 %v2495, 1.442695
        %v2600 = vpow.pop %v2599
        %v2601 = vmul.f32 %v2496, 1.442695
        %v2602 = vpow.pop %v2601
        %v2603 = vmul.f32 %v2497, 1.442695
        %v2604 = vpow.pop %v2603
        %v2605 = vmul.f32 %v2498, 1.442695
        %v2606 = vpow.pop %v2605
        %v2607 = vmul.f32 %v2499, 1.442695
        %v2608 = vpow.pop %v2607
        %v2609 = vmul.f32 %v2500, 1.442695
        %v2610 = vpow.pop %v2609
        %v2611 = vmul.f32 %v2501, 1.442695
        %v2612 = vpow.pop %v2611
        %v2613 = vmul.f32 %v2502, 1.442695
        %v2614 = vpow.pop %v2613
        %v2615 = vmul.f32 %v2503, 1.442695
        %v2616 = vpow.pop %v2615
        %v2617 = vmul.f32 %v2504, 1.442695
        %v2618 = vpow.pop %v2617
        %v2619 = vmul.f32 %v2505, 1.442695
        %v2620 = vpow.pop %v2619
        %v2621 = vmul.f32 %v2506, 1.442695
        %v2622 = vpow.pop %v2621
        %v2623 = vmul.f32 %v2507, 1.442695
        %v2624 = vpow.pop %v2623
        %v2625 = vmul.f32 %v2508, 1.442695
        %v2626 = vpow.pop %v2625
        %v2627 = vmul.f32 %v2509, 1.442695
        %v2628 = vpow.pop %v2627
        %v2629 = vmul.f32 %v2510, 1.442695
        %v2630 = vpow.pop %v2629
        %v2631 = vmul.f32 %v2511, 1.442695
        %v2632 = vpow.pop %v2631
        %v2633 = vmul.f32 %v2512, 1.442695
        %v2634 = vpow.pop %v2633
        %v2635 = vmul.f32 %v2513, 1.442695
        %v2636 = vpow.pop %v2635
        %v2637 = vmul.f32 %v2514, 1.442695
        %v2638 = vpow.pop %v2637
        %v2639 = vmul.f32 %v2515, 1.442695
        %v2640 = vpow.pop %v2639
        %v2641 = vmul.f32 %v2516, 1.442695
        %v2642 = vpow.pop %v2641
        %v2643 = vmul.f32 %v2517, 1.442695
        %v2644 = vpow.pop %v2643
        %v2645 = vmul.f32 %v2518, 1.442695
        %v2646 = vpow.pop %v2645
        %v2647 = vadd.f32 %v2520, 1.0
        %v2648 = vadd.f32 %v2522, 1.0
        %v2649 = vadd.f32 %v2524, 1.0
        %v2650 = vadd.f32 %v2526, 1.0
        %v2651 = vadd.f32 %v2528, 1.0
        %v2652 = vadd.f32 %v2530, 1.0
        %v2653 = vadd.f32 %v2532, 1.0
        %v2654 = vadd.f32 %v2534, 1.0
        %v2655 = vadd.f32 %v2536, 1.0
        %v2656 = vadd.f32 %v2538, 1.0
        %v2657 = vadd.f32 %v2540, 1.0
        %v2658 = vadd.f32 %v2542, 1.0
        %v2659 = vadd.f32 %v2544, 1.0
        %v2660 = vadd.f32 %v2546, 1.0
        %v2661 = vadd.f32 %v2548, 1.0
        %v2662 = vadd.f32 %v2550, 1.0
        %v2663 = vadd.f32 %v2552, 1.0
        %v2664 = vadd.f32 %v2554, 1.0
        %v2665 = vadd.f32 %v2556, 1.0
        %v2666 = vadd.f32 %v2558, 1.0
        %v2667 = vadd.f32 %v2560, 1.0
        %v2668 = vadd.f32 %v2562, 1.0
        %v2669 = vadd.f32 %v2564, 1.0
        %v2670 = vadd.f32 %v2566, 1.0
        %v2671 = vadd.f32 %v2568, 1.0
        %v2672 = vadd.f32 %v2570, 1.0
        %v2673 = vadd.f32 %v2572, 1.0
        %v2674 = vadd.f32 %v2574, 1.0
        %v2675 = vadd.f32 %v2576, 1.0
        %v2676 = vadd.f32 %v2578, 1.0
        %v2677 = vadd.f32 %v2580, 1.0
        %v2678 = vadd.f32 %v2582, 1.0
        %v2679 = vadd.f32 %v2584, 1.0
        %v2680 = vadd.f32 %v2586, 1.0
        %v2681 = vadd.f32 %v2588, 1.0
        %v2682 = vadd.f32 %v2590, 1.0
        %v2683 = vadd.f32 %v2592, 1.0
        %v2684 = vadd.f32 %v2594, 1.0
        %v2685 = vadd.f32 %v2596, 1.0
        %v2686 = vadd.f32 %v2598, 1.0
        %v2687 = vadd.f32 %v2600, 1.0
        %v2688 = vadd.f32 %v2602, 1.0
        %v2689 = vadd.f32 %v2604, 1.0
        %v2690 = vadd.f32 %v2606, 1.0
        %v2691 = vadd.f32 %v2608, 1.0
        %v2692 = vadd.f32 %v2610, 1.0
        %v2693 = vadd.f32 %v2612, 1.0
        %v2694 = vadd.f32 %v2614, 1.0
        %v2695 = vadd.f32 %v2616, 1.0
        %v2696 = vadd.f32 %v2618, 1.0
        %v2697 = vadd.f32 %v2620, 1.0
        %v2698 = vadd.f32 %v2622, 1.0
        %v2699 = vadd.f32 %v2624, 1.0
        %v2700 = vadd.f32 %v2626, 1.0
        %v2701 = vadd.f32 %v2628, 1.0
        %v2702 = vadd.f32 %v2630, 1.0
        %v2703 = vadd.f32 %v2632, 1.0
        %v2704 = vadd.f32 %v2634, 1.0
        %v2705 = vadd.f32 %v2636, 1.0
        %v2706 = vadd.f32 %v2638, 1.0
        %v2707 = vadd.f32 %v2640, 1.0
        %v2708 = vadd.f32 %v2642, 1.0
        %v2709 = vadd.f32 %v2644, 1.0
        %v2710 = vadd.f32 %v2646, 1.0
        %v2711 = vrcp.pop %v2647
        %v2712 = vmul.f32 1.0, %v2711
        %v2713 = vrcp.pop %v2648
        %v2714 = vmul.f32 1.0, %v2713
        %v2715 = vrcp.pop %v2649
        %v2716 = vmul.f32 1.0, %v2715
        %v2717 = vrcp.pop %v2650
        %v2718 = vmul.f32 1.0, %v2717
        %v2719 = vrcp.pop %v2651
        %v2720 = vmul.f32 1.0, %v2719
        %v2721 = vrcp.pop %v2652
        %v2722 = vmul.f32 1.0, %v2721
        %v2723 = vrcp.pop %v2653
        %v2724 = vmul.f32 1.0, %v2723
        %v2725 = vrcp.pop %v2654
        %v2726 = vmul.f32 1.0, %v2725
        %v2727 = vrcp.pop %v2655
        %v2728 = vmul.f32 1.0, %v2727
        %v2729 = vrcp.pop %v2656
        %v2730 = vmul.f32 1.0, %v2729
        %v2731 = vrcp.pop %v2657
        %v2732 = vmul.f32 1.0, %v2731
        %v2733 = vrcp.pop %v2658
        %v2734 = vmul.f32 1.0, %v2733
        %v2735 = vrcp.pop %v2659
        %v2736 = vmul.f32 1.0, %v2735
        %v2737 = vrcp.pop %v2660
        %v2738 = vmul.f32 1.0, %v2737
        %v2739 = vrcp.pop %v2661
        %v2740 = vmul.f32 1.0, %v2739
        %v2741 = vrcp.pop %v2662
        %v2742 = vmul.f32 1.0, %v2741
        %v2743 = vrcp.pop %v2663
        %v2744 = vmul.f32 1.0, %v2743
        %v2745 = vrcp.pop %v2664
        %v2746 = vmul.f32 1.0, %v2745
        %v2747 = vrcp.pop %v2665
        %v2748 = vmul.f32 1.0, %v2747
        %v2749 = vrcp.pop %v2666
        %v2750 = vmul.f32 1.0, %v2749
        %v2751 = vrcp.pop %v2667
        %v2752 = vmul.f32 1.0, %v2751
        %v2753 = vrcp.pop %v2668
        %v2754 = vmul.f32 1.0, %v2753
        %v2755 = vrcp.pop %v2669
        %v2756 = vmul.f32 1.0, %v2755
        %v2757 = vrcp.pop %v2670
        %v2758 = vmul.f32 1.0, %v2757
        %v2759 = vrcp.pop %v2671
        %v2760 = vmul.f32 1.0, %v2759
        %v2761 = vrcp.pop %v2672
        %v2762 = vmul.f32 1.0, %v2761
        %v2763 = vrcp.pop %v2673
        %v2764 = vmul.f32 1.0, %v2763
        %v2765 = vrcp.pop %v2674
        %v2766 = vmul.f32 1.0, %v2765
        %v2767 = vrcp.pop %v2675
        %v2768 = vmul.f32 1.0, %v2767
        %v2769 = vrcp.pop %v2676
        %v2770 = vmul.f32 1.0, %v2769
        %v2771 = vrcp.pop %v2677
        %v2772 = vmul.f32 1.0, %v2771
        %v2773 = vrcp.pop %v2678
        %v2774 = vmul.f32 1.0, %v2773
        %v2775 = vrcp.pop %v2679
        %v2776 = vmul.f32 1.0, %v2775
        %v2777 = vrcp.pop %v2680
        %v2778 = vmul.f32 1.0, %v2777
        %v2779 = vrcp.pop %v2681
        %v2780 = vmul.f32 1.0, %v2779
        %v2781 = vrcp.pop %v2682
        %v2782 = vmul.f32 1.0, %v2781
        %v2783 = vrcp.pop %v2683
        %v2784 = vmul.f32 1.0, %v2783
        %v2785 = vrcp.pop %v2684
        %v2786 = vmul.f32 1.0, %v2785
        %v2787 = vrcp.pop %v2685
        %v2788 = vmul.f32 1.0, %v2787
        %v2789 = vrcp.pop %v2686
        %v2790 = vmul.f32 1.0, %v2789
        %v2791 = vrcp.pop %v2687
        %v2792 = vmul.f32 1.0, %v2791
        %v2793 = vrcp.pop %v2688
        %v2794 = vmul.f32 1.0, %v2793
        %v2795 = vrcp.pop %v2689
        %v2796 = vmul.f32 1.0, %v2795
        %v2797 = vrcp.pop %v2690
        %v2798 = vmul.f32 1.0, %v2797
        %v2799 = vrcp.pop %v2691
        %v2800 = vmul.f32 1.0, %v2799
        %v2801 = vrcp.pop %v2692
        %v2802 = vmul.f32 1.0, %v2801
        %v2803 = vrcp.pop %v2693
        %v2804 = vmul.f32 1.0, %v2803
        %v2805 = vrcp.pop %v2694
        %v2806 = vmul.f32 1.0, %v2805
        %v2807 = vrcp.pop %v2695
        %v2808 = vmul.f32 1.0, %v2807
        %v2809 = vrcp.pop %v2696
        %v2810 = vmul.f32 1.0, %v2809
        %v2811 = vrcp.pop %v2697
        %v2812 = vmul.f32 1.0, %v2811
        %v2813 = vrcp.pop %v2698
        %v2814 = vmul.f32 1.0, %v2813
        %v2815 = vrcp.pop %v2699
        %v2816 = vmul.f32 1.0, %v2815
        %v2817 = vrcp.pop %v2700
        %v2818 = vmul.f32 1.0, %v2817
        %v2819 = vrcp.pop %v2701
        %v2820 = vmul.f32 1.0, %v2819
        %v2821 = vrcp.pop %v2702
        %v2822 = vmul.f32 1.0, %v2821
        %v2823 = vrcp.pop %v2703
        %v2824 = vmul.f32 1.0, %v2823
        %v2825 = vrcp.pop %v2704
        %v2826 = vmul.f32 1.0, %v2825
        %v2827 = vrcp.pop %v2705
        %v2828 = vmul.f32 1.0, %v2827
        %v2829 = vrcp.pop %v2706
        %v2830 = vmul.f32 1.0, %v2829
        %v2831 = vrcp.pop %v2707
        %v2832 = vmul.f32 1.0, %v2831
        %v2833 = vrcp.pop %v2708
        %v2834 = vmul.f32 1.0, %v2833
        %v2835 = vrcp.pop %v2709
        %v2836 = vmul.f32 1.0, %v2835
        %v2837 = vrcp.pop %v2710
        %v2838 = vmul.f32 1.0, %v2837
        %v2839 = vmul.f32 %v2104, %v2712
        %v2840 = vmul.f32 %v2106, %v2714
        %v2841 = vmul.f32 %v2108, %v2716
        %v2842 = vmul.f32 %v2110, %v2718
        %v2843 = vmul.f32 %v2114, %v2720
        %v2844 = vmul.f32 %v2116, %v2722
        %v2845 = vmul.f32 %v2118, %v2724
        %v2846 = vmul.f32 %v2120, %v2726
        %v2847 = vmul.f32 %v2124, %v2728
        %v2848 = vmul.f32 %v2126, %v2730
        %v2849 = vmul.f32 %v2128, %v2732
        %v2850 = vmul.f32 %v2130, %v2734
        %v2851 = vmul.f32 %v2134, %v2736
        %v2852 = vmul.f32 %v2136, %v2738
        %v2853 = vmul.f32 %v2138, %v2740
        %v2854 = vmul.f32 %v2140, %v2742
        %v2855 = vmul.f32 %v2144, %v2744
        %v2856 = vmul.f32 %v2146, %v2746
        %v2857 = vmul.f32 %v2148, %v2748
        %v2858 = vmul.f32 %v2150, %v2750
        %v2859 = vmul.f32 %v2154, %v2752
        %v2860 = vmul.f32 %v2156, %v2754
        %v2861 = vmul.f32 %v2158, %v2756
        %v2862 = vmul.f32 %v2160, %v2758
        %v2863 = vmul.f32 %v2164, %v2760
        %v2864 = vmul.f32 %v2166, %v2762
        %v2865 = vmul.f32 %v2168, %v2764
        %v2866 = vmul.f32 %v2170, %v2766
        %v2867 = vmul.f32 %v2174, %v2768
        %v2868 = vmul.f32 %v2176, %v2770
        %v2869 = vmul.f32 %v2178, %v2772
        %v2870 = vmul.f32 %v2180, %v2774
        %v2871 = vmul.f32 %v2184, %v2776
        %v2872 = vmul.f32 %v2186, %v2778
        %v2873 = vmul.f32 %v2188, %v2780
        %v2874 = vmul.f32 %v2190, %v2782
        %v2875 = vmul.f32 %v2194, %v2784
        %v2876 = vmul.f32 %v2196, %v2786
        %v2877 = vmul.f32 %v2198, %v2788
        %v2878 = vmul.f32 %v2200, %v2790
        %v2879 = vmul.f32 %v2204, %v2792
        %v2880 = vmul.f32 %v2206, %v2794
        %v2881 = vmul.f32 %v2208, %v2796
        %v2882 = vmul.f32 %v2210, %v2798
        %v2883 = vmul.f32 %v2214, %v2800
        %v2884 = vmul.f32 %v2216, %v2802
        %v2885 = vmul.f32 %v2218, %v2804
        %v2886 = vmul.f32 %v2220, %v2806
        %v2887 = vmul.f32 %v2224, %v2808
        %v2888 = vmul.f32 %v2226, %v2810
        %v2889 = vmul.f32 %v2228, %v2812
        %v2890 = vmul.f32 %v2230, %v2814
        %v2891 = vmul.f32 %v2234, %v2816
        %v2892 = vmul.f32 %v2236, %v2818
        %v2893 = vmul.f32 %v2238, %v2820
        %v2894 = vmul.f32 %v2240, %v2822
        %v2895 = vmul.f32 %v2244, %v2824
        %v2896 = vmul.f32 %v2246, %v2826
        %v2897 = vmul.f32 %v2248, %v2828
        %v2898 = vmul.f32 %v2250, %v2830
        %v2899 = vmul.f32 %v2254, %v2832
        %v2900 = vmul.f32 %v2256, %v2834
        %v2901 = vmul.f32 %v2258, %v2836
        %v2902 = vmul.f32 %v2260, %v2838
        %v2903 = vmul.f32 %v2839, %v2297
        %v2904 = vmul.f32 %v2840, %v2299
        %v2905 = vmul.f32 %v2841, %v2301
        %v2906 = vmul.f32 %v2842, %v2303
        %v2907 = vmul.f32 %v2843, %v2307
        %v2908 = vmul.f32 %v2844, %v2309
        %v2909 = vmul.f32 %v2845, %v2311
        %v2910 = vmul.f32 %v2846, %v2313
        %v2911 = vmul.f32 %v2847, %v2317
        %v2912 = vmul.f32 %v2848, %v2319
        %v2913 = vmul.f32 %v2849, %v2321
        %v2914 = vmul.f32 %v2850, %v2323
        %v2915 = vmul.f32 %v2851, %v2327
        %v2916 = vmul.f32 %v2852, %v2329
        %v2917 = vmul.f32 %v2853, %v2331
        %v2918 = vmul.f32 %v2854, %v2333
        %v2919 = vmul.f32 %v2855, %v2337
        %v2920 = vmul.f32 %v2856, %v2339
        %v2921 = vmul.f32 %v2857, %v2341
        %v2922 = vmul.f32 %v2858, %v2343
        %v2923 = vmul.f32 %v2859, %v2347
        %v2924 = vmul.f32 %v2860, %v2349
        %v2925 = vmul.f32 %v2861, %v2351
        %v2926 = vmul.f32 %v2862, %v2353
        %v2927 = vmul.f32 %v2863, %v2357
        %v2928 = vmul.f32 %v2864, %v2359
        %v2929 = vmul.f32 %v2865, %v2361
        %v2930 = vmul.f32 %v2866, %v2363
        %v2931 = vmul.f32 %v2867, %v2367
        %v2932 = vmul.f32 %v2868, %v2369
        %v2933 = vmul.f32 %v2869, %v2371
        %v2934 = vmul.f32 %v2870, %v2373
        %v2935 = vmul.f32 %v2871, %v2377
        %v2936 = vmul.f32 %v2872, %v2379
        %v2937 = vmul.f32 %v2873, %v2381
        %v2938 = vmul.f32 %v2874, %v2383
        %v2939 = vmul.f32 %v2875, %v2387
        %v2940 = vmul.f32 %v2876, %v2389
        %v2941 = vmul.f32 %v2877, %v2391
        %v2942 = vmul.f32 %v2878, %v2393
        %v2943 = vmul.f32 %v2879, %v2397
        %v2944 = vmul.f32 %v2880, %v2399
        %v2945 = vmul.f32 %v2881, %v2401
        %v2946 = vmul.f32 %v2882, %v2403
        %v2947 = vmul.f32 %v2883, %v2407
        %v2948 = vmul.f32 %v2884, %v2409
        %v2949 = vmul.f32 %v2885, %v2411
        %v2950 = vmul.f32 %v2886, %v2413
        %v2951 = vmul.f32 %v2887, %v2417
        %v2952 = vmul.f32 %v2888, %v2419
        %v2953 = vmul.f32 %v2889, %v2421
        %v2954 = vmul.f32 %v2890, %v2423
        %v2955 = vmul.f32 %v2891, %v2427
        %v2956 = vmul.f32 %v2892, %v2429
        %v2957 = vmul.f32 %v2893, %v2431
        %v2958 = vmul.f32 %v2894, %v2433
        %v2959 = vmul.f32 %v2895, %v2437
        %v2960 = vmul.f32 %v2896, %v2439
        %v2961 = vmul.f32 %v2897, %v2441
        %v2962 = vmul.f32 %v2898, %v2443
        %v2963 = vmul.f32 %v2899, %v2447
        %v2964 = vmul.f32 %v2900, %v2449
        %v2965 = vmul.f32 %v2901, %v2451
        %v2966 = vmul.f32 %v2902, %v2453
        %v2967 = vpack.c.bf16 %v486, %v485
        %v2968 = vpack.c.bf16 %v488, %v487
        %v2969 = vpack.c.bf16 %v490, %v489
        %v2970 = vpack.c.bf16 %v492, %v491
        %v2971 = vpack.c.bf16 %v494, %v493
        %v2972 = vpack.c.bf16 %v496, %v495
        %v2973 = vpack.c.bf16 %v498, %v497
        %v2974 = vpack.c.bf16 %v500, %v499
        %v2975 = vpack.c.bf16 %v502, %v501
        %v2976 = vpack.c.bf16 %v504, %v503
        %v2977 = vpack.c.bf16 %v506, %v505
        %v2978 = vpack.c.bf16 %v508, %v507
        %v2979 = vpack.c.bf16 %v510, %v509
        %v2980 = vpack.c.bf16 %v512, %v511
        %v2981 = vpack.c.bf16 %v514, %v513
        %v2982 = vpack.c.bf16 %v516, %v515
        %v2983 = vld [vmem:[#allocation11] sm:$0xf]
        %v2984 = vld [vmem:[#allocation11 + $0x4] sm:$0xf]
        %v2985 = vld [vmem:[#allocation11 + $0x8] sm:$0xf]
        %v2986 = vld [vmem:[#allocation11 + $0xc] sm:$0xf]
        %v2987 = vld [vmem:[#allocation11 + $0x10] sm:$0xf]
        %v2988 = vld [vmem:[#allocation11 + $0x14] sm:$0xf]
        %v2989 = vld [vmem:[#allocation11 + $0x18] sm:$0xf]
        %v2990 = vld [vmem:[#allocation11 + $0x1c] sm:$0xf]
        %v2991 = vld [vmem:[#allocation11 + $0x20] sm:$0xf]
        %v2992 = vld [vmem:[#allocation11 + $0x24] sm:$0xf]
        %v2993 = vld [vmem:[#allocation11 + $0x28] sm:$0xf]
        %v2994 = vld [vmem:[#allocation11 + $0x2c] sm:$0xf]
        %v2995 = vld [vmem:[#allocation11 + $0x30] sm:$0xf]
        %v2996 = vld [vmem:[#allocation11 + $0x34] sm:$0xf]
        %v2997 = vld [vmem:[#allocation11 + $0x38] sm:$0xf]
        %v2998 = vld [vmem:[#allocation11 + $0x3c] sm:$0xf]
        %v2999 = vld [vmem:[%s4] sm:$0x1]
        %v3001 = vlaneseq
        %v3002 = vshrl.u32 %v3001, 7
        %v3003 = vsub.s32 0, %v3002
        %v3004 = vrot.slane %v2999, %v3003
        %v3022 = vunpack.c.l.b16 %v2983
        %v3023 = vunpack.c.l.b16 %v2984
        %v3024 = vunpack.c.l.b16 %v2985
        %v3025 = vunpack.c.l.b16 %v2986
        %v3026 = vunpack.c.l.b16 %v2987
        %v3027 = vunpack.c.l.b16 %v2988
        %v3028 = vunpack.c.l.b16 %v2989
        %v3029 = vunpack.c.l.b16 %v2990
        %v3030 = vunpack.c.l.b16 %v2991
        %v3031 = vunpack.c.l.b16 %v2992
        %v3032 = vunpack.c.l.b16 %v2993
        %v3033 = vunpack.c.l.b16 %v2994
        %v3034 = vunpack.c.l.b16 %v2995
        %v3035 = vunpack.c.l.b16 %v2996
        %v3036 = vunpack.c.l.b16 %v2997
        %v3037 = vunpack.c.l.b16 %v2998
        %v3038 = vpack.c.b16 %v3023, %v3022
        %v3039 = vpack.c.b16 %v3025, %v3024
        %v3040 = vpack.c.b16 %v3027, %v3026
        %v3041 = vpack.c.b16 %v3029, %v3028
        %v3042 = vpack.c.b16 %v3031, %v3030
        %v3043 = vpack.c.b16 %v3033, %v3032
        %v3044 = vpack.c.b16 %v3035, %v3034
        %v3045 = vpack.c.b16 %v3037, %v3036
        %3054 = vmatprep.subr.bf16.mxu0 0
        %3055 = vmatpush1.bf16.msra.mxu0 %v3038
        %3056 = vmatprep.subr.bf16.mxu0 0
        %3057 = vmatpush1.bf16.msra.mxu0 %v3039
        %3058 = vmatprep.subr.bf16.mxu0 0
        %3059 = vmatpush1.bf16.msra.mxu0 %v3040
        %3060 = vmatprep.subr.bf16.mxu0 0
        %3061 = vmatpush1.bf16.msra.mxu0 %v3041
        %3062 = vmatprep.subr.bf16.mxu0 0
        %3063 = vmatpush1.bf16.msra.mxu0 %v3042
        %3064 = vmatprep.subr.bf16.mxu0 0
        %3065 = vmatpush1.bf16.msra.mxu0 %v3043
        %3066 = vmatprep.subr.bf16.mxu0 0
        %3067 = vmatpush1.bf16.msra.mxu0 %v3044
        %3068 = vmatprep.subr.bf16.mxu0 0
        %3069 = vmatpush1.bf16.msra.mxu0 %v3045
        %3070 = vmatprep.subr.bf16.mxu0 0
        %3071 = vmatpush1.bf16.msra.mxu0 0
        %3072 = vmatprep.subr.bf16.mxu0 0
        %3073 = vmatpush1.bf16.msra.mxu0 0
        %3074 = vmatprep.subr.bf16.mxu0 0
        %3075 = vmatpush1.bf16.msra.mxu0 0
        %3076 = vmatprep.subr.bf16.mxu0 0
        %3077 = vmatpush1.bf16.msra.mxu0 0
        %3078 = vmatprep.subr.bf16.mxu0 0
        %3079 = vmatpush1.bf16.msra.mxu0 0
        %3080 = vmatprep.subr.bf16.mxu0 0
        %3081 = vmatpush1.bf16.msra.mxu0 0
        %3082 = vmatprep.subr.bf16.mxu0 0
        %3083 = vmatpush1.bf16.msra.mxu0 0
        %3084 = vmatprep.subr.bf16.mxu0 0
        %3085 = vmatpush1.bf16.msra.mxu0 0
        %3086 = vmatprep.mubr.bf16.mxu0 0
        %3087 = vmatmul.mubr.bf16.gmra.mrb[0].mxu0 %v2967
        %v3088 = vpop.f32.mrb[0].mxu0
        %v3089 = vadd.f32 %v3004, %v3088
        %v3090 = vpop.f32.mrb[0].mxu0
        %v3091 = vpop.f32.mrb[0].mxu0
        %v3092 = vadd.f32 %v3004, %v3091
        %v3093 = vpop.f32.mrb[0].mxu0
        %3094 = vmatprep.mubr.bf16.mxu0 0
        %3095 = vmatmul.mubr.bf16.gmra.mrb[0].mxu0 %v2968
        %v3096 = vpop.f32.mrb[0].mxu0
        %v3097 = vadd.f32 %v3004, %v3096
        %v3098 = vpop.f32.mrb[0].mxu0
        %v3099 = vpop.f32.mrb[0].mxu0
        %v3100 = vadd.f32 %v3004, %v3099
        %v3101 = vpop.f32.mrb[0].mxu0
        %3102 = vmatprep.mubr.bf16.mxu0 0
        %3103 = vmatmul.mubr.bf16.gmra.mrb[0].mxu0 %v2969
        %v3104 = vpop.f32.mrb[0].mxu0
        %v3105 = vadd.f32 %v3004, %v3104
        %v3106 = vpop.f32.mrb[0].mxu0
        %v3107 = vpop.f32.mrb[0].mxu0
        %v3108 = vadd.f32 %v3004, %v3107
        %v3109 = vpop.f32.mrb[0].mxu0
        %3110 = vmatprep.mubr.bf16.mxu0 0
        %3111 = vmatmul.mubr.bf16.gmra.mrb[0].mxu0 %v2970
        %v3112 = vpop.f32.mrb[0].mxu0
        %v3113 = vadd.f32 %v3004, %v3112
        %v3114 = vpop.f32.mrb[0].mxu0
        %v3115 = vpop.f32.mrb[0].mxu0
        %v3116 = vadd.f32 %v3004, %v3115
        %v3117 = vpop.f32.mrb[0].mxu0
        %3118 = vmatprep.mubr.bf16.mxu0 0
        %3119 = vmatmul.mubr.bf16.gmra.mrb[0].mxu0 %v2971
        %v3120 = vpop.f32.mrb[0].mxu0
        %v3121 = vadd.f32 %v3004, %v3120
        %v3122 = vpop.f32.mrb[0].mxu0
        %v3123 = vpop.f32.mrb[0].mxu0
        %v3124 = vadd.f32 %v3004, %v3123
        %v3125 = vpop.f32.mrb[0].mxu0
        %3126 = vmatprep.mubr.bf16.mxu0 0
        %3127 = vmatmul.mubr.bf16.gmra.mrb[0].mxu0 %v2972
        %v3128 = vpop.f32.mrb[0].mxu0
        %v3129 = vadd.f32 %v3004, %v3128
        %v3130 = vpop.f32.mrb[0].mxu0
        %v3131 = vpop.f32.mrb[0].mxu0
        %v3132 = vadd.f32 %v3004, %v3131
        %v3133 = vpop.f32.mrb[0].mxu0
        %3134 = vmatprep.mubr.bf16.mxu0 0
        %3135 = vmatmul.mubr.bf16.gmra.mrb[0].mxu0 %v2973
        %v3136 = vpop.f32.mrb[0].mxu0
        %v3137 = vadd.f32 %v3004, %v3136
        %v3138 = vpop.f32.mrb[0].mxu0
        %v3139 = vpop.f32.mrb[0].mxu0
        %v3140 = vadd.f32 %v3004, %v3139
        %v3141 = vpop.f32.mrb[0].mxu0
        %3142 = vmatprep.mubr.bf16.mxu0 0
        %3143 = vmatmul.mubr.bf16.gmra.mrb[0].mxu0 %v2974
        %v3144 = vpop.f32.mrb[0].mxu0
        %v3145 = vadd.f32 %v3004, %v3144
        %v3146 = vpop.f32.mrb[0].mxu0
        %v3147 = vpop.f32.mrb[0].mxu0
        %v3148 = vadd.f32 %v3004, %v3147
        %v3149 = vpop.f32.mrb[0].mxu0
        %3150 = vmatprep.mubr.bf16.mxu0 0
        %3151 = vmatmul.mubr.bf16.gmra.mrb[0].mxu0 %v2975
        %v3152 = vpop.f32.mrb[0].mxu0
        %v3153 = vadd.f32 %v3004, %v3152
        %v3154 = vpop.f32.mrb[0].mxu0
        %v3155 = vpop.f32.mrb[0].mxu0
        %v3156 = vadd.f32 %v3004, %v3155
        %v3157 = vpop.f32.mrb[0].mxu0
        %3158 = vmatprep.mubr.bf16.mxu0 0
        %3159 = vmatmul.mubr.bf16.gmra.mrb[0].mxu0 %v2976
        %v3160 = vpop.f32.mrb[0].mxu0
        %v3161 = vadd.f32 %v3004, %v3160
        %v3162 = vpop.f32.mrb[0].mxu0
        %v3163 = vpop.f32.mrb[0].mxu0
        %v3164 = vadd.f32 %v3004, %v3163
        %v3165 = vpop.f32.mrb[0].mxu0
        %3166 = vmatprep.mubr.bf16.mxu0 0
        %3167 = vmatmul.mubr.bf16.gmra.mrb[0].mxu0 %v2977
        %v3168 = vpop.f32.mrb[0].mxu0
        %v3169 = vadd.f32 %v3004, %v3168
        %v3170 = vpop.f32.mrb[0].mxu0
        %v3171 = vpop.f32.mrb[0].mxu0
        %v3172 = vadd.f32 %v3004, %v3171
        %v3173 = vpop.f32.mrb[0].mxu0
        %3174 = vmatprep.mubr.bf16.mxu0 0
        %3175 = vmatmul.mubr.bf16.gmra.mrb[0].mxu0 %v2978
        %v3176 = vpop.f32.mrb[0].mxu0
        %v3177 = vadd.f32 %v3004, %v3176
        %v3178 = vpop.f32.mrb[0].mxu0
        %v3179 = vpop.f32.mrb[0].mxu0
        %v3180 = vadd.f32 %v3004, %v3179
        %v3181 = vpop.f32.mrb[0].mxu0
        %3182 = vmatprep.mubr.bf16.mxu0 0
        %3183 = vmatmul.mubr.bf16.gmra.mrb[0].mxu0 %v2979
        %v3184 = vpop.f32.mrb[0].mxu0
        %v3185 = vadd.f32 %v3004, %v3184
        %v3186 = vpop.f32.mrb[0].mxu0
        %v3187 = vpop.f32.mrb[0].mxu0
        %v3188 = vadd.f32 %v3004, %v3187
        %v3189 = vpop.f32.mrb[0].mxu0
        %3190 = vmatprep.mubr.bf16.mxu0 0
        %3191 = vmatmul.mubr.bf16.gmra.mrb[0].mxu0 %v2980
        %v3192 = vpop.f32.mrb[0].mxu0
        %v3193 = vadd.f32 %v3004, %v3192
        %v3194 = vpop.f32.mrb[0].mxu0
        %v3195 = vpop.f32.mrb[0].mxu0
        %v3196 = vadd.f32 %v3004, %v3195
        %v3197 = vpop.f32.mrb[0].mxu0
        %3198 = vmatprep.mubr.bf16.mxu0 0
        %3199 = vmatmul.mubr.bf16.gmra.mrb[0].mxu0 %v2981
        %v3200 = vpop.f32.mrb[0].mxu0
        %v3201 = vadd.f32 %v3004, %v3200
        %v3202 = vpop.f32.mrb[0].mxu0
        %v3203 = vpop.f32.mrb[0].mxu0
        %v3204 = vadd.f32 %v3004, %v3203
        %v3205 = vpop.f32.mrb[0].mxu0
        %3206 = vmatprep.mubr.bf16.mxu0 0
        %3207 = vmatmul.mubr.bf16.gmra.mrb[0].mxu0 %v2982
        %v3208 = vpop.f32.mrb[0].mxu0
        %v3209 = vadd.f32 %v3004, %v3208
        %v3210 = vpop.f32.mrb[0].mxu0
        %v3211 = vpop.f32.mrb[0].mxu0
        %v3212 = vadd.f32 %v3004, %v3211
        %v3213 = vpop.f32.mrb[0].mxu0
        %3214 = vdwg.mxu0
        %v3215 = vxor.u32 %v3089, 2147483648
        %v3216 = vxor.u32 %v3092, 2147483648
        %v3217 = vxor.u32 %v3097, 2147483648
        %v3218 = vxor.u32 %v3100, 2147483648
        %v3219 = vxor.u32 %v3105, 2147483648
        %v3220 = vxor.u32 %v3108, 2147483648
        %v3221 = vxor.u32 %v3113, 2147483648
        %v3222 = vxor.u32 %v3116, 2147483648
        %v3223 = vxor.u32 %v3121, 2147483648
        %v3224 = vxor.u32 %v3124, 2147483648
        %v3225 = vxor.u32 %v3129, 2147483648
        %v3226 = vxor.u32 %v3132, 2147483648
        %v3227 = vxor.u32 %v3137, 2147483648
        %v3228 = vxor.u32 %v3140, 2147483648
        %v3229 = vxor.u32 %v3145, 2147483648
        %v3230 = vxor.u32 %v3148, 2147483648
        %v3231 = vxor.u32 %v3153, 2147483648
        %v3232 = vxor.u32 %v3156, 2147483648
        %v3233 = vxor.u32 %v3161, 2147483648
        %v3234 = vxor.u32 %v3164, 2147483648
        %v3235 = vxor.u32 %v3169, 2147483648
        %v3236 = vxor.u32 %v3172, 2147483648
        %v3237 = vxor.u32 %v3177, 2147483648
        %v3238 = vxor.u32 %v3180, 2147483648
        %v3239 = vxor.u32 %v3185, 2147483648
        %v3240 = vxor.u32 %v3188, 2147483648
        %v3241 = vxor.u32 %v3193, 2147483648
        %v3242 = vxor.u32 %v3196, 2147483648
        %v3243 = vxor.u32 %v3201, 2147483648
        %v3244 = vxor.u32 %v3204, 2147483648
        %v3245 = vxor.u32 %v3209, 2147483648
        %v3246 = vxor.u32 %v3212, 2147483648
        %v3247 = vmul.f32 %v3215, 1.442695
        %v3248 = vpow.pop %v3247
        %v3249 = vmul.f32 %v3216, 1.442695
        %v3250 = vpow.pop %v3249
        %v3251 = vmul.f32 %v3217, 1.442695
        %v3252 = vpow.pop %v3251
        %v3253 = vmul.f32 %v3218, 1.442695
        %v3254 = vpow.pop %v3253
        %v3255 = vmul.f32 %v3219, 1.442695
        %v3256 = vpow.pop %v3255
        %v3257 = vmul.f32 %v3220, 1.442695
        %v3258 = vpow.pop %v3257
        %v3259 = vmul.f32 %v3221, 1.442695
        %v3260 = vpow.pop %v3259
        %v3261 = vmul.f32 %v3222, 1.442695
        %v3262 = vpow.pop %v3261
        %v3263 = vmul.f32 %v3223, 1.442695
        %v3264 = vpow.pop %v3263
        %v3265 = vmul.f32 %v3224, 1.442695
        %v3266 = vpow.pop %v3265
        %v3267 = vmul.f32 %v3225, 1.442695
        %v3268 = vpow.pop %v3267
        %v3269 = vmul.f32 %v3226, 1.442695
        %v3270 = vpow.pop %v3269
        %v3271 = vmul.f32 %v3227, 1.442695
        %v3272 = vpow.pop %v3271
        %v3273 = vmul.f32 %v3228, 1.442695
        %v3274 = vpow.pop %v3273
        %v3275 = vmul.f32 %v3229, 1.442695
        %v3276 = vpow.pop %v3275
        %v3277 = vmul.f32 %v3230, 1.442695
        %v3278 = vpow.pop %v3277
        %v3279 = vmul.f32 %v3231, 1.442695
        %v3280 = vpow.pop %v3279
        %v3281 = vmul.f32 %v3232, 1.442695
        %v3282 = vpow.pop %v3281
        %v3283 = vmul.f32 %v3233, 1.442695
        %v3284 = vpow.pop %v3283
        %v3285 = vmul.f32 %v3234, 1.442695
        %v3286 = vpow.pop %v3285
        %v3287 = vmul.f32 %v3235, 1.442695
        %v3288 = vpow.pop %v3287
        %v3289 = vmul.f32 %v3236, 1.442695
        %v3290 = vpow.pop %v3289
        %v3291 = vmul.f32 %v3237, 1.442695
        %v3292 = vpow.pop %v3291
        %v3293 = vmul.f32 %v3238, 1.442695
        %v3294 = vpow.pop %v3293
        %v3295 = vmul.f32 %v3239, 1.442695
        %v3296 = vpow.pop %v3295
        %v3297 = vmul.f32 %v3240, 1.442695
        %v3298 = vpow.pop %v3297
        %v3299 = vmul.f32 %v3241, 1.442695
        %v3300 = vpow.pop %v3299
        %v3301 = vmul.f32 %v3242, 1.442695
        %v3302 = vpow.pop %v3301
        %v3303 = vmul.f32 %v3243, 1.442695
        %v3304 = vpow.pop %v3303
        %v3305 = vmul.f32 %v3244, 1.442695
        %v3306 = vpow.pop %v3305
        %v3307 = vmul.f32 %v3245, 1.442695
        %v3308 = vpow.pop %v3307
        %v3309 = vmul.f32 %v3246, 1.442695
        %v3310 = vpow.pop %v3309
        %v3311 = vadd.f32 %v3248, 1.0
        %v3312 = vadd.f32 %v3250, 1.0
        %v3313 = vadd.f32 %v3252, 1.0
        %v3314 = vadd.f32 %v3254, 1.0
        %v3315 = vadd.f32 %v3256, 1.0
        %v3316 = vadd.f32 %v3258, 1.0
        %v3317 = vadd.f32 %v3260, 1.0
        %v3318 = vadd.f32 %v3262, 1.0
        %v3319 = vadd.f32 %v3264, 1.0
        %v3320 = vadd.f32 %v3266, 1.0
        %v3321 = vadd.f32 %v3268, 1.0
        %v3322 = vadd.f32 %v3270, 1.0
        %v3323 = vadd.f32 %v3272, 1.0
        %v3324 = vadd.f32 %v3274, 1.0
        %v3325 = vadd.f32 %v3276, 1.0
        %v3326 = vadd.f32 %v3278, 1.0
        %v3327 = vadd.f32 %v3280, 1.0
        %v3328 = vadd.f32 %v3282, 1.0
        %v3329 = vadd.f32 %v3284, 1.0
        %v3330 = vadd.f32 %v3286, 1.0
        %v3331 = vadd.f32 %v3288, 1.0
        %v3332 = vadd.f32 %v3290, 1.0
        %v3333 = vadd.f32 %v3292, 1.0
        %v3334 = vadd.f32 %v3294, 1.0
        %v3335 = vadd.f32 %v3296, 1.0
        %v3336 = vadd.f32 %v3298, 1.0
        %v3337 = vadd.f32 %v3300, 1.0
        %v3338 = vadd.f32 %v3302, 1.0
        %v3339 = vadd.f32 %v3304, 1.0
        %v3340 = vadd.f32 %v3306, 1.0
        %v3341 = vadd.f32 %v3308, 1.0
        %v3342 = vadd.f32 %v3310, 1.0
        %v3343 = vrcp.pop %v3311
        %v3344 = vmul.f32 1.0, %v3343
        %v3345 = vrcp.pop %v3312
        %v3346 = vmul.f32 1.0, %v3345
        %v3347 = vrcp.pop %v3313
        %v3348 = vmul.f32 1.0, %v3347
        %v3349 = vrcp.pop %v3314
        %v3350 = vmul.f32 1.0, %v3349
        %v3351 = vrcp.pop %v3315
        %v3352 = vmul.f32 1.0, %v3351
        %v3353 = vrcp.pop %v3316
        %v3354 = vmul.f32 1.0, %v3353
        %v3355 = vrcp.pop %v3317
        %v3356 = vmul.f32 1.0, %v3355
        %v3357 = vrcp.pop %v3318
        %v3358 = vmul.f32 1.0, %v3357
        %v3359 = vrcp.pop %v3319
        %v3360 = vmul.f32 1.0, %v3359
        %v3361 = vrcp.pop %v3320
        %v3362 = vmul.f32 1.0, %v3361
        %v3363 = vrcp.pop %v3321
        %v3364 = vmul.f32 1.0, %v3363
        %v3365 = vrcp.pop %v3322
        %v3366 = vmul.f32 1.0, %v3365
        %v3367 = vrcp.pop %v3323
        %v3368 = vmul.f32 1.0, %v3367
        %v3369 = vrcp.pop %v3324
        %v3370 = vmul.f32 1.0, %v3369
        %v3371 = vrcp.pop %v3325
        %v3372 = vmul.f32 1.0, %v3371
        %v3373 = vrcp.pop %v3326
        %v3374 = vmul.f32 1.0, %v3373
        %v3375 = vrcp.pop %v3327
        %v3376 = vmul.f32 1.0, %v3375
        %v3377 = vrcp.pop %v3328
        %v3378 = vmul.f32 1.0, %v3377
        %v3379 = vrcp.pop %v3329
        %v3380 = vmul.f32 1.0, %v3379
        %v3381 = vrcp.pop %v3330
        %v3382 = vmul.f32 1.0, %v3381
        %v3383 = vrcp.pop %v3331
        %v3384 = vmul.f32 1.0, %v3383
        %v3385 = vrcp.pop %v3332
        %v3386 = vmul.f32 1.0, %v3385
        %v3387 = vrcp.pop %v3333
        %v3388 = vmul.f32 1.0, %v3387
        %v3389 = vrcp.pop %v3334
        %v3390 = vmul.f32 1.0, %v3389
        %v3391 = vrcp.pop %v3335
        %v3392 = vmul.f32 1.0, %v3391
        %v3393 = vrcp.pop %v3336
        %v3394 = vmul.f32 1.0, %v3393
        %v3395 = vrcp.pop %v3337
        %v3396 = vmul.f32 1.0, %v3395
        %v3397 = vrcp.pop %v3338
        %v3398 = vmul.f32 1.0, %v3397
        %v3399 = vrcp.pop %v3339
        %v3400 = vmul.f32 1.0, %v3399
        %v3401 = vrcp.pop %v3340
        %v3402 = vmul.f32 1.0, %v3401
        %v3403 = vrcp.pop %v3341
        %v3404 = vmul.f32 1.0, %v3403
        %v3405 = vrcp.pop %v3342
        %v3406 = vmul.f32 1.0, %v3405
        %v3407 = vpack.c.bf16 %v2905, %v2903
        %v3408 = vpack.c.bf16 %v2906, %v2904
        %v3409 = vpack.c.bf16 %v2909, %v2907
        %v3410 = vpack.c.bf16 %v2910, %v2908
        %v3411 = vpack.c.bf16 %v2913, %v2911
        %v3412 = vpack.c.bf16 %v2914, %v2912
        %v3413 = vpack.c.bf16 %v2917, %v2915
        %v3414 = vpack.c.bf16 %v2918, %v2916
        %v3415 = vpack.c.bf16 %v2921, %v2919
        %v3416 = vpack.c.bf16 %v2922, %v2920
        %v3417 = vpack.c.bf16 %v2925, %v2923
        %v3418 = vpack.c.bf16 %v2926, %v2924
        %v3419 = vpack.c.bf16 %v2929, %v2927
        %v3420 = vpack.c.bf16 %v2930, %v2928
        %v3421 = vpack.c.bf16 %v2933, %v2931
        %v3422 = vpack.c.bf16 %v2934, %v2932
        %v3423 = vpack.c.bf16 %v2937, %v2935
        %v3424 = vpack.c.bf16 %v2938, %v2936
        %v3425 = vpack.c.bf16 %v2941, %v2939
        %v3426 = vpack.c.bf16 %v2942, %v2940
        %v3427 = vpack.c.bf16 %v2945, %v2943
        %v3428 = vpack.c.bf16 %v2946, %v2944
        %v3429 = vpack.c.bf16 %v2949, %v2947
        %v3430 = vpack.c.bf16 %v2950, %v2948
        %v3431 = vpack.c.bf16 %v2953, %v2951
        %v3432 = vpack.c.bf16 %v2954, %v2952
        %v3433 = vpack.c.bf16 %v2957, %v2955
        %v3434 = vpack.c.bf16 %v2958, %v2956
        %v3435 = vpack.c.bf16 %v2961, %v2959
        %v3436 = vpack.c.bf16 %v2962, %v2960
        %v3437 = vpack.c.bf16 %v2965, %v2963
        %v3438 = vpack.c.bf16 %v2966, %v2964
        %v3439 = vld [vmem:[#allocation10] sm:$0xf]
        %v3440 = vld [vmem:[#allocation10 + $0x4] sm:$0xf]
        %v3441 = vld [vmem:[#allocation10 + $0x8] sm:$0xf]
        %v3442 = vld [vmem:[#allocation10 + $0xc] sm:$0xf]
        %v3443 = vld [vmem:[#allocation10 + $0x10] sm:$0xf]
        %v3444 = vld [vmem:[#allocation10 + $0x14] sm:$0xf]
        %v3445 = vld [vmem:[#allocation10 + $0x18] sm:$0xf]
        %v3446 = vld [vmem:[#allocation10 + $0x1c] sm:$0xf]
        %v3447 = vld [vmem:[#allocation10 + $0x20] sm:$0xf]
        %v3448 = vld [vmem:[#allocation10 + $0x24] sm:$0xf]
        %v3449 = vld [vmem:[#allocation10 + $0x28] sm:$0xf]
        %v3450 = vld [vmem:[#allocation10 + $0x2c] sm:$0xf]
        %v3451 = vld [vmem:[#allocation10 + $0x30] sm:$0xf]
        %v3452 = vld [vmem:[#allocation10 + $0x34] sm:$0xf]
        %v3453 = vld [vmem:[#allocation10 + $0x38] sm:$0xf]
        %v3454 = vld [vmem:[#allocation10 + $0x3c] sm:$0xf]
        %v3455 = vld [vmem:[#allocation10 + $0x40] sm:$0xf]
        %v3456 = vld [vmem:[#allocation10 + $0x44] sm:$0xf]
        %v3457 = vld [vmem:[#allocation10 + $0x48] sm:$0xf]
        %v3458 = vld [vmem:[#allocation10 + $0x4c] sm:$0xf]
        %v3459 = vld [vmem:[#allocation10 + $0x50] sm:$0xf]
        %v3460 = vld [vmem:[#allocation10 + $0x54] sm:$0xf]
        %v3461 = vld [vmem:[#allocation10 + $0x58] sm:$0xf]
        %v3462 = vld [vmem:[#allocation10 + $0x5c] sm:$0xf]
        %v3463 = vld [vmem:[#allocation10 + $0x60] sm:$0xf]
        %v3464 = vld [vmem:[#allocation10 + $0x64] sm:$0xf]
        %v3465 = vld [vmem:[#allocation10 + $0x68] sm:$0xf]
        %v3466 = vld [vmem:[#allocation10 + $0x6c] sm:$0xf]
        %v3467 = vld [vmem:[#allocation10 + $0x70] sm:$0xf]
        %v3468 = vld [vmem:[#allocation10 + $0x74] sm:$0xf]
        %v3469 = vld [vmem:[#allocation10 + $0x78] sm:$0xf]
        %v3470 = vld [vmem:[#allocation10 + $0x7c] sm:$0xf]
        %v3503 = vunpack.c.l.b16 %v3439
        %v3504 = vunpack.c.l.b16 %v3440
        %v3505 = vunpack.c.l.b16 %v3441
        %v3506 = vunpack.c.l.b16 %v3442
        %v3507 = vunpack.c.l.b16 %v3443
        %v3508 = vunpack.c.l.b16 %v3444
        %v3509 = vunpack.c.l.b16 %v3445
        %v3510 = vunpack.c.l.b16 %v3446
        %v3511 = vunpack.c.l.b16 %v3447
        %v3512 = vunpack.c.l.b16 %v3448
        %v3513 = vunpack.c.l.b16 %v3449
        %v3514 = vunpack.c.l.b16 %v3450
        %v3515 = vunpack.c.l.b16 %v3451
        %v3516 = vunpack.c.l.b16 %v3452
        %v3517 = vunpack.c.l.b16 %v3453
        %v3518 = vunpack.c.l.b16 %v3454
        %v3519 = vunpack.c.l.b16 %v3455
        %v3520 = vunpack.c.l.b16 %v3456
        %v3521 = vunpack.c.l.b16 %v3457
        %v3522 = vunpack.c.l.b16 %v3458
        %v3523 = vunpack.c.l.b16 %v3459
        %v3524 = vunpack.c.l.b16 %v3460
        %v3525 = vunpack.c.l.b16 %v3461
        %v3526 = vunpack.c.l.b16 %v3462
        %v3527 = vunpack.c.l.b16 %v3463
        %v3528 = vunpack.c.l.b16 %v3464
        %v3529 = vunpack.c.l.b16 %v3465
        %v3530 = vunpack.c.l.b16 %v3466
        %v3531 = vunpack.c.l.b16 %v3467
        %v3532 = vunpack.c.l.b16 %v3468
        %v3533 = vunpack.c.l.b16 %v3469
        %v3534 = vunpack.c.l.b16 %v3470
        %v3535 = vpack.c.b16 %v3504, %v3503
        %v3536 = vpack.c.b16 %v3506, %v3505
        %v3537 = vpack.c.b16 %v3508, %v3507
        %v3538 = vpack.c.b16 %v3510, %v3509
        %v3539 = vpack.c.b16 %v3512, %v3511
        %v3540 = vpack.c.b16 %v3514, %v3513
        %v3541 = vpack.c.b16 %v3516, %v3515
        %v3542 = vpack.c.b16 %v3518, %v3517
        %v3543 = vpack.c.b16 %v3520, %v3519
        %v3544 = vpack.c.b16 %v3522, %v3521
        %v3545 = vpack.c.b16 %v3524, %v3523
        %v3546 = vpack.c.b16 %v3526, %v3525
        %v3547 = vpack.c.b16 %v3528, %v3527
        %v3548 = vpack.c.b16 %v3530, %v3529
        %v3549 = vpack.c.b16 %v3532, %v3531
        %v3550 = vpack.c.b16 %v3534, %v3533
        %3567 = vmatprep.subr.bf16.mxu0 0
        %3568 = vmatpush1.bf16.msra.mxu0 %v3535
        %3569 = vmatprep.subr.bf16.mxu0 0
        %3570 = vmatpush1.bf16.msra.mxu0 %v3536
        %3571 = vmatprep.subr.bf16.mxu0 0
        %3572 = vmatpush1.bf16.msra.mxu0 %v3537
        %3573 = vmatprep.subr.bf16.mxu0 0
        %3574 = vmatpush1.bf16.msra.mxu0 %v3538
        %3575 = vmatprep.subr.bf16.mxu0 0
        %3576 = vmatpush1.bf16.msra.mxu0 %v3539
        %3577 = vmatprep.subr.bf16.mxu0 0
        %3578 = vmatpush1.bf16.msra.mxu0 %v3540
        %3579 = vmatprep.subr.bf16.mxu0 0
        %3580 = vmatpush1.bf16.msra.mxu0 %v3541
        %3581 = vmatprep.subr.bf16.mxu0 0
        %3582 = vmatpush1.bf16.msra.mxu0 %v3542
        %3583 = vmatprep.subr.bf16.mxu0 0
        %3584 = vmatpush1.bf16.msra.mxu0 %v3543
        %3585 = vmatprep.subr.bf16.mxu0 0
        %3586 = vmatpush1.bf16.msra.mxu0 %v3544
        %3587 = vmatprep.subr.bf16.mxu0 0
        %3588 = vmatpush1.bf16.msra.mxu0 %v3545
        %3589 = vmatprep.subr.bf16.mxu0 0
        %3590 = vmatpush1.bf16.msra.mxu0 %v3546
        %3591 = vmatprep.subr.bf16.mxu0 0
        %3592 = vmatpush1.bf16.msra.mxu0 %v3547
        %3593 = vmatprep.subr.bf16.mxu0 0
        %3594 = vmatpush1.bf16.msra.mxu0 %v3548
        %3595 = vmatprep.subr.bf16.mxu0 0
        %3596 = vmatpush1.bf16.msra.mxu0 %v3549
        %3597 = vmatprep.subr.bf16.mxu0 0
        %3598 = vmatpush1.bf16.msra.mxu0 %v3550
        %3599 = vmatprep.mubr.bf16.mxu0 %v3408
        %3600 = vmatmul.mubr.bf16.gmra.mrb[0].mxu0 %v3407
        %v3601 = vpop.f32.mrb[0].mxu0
        %v3602 = vadd.f32 0.0, %v3601
        %v3603 = vpop.f32.mrb[0].mxu0
        %v3604 = vpop.f32.mrb[0].mxu0
        %v3605 = vadd.f32 0.0, %v3604
        %v3606 = vpop.f32.mrb[0].mxu0
        %3607 = vmatprep.mubr.bf16.mxu0 %v3410
        %3608 = vmatmul.mubr.bf16.gmra.mrb[0].mxu0 %v3409
        %v3609 = vpop.f32.mrb[0].mxu0
        %v3610 = vadd.f32 0.0, %v3609
        %v3611 = vpop.f32.mrb[0].mxu0
        %v3612 = vpop.f32.mrb[0].mxu0
        %v3613 = vadd.f32 0.0, %v3612
        %v3614 = vpop.f32.mrb[0].mxu0
        %3615 = vmatprep.mubr.bf16.mxu0 %v3412
        %3616 = vmatmul.mubr.bf16.gmra.mrb[0].mxu0 %v3411
        %v3617 = vpop.f32.mrb[0].mxu0
        %v3618 = vadd.f32 0.0, %v3617
        %v3619 = vpop.f32.mrb[0].mxu0
        %v3620 = vpop.f32.mrb[0].mxu0
        %v3621 = vadd.f32 0.0, %v3620
        %v3622 = vpop.f32.mrb[0].mxu0
        %3623 = vmatprep.mubr.bf16.mxu0 %v3414
        %3624 = vmatmul.mubr.bf16.gmra.mrb[0].mxu0 %v3413
        %v3625 = vpop.f32.mrb[0].mxu0
        %v3626 = vadd.f32 0.0, %v3625
        %v3627 = vpop.f32.mrb[0].mxu0
        %v3628 = vpop.f32.mrb[0].mxu0
        %v3629 = vadd.f32 0.0, %v3628
        %v3630 = vpop.f32.mrb[0].mxu0
        %3631 = vmatprep.mubr.bf16.mxu0 %v3416
        %3632 = vmatmul.mubr.bf16.gmra.mrb[0].mxu0 %v3415
        %v3633 = vpop.f32.mrb[0].mxu0
        %v3634 = vadd.f32 0.0, %v3633
        %v3635 = vpop.f32.mrb[0].mxu0
        %v3636 = vpop.f32.mrb[0].mxu0
        %v3637 = vadd.f32 0.0, %v3636
        %v3638 = vpop.f32.mrb[0].mxu0
        %3639 = vmatprep.mubr.bf16.mxu0 %v3418
        %3640 = vmatmul.mubr.bf16.gmra.mrb[0].mxu0 %v3417
        %v3641 = vpop.f32.mrb[0].mxu0
        %v3642 = vadd.f32 0.0, %v3641
        %v3643 = vpop.f32.mrb[0].mxu0
        %v3644 = vpop.f32.mrb[0].mxu0
        %v3645 = vadd.f32 0.0, %v3644
        %v3646 = vpop.f32.mrb[0].mxu0
        %3647 = vmatprep.mubr.bf16.mxu0 %v3420
        %3648 = vmatmul.mubr.bf16.gmra.mrb[0].mxu0 %v3419
        %v3649 = vpop.f32.mrb[0].mxu0
        %v3650 = vadd.f32 0.0, %v3649
        %v3651 = vpop.f32.mrb[0].mxu0
        %v3652 = vpop.f32.mrb[0].mxu0
        %v3653 = vadd.f32 0.0, %v3652
        %v3654 = vpop.f32.mrb[0].mxu0
        %3655 = vmatprep.mubr.bf16.mxu0 %v3422
        %3656 = vmatmul.mubr.bf16.gmra.mrb[0].mxu0 %v3421
        %v3657 = vpop.f32.mrb[0].mxu0
        %v3658 = vadd.f32 0.0, %v3657
        %v3659 = vpop.f32.mrb[0].mxu0
        %v3660 = vpop.f32.mrb[0].mxu0
        %v3661 = vadd.f32 0.0, %v3660
        %v3662 = vpop.f32.mrb[0].mxu0
        %3663 = vmatprep.mubr.bf16.mxu0 %v3424
        %3664 = vmatmul.mubr.bf16.gmra.mrb[0].mxu0 %v3423
        %v3665 = vpop.f32.mrb[0].mxu0
        %v3666 = vadd.f32 0.0, %v3665
        %v3667 = vpop.f32.mrb[0].mxu0
        %v3668 = vpop.f32.mrb[0].mxu0
        %v3669 = vadd.f32 0.0, %v3668
        %v3670 = vpop.f32.mrb[0].mxu0
        %3671 = vmatprep.mubr.bf16.mxu0 %v3426
        %3672 = vmatmul.mubr.bf16.gmra.mrb[0].mxu0 %v3425
        %v3673 = vpop.f32.mrb[0].mxu0
        %v3674 = vadd.f32 0.0, %v3673
        %v3675 = vpop.f32.mrb[0].mxu0
        %v3676 = vpop.f32.mrb[0].mxu0
        %v3677 = vadd.f32 0.0, %v3676
        %v3678 = vpop.f32.mrb[0].mxu0
        %3679 = vmatprep.mubr.bf16.mxu0 %v3428
        %3680 = vmatmul.mubr.bf16.gmra.mrb[0].mxu0 %v3427
        %v3681 = vpop.f32.mrb[0].mxu0
        %v3682 = vadd.f32 0.0, %v3681
        %v3683 = vpop.f32.mrb[0].mxu0
        %v3684 = vpop.f32.mrb[0].mxu0
        %v3685 = vadd.f32 0.0, %v3684
        %v3686 = vpop.f32.mrb[0].mxu0
        %3687 = vmatprep.mubr.bf16.mxu0 %v3430
        %3688 = vmatmul.mubr.bf16.gmra.mrb[0].mxu0 %v3429
        %v3689 = vpop.f32.mrb[0].mxu0
        %v3690 = vadd.f32 0.0, %v3689
        %v3691 = vpop.f32.mrb[0].mxu0
        %v3692 = vpop.f32.mrb[0].mxu0
        %v3693 = vadd.f32 0.0, %v3692
        %v3694 = vpop.f32.mrb[0].mxu0
        %3695 = vmatprep.mubr.bf16.mxu0 %v3432
        %3696 = vmatmul.mubr.bf16.gmra.mrb[0].mxu0 %v3431
        %v3697 = vpop.f32.mrb[0].mxu0
        %v3698 = vadd.f32 0.0, %v3697
        %v3699 = vpop.f32.mrb[0].mxu0
        %v3700 = vpop.f32.mrb[0].mxu0
        %v3701 = vadd.f32 0.0, %v3700
        %v3702 = vpop.f32.mrb[0].mxu0
        %3703 = vmatprep.mubr.bf16.mxu0 %v3434
        %3704 = vmatmul.mubr.bf16.gmra.mrb[0].mxu0 %v3433
        %v3705 = vpop.f32.mrb[0].mxu0
        %v3706 = vadd.f32 0.0, %v3705
        %v3707 = vpop.f32.mrb[0].mxu0
        %v3708 = vpop.f32.mrb[0].mxu0
        %v3709 = vadd.f32 0.0, %v3708
        %v3710 = vpop.f32.mrb[0].mxu0
        %3711 = vmatprep.mubr.bf16.mxu0 %v3436
        %3712 = vmatmul.mubr.bf16.gmra.mrb[0].mxu0 %v3435
        %v3713 = vpop.f32.mrb[0].mxu0
        %v3714 = vadd.f32 0.0, %v3713
        %v3715 = vpop.f32.mrb[0].mxu0
        %v3716 = vpop.f32.mrb[0].mxu0
        %v3717 = vadd.f32 0.0, %v3716
        %v3718 = vpop.f32.mrb[0].mxu0
        %3719 = vmatprep.mubr.bf16.mxu0 %v3438
        %3720 = vmatmul.mubr.bf16.gmra.mrb[0].mxu0 %v3437
        %v3721 = vpop.f32.mrb[0].mxu0
        %v3722 = vadd.f32 0.0, %v3721
        %v3723 = vpop.f32.mrb[0].mxu0
        %v3724 = vpop.f32.mrb[0].mxu0
        %v3725 = vadd.f32 0.0, %v3724
        %v3726 = vpop.f32.mrb[0].mxu0
        %3727 = vdwg.mxu0
        %v3728 = vmul.f32 %v3344, %v3602
        %v3729 = vmul.f32 %v3346, %v3605
        %v3730 = vmul.f32 %v3348, %v3610
        %v3731 = vmul.f32 %v3350, %v3613
        %v3732 = vmul.f32 %v3352, %v3618
        %v3733 = vmul.f32 %v3354, %v3621
        %v3734 = vmul.f32 %v3356, %v3626
        %v3735 = vmul.f32 %v3358, %v3629
        %v3736 = vmul.f32 %v3360, %v3634
        %v3737 = vmul.f32 %v3362, %v3637
        %v3738 = vmul.f32 %v3364, %v3642
        %v3739 = vmul.f32 %v3366, %v3645
        %v3740 = vmul.f32 %v3368, %v3650
        %v3741 = vmul.f32 %v3370, %v3653
        %v3742 = vmul.f32 %v3372, %v3658
        %v3743 = vmul.f32 %v3374, %v3661
        %v3744 = vmul.f32 %v3376, %v3666
        %v3745 = vmul.f32 %v3378, %v3669
        %v3746 = vmul.f32 %v3380, %v3674
        %v3747 = vmul.f32 %v3382, %v3677
        %v3748 = vmul.f32 %v3384, %v3682
        %v3749 = vmul.f32 %v3386, %v3685
        %v3750 = vmul.f32 %v3388, %v3690
        %v3751 = vmul.f32 %v3390, %v3693
        %v3752 = vmul.f32 %v3392, %v3698
        %v3753 = vmul.f32 %v3394, %v3701
        %v3754 = vmul.f32 %v3396, %v3706
        %v3755 = vmul.f32 %v3398, %v3709
        %v3756 = vmul.f32 %v3400, %v3714
        %v3757 = vmul.f32 %v3402, %v3717
        %v3758 = vmul.f32 %v3404, %v3722
        %v3759 = vmul.f32 %v3406, %v3725
        %3760 = vst [vmem:[%s448] sm:$0xff] %v3728
        %3761 = vst [vmem:[%s448 + $0x8] sm:$0xff] %v3729
        %3762 = vst [vmem:[%s448 + $0x10] sm:$0xff] %v3730
        %3763 = vst [vmem:[%s448 + $0x18] sm:$0xff] %v3731
        %3764 = vst [vmem:[%s448 + $0x20] sm:$0xff] %v3732
        %3765 = vst [vmem:[%s448 + $0x28] sm:$0xff] %v3733
        %3766 = vst [vmem:[%s448 + $0x30] sm:$0xff] %v3734
        %3767 = vst [vmem:[%s448 + $0x38] sm:$0xff] %v3735
        %3768 = vst [vmem:[%s448 + $0x40] sm:$0xff] %v3736
        %3769 = vst [vmem:[%s448 + $0x48] sm:$0xff] %v3737
        %3770 = vst [vmem:[%s448 + $0x50] sm:$0xff] %v3738
        %3771 = vst [vmem:[%s448 + $0x58] sm:$0xff] %v3739
        %3772 = vst [vmem:[%s448 + $0x60] sm:$0xff] %v3740
        %3773 = vst [vmem:[%s448 + $0x68] sm:$0xff] %v3741
        %3774 = vst [vmem:[%s448 + $0x70] sm:$0xff] %v3742
        %3775 = vst [vmem:[%s448 + $0x78] sm:$0xff] %v3743
        %3776 = vst [vmem:[%s448 + $0x80] sm:$0xff] %v3744
        %3777 = vst [vmem:[%s448 + $0x88] sm:$0xff] %v3745
        %3778 = vst [vmem:[%s448 + $0x90] sm:$0xff] %v3746
        %3779 = vst [vmem:[%s448 + $0x98] sm:$0xff] %v3747
        %3780 = vst [vmem:[%s448 + $0xa0] sm:$0xff] %v3748
        %3781 = vst [vmem:[%s448 + $0xa8] sm:$0xff] %v3749
        %3782 = vst [vmem:[%s448 + $0xb0] sm:$0xff] %v3750
        %3783 = vst [vmem:[%s448 + $0xb8] sm:$0xff] %v3751
        %3784 = vst [vmem:[%s448 + $0xc0] sm:$0xff] %v3752
        %3785 = vst [vmem:[%s448 + $0xc8] sm:$0xff] %v3753
        %3786 = vst [vmem:[%s448 + $0xd0] sm:$0xff] %v3754
        %3787 = vst [vmem:[%s448 + $0xd8] sm:$0xff] %v3755
        %3788 = vst [vmem:[%s448 + $0xe0] sm:$0xff] %v3756
        %3789 = vst [vmem:[%s448 + $0xe8] sm:$0xff] %v3757
        %3790 = vst [vmem:[%s448 + $0xf0] sm:$0xff] %v3758
        %3791 = vst [vmem:[%s448 + $0xf8] sm:$0xff] %v3759
        %s3792 = sand.u32 %s238, 1
        %s3793 = scalar_lea.sflag [#allocation4], %s3792
        %s3794 = sand.u32 %s238, 1
        %s3795 = smul.addr %s3794, 256
        %s3796 = scalar_lea.vmem [#allocation13], %s3795
        // Predicated region
        $region81: #{_ctb_call.1} parent=55 // pred_check
          %p3797 = pneg %p248
        $region82: #{_ctb_call.1} parent=55 // pred_check_branch
          %3799 = sbr.rel (%p3797) target = $region84
        $region83: #{_ctb_call.1} parent=55 // pred_region
          %s3800 = smul.u32 32, %s31
          %s3802 = ssub.s32 4096, 4096
          %3803 = vsyncadd %s3793, %s3802
          %s3804 = smul.addr %s3800, 128
          %s3805 = scalar_lea.hbm %s9, %s3804
          %s3806 = sshll.u32 %s3796, 4
          %s3807 = int_to_ptr.vmem [resolvable:$true] %s3806
          %3812 = dma.vmem_to_hbm [thread:$0]  %s3807, 4096, %s3805, %s3793, 128, 128, 8
        $region84: #{_ctb_call.1} parent=55 // pred_fallthru
          _
      $region56: #{_ctb_call.1} parent=5 // pred_fallthru
        _
      %p3813 = scmp.le.s32.totalorder 2, %s26
      // Predicated region
      $region85: #{_ctb_call.1} parent=5 // pred_check
        %p3814 = pneg %p3813
      $region86: #{_ctb_call.1} parent=5 // pred_check_branch
        %3816 = sbr.rel (%p3814) target = $region88
      $region87: #{_ctb_call.1} parent=5 // pred_region
        %s3817 = ssub.s32 %s26, 2
        // Predicated region
        $region89: #{_ctb_call.1} parent=87 // pred_check
          %p3818 = pneg %p254
        $region90: #{_ctb_call.1} parent=87 // pred_check_branch
          %3820 = sbr.rel (%p3818) target = $region92
        $region91: #{_ctb_call.1} parent=87 // pred_region
          %s3821 = sand.u32 %s239, 1
          %s3822 = scalar_lea.sflag [#allocation4], %s3821
          %s3823 = sand.u32 %s239, 1
          %s3824 = smul.addr %s3823, 256
          %s3825 = scalar_lea.vmem [#allocation13], %s3824
          %3826 = dma.done %s3822, 4096
        $region92: #{_ctb_call.1} parent=87 // pred_fallthru
          _
      $region88: #{_ctb_call.1} parent=5 // pred_fallthru
        _
    $region6: #{_ctb_call.1} parent=1 // loop_footer
      %s30 = sadd.s32 1, %s26
    $region7: #{_ctb_call.1} parent=1 // loop_footer_branch
      %25 = sbr.rel target = $region3
    $region8: #{_ctb_call.1} parent=1 // loop_exit
      _
    %3827 = vsyncpa [#allocation3], 1
    %s3828 = scalar_lea.sflag [#allocation3], 1
    %3829 = vsyncpa %s3828, 1
    %3830 = vsyncpa [#allocation6], 1
    %s3831 = scalar_lea.sflag [#allocation6], 1
    %3832 = vsyncpa %s3831, 1
    %3833 = vsyncpa [#allocation9], 1
    %3834 = vsyncpa [#allocation12], 1
    %3835 = vsyncpa [#allocation4], 1
    %s3836 = scalar_lea.sflag [#allocation4], 1
    %3837 = vsyncpa %s3836, 1

</llo_original>
